<compile_context>
chip_gen: v6e
topology: v6e:2x2x1
jax: 0.10.0
libtpu: 0.0.40
codegen_flags: <defaults>
</compile_context>

<pallas_src>
import jax
import jax.numpy as jnp
import numpy as np
from jax.experimental import pallas as pl
from jax.experimental.pallas import tpu as pltpu

IN_DIM = 256 * 4 * 4   # 4096
HID = 1024
OUT_DIM = 10
OUT_PAD = 128          # pad fc3 output to a lane-dense 128, slice afterwards
TK = 1024              # K-tile for the fc1 contraction (4096 = 4 * 1024)


def _net_forward_kernel(h_ref, w1_ref, w2_hbm, w3_hbm,
                        y_ref, m0_ref, m1_ref, m2_ref,
                        acc_ref, w2_vmem, w3_vmem, sem):
    k = pl.program_id(0)
    last = pl.num_programs(0) - 1

    @pl.when(k == 0)
    def _():
        acc_ref[...] = jnp.zeros_like(acc_ref)
        # Kick off w2/w3 transfers now; they are only consumed at k == last,
        # so they overlap with the whole fc1 K-loop (no exposed prologue DMA).
        pltpu.make_async_copy(w2_hbm, w2_vmem, sem.at[0]).start()
        pltpu.make_async_copy(w3_hbm, w3_vmem, sem.at[1]).start()

    hb = h_ref[...]                                       # (B, TK) bf16 slice
    # h_list[0]: per-K-tile slice of mean(h, axis=0), computed in f32.
    m0_ref[...] = jnp.mean(hb.astype(jnp.float32), axis=0, keepdims=True)

    # fc1 partial accumulation over the K axis (bf16 inputs, f32 accumulate).
    acc_ref[...] += jnp.dot(hb, w1_ref[...], preferred_element_type=jnp.float32)

    @pl.when(k == last)
    def _():
        pltpu.make_async_copy(w2_hbm, w2_vmem, sem.at[0]).wait()
        pltpu.make_async_copy(w3_hbm, w3_vmem, sem.at[1]).wait()

        h1 = jnp.maximum(acc_ref[...], 0.0)               # relu(fc1(h)), f32
        m1_ref[...] = jnp.mean(h1, axis=0, keepdims=True)

        h2 = jnp.maximum(
            jnp.dot(h1.astype(jnp.bfloat16), w2_vmem[...],
                    preferred_element_type=jnp.float32), 0.0)
        m2_ref[...] = jnp.mean(h2, axis=0, keepdims=True)

        y_ref[...] = jnp.dot(h2.astype(jnp.bfloat16), w3_vmem[...],
                             preferred_element_type=jnp.float32)


def prepare_params(w1, w2, w3):
    """One-time weight preprocessing (call at parameter-init time, not per step).

    Torch-convention (out, in) f32 weights -> (in, out) bf16, fc3 padded to 128
    output lanes so the kernel stores are lane-dense.
    """
    w1t = w1.T.astype(jnp.bfloat16)                                   # (4096, 1024)
    w2t = w2.T.astype(jnp.bfloat16)                                   # (1024, 1024)
    w3t = jnp.zeros((HID, OUT_PAD), jnp.bfloat16).at[:, :OUT_DIM].set(
        w3.T.astype(jnp.bfloat16))                                    # (1024, 128)
    return w1t, w2t, w3t


@jax.jit
def net_forward(h, w1t, w2t, w3t):
    """h: (B, 4096) f32.  w1t/w2t/w3t: pre-laid-out bf16 weights from prepare_params."""
    B = h.shape[0]
    h_bf = h.astype(jnp.bfloat16)

    n_k = IN_DIM // TK
    out_shapes = (
        jax.ShapeDtypeStruct((B, OUT_PAD), jnp.float32),   # y (padded)
        jax.ShapeDtypeStruct((1, IN_DIM), jnp.float32),    # mean(h)
        jax.ShapeDtypeStruct((1, HID), jnp.float32),       # mean(relu(fc1 h))
        jax.ShapeDtypeStruct((1, HID), jnp.float32),       # mean(relu(fc2 .))
    )

    y_pad, m0, m1, m2 = pl.pallas_call(
        _net_forward_kernel,
        out_shape=out_shapes,
        grid_spec=pltpu.PrefetchScalarGridSpec(
            num_scalar_prefetch=0,
            grid=(n_k,),
            in_specs=[
                pl.BlockSpec((B, TK), lambda k: (0, k)),      # h tile over K
                pl.BlockSpec((TK, HID), lambda k: (k, 0)),    # w1 tile over K
                pl.BlockSpec(memory_space=pl.ANY),            # w2 stays in HBM
                pl.BlockSpec(memory_space=pl.ANY),            # w3 stays in HBM
            ],
            out_specs=[
                pl.BlockSpec((B, OUT_PAD), lambda k: (0, 0)),
                pl.BlockSpec((1, TK), lambda k: (0, k)),
                pl.BlockSpec((1, HID), lambda k: (0, 0)),
                pl.BlockSpec((1, HID), lambda k: (0, 0)),
            ],
            scratch_shapes=[
                pltpu.VMEM((B, HID), jnp.float32),            # fc1 f32 accumulator
                pltpu.VMEM((HID, HID), jnp.bfloat16),         # w2 (single-buffered)
                pltpu.VMEM((HID, OUT_PAD), jnp.bfloat16),     # w3 (single-buffered)
                pltpu.SemaphoreType.DMA((2,)),
            ],
        ),
        compiler_params=pltpu.CompilerParams(
            dimension_semantics=("arbitrary",),               # K axis is a reduction
            vmem_limit_bytes=32 << 20,
        ),
    )(h_bf, w1t, w2t, w3t)

    y = y_pad[:, :OUT_DIM]
    return y, [m0, m1, m2]


def _xavier_normal(key, shape):
    # torch.nn.init.xavier_normal_ for Linear weight (out, in)
    fan_out, fan_in = shape
    std = np.sqrt(2.0 / (fan_in + fan_out))
    return jax.random.normal(key, shape, jnp.float32) * std


def _reference_forward(h, w1, w2, w3):
    hl0 = jnp.mean(h, axis=0, keepdims=True)
    h1 = jnp.maximum(h @ w1.T, 0.0)
    hl1 = jnp.mean(h1, axis=0, keepdims=True)
    h2 = jnp.maximum(h1 @ w2.T, 0.0)
    hl2 = jnp.mean(h2, axis=0, keepdims=True)
    y = h2 @ w3.T
    return y, [hl0, hl1, hl2]


if __name__ == "__main__":
    key = jax.random.PRNGKey(0)
    k_h, k1, k2, k3 = jax.random.split(key, 4)

    B = 8
    h = jax.random.normal(k_h, (B, IN_DIM), jnp.float32)    # flattened conv features
    w1 = _xavier_normal(k1, (HID, IN_DIM))                   # fc1.weight (out, in)
    w2 = _xavier_normal(k2, (HID, HID))                      # fc2.weight
    w3 = _xavier_normal(k3, (OUT_DIM, HID))                  # fc3.weight

    # One-time parameter layout/cast (hoisted out of the per-call path).
    w1t, w2t, w3t = jax.block_until_ready(prepare_params(w1, w2, w3))

    y, h_list = net_forward(h, w1t, w2t, w3t)
    jax.block_until_ready((y, h_list))

    # f32 reference; bf16 weight/activation stream needs a looser tolerance.
    y_ref, h_list_ref = _reference_forward(h, w1, w2, w3)
    assert np.allclose(np.asarray(y), np.asarray(y_ref), rtol=2e-2, atol=2e-2)
    for a, b in zip(h_list, h_list_ref):
        assert np.allclose(np.asarray(a), np.asarray(b), rtol=2e-2, atol=2e-2)

    print("KERNEL_OK")
</pallas_src>

<mosaic_0001>
module attributes {stable_mosaic.version = 11 : i64} {
  func.func @_net_forward_kernel(%arg0: i32, %arg1: memref<8x1024xbf16, #tpu.memory_space<vmem>>, %arg2: memref<1024x1024xbf16, #tpu.memory_space<vmem>>, %arg3: memref<1024x1024xbf16, #tpu.memory_space<any>>, %arg4: memref<1024x128xbf16, #tpu.memory_space<any>>, %arg5: memref<8x128xf32, #tpu.memory_space<vmem>>, %arg6: memref<1x1024xf32, #tpu.memory_space<vmem>>, %arg7: memref<1x1024xf32, #tpu.memory_space<vmem>>, %arg8: memref<1x1024xf32, #tpu.memory_space<vmem>>, %arg9: memref<8x1024xf32, #tpu.memory_space<vmem>>, %arg10: memref<1024x1024xbf16, #tpu.memory_space<vmem>>, %arg11: memref<1024x128xbf16, #tpu.memory_space<vmem>>, %arg12: memref<2x!tpu.dma_semaphore, #tpu.memory_space<semaphore_mem>>) attributes {dimension_semantics = [#tpu.dimension_semantics<arbitrary>], iteration_bounds = array<i64: 4>, scalar_prefetch = 0 : i64, scratch_operands = 4 : i64, tpu.core_type = #tpu.core_type<tc>, window_params = [{transform_indices = @transform_0, window_bounds = array<i64: 8, 1024>}, {transform_indices = @transform_1, window_bounds = array<i64: 1024, 1024>}, {}, {}, {pipeline_mode = #tpu.pipeline_mode<synchronous>, transform_indices = @transform_4, window_bounds = array<i64: 8, 128>}, {transform_indices = @transform_5, window_bounds = array<i64: 1, 1024>}, {pipeline_mode = #tpu.pipeline_mode<synchronous>, transform_indices = @transform_6, window_bounds = array<i64: 1, 1024>}, {pipeline_mode = #tpu.pipeline_mode<synchronous>, transform_indices = @transform_7, window_bounds = array<i64: 1, 1024>}]} {
    %c0_i32 = arith.constant 0 : i32
    %0 = arith.cmpi eq, %arg0, %c0_i32 : i32
    %1 = arith.extui %0 : i1 to i32
    %c0_i32_0 = arith.constant 0 : i32
    %2 = arith.cmpi ne, %1, %c0_i32_0 : i32
    scf.if %2 {
      %cst_13 = arith.constant 0.000000e+00 : f32
      %18 = vector.broadcast %cst_13 : f32 to vector<8x1024xf32>
      %c0_14 = arith.constant 0 : index
      %c0_15 = arith.constant 0 : index
      %19 = vector.load %arg9[%c0_14, %c0_15] : memref<8x1024xf32, #tpu.memory_space<vmem>>, vector<8x1024xf32>
      tpu.vector_store %arg9[%c0_14, %c0_15], %18 {strides = array<i32>} : memref<8x1024xf32, #tpu.memory_space<vmem>>, vector<8x1024xf32>,
      %c0_i32_16 = arith.constant 0 : i32
      %20 = tpu.memref_slice %arg12[%c0_i32_16] : memref<2x!tpu.dma_semaphore, #tpu.memory_space<semaphore_mem>> -> memref<1x!tpu.dma_semaphore, #tpu.memory_space<semaphore_mem>>
      %21 = tpu.memref_squeeze %20 : memref<1x!tpu.dma_semaphore, #tpu.memory_space<semaphore_mem>> -> memref<!tpu.dma_semaphore, #tpu.memory_space<semaphore_mem>>
      tpu.enqueue_dma source(%arg3 : memref<1024x1024xbf16, #tpu.memory_space<any>>) target(%arg10 : memref<1024x1024xbf16, #tpu.memory_space<vmem>>) target_semaphore(%21 : memref<!tpu.dma_semaphore, #tpu.memory_space<semaphore_mem>>)
      %c1_i32 = arith.constant 1 : i32
      %22 = tpu.memref_slice %arg12[%c1_i32] : memref<2x!tpu.dma_semaphore, #tpu.memory_space<semaphore_mem>> -> memref<1x!tpu.dma_semaphore, #tpu.memory_space<semaphore_mem>>
      %23 = tpu.memref_squeeze %22 : memref<1x!tpu.dma_semaphore, #tpu.memory_space<semaphore_mem>> -> memref<!tpu.dma_semaphore, #tpu.memory_space<semaphore_mem>>
      tpu.enqueue_dma source(%arg4 : memref<1024x128xbf16, #tpu.memory_space<any>>) target(%arg11 : memref<1024x128xbf16, #tpu.memory_space<vmem>>) target_semaphore(%23 : memref<!tpu.dma_semaphore, #tpu.memory_space<semaphore_mem>>)
    } else {
    }
    %c0 = arith.constant 0 : index
    %c0_1 = arith.constant 0 : index
    %3 = vector.load %arg1[%c0, %c0_1] : memref<8x1024xbf16, #tpu.memory_space<vmem>>, vector<8x1024xbf16>
    %4 = arith.extf %3 : vector<8x1024xbf16> to vector<8x1024xf32>
    %cst = arith.constant dense<0.000000e+00> : vector<1024xf32>
    %5 = vector.multi_reduction <add>, %4, %cst [0] : vector<8x1024xf32> to vector<1024xf32>
    %6 = vector.shape_cast %5 : vector<1024xf32> to vector<1x1024xf32>
    %cst_2 = arith.constant 8.000000e+00 : f32
    %7 = vector.broadcast %cst_2 : f32 to vector<1x1024xf32>
    %8 = arith.divf %6, %7 : vector<1x1024xf32>
    %c0_3 = arith.constant 0 : index
    %c0_4 = arith.constant 0 : index
    %9 = vector.load %arg6[%c0_3, %c0_4] : memref<1x1024xf32, #tpu.memory_space<vmem>>, vector<1x1024xf32>
    tpu.vector_store %arg6[%c0_3, %c0_4], %8 {strides = array<i32>} : memref<1x1024xf32, #tpu.memory_space<vmem>>, vector<1x1024xf32>,
    %c0_5 = arith.constant 0 : index
    %c0_6 = arith.constant 0 : index
    %10 = vector.load %arg9[%c0_5, %c0_6] : memref<8x1024xf32, #tpu.memory_space<vmem>>, vector<8x1024xf32>
    %c0_7 = arith.constant 0 : index
    %c0_8 = arith.constant 0 : index
    %11 = vector.load %arg2[%c0_7, %c0_8] : memref<1024x1024xbf16, #tpu.memory_space<vmem>>, vector<1024x1024xbf16>
    %cst_9 = arith.constant dense<0.000000e+00> : vector<8x1024xf32>
    %12 = tpu.matmul %3, %11, %cst_9 {dimension_numbers = #tpu.dot_dimension_numbers<[1], [0], [0], [1], [0, 0, 1, 1], [], []>} : vector<8x1024xbf16>, vector<1024x1024xbf16>, vector<8x1024xf32> -> vector<8x1024xf32>
    %13 = arith.addf %10, %12 : vector<8x1024xf32>
    %c0_10 = arith.constant 0 : index
    %c0_11 = arith.constant 0 : index
    %14 = vector.load %arg9[%c0_10, %c0_11] : memref<8x1024xf32, #tpu.memory_space<vmem>>, vector<8x1024xf32>
    tpu.vector_store %arg9[%c0_10, %c0_11], %13 {strides = array<i32>} : memref<8x1024xf32, #tpu.memory_space<vmem>>, vector<8x1024xf32>,
    %c3_i32 = arith.constant 3 : i32
    %15 = arith.cmpi eq, %arg0, %c3_i32 : i32
    %16 = arith.extui %15 : i1 to i32
    %c0_i32_12 = arith.constant 0 : i32
    %17 = arith.cmpi ne, %16, %c0_i32_12 : i32
    scf.if %17 {
      %c0_i32_13 = arith.constant 0 : i32
      %18 = tpu.memref_slice %arg12[%c0_i32_13] : memref<2x!tpu.dma_semaphore, #tpu.memory_space<semaphore_mem>> -> memref<1x!tpu.dma_semaphore, #tpu.memory_space<semaphore_mem>>
      %19 = tpu.memref_squeeze %18 : memref<1x!tpu.dma_semaphore, #tpu.memory_space<semaphore_mem>> -> memref<!tpu.dma_semaphore, #tpu.memory_space<semaphore_mem>>
      tpu.wait_dma2 semaphore(%19 : memref<!tpu.dma_semaphore, #tpu.memory_space<semaphore_mem>>) src(%arg3 : memref<1024x1024xbf16, #tpu.memory_space<any>>) dst(%arg10 : memref<1024x1024xbf16, #tpu.memory_space<vmem>>)
      %c1_i32 = arith.constant 1 : i32
      %20 = tpu.memref_slice %arg12[%c1_i32] : memref<2x!tpu.dma_semaphore, #tpu.memory_space<semaphore_mem>> -> memref<1x!tpu.dma_semaphore, #tpu.memory_space<semaphore_mem>>
      %21 = tpu.memref_squeeze %20 : memref<1x!tpu.dma_semaphore, #tpu.memory_space<semaphore_mem>> -> memref<!tpu.dma_semaphore, #tpu.memory_space<semaphore_mem>>
      tpu.wait_dma2 semaphore(%21 : memref<!tpu.dma_semaphore, #tpu.memory_space<semaphore_mem>>) src(%arg4 : memref<1024x128xbf16, #tpu.memory_space<any>>) dst(%arg11 : memref<1024x128xbf16, #tpu.memory_space<vmem>>)
      %c0_14 = arith.constant 0 : index
      %c0_15 = arith.constant 0 : index
      %22 = vector.load %arg9[%c0_14, %c0_15] : memref<8x1024xf32, #tpu.memory_space<vmem>>, vector<8x1024xf32>
      %cst_16 = arith.constant 0.000000e+00 : f32
      %23 = vector.broadcast %cst_16 : f32 to vector<8x1024xf32>
      %24 = arith.maximumf %22, %23 : vector<8x1024xf32>
      %cst_17 = arith.constant dense<0.000000e+00> : vector<1024xf32>
      %25 = vector.multi_reduction <add>, %24, %cst_17 [0] : vector<8x1024xf32> to vector<1024xf32>
      %26 = vector.shape_cast %25 : vector<1024xf32> to vector<1x1024xf32>
      %cst_18 = arith.constant 8.000000e+00 : f32
      %27 = vector.broadcast %cst_18 : f32 to vector<1x1024xf32>
      %28 = arith.divf %26, %27 : vector<1x1024xf32>
      %c0_19 = arith.constant 0 : index
      %c0_20 = arith.constant 0 : index
      %29 = vector.load %arg7[%c0_19, %c0_20] : memref<1x1024xf32, #tpu.memory_space<vmem>>, vector<1x1024xf32>
      tpu.vector_store %arg7[%c0_19, %c0_20], %28 {strides = array<i32>} : memref<1x1024xf32, #tpu.memory_space<vmem>>, vector<1x1024xf32>,
      %30 = arith.truncf %24 : vector<8x1024xf32> to vector<8x1024xbf16>
      %c0_21 = arith.constant 0 : index
      %c0_22 = arith.constant 0 : index
      %31 = vector.load %arg10[%c0_21, %c0_22] : memref<1024x1024xbf16, #tpu.memory_space<vmem>>, vector<1024x1024xbf16>
      %cst_23 = arith.constant dense<0.000000e+00> : vector<8x1024xf32>
      %32 = tpu.matmul %30, %31, %cst_23 {dimension_numbers = #tpu.dot_dimension_numbers<[1], [0], [0], [1], [0, 0, 1, 1], [], []>} : vector<8x1024xbf16>, vector<1024x1024xbf16>, vector<8x1024xf32> -> vector<8x1024xf32>
      %cst_24 = arith.constant 0.000000e+00 : f32
      %33 = vector.broadcast %cst_24 : f32 to vector<8x1024xf32>
      %34 = arith.maximumf %32, %33 : vector<8x1024xf32>
      %cst_25 = arith.constant dense<0.000000e+00> : vector<1024xf32>
      %35 = vector.multi_reduction <add>, %34, %cst_25 [0] : vector<8x1024xf32> to vector<1024xf32>
      %36 = vector.shape_cast %35 : vector<1024xf32> to vector<1x1024xf32>
      %cst_26 = arith.constant 8.000000e+00 : f32
      %37 = vector.broadcast %cst_26 : f32 to vector<1x1024xf32>
      %38 = arith.divf %36, %37 : vector<1x1024xf32>
      %c0_27 = arith.constant 0 : index
      %c0_28 = arith.constant 0 : index
      %39 = vector.load %arg8[%c0_27, %c0_28] : memref<1x1024xf32, #tpu.memory_space<vmem>>, vector<1x1024xf32>
      tpu.vector_store %arg8[%c0_27, %c0_28], %38 {strides = array<i32>} : memref<1x1024xf32, #tpu.memory_space<vmem>>, vector<1x1024xf32>,
      %40 = arith.truncf %34 : vector<8x1024xf32> to vector<8x1024xbf16>
      %c0_29 = arith.constant 0 : index
      %c0_30 = arith.constant 0 : index
      %41 = vector.load %arg11[%c0_29, %c0_30] : memref<1024x128xbf16, #tpu.memory_space<vmem>>, vector<1024x128xbf16>
      %cst_31 = arith.constant dense<0.000000e+00> : vector<8x128xf32>
      %42 = tpu.matmul %40, %41, %cst_31 {dimension_numbers = #tpu.dot_dimension_numbers<[1], [0], [0], [1], [0, 0, 1, 1], [], []>} : vector<8x1024xbf16>, vector<1024x128xbf16>, vector<8x128xf32> -> vector<8x128xf32>
      %c0_32 = arith.constant 0 : index
      %c0_33 = arith.constant 0 : index
      %43 = vector.load %arg5[%c0_32, %c0_33] : memref<8x128xf32, #tpu.memory_space<vmem>>, vector<8x128xf32>
      tpu.vector_store %arg5[%c0_32, %c0_33], %42 {strides = array<i32>} : memref<8x128xf32, #tpu.memory_space<vmem>>, vector<8x128xf32>,
    } else {
    }
    return
  }
  func.func @transform_0(%arg0: i32) -> (i32, i32) {
    %c0_i32 = arith.constant 0 : i32
    %c0_i32_0 = arith.constant 0 : i32
    return %c0_i32, %arg0 : i32, i32
  }
  func.func @transform_1(%arg0: i32) -> (i32, i32) {
    %c0_i32 = arith.constant 0 : i32
    %c0_i32_0 = arith.constant 0 : i32
    return %arg0, %c0_i32 : i32, i32
  }
  func.func @transform_4(%arg0: i32) -> (i32, i32) {
    %c0_i32 = arith.constant 0 : i32
    %c0_i32_0 = arith.constant 0 : i32
    %c0_i32_1 = arith.constant 0 : i32
    return %c0_i32, %c0_i32_0 : i32, i32
  }
  func.func @transform_5(%arg0: i32) -> (i32, i32) {
    %c0_i32 = arith.constant 0 : i32
    %c0_i32_0 = arith.constant 0 : i32
    return %c0_i32, %arg0 : i32, i32
  }
  func.func @transform_6(%arg0: i32) -> (i32, i32) {
    %c0_i32 = arith.constant 0 : i32
    %c0_i32_0 = arith.constant 0 : i32
    %c0_i32_1 = arith.constant 0 : i32
    return %c0_i32, %c0_i32_0 : i32, i32
  }
  func.func @transform_7(%arg0: i32) -> (i32, i32) {
    %c0_i32 = arith.constant 0 : i32
    %c0_i32_0 = arith.constant 0 : i32
    %c0_i32_1 = arith.constant 0 : i32
    return %c0_i32, %c0_i32_0 : i32, i32
  }
}

</mosaic_0001>

<llo_original>
// kernel: net_forward.1
$region0: #{net_forward.1}
  #allocation0 [shape = 'u32[]', space=smem, size = 0x4, offset = 0x4, fixed_abs, tag = 'smem constant byte address 0x4 - core index']
  #allocation1 [shape = 'u32[144,128]{1,0:T(1,128)}', space=vmem, size = 0x12000, scoped, tag = 'internal scratch']
  #allocation2 [shape = 'f32[8,1024]{1,0:T(8,128)}', space=vmem, size = 0x8000, scoped, tag = 'scratch operand']
  #allocation3 [shape = 'bf16[1024,1024]{1,0:T(8,128)(2,1)}', space=vmem, size = 0x200000, scoped, tag = 'scratch operand']
  #allocation4 [shape = 'bf16[1024,128]{1,0:T(8,128)(2,1)}', space=vmem, size = 0x40000, scoped, tag = 'scratch operand']
  #allocation5 [shape = 's32[2]{0}', space=sflag, size = 0x8, scoped, tag = 'scratch operand']
  #allocation15 [shape = 's32[]', space=sflag, size = 0x4, offset = 0, fixed_abs, tag = 'sflag constant byte address 0x0 - dummy sync flag']
  #allocation16 [shape = 's32[]', space=sflag, size = 0x4, offset = 0, fixed_abs, tag = 'sflag constant byte address 0x0 - dummy sync flag']
  #allocation17 [shape = 'u32[]', space=smem, size = 0x4, offset = 0x44, fixed_abs, tag = 'smem constant byte address 0x44 - assertion arg 0']
  #allocation18 [shape = 'u32[]', space=smem, size = 0x4, offset = 0x48, fixed_abs, tag = 'smem constant byte address 0x48 - assertion arg 1']
  #allocation19 [shape = 's32[]', space=sflag, size = 0x4, offset = 0, fixed_abs, tag = 'sflag constant byte address 0x0 - dummy sync flag']
  #allocation20 [shape = 's32[]', space=sflag, size = 0x4, offset = 0, fixed_abs, tag = 'sflag constant byte address 0x0 - dummy sync flag']
  %s0 = inlined_call_operand.vmem [shape: bf16[8,4096], index: 0, kind: input, shape index: {}]
  %s1 = inlined_call_operand.hbm [shape: bf16[4096,1024], index: 1, kind: input, shape index: {}]
  %s2 = inlined_call_operand.hbm [shape: bf16[1024,1024], index: 2, kind: input, shape index: {}]
  %s3 = inlined_call_operand.hbm [shape: bf16[1024,128], index: 3, kind: input, shape index: {}]
  %s4 = inlined_call_operand.hbm [shape: f32[8,128], index: 4, kind: output, shape index: {0}]
  %s5 = inlined_call_operand.hbm [shape: f32[1,4096], index: 5, kind: output, shape index: {1}]
  %s6 = inlined_call_operand.hbm [shape: f32[1,1024], index: 6, kind: output, shape index: {2}]
  %s7 = inlined_call_operand.hbm [shape: f32[1,1024], index: 7, kind: output, shape index: {3}]
  %8 = xla_tuple %s4, %s5, %s6, %s7
  %s9 = sld [smem:[#allocation0]]
  $region85: #{net_forward.1} parent=0
    _
  %s11 = ssub.s32 1, %s9
  %s12 = scalar_select 0, %s11, %s9
  $region1: #{net_forward.1} parent=0
    #allocation6 [shape = 'u8[4194304]{0}', space=vmem, size = 0x400000, scoped, tag = 'input window, operand 1']
    #allocation7 [shape = 's32[2]{0}', space=sflag, size = 0x8, scoped, tag = 'scoped memory for net_forward.1']
    #allocation8 [shape = 's32[2]{0}', space=sflag, size = 0x8, scoped, tag = 'scoped memory for net_forward.1']
    #allocation9 [shape = 'u8[4096]{0}', space=vmem, size = 0x1000, scoped, tag = 'output window, operand 0, single buffered']
    #allocation10 [shape = 'u8[8192]{0}', space=vmem, size = 0x2000, scoped, tag = 'output window, operand 1']
    #allocation11 [shape = 's32[2]{0}', space=sflag, size = 0x8, scoped, tag = 'scoped memory for net_forward.1']
    #allocation12 [shape = 'u8[4096]{0}', space=vmem, size = 0x1000, scoped, tag = 'output window, operand 2, single buffered']
    #allocation13 [shape = 'u8[4096]{0}', space=vmem, size = 0x1000, scoped, tag = 'output window, operand 3, single buffered']
    #allocation14 [shape = 's32[1]{0}', space=sflag, size = 0x4, scoped, tag = 'scoped memory for net_forward.1']
    %13 = vsyncpa [#allocation7], 0
    %s14 = scalar_lea.sflag [#allocation7], 1
    %15 = vsyncpa %s14, 0
    %16 = vsyncpa [#allocation8], 0
    %17 = vsyncpa [#allocation11], 0
    %s18 = scalar_lea.sflag [#allocation11], 1
    %19 = vsyncpa %s18, 0
    %20 = vsyncpa [#allocation14], 0
    loop: start=0, step=1, limit=6
    $region2: #{net_forward.1} parent=1 // loop_pre_header
      _
    $region3: #{net_forward.1} parent=1 // loop_header
      %s22 = sphi 0, %s26
      %p23 = scmp.ge.s32.totalorder %s22, 6
      %s32 = sphi 0, %s34
      %s35 = sphi 0, %s32
      %s36 = sphi 0, %s35
      %s52 = sphi 0, %s36
      %s58 = sphi 0, %s60
      %s61 = sphi 0, %s58
      %s62 = sphi 0, %s61
      %s78 = sphi 0, %s62
      %s82 = sphi 0, %s82
      %s84 = sphi 0, %s82
      %s85 = sphi 0, %s84
      %s99 = sphi 0, %s85
      %s105 = sphi 0, %s107
      %s108 = sphi 0, %s105
      %s109 = sphi 0, %s108
      %s125 = sphi 0, %s109
      %s129 = sphi 0, %s129
      %s131 = sphi 0, %s129
      %s132 = sphi 0, %s131
      %s146 = sphi 0, %s132
      %s150 = sphi 0, %s150
      %s152 = sphi 0, %s150
      %s153 = sphi 0, %s152
      %s167 = sphi 0, %s153
    $region4: #{net_forward.1} parent=1 // loop_header_branch
      %25 = sbr.rel (%p23) target = $region8
    $region5: #{net_forward.1} parent=1 // loop_body
      %s27 = ssub.s32 %s22, 1
      %s28 = ssub.s32 %s22, 2
      %s29 = sadd.s32 %s22, 1
      %s30 = ssub.s32 %s22, %s29
      %p31 = scmp.eq.s32.totalorder %s30, 0
      %s33 = sadd.s32 %s32, 1
      %s34 = scalar_select %p31, %s32, %s33
      %p37 = pneg %p31
      %p38 = scmp.eq.s32.totalorder %s22, 3
      %p39 = por %p37, %p38
      %p40 = scmp.ne.s32.totalorder %s32, %s35
      %p41 = scmp.eq.s32.totalorder %s22, 0
      %p42 = por %p40, %p41
      %p43 = scmp.ne.s32.totalorder %s32, %s35
      %p44 = scmp.eq.s32.totalorder %s27, 3
      %p45 = por %p43, %p44
      %p46 = scmp.ne.s32.totalorder %s35, %s36
      %p47 = scmp.eq.s32.totalorder %s27, 0
      %p48 = por %p46, %p47
      %p49 = scmp.ne.s32.totalorder %s35, %s36
      %p50 = scmp.eq.s32.totalorder %s28, 3
      %p51 = por %p49, %p50
      %p53 = scmp.ne.s32.totalorder %s36, %s52
      %p54 = scmp.eq.s32.totalorder %s28, 0
      %p55 = por %p53, %p54
      %s56 = ssub.s32 %s22, %s29
      %p57 = scmp.eq.s32.totalorder %s56, 0
      %s59 = sadd.s32 %s58, 1
      %s60 = scalar_select %p57, %s58, %s59
      %p63 = pneg %p57
      %p64 = scmp.eq.s32.totalorder %s22, 3
      %p65 = por %p63, %p64
      %p66 = scmp.ne.s32.totalorder %s58, %s61
      %p67 = scmp.eq.s32.totalorder %s22, 0
      %p68 = por %p66, %p67
      %p69 = scmp.ne.s32.totalorder %s58, %s61
      %p70 = scmp.eq.s32.totalorder %s27, 3
      %p71 = por %p69, %p70
      %p72 = scmp.ne.s32.totalorder %s61, %s62
      %p73 = scmp.eq.s32.totalorder %s27, 0
      %p74 = por %p72, %p73
      %p75 = scmp.ne.s32.totalorder %s61, %s62
      %p76 = scmp.eq.s32.totalorder %s28, 3
      %p77 = por %p75, %p76
      %p79 = scmp.ne.s32.totalorder %s62, %s78
      %p80 = scmp.eq.s32.totalorder %s28, 0
      %p81 = por %p79, %p80
      %s83 = sadd.s32 %s82, 1
      %p86 = scmp.eq.s32.totalorder %s22, 3
      %p87 = scmp.ne.s32.totalorder %s82, %s84
      %p88 = scmp.eq.s32.totalorder %s22, 0
      %p89 = por %p87, %p88
      %p90 = scmp.ne.s32.totalorder %s82, %s84
      %p91 = scmp.eq.s32.totalorder %s27, 3
      %p92 = por %p90, %p91
      %p93 = scmp.ne.s32.totalorder %s84, %s85
      %p94 = scmp.eq.s32.totalorder %s27, 0
      %p95 = por %p93, %p94
      %p96 = scmp.ne.s32.totalorder %s84, %s85
      %p97 = scmp.eq.s32.totalorder %s28, 3
      %p98 = por %p96, %p97
      %p100 = scmp.ne.s32.totalorder %s85, %s99
      %p101 = scmp.eq.s32.totalorder %s28, 0
      %p102 = por %p100, %p101
      %s103 = ssub.s32 %s22, %s29
      %p104 = scmp.eq.s32.totalorder %s103, 0
      %s106 = sadd.s32 %s105, 1
      %s107 = scalar_select %p104, %s105, %s106
      %p110 = pneg %p104
      %p111 = scmp.eq.s32.totalorder %s22, 3
      %p112 = por %p110, %p111
      %p113 = scmp.ne.s32.totalorder %s105, %s108
      %p114 = scmp.eq.s32.totalorder %s22, 0
      %p115 = por %p113, %p114
      %p116 = scmp.ne.s32.totalorder %s105, %s108
      %p117 = scmp.eq.s32.totalorder %s27, 3
      %p118 = por %p116, %p117
      %p119 = scmp.ne.s32.totalorder %s108, %s109
      %p120 = scmp.eq.s32.totalorder %s27, 0
      %p121 = por %p119, %p120
      %p122 = scmp.ne.s32.totalorder %s108, %s109
      %p123 = scmp.eq.s32.totalorder %s28, 3
      %p124 = por %p122, %p123
      %p126 = scmp.ne.s32.totalorder %s109, %s125
      %p127 = scmp.eq.s32.totalorder %s28, 0
      %p128 = por %p126, %p127
      %s130 = sadd.s32 %s129, 1
      %p133 = scmp.eq.s32.totalorder %s22, 3
      %p134 = scmp.ne.s32.totalorder %s129, %s131
      %p135 = scmp.eq.s32.totalorder %s22, 0
      %p136 = por %p134, %p135
      %p137 = scmp.ne.s32.totalorder %s129, %s131
      %p138 = scmp.eq.s32.totalorder %s27, 3
      %p139 = por %p137, %p138
      %p140 = scmp.ne.s32.totalorder %s131, %s132
      %p141 = scmp.eq.s32.totalorder %s27, 0
      %p142 = por %p140, %p141
      %p143 = scmp.ne.s32.totalorder %s131, %s132
      %p144 = scmp.eq.s32.totalorder %s28, 3
      %p145 = por %p143, %p144
      %p147 = scmp.ne.s32.totalorder %s132, %s146
      %p148 = scmp.eq.s32.totalorder %s28, 0
      %p149 = por %p147, %p148
      %s151 = sadd.s32 %s150, 1
      %p154 = scmp.eq.s32.totalorder %s22, 3
      %p155 = scmp.ne.s32.totalorder %s150, %s152
      %p156 = scmp.eq.s32.totalorder %s22, 0
      %p157 = por %p155, %p156
      %p158 = scmp.ne.s32.totalorder %s150, %s152
      %p159 = scmp.eq.s32.totalorder %s27, 3
      %p160 = por %p158, %p159
      %p161 = scmp.ne.s32.totalorder %s152, %s153
      %p162 = scmp.eq.s32.totalorder %s27, 0
      %p163 = por %p161, %p162
      %p164 = scmp.ne.s32.totalorder %s152, %s153
      %p165 = scmp.eq.s32.totalorder %s28, 3
      %p166 = por %p164, %p165
      %p168 = scmp.ne.s32.totalorder %s153, %s167
      %p169 = scmp.eq.s32.totalorder %s28, 0
      %p170 = por %p168, %p169
      %p171 = scmp.le.s32.totalorder 1, %s22
      %p172 = scmp.lt.s32.totalorder %s22, 5
      %p173 = pnand %p171, %p172
      %p174 = pneg %p173
      // Predicated region
      $region9: #{net_forward.1} parent=5 // pred_check
        _
      $region10: #{net_forward.1} parent=5 // pred_check_branch
        %176 = sbr.rel (%p173) target = $region12
      $region11: #{net_forward.1} parent=5 // pred_region
        %s177 = ssub.s32 %s22, 1
      $region12: #{net_forward.1} parent=5 // pred_fallthru
        _
      %p178 = scmp.lt.s32.totalorder %s22, 4
      // Predicated region
      $region13: #{net_forward.1} parent=5 // pred_check
        %p179 = pneg %p178
      $region14: #{net_forward.1} parent=5 // pred_check_branch
        %181 = sbr.rel (%p179) target = $region16
      $region15: #{net_forward.1} parent=5 // pred_region
        // Predicated region
        $region17: #{net_forward.1} parent=15 // pred_check
          %p182 = pneg %p42
        $region18: #{net_forward.1} parent=15 // pred_check_branch
          %184 = sbr.rel (%p182) target = $region20
        $region19: #{net_forward.1} parent=15 // pred_region
          %s185 = smul.u32 8, %s22
          %p186 = scmp.lt.s32.totalorder %s185, 31
          %s187 = scalar_select %p186, %s185, 31
          %s188 = smul.addr %s187, 4
          %s189 = scalar_lea.vmem %s0, %s188
          %s190 = smul.u32 8, %s22
        $region20: #{net_forward.1} parent=15 // pred_fallthru
          _
        // Predicated region
        $region21: #{net_forward.1} parent=15 // pred_check
          %p191 = pneg %p68
        $region22: #{net_forward.1} parent=15 // pred_check_branch
          %193 = sbr.rel (%p191) target = $region24
        $region23: #{net_forward.1} parent=15 // pred_region
          %s194 = sand.u32 %s58, 1
          %s195 = scalar_lea.sflag [#allocation7], %s194
          %s196 = sand.u32 %s58, 1
          %s197 = smul.addr %s196, 4096
          %s198 = scalar_lea.vmem [#allocation6], %s197
          %s199 = smul.u32 128, %s22
          %s201 = ssub.s32 65536, 65536
          %202 = vsyncadd %s195, %s201
          %s203 = smul.addr %s199, 8
          %s204 = smul.addr %s203, 64
          %s205 = scalar_lea.hbm %s1, %s204
          %s206 = sshll.u32 %s198, 4
          %s207 = int_to_ptr.vmem [resolvable:$true] %s206
          %212 = dma.hbm_to_vmem [thread:$0]  %s205, 65536, %s207, %s195, 512, 512, 32
        $region24: #{net_forward.1} parent=15 // pred_fallthru
          _
      $region16: #{net_forward.1} parent=5 // pred_fallthru
        _
      %p213 = scmp.le.s32.totalorder 1, %s22
      %p214 = scmp.lt.s32.totalorder %s22, 5
      %p215 = pnand %p213, %p214
      %p216 = pneg %p215
      // Predicated region
      $region25: #{net_forward.1} parent=5 // pred_check
        _
      $region26: #{net_forward.1} parent=5 // pred_check_branch
        %218 = sbr.rel (%p215) target = $region28
      $region27: #{net_forward.1} parent=5 // pred_region
        %s219 = ssub.s32 %s22, 1
        %s220 = sand.u32 %s61, 1
        %s221 = scalar_lea.sflag [#allocation7], %s220
        %s222 = sand.u32 %s61, 1
        %s223 = smul.addr %s222, 4096
        %s224 = scalar_lea.vmem [#allocation6], %s223
        // Predicated region
        $region29: #{net_forward.1} parent=27 // pred_check
          %p225 = pneg %p74
        $region30: #{net_forward.1} parent=27 // pred_check_branch
          %227 = sbr.rel (%p225) target = $region32
        $region31: #{net_forward.1} parent=27 // pred_region
          %228 = dma.done %s221, 65536
        $region32: #{net_forward.1} parent=27 // pred_fallthru
          _
        %s229 = smul.u32 8, %s27
        %p230 = scmp.lt.s32.totalorder %s229, 31
        %s231 = scalar_select %p230, %s229, 31
        %s232 = smul.addr %s231, 4
        %s233 = scalar_lea.vmem %s0, %s232
        %p234 = pneg %p48
        %p235 = pneg %p45
        %s236 = sand.u32 %s61, 1
        %s237 = scalar_lea.sflag [#allocation7], %s236
        %s238 = sand.u32 %s61, 1
        %s239 = smul.addr %s238, 4096
        %s240 = scalar_lea.vmem [#allocation6], %s239
        %p241 = pneg %p74
        %p242 = pneg %p71
        %p243 = pneg %p95
        %p244 = pneg %p92
        %p245 = pneg %p121
        %p246 = pneg %p118
        %s247 = sand.u32 %s27, 1
        %s248 = scalar_lea.sflag [#allocation11], %s247
        %s249 = sand.u32 %s108, 1
        %s250 = smul.addr %s249, 8
        %s251 = scalar_lea.vmem [#allocation10], %s250
        %p252 = pneg %p142
        %p253 = pneg %p139
        %p254 = pneg %p163
        %p255 = pneg %p160
        %s256 = smul.u32 8, %s27
        %p257 = scmp.lt.s32.totalorder %s256, 31
        %s258 = scalar_select %p257, %s256, 31
        %s259 = smul.addr %s258, 4
        %s260 = scalar_lea.vmem %s0, %s259
        %s261 = smul.u32 8, %s27
        %s262 = smul.u32 128, %s27
        %s263 = smul.u32 8, %s27
        %p265 = scmp.eq.s32.totalorder %s27, 0
        // Predicated region
        $region33: #{net_forward.1} parent=27 // pred_check
          %p266 = pneg %p265
        $region34: #{net_forward.1} parent=27 // pred_check_branch
          %268 = sbr.rel (%p266) target = $region36
        $region35: #{net_forward.1} parent=27 // pred_region
          %269 = vst [vmem:[#allocation2] sm:$0xff] 0.0
          %270 = vst [vmem:[#allocation2 + $0x8] sm:$0xff] 0.0
          %271 = vst [vmem:[#allocation2 + $0x10] sm:$0xff] 0.0
          %272 = vst [vmem:[#allocation2 + $0x18] sm:$0xff] 0.0
          %273 = vst [vmem:[#allocation2 + $0x20] sm:$0xff] 0.0
          %274 = vst [vmem:[#allocation2 + $0x28] sm:$0xff] 0.0
          %275 = vst [vmem:[#allocation2 + $0x30] sm:$0xff] 0.0
          %276 = vst [vmem:[#allocation2 + $0x38] sm:$0xff] 0.0
          // Predicated region
          $region37: #{net_forward.1} parent=35 // pred_check
            _
          $region38: #{net_forward.1} parent=35 // pred_check_branch
            %278 = sbr.rel target = $region40
          $region39: #{net_forward.1} parent=35 // pred_region
            %279 = sst [smem:[#allocation17]] [#allocation16]
            %280 = sst [smem:[#allocation18]] [#allocation15]
          $region40: #{net_forward.1} parent=35 // pred_fallthru
            _
          %282 = shalt.err (0)
          %s284 = sshll.u32 [#allocation3], 4
          %s285 = int_to_ptr.vmem [resolvable:$true] %s284
          %287 = dma.hbm_to_vmem [thread:$0]  %s2, 65536, %s285, [#allocation5]
          %s288 = scalar_lea.sflag [#allocation5], 1
          // Predicated region
          $region41: #{net_forward.1} parent=35 // pred_check
            _
          $region42: #{net_forward.1} parent=35 // pred_check_branch
            %290 = sbr.rel target = $region44
          $region43: #{net_forward.1} parent=35 // pred_region
            %291 = sst [smem:[#allocation17]] [#allocation20]
            %292 = sst [smem:[#allocation18]] [#allocation19]
          $region44: #{net_forward.1} parent=35 // pred_fallthru
            _
          %294 = shalt.err (0)
          %s296 = sshll.u32 [#allocation4], 4
          %s297 = int_to_ptr.vmem [resolvable:$true] %s296
          %299 = dma.hbm_to_vmem [thread:$0]  %s3, 8192, %s297, %s288
        $region36: #{net_forward.1} parent=27 // pred_fallthru
          _
        %v300 = vld [vmem:[%s260] sm:$0xff]
        %v301 = vld [vmem:[%s260 + $0x8] sm:$0xff]
        %v302 = vld [vmem:[%s260 + $0x10] sm:$0xff]
        %v303 = vld [vmem:[%s260 + $0x18] sm:$0xff]
        %v304 = vunpack.c.l.bf16 %v300
        %v305 = vunpack.c.h.bf16 %v300
        %v306 = vunpack.c.l.bf16 %v301
        %v307 = vunpack.c.h.bf16 %v301
        %v308 = vunpack.c.l.bf16 %v302
        %v309 = vunpack.c.h.bf16 %v302
        %v310 = vunpack.c.l.bf16 %v303
        %v311 = vunpack.c.h.bf16 %v303
        %v312 = vrot.slane %v304, 4
        %v313 = vadd.f32 %v304, %v312
        %v314 = vrot.slane %v313, 2
        %v315 = vadd.f32 %v313, %v314
        %v316 = vrot.slane %v315, 1
        %v317 = vadd.f32 %v315, %v316
        %v318 = vrot.slane %v305, 4
        %v319 = vadd.f32 %v305, %v318
        %v320 = vrot.slane %v319, 2
        %v321 = vadd.f32 %v319, %v320
        %v322 = vrot.slane %v321, 1
        %v323 = vadd.f32 %v321, %v322
        %v324 = vrot.slane %v306, 4
        %v325 = vadd.f32 %v306, %v324
        %v326 = vrot.slane %v325, 2
        %v327 = vadd.f32 %v325, %v326
        %v328 = vrot.slane %v327, 1
        %v329 = vadd.f32 %v327, %v328
        %v330 = vrot.slane %v307, 4
        %v331 = vadd.f32 %v307, %v330
        %v332 = vrot.slane %v331, 2
        %v333 = vadd.f32 %v331, %v332
        %v334 = vrot.slane %v333, 1
        %v335 = vadd.f32 %v333, %v334
        %v336 = vrot.slane %v308, 4
        %v337 = vadd.f32 %v308, %v336
        %v338 = vrot.slane %v337, 2
        %v339 = vadd.f32 %v337, %v338
        %v340 = vrot.slane %v339, 1
        %v341 = vadd.f32 %v339, %v340
        %v342 = vrot.slane %v309, 4
        %v343 = vadd.f32 %v309, %v342
        %v344 = vrot.slane %v343, 2
        %v345 = vadd.f32 %v343, %v344
        %v346 = vrot.slane %v345, 1
        %v347 = vadd.f32 %v345, %v346
        %v348 = vrot.slane %v310, 4
        %v349 = vadd.f32 %v310, %v348
        %v350 = vrot.slane %v349, 2
        %v351 = vadd.f32 %v349, %v350
        %v352 = vrot.slane %v351, 1
        %v353 = vadd.f32 %v351, %v352
        %v354 = vrot.slane %v311, 4
        %v355 = vadd.f32 %v311, %v354
        %v356 = vrot.slane %v355, 2
        %v357 = vadd.f32 %v355, %v356
        %v358 = vrot.slane %v357, 1
        %v359 = vadd.f32 %v357, %v358
        %v360 = vrcp.pop 8.0
        %v361 = vmul.f32 %v317, %v360
        %v362 = vmul.f32 %v323, %v360
        %v363 = vmul.f32 %v329, %v360
        %v364 = vmul.f32 %v335, %v360
        %v365 = vmul.f32 %v341, %v360
        %v366 = vmul.f32 %v347, %v360
        %v367 = vmul.f32 %v353, %v360
        %v368 = vmul.f32 %v359, %v360
        %v377 = vcombine.low %v361, %v362
        %v378 = vcombine.low %v363, %v364
        %v379 = vcombine.low %v365, %v366
        %v380 = vcombine.low %v367, %v368
        %v382 = vunpack.c.l.s4 1966171168
        %v383 = vunpack.c.0.s8 %v382
        %v384 = vlaneseq
        %v385 = vshrl.u32 %v384, 7
        %v386 = vsub.s32 %v383, %v385
        %v387 = vrot.slane %v377, %v386
        %v389 = vunpack.c.l.s4 1966171168
        %v390 = vunpack.c.0.s8 %v389
        %v391 = vlaneseq
        %v392 = vshrl.u32 %v391, 7
        %v393 = vsub.s32 %v390, %v392
        %v394 = vrot.slane %v378, %v393
        %v396 = vunpack.c.l.s4 1966171168
        %v397 = vunpack.c.0.s8 %v396
        %v398 = vlaneseq
        %v399 = vshrl.u32 %v398, 7
        %v400 = vsub.s32 %v397, %v399
        %v401 = vrot.slane %v379, %v400
        %v403 = vunpack.c.l.s4 1966171168
        %v404 = vunpack.c.0.s8 %v403
        %v405 = vlaneseq
        %v406 = vshrl.u32 %v405, 7
        %v407 = vsub.s32 %v404, %v406
        %v408 = vrot.slane %v380, %v407
        %v409 = vcombine.low %v387, %v394
        %v410 = vcombine.low %v401, %v408
        %v412 = vunpack.c.l.s4 1966171168
        %v413 = vunpack.c.0.s8 %v412
        %v414 = vlaneseq
        %v415 = vshrl.u32 %v414, 7
        %v416 = vsub.s32 %v413, %v415
        %v417 = vrot.slane %v409, %v416
        %v419 = vunpack.c.l.s4 1966171168
        %v420 = vunpack.c.0.s8 %v419
        %v421 = vlaneseq
        %v422 = vshrl.u32 %v421, 7
        %v423 = vsub.s32 %v420, %v422
        %v424 = vrot.slane %v410, %v423
        %v425 = vcombine.low %v417, %v424
        %427 = vst [vmem:[%s251] sm:$0xff] %v425
        %v428 = vld [vmem:[#allocation2] sm:$0xff]
        %v429 = vld [vmem:[#allocation2 + $0x8] sm:$0xff]
        %v430 = vld [vmem:[#allocation2 + $0x10] sm:$0xff]
        %v431 = vld [vmem:[#allocation2 + $0x18] sm:$0xff]
        %v432 = vld [vmem:[#allocation2 + $0x20] sm:$0xff]
        %v433 = vld [vmem:[#allocation2 + $0x28] sm:$0xff]
        %v434 = vld [vmem:[#allocation2 + $0x30] sm:$0xff]
        %v435 = vld [vmem:[#allocation2 + $0x38] sm:$0xff]
        %v436 = vld [vmem:[%s224] sm:$0xff]
        %v437 = vld [vmem:[%s224 + $0x8] sm:$0xff]
        %v438 = vld [vmem:[%s224 + $0x10] sm:$0xff]
        %v439 = vld [vmem:[%s224 + $0x18] sm:$0xff]
        %v440 = vld [vmem:[%s224 + $0x20] sm:$0xff]
        %v441 = vld [vmem:[%s224 + $0x28] sm:$0xff]
        %v442 = vld [vmem:[%s224 + $0x30] sm:$0xff]
        %v443 = vld [vmem:[%s224 + $0x38] sm:$0xff]
        %v444 = vld [vmem:[%s224 + $0x40] sm:$0xff]
        %v445 = vld [vmem:[%s224 + $0x48] sm:$0xff]
        %v446 = vld [vmem:[%s224 + $0x50] sm:$0xff]
        %v447 = vld [vmem:[%s224 + $0x58] sm:$0xff]
        %v448 = vld [vmem:[%s224 + $0x60] sm:$0xff]
        %v449 = vld [vmem:[%s224 + $0x68] sm:$0xff]
        %v450 = vld [vmem:[%s224 + $0x70] sm:$0xff]
        %v451 = vld [vmem:[%s224 + $0x78] sm:$0xff]
        %v452 = vld [vmem:[%s224 + $0x80] sm:$0xff]
        %v453 = vld [vmem:[%s224 + $0x88] sm:$0xff]
        %v454 = vld [vmem:[%s224 + $0x90] sm:$0xff]
        %v455 = vld [vmem:[%s224 + $0x98] sm:$0xff]
        %v456 = vld [vmem:[%s224 + $0xa0] sm:$0xff]
        %v457 = vld [vmem:[%s224 + $0xa8] sm:$0xff]
        %v458 = vld [vmem:[%s224 + $0xb0] sm:$0xff]
        %v459 = vld [vmem:[%s224 + $0xb8] sm:$0xff]
        %v460 = vld [vmem:[%s224 + $0xc0] sm:$0xff]
        %v461 = vld [vmem:[%s224 + $0xc8] sm:$0xff]
        %v462 = vld [vmem:[%s224 + $0xd0] sm:$0xff]
        %v463 = vld [vmem:[%s224 + $0xd8] sm:$0xff]
        %v464 = vld [vmem:[%s224 + $0xe0] sm:$0xff]
        %v465 = vld [vmem:[%s224 + $0xe8] sm:$0xff]
        %v466 = vld [vmem:[%s224 + $0xf0] sm:$0xff]
        %v467 = vld [vmem:[%s224 + $0xf8] sm:$0xff]
        %v468 = vld [vmem:[%s224 + $0x100] sm:$0xff]
        %v469 = vld [vmem:[%s224 + $0x108] sm:$0xff]
        %v470 = vld [vmem:[%s224 + $0x110] sm:$0xff]
        %v471 = vld [vmem:[%s224 + $0x118] sm:$0xff]
        %v472 = vld [vmem:[%s224 + $0x120] sm:$0xff]
        %v473 = vld [vmem:[%s224 + $0x128] sm:$0xff]
        %v474 = vld [vmem:[%s224 + $0x130] sm:$0xff]
        %v475 = vld [vmem:[%s224 + $0x138] sm:$0xff]
        %v476 = vld [vmem:[%s224 + $0x140] sm:$0xff]
        %v477 = vld [vmem:[%s224 + $0x148] sm:$0xff]
        %v478 = vld [vmem:[%s224 + $0x150] sm:$0xff]
        %v479 = vld [vmem:[%s224 + $0x158] sm:$0xff]
        %v480 = vld [vmem:[%s224 + $0x160] sm:$0xff]
        %v481 = vld [vmem:[%s224 + $0x168] sm:$0xff]
        %v482 = vld [vmem:[%s224 + $0x170] sm:$0xff]
        %v483 = vld [vmem:[%s224 + $0x178] sm:$0xff]
        %v484 = vld [vmem:[%s224 + $0x180] sm:$0xff]
        %v485 = vld [vmem:[%s224 + $0x188] sm:$0xff]
        %v486 = vld [vmem:[%s224 + $0x190] sm:$0xff]
        %v487 = vld [vmem:[%s224 + $0x198] sm:$0xff]
        %v488 = vld [vmem:[%s224 + $0x1a0] sm:$0xff]
        %v489 = vld [vmem:[%s224 + $0x1a8] sm:$0xff]
        %v490 = vld [vmem:[%s224 + $0x1b0] sm:$0xff]
        %v491 = vld [vmem:[%s224 + $0x1b8] sm:$0xff]
        %v492 = vld [vmem:[%s224 + $0x1c0] sm:$0xff]
        %v493 = vld [vmem:[%s224 + $0x1c8] sm:$0xff]
        %v494 = vld [vmem:[%s224 + $0x1d0] sm:$0xff]
        %v495 = vld [vmem:[%s224 + $0x1d8] sm:$0xff]
        %v496 = vld [vmem:[%s224 + $0x1e0] sm:$0xff]
        %v497 = vld [vmem:[%s224 + $0x1e8] sm:$0xff]
        %v498 = vld [vmem:[%s224 + $0x1f0] sm:$0xff]
        %v499 = vld [vmem:[%s224 + $0x1f8] sm:$0xff]
        %v500 = vld [vmem:[%s224 + $0x200] sm:$0xff]
        %v501 = vld [vmem:[%s224 + $0x208] sm:$0xff]
        %v502 = vld [vmem:[%s224 + $0x210] sm:$0xff]
        %v503 = vld [vmem:[%s224 + $0x218] sm:$0xff]
        %v504 = vld [vmem:[%s224 + $0x220] sm:$0xff]
        %v505 = vld [vmem:[%s224 + $0x228] sm:$0xff]
        %v506 = vld [vmem:[%s224 + $0x230] sm:$0xff]
        %v507 = vld [vmem:[%s224 + $0x238] sm:$0xff]
        %v508 = vld [vmem:[%s224 + $0x240] sm:$0xff]
        %v509 = vld [vmem:[%s224 + $0x248] sm:$0xff]
        %v510 = vld [vmem:[%s224 + $0x250] sm:$0xff]
        %v511 = vld [vmem:[%s224 + $0x258] sm:$0xff]
        %v512 = vld [vmem:[%s224 + $0x260] sm:$0xff]
        %v513 = vld [vmem:[%s224 + $0x268] sm:$0xff]
        %v514 = vld [vmem:[%s224 + $0x270] sm:$0xff]
        %v515 = vld [vmem:[%s224 + $0x278] sm:$0xff]
        %v516 = vld [vmem:[%s224 + $0x280] sm:$0xff]
        %v517 = vld [vmem:[%s224 + $0x288] sm:$0xff]
        %v518 = vld [vmem:[%s224 + $0x290] sm:$0xff]
        %v519 = vld [vmem:[%s224 + $0x298] sm:$0xff]
        %v520 = vld [vmem:[%s224 + $0x2a0] sm:$0xff]
        %v521 = vld [vmem:[%s224 + $0x2a8] sm:$0xff]
        %v522 = vld [vmem:[%s224 + $0x2b0] sm:$0xff]
        %v523 = vld [vmem:[%s224 + $0x2b8] sm:$0xff]
        %v524 = vld [vmem:[%s224 + $0x2c0] sm:$0xff]
        %v525 = vld [vmem:[%s224 + $0x2c8] sm:$0xff]
        %v526 = vld [vmem:[%s224 + $0x2d0] sm:$0xff]
        %v527 = vld [vmem:[%s224 + $0x2d8] sm:$0xff]
        %v528 = vld [vmem:[%s224 + $0x2e0] sm:$0xff]
        %v529 = vld [vmem:[%s224 + $0x2e8] sm:$0xff]
        %v530 = vld [vmem:[%s224 + $0x2f0] sm:$0xff]
        %v531 = vld [vmem:[%s224 + $0x2f8] sm:$0xff]
        %v532 = vld [vmem:[%s224 + $0x300] sm:$0xff]
        %v533 = vld [vmem:[%s224 + $0x308] sm:$0xff]
        %v534 = vld [vmem:[%s224 + $0x310] sm:$0xff]
        %v535 = vld [vmem:[%s224 + $0x318] sm:$0xff]
        %v536 = vld [vmem:[%s224 + $0x320] sm:$0xff]
        %v537 = vld [vmem:[%s224 + $0x328] sm:$0xff]
        %v538 = vld [vmem:[%s224 + $0x330] sm:$0xff]
        %v539 = vld [vmem:[%s224 + $0x338] sm:$0xff]
        %v540 = vld [vmem:[%s224 + $0x340] sm:$0xff]
        %v541 = vld [vmem:[%s224 + $0x348] sm:$0xff]
        %v542 = vld [vmem:[%s224 + $0x350] sm:$0xff]
        %v543 = vld [vmem:[%s224 + $0x358] sm:$0xff]
        %v544 = vld [vmem:[%s224 + $0x360] sm:$0xff]
        %v545 = vld [vmem:[%s224 + $0x368] sm:$0xff]
        %v546 = vld [vmem:[%s224 + $0x370] sm:$0xff]
        %v547 = vld [vmem:[%s224 + $0x378] sm:$0xff]
        %v548 = vld [vmem:[%s224 + $0x380] sm:$0xff]
        %v549 = vld [vmem:[%s224 + $0x388] sm:$0xff]
        %v550 = vld [vmem:[%s224 + $0x390] sm:$0xff]
        %v551 = vld [vmem:[%s224 + $0x398] sm:$0xff]
        %v552 = vld [vmem:[%s224 + $0x3a0] sm:$0xff]
        %v553 = vld [vmem:[%s224 + $0x3a8] sm:$0xff]
        %v554 = vld [vmem:[%s224 + $0x3b0] sm:$0xff]
        %v555 = vld [vmem:[%s224 + $0x3b8] sm:$0xff]
        %v556 = vld [vmem:[%s224 + $0x3c0] sm:$0xff]
        %v557 = vld [vmem:[%s224 + $0x3c8] sm:$0xff]
        %v558 = vld [vmem:[%s224 + $0x3d0] sm:$0xff]
        %v559 = vld [vmem:[%s224 + $0x3d8] sm:$0xff]
        %v560 = vld [vmem:[%s224 + $0x3e0] sm:$0xff]
        %v561 = vld [vmem:[%s224 + $0x3e8] sm:$0xff]
        %v562 = vld [vmem:[%s224 + $0x3f0] sm:$0xff]
        %v563 = vld [vmem:[%s224 + $0x3f8] sm:$0xff]
        %v564 = vld [vmem:[%s224 + $0x400] sm:$0xff]
        %v565 = vld [vmem:[%s224 + $0x408] sm:$0xff]
        %v566 = vld [vmem:[%s224 + $0x410] sm:$0xff]
        %v567 = vld [vmem:[%s224 + $0x418] sm:$0xff]
        %v568 = vld [vmem:[%s224 + $0x420] sm:$0xff]
        %v569 = vld [vmem:[%s224 + $0x428] sm:$0xff]
        %v570 = vld [vmem:[%s224 + $0x430] sm:$0xff]
        %v571 = vld [vmem:[%s224 + $0x438] sm:$0xff]
        %v572 = vld [vmem:[%s224 + $0x440] sm:$0xff]
        %v573 = vld [vmem:[%s224 + $0x448] sm:$0xff]
        %v574 = vld [vmem:[%s224 + $0x450] sm:$0xff]
        %v575 = vld [vmem:[%s224 + $0x458] sm:$0xff]
        %v576 = vld [vmem:[%s224 + $0x460] sm:$0xff]
        %v577 = vld [vmem:[%s224 + $0x468] sm:$0xff]
        %v578 = vld [vmem:[%s224 + $0x470] sm:$0xff]
        %v579 = vld [vmem:[%s224 + $0x478] sm:$0xff]
        %v580 = vld [vmem:[%s224 + $0x480] sm:$0xff]
        %v581 = vld [vmem:[%s224 + $0x488] sm:$0xff]
        %v582 = vld [vmem:[%s224 + $0x490] sm:$0xff]
        %v583 = vld [vmem:[%s224 + $0x498] sm:$0xff]
        %v584 = vld [vmem:[%s224 + $0x4a0] sm:$0xff]
        %v585 = vld [vmem:[%s224 + $0x4a8] sm:$0xff]
        %v586 = vld [vmem:[%s224 + $0x4b0] sm:$0xff]
        %v587 = vld [vmem:[%s224 + $0x4b8] sm:$0xff]
        %v588 = vld [vmem:[%s224 + $0x4c0] sm:$0xff]
        %v589 = vld [vmem:[%s224 + $0x4c8] sm:$0xff]
        %v590 = vld [vmem:[%s224 + $0x4d0] sm:$0xff]
        %v591 = vld [vmem:[%s224 + $0x4d8] sm:$0xff]
        %v592 = vld [vmem:[%s224 + $0x4e0] sm:$0xff]
        %v593 = vld [vmem:[%s224 + $0x4e8] sm:$0xff]
        %v594 = vld [vmem:[%s224 + $0x4f0] sm:$0xff]
        %v595 = vld [vmem:[%s224 + $0x4f8] sm:$0xff]
        %v596 = vld [vmem:[%s224 + $0x500] sm:$0xff]
        %v597 = vld [vmem:[%s224 + $0x508] sm:$0xff]
        %v598 = vld [vmem:[%s224 + $0x510] sm:$0xff]
        %v599 = vld [vmem:[%s224 + $0x518] sm:$0xff]
        %v600 = vld [vmem:[%s224 + $0x520] sm:$0xff]
        %v601 = vld [vmem:[%s224 + $0x528] sm:$0xff]
        %v602 = vld [vmem:[%s224 + $0x530] sm:$0xff]
        %v603 = vld [vmem:[%s224 + $0x538] sm:$0xff]
        %v604 = vld [vmem:[%s224 + $0x540] sm:$0xff]
        %v605 = vld [vmem:[%s224 + $0x548] sm:$0xff]
        %v606 = vld [vmem:[%s224 + $0x550] sm:$0xff]
        %v607 = vld [vmem:[%s224 + $0x558] sm:$0xff]
        %v608 = vld [vmem:[%s224 + $0x560] sm:$0xff]
        %v609 = vld [vmem:[%s224 + $0x568] sm:$0xff]
        %v610 = vld [vmem:[%s224 + $0x570] sm:$0xff]
        %v611 = vld [vmem:[%s224 + $0x578] sm:$0xff]
        %v612 = vld [vmem:[%s224 + $0x580] sm:$0xff]
        %v613 = vld [vmem:[%s224 + $0x588] sm:$0xff]
        %v614 = vld [vmem:[%s224 + $0x590] sm:$0xff]
        %v615 = vld [vmem:[%s224 + $0x598] sm:$0xff]
        %v616 = vld [vmem:[%s224 + $0x5a0] sm:$0xff]
        %v617 = vld [vmem:[%s224 + $0x5a8] sm:$0xff]
        %v618 = vld [vmem:[%s224 + $0x5b0] sm:$0xff]
        %v619 = vld [vmem:[%s224 + $0x5b8] sm:$0xff]
        %v620 = vld [vmem:[%s224 + $0x5c0] sm:$0xff]
        %v621 = vld [vmem:[%s224 + $0x5c8] sm:$0xff]
        %v622 = vld [vmem:[%s224 + $0x5d0] sm:$0xff]
        %v623 = vld [vmem:[%s224 + $0x5d8] sm:$0xff]
        %v624 = vld [vmem:[%s224 + $0x5e0] sm:$0xff]
        %v625 = vld [vmem:[%s224 + $0x5e8] sm:$0xff]
        %v626 = vld [vmem:[%s224 + $0x5f0] sm:$0xff]
        %v627 = vld [vmem:[%s224 + $0x5f8] sm:$0xff]
        %v628 = vld [vmem:[%s224 + $0x600] sm:$0xff]
        %v629 = vld [vmem:[%s224 + $0x608] sm:$0xff]
        %v630 = vld [vmem:[%s224 + $0x610] sm:$0xff]
        %v631 = vld [vmem:[%s224 + $0x618] sm:$0xff]
        %v632 = vld [vmem:[%s224 + $0x620] sm:$0xff]
        %v633 = vld [vmem:[%s224 + $0x628] sm:$0xff]
        %v634 = vld [vmem:[%s224 + $0x630] sm:$0xff]
        %v635 = vld [vmem:[%s224 + $0x638] sm:$0xff]
        %v636 = vld [vmem:[%s224 + $0x640] sm:$0xff]
        %v637 = vld [vmem:[%s224 + $0x648] sm:$0xff]
        %v638 = vld [vmem:[%s224 + $0x650] sm:$0xff]
        %v639 = vld [vmem:[%s224 + $0x658] sm:$0xff]
        %v640 = vld [vmem:[%s224 + $0x660] sm:$0xff]
        %v641 = vld [vmem:[%s224 + $0x668] sm:$0xff]
        %v642 = vld [vmem:[%s224 + $0x670] sm:$0xff]
        %v643 = vld [vmem:[%s224 + $0x678] sm:$0xff]
        %v644 = vld [vmem:[%s224 + $0x680] sm:$0xff]
        %v645 = vld [vmem:[%s224 + $0x688] sm:$0xff]
        %v646 = vld [vmem:[%s224 + $0x690] sm:$0xff]
        %v647 = vld [vmem:[%s224 + $0x698] sm:$0xff]
        %v648 = vld [vmem:[%s224 + $0x6a0] sm:$0xff]
        %v649 = vld [vmem:[%s224 + $0x6a8] sm:$0xff]
        %v650 = vld [vmem:[%s224 + $0x6b0] sm:$0xff]
        %v651 = vld [vmem:[%s224 + $0x6b8] sm:$0xff]
        %v652 = vld [vmem:[%s224 + $0x6c0] sm:$0xff]
        %v653 = vld [vmem:[%s224 + $0x6c8] sm:$0xff]
        %v654 = vld [vmem:[%s224 + $0x6d0] sm:$0xff]
        %v655 = vld [vmem:[%s224 + $0x6d8] sm:$0xff]
        %v656 = vld [vmem:[%s224 + $0x6e0] sm:$0xff]
        %v657 = vld [vmem:[%s224 + $0x6e8] sm:$0xff]
        %v658 = vld [vmem:[%s224 + $0x6f0] sm:$0xff]
        %v659 = vld [vmem:[%s224 + $0x6f8] sm:$0xff]
        %v660 = vld [vmem:[%s224 + $0x700] sm:$0xff]
        %v661 = vld [vmem:[%s224 + $0x708] sm:$0xff]
        %v662 = vld [vmem:[%s224 + $0x710] sm:$0xff]
        %v663 = vld [vmem:[%s224 + $0x718] sm:$0xff]
        %v664 = vld [vmem:[%s224 + $0x720] sm:$0xff]
        %v665 = vld [vmem:[%s224 + $0x728] sm:$0xff]
        %v666 = vld [vmem:[%s224 + $0x730] sm:$0xff]
        %v667 = vld [vmem:[%s224 + $0x738] sm:$0xff]
        %v668 = vld [vmem:[%s224 + $0x740] sm:$0xff]
        %v669 = vld [vmem:[%s224 + $0x748] sm:$0xff]
        %v670 = vld [vmem:[%s224 + $0x750] sm:$0xff]
        %v671 = vld [vmem:[%s224 + $0x758] sm:$0xff]
        %v672 = vld [vmem:[%s224 + $0x760] sm:$0xff]
        %v673 = vld [vmem:[%s224 + $0x768] sm:$0xff]
        %v674 = vld [vmem:[%s224 + $0x770] sm:$0xff]
        %v675 = vld [vmem:[%s224 + $0x778] sm:$0xff]
        %v676 = vld [vmem:[%s224 + $0x780] sm:$0xff]
        %v677 = vld [vmem:[%s224 + $0x788] sm:$0xff]
        %v678 = vld [vmem:[%s224 + $0x790] sm:$0xff]
        %v679 = vld [vmem:[%s224 + $0x798] sm:$0xff]
        %v680 = vld [vmem:[%s224 + $0x7a0] sm:$0xff]
        %v681 = vld [vmem:[%s224 + $0x7a8] sm:$0xff]
        %v682 = vld [vmem:[%s224 + $0x7b0] sm:$0xff]
        %v683 = vld [vmem:[%s224 + $0x7b8] sm:$0xff]
        %v684 = vld [vmem:[%s224 + $0x7c0] sm:$0xff]
        %v685 = vld [vmem:[%s224 + $0x7c8] sm:$0xff]
        %v686 = vld [vmem:[%s224 + $0x7d0] sm:$0xff]
        %v687 = vld [vmem:[%s224 + $0x7d8] sm:$0xff]
        %v688 = vld [vmem:[%s224 + $0x7e0] sm:$0xff]
        %v689 = vld [vmem:[%s224 + $0x7e8] sm:$0xff]
        %v690 = vld [vmem:[%s224 + $0x7f0] sm:$0xff]
        %v691 = vld [vmem:[%s224 + $0x7f8] sm:$0xff]
        %v692 = vld [vmem:[%s224 + $0x800] sm:$0xff]
        %v693 = vld [vmem:[%s224 + $0x808] sm:$0xff]
        %v694 = vld [vmem:[%s224 + $0x810] sm:$0xff]
        %v695 = vld [vmem:[%s224 + $0x818] sm:$0xff]
        %v696 = vld [vmem:[%s224 + $0x820] sm:$0xff]
        %v697 = vld [vmem:[%s224 + $0x828] sm:$0xff]
        %v698 = vld [vmem:[%s224 + $0x830] sm:$0xff]
        %v699 = vld [vmem:[%s224 + $0x838] sm:$0xff]
        %v700 = vld [vmem:[%s224 + $0x840] sm:$0xff]
        %v701 = vld [vmem:[%s224 + $0x848] sm:$0xff]
        %v702 = vld [vmem:[%s224 + $0x850] sm:$0xff]
        %v703 = vld [vmem:[%s224 + $0x858] sm:$0xff]
        %v704 = vld [vmem:[%s224 + $0x860] sm:$0xff]
        %v705 = vld [vmem:[%s224 + $0x868] sm:$0xff]
        %v706 = vld [vmem:[%s224 + $0x870] sm:$0xff]
        %v707 = vld [vmem:[%s224 + $0x878] sm:$0xff]
        %v708 = vld [vmem:[%s224 + $0x880] sm:$0xff]
        %v709 = vld [vmem:[%s224 + $0x888] sm:$0xff]
        %v710 = vld [vmem:[%s224 + $0x890] sm:$0xff]
        %v711 = vld [vmem:[%s224 + $0x898] sm:$0xff]
        %v712 = vld [vmem:[%s224 + $0x8a0] sm:$0xff]
        %v713 = vld [vmem:[%s224 + $0x8a8] sm:$0xff]
        %v714 = vld [vmem:[%s224 + $0x8b0] sm:$0xff]
        %v715 = vld [vmem:[%s224 + $0x8b8] sm:$0xff]
        %v716 = vld [vmem:[%s224 + $0x8c0] sm:$0xff]
        %v717 = vld [vmem:[%s224 + $0x8c8] sm:$0xff]
        %v718 = vld [vmem:[%s224 + $0x8d0] sm:$0xff]
        %v719 = vld [vmem:[%s224 + $0x8d8] sm:$0xff]
        %v720 = vld [vmem:[%s224 + $0x8e0] sm:$0xff]
        %v721 = vld [vmem:[%s224 + $0x8e8] sm:$0xff]
        %v722 = vld [vmem:[%s224 + $0x8f0] sm:$0xff]
        %v723 = vld [vmem:[%s224 + $0x8f8] sm:$0xff]
        %v724 = vld [vmem:[%s224 + $0x900] sm:$0xff]
        %v725 = vld [vmem:[%s224 + $0x908] sm:$0xff]
        %v726 = vld [vmem:[%s224 + $0x910] sm:$0xff]
        %v727 = vld [vmem:[%s224 + $0x918] sm:$0xff]
        %v728 = vld [vmem:[%s224 + $0x920] sm:$0xff]
        %v729 = vld [vmem:[%s224 + $0x928] sm:$0xff]
        %v730 = vld [vmem:[%s224 + $0x930] sm:$0xff]
        %v731 = vld [vmem:[%s224 + $0x938] sm:$0xff]
        %v732 = vld [vmem:[%s224 + $0x940] sm:$0xff]
        %v733 = vld [vmem:[%s224 + $0x948] sm:$0xff]
        %v734 = vld [vmem:[%s224 + $0x950] sm:$0xff]
        %v735 = vld [vmem:[%s224 + $0x958] sm:$0xff]
        %v736 = vld [vmem:[%s224 + $0x960] sm:$0xff]
        %v737 = vld [vmem:[%s224 + $0x968] sm:$0xff]
        %v738 = vld [vmem:[%s224 + $0x970] sm:$0xff]
        %v739 = vld [vmem:[%s224 + $0x978] sm:$0xff]
        %v740 = vld [vmem:[%s224 + $0x980] sm:$0xff]
        %v741 = vld [vmem:[%s224 + $0x988] sm:$0xff]
        %v742 = vld [vmem:[%s224 + $0x990] sm:$0xff]
        %v743 = vld [vmem:[%s224 + $0x998] sm:$0xff]
        %v744 = vld [vmem:[%s224 + $0x9a0] sm:$0xff]
        %v745 = vld [vmem:[%s224 + $0x9a8] sm:$0xff]
        %v746 = vld [vmem:[%s224 + $0x9b0] sm:$0xff]
        %v747 = vld [vmem:[%s224 + $0x9b8] sm:$0xff]
        %v748 = vld [vmem:[%s224 + $0x9c0] sm:$0xff]
        %v749 = vld [vmem:[%s224 + $0x9c8] sm:$0xff]
        %v750 = vld [vmem:[%s224 + $0x9d0] sm:$0xff]
        %v751 = vld [vmem:[%s224 + $0x9d8] sm:$0xff]
        %v752 = vld [vmem:[%s224 + $0x9e0] sm:$0xff]
        %v753 = vld [vmem:[%s224 + $0x9e8] sm:$0xff]
        %v754 = vld [vmem:[%s224 + $0x9f0] sm:$0xff]
        %v755 = vld [vmem:[%s224 + $0x9f8] sm:$0xff]
        %v756 = vld [vmem:[%s224 + $0xa00] sm:$0xff]
        %v757 = vld [vmem:[%s224 + $0xa08] sm:$0xff]
        %v758 = vld [vmem:[%s224 + $0xa10] sm:$0xff]
        %v759 = vld [vmem:[%s224 + $0xa18] sm:$0xff]
        %v760 = vld [vmem:[%s224 + $0xa20] sm:$0xff]
        %v761 = vld [vmem:[%s224 + $0xa28] sm:$0xff]
        %v762 = vld [vmem:[%s224 + $0xa30] sm:$0xff]
        %v763 = vld [vmem:[%s224 + $0xa38] sm:$0xff]
        %v764 = vld [vmem:[%s224 + $0xa40] sm:$0xff]
        %v765 = vld [vmem:[%s224 + $0xa48] sm:$0xff]
        %v766 = vld [vmem:[%s224 + $0xa50] sm:$0xff]
        %v767 = vld [vmem:[%s224 + $0xa58] sm:$0xff]
        %v768 = vld [vmem:[%s224 + $0xa60] sm:$0xff]
        %v769 = vld [vmem:[%s224 + $0xa68] sm:$0xff]
        %v770 = vld [vmem:[%s224 + $0xa70] sm:$0xff]
        %v771 = vld [vmem:[%s224 + $0xa78] sm:$0xff]
        %v772 = vld [vmem:[%s224 + $0xa80] sm:$0xff]
        %v773 = vld [vmem:[%s224 + $0xa88] sm:$0xff]
        %v774 = vld [vmem:[%s224 + $0xa90] sm:$0xff]
        %v775 = vld [vmem:[%s224 + $0xa98] sm:$0xff]
        %v776 = vld [vmem:[%s224 + $0xaa0] sm:$0xff]
        %v777 = vld [vmem:[%s224 + $0xaa8] sm:$0xff]
        %v778 = vld [vmem:[%s224 + $0xab0] sm:$0xff]
        %v779 = vld [vmem:[%s224 + $0xab8] sm:$0xff]
        %v780 = vld [vmem:[%s224 + $0xac0] sm:$0xff]
        %v781 = vld [vmem:[%s224 + $0xac8] sm:$0xff]
        %v782 = vld [vmem:[%s224 + $0xad0] sm:$0xff]
        %v783 = vld [vmem:[%s224 + $0xad8] sm:$0xff]
        %v784 = vld [vmem:[%s224 + $0xae0] sm:$0xff]
        %v785 = vld [vmem:[%s224 + $0xae8] sm:$0xff]
        %v786 = vld [vmem:[%s224 + $0xaf0] sm:$0xff]
        %v787 = vld [vmem:[%s224 + $0xaf8] sm:$0xff]
        %v788 = vld [vmem:[%s224 + $0xb00] sm:$0xff]
        %v789 = vld [vmem:[%s224 + $0xb08] sm:$0xff]
        %v790 = vld [vmem:[%s224 + $0xb10] sm:$0xff]
        %v791 = vld [vmem:[%s224 + $0xb18] sm:$0xff]
        %v792 = vld [vmem:[%s224 + $0xb20] sm:$0xff]
        %v793 = vld [vmem:[%s224 + $0xb28] sm:$0xff]
        %v794 = vld [vmem:[%s224 + $0xb30] sm:$0xff]
        %v795 = vld [vmem:[%s224 + $0xb38] sm:$0xff]
        %v796 = vld [vmem:[%s224 + $0xb40] sm:$0xff]
        %v797 = vld [vmem:[%s224 + $0xb48] sm:$0xff]
        %v798 = vld [vmem:[%s224 + $0xb50] sm:$0xff]
        %v799 = vld [vmem:[%s224 + $0xb58] sm:$0xff]
        %v800 = vld [vmem:[%s224 + $0xb60] sm:$0xff]
        %v801 = vld [vmem:[%s224 + $0xb68] sm:$0xff]
        %v802 = vld [vmem:[%s224 + $0xb70] sm:$0xff]
        %v803 = vld [vmem:[%s224 + $0xb78] sm:$0xff]
        %v804 = vld [vmem:[%s224 + $0xb80] sm:$0xff]
        %v805 = vld [vmem:[%s224 + $0xb88] sm:$0xff]
        %v806 = vld [vmem:[%s224 + $0xb90] sm:$0xff]
        %v807 = vld [vmem:[%s224 + $0xb98] sm:$0xff]
        %v808 = vld [vmem:[%s224 + $0xba0] sm:$0xff]
        %v809 = vld [vmem:[%s224 + $0xba8] sm:$0xff]
        %v810 = vld [vmem:[%s224 + $0xbb0] sm:$0xff]
        %v811 = vld [vmem:[%s224 + $0xbb8] sm:$0xff]
        %v812 = vld [vmem:[%s224 + $0xbc0] sm:$0xff]
        %v813 = vld [vmem:[%s224 + $0xbc8] sm:$0xff]
        %v814 = vld [vmem:[%s224 + $0xbd0] sm:$0xff]
        %v815 = vld [vmem:[%s224 + $0xbd8] sm:$0xff]
        %v816 = vld [vmem:[%s224 + $0xbe0] sm:$0xff]
        %v817 = vld [vmem:[%s224 + $0xbe8] sm:$0xff]
        %v818 = vld [vmem:[%s224 + $0xbf0] sm:$0xff]
        %v819 = vld [vmem:[%s224 + $0xbf8] sm:$0xff]
        %v820 = vld [vmem:[%s224 + $0xc00] sm:$0xff]
        %v821 = vld [vmem:[%s224 + $0xc08] sm:$0xff]
        %v822 = vld [vmem:[%s224 + $0xc10] sm:$0xff]
        %v823 = vld [vmem:[%s224 + $0xc18] sm:$0xff]
        %v824 = vld [vmem:[%s224 + $0xc20] sm:$0xff]
        %v825 = vld [vmem:[%s224 + $0xc28] sm:$0xff]
        %v826 = vld [vmem:[%s224 + $0xc30] sm:$0xff]
        %v827 = vld [vmem:[%s224 + $0xc38] sm:$0xff]
        %v828 = vld [vmem:[%s224 + $0xc40] sm:$0xff]
        %v829 = vld [vmem:[%s224 + $0xc48] sm:$0xff]
        %v830 = vld [vmem:[%s224 + $0xc50] sm:$0xff]
        %v831 = vld [vmem:[%s224 + $0xc58] sm:$0xff]
        %v832 = vld [vmem:[%s224 + $0xc60] sm:$0xff]
        %v833 = vld [vmem:[%s224 + $0xc68] sm:$0xff]
        %v834 = vld [vmem:[%s224 + $0xc70] sm:$0xff]
        %v835 = vld [vmem:[%s224 + $0xc78] sm:$0xff]
        %v836 = vld [vmem:[%s224 + $0xc80] sm:$0xff]
        %v837 = vld [vmem:[%s224 + $0xc88] sm:$0xff]
        %v838 = vld [vmem:[%s224 + $0xc90] sm:$0xff]
        %v839 = vld [vmem:[%s224 + $0xc98] sm:$0xff]
        %v840 = vld [vmem:[%s224 + $0xca0] sm:$0xff]
        %v841 = vld [vmem:[%s224 + $0xca8] sm:$0xff]
        %v842 = vld [vmem:[%s224 + $0xcb0] sm:$0xff]
        %v843 = vld [vmem:[%s224 + $0xcb8] sm:$0xff]
        %v844 = vld [vmem:[%s224 + $0xcc0] sm:$0xff]
        %v845 = vld [vmem:[%s224 + $0xcc8] sm:$0xff]
        %v846 = vld [vmem:[%s224 + $0xcd0] sm:$0xff]
        %v847 = vld [vmem:[%s224 + $0xcd8] sm:$0xff]
        %v848 = vld [vmem:[%s224 + $0xce0] sm:$0xff]
        %v849 = vld [vmem:[%s224 + $0xce8] sm:$0xff]
        %v850 = vld [vmem:[%s224 + $0xcf0] sm:$0xff]
        %v851 = vld [vmem:[%s224 + $0xcf8] sm:$0xff]
        %v852 = vld [vmem:[%s224 + $0xd00] sm:$0xff]
        %v853 = vld [vmem:[%s224 + $0xd08] sm:$0xff]
        %v854 = vld [vmem:[%s224 + $0xd10] sm:$0xff]
        %v855 = vld [vmem:[%s224 + $0xd18] sm:$0xff]
        %v856 = vld [vmem:[%s224 + $0xd20] sm:$0xff]
        %v857 = vld [vmem:[%s224 + $0xd28] sm:$0xff]
        %v858 = vld [vmem:[%s224 + $0xd30] sm:$0xff]
        %v859 = vld [vmem:[%s224 + $0xd38] sm:$0xff]
        %v860 = vld [vmem:[%s224 + $0xd40] sm:$0xff]
        %v861 = vld [vmem:[%s224 + $0xd48] sm:$0xff]
        %v862 = vld [vmem:[%s224 + $0xd50] sm:$0xff]
        %v863 = vld [vmem:[%s224 + $0xd58] sm:$0xff]
        %v864 = vld [vmem:[%s224 + $0xd60] sm:$0xff]
        %v865 = vld [vmem:[%s224 + $0xd68] sm:$0xff]
        %v866 = vld [vmem:[%s224 + $0xd70] sm:$0xff]
        %v867 = vld [vmem:[%s224 + $0xd78] sm:$0xff]
        %v868 = vld [vmem:[%s224 + $0xd80] sm:$0xff]
        %v869 = vld [vmem:[%s224 + $0xd88] sm:$0xff]
        %v870 = vld [vmem:[%s224 + $0xd90] sm:$0xff]
        %v871 = vld [vmem:[%s224 + $0xd98] sm:$0xff]
        %v872 = vld [vmem:[%s224 + $0xda0] sm:$0xff]
        %v873 = vld [vmem:[%s224 + $0xda8] sm:$0xff]
        %v874 = vld [vmem:[%s224 + $0xdb0] sm:$0xff]
        %v875 = vld [vmem:[%s224 + $0xdb8] sm:$0xff]
        %v876 = vld [vmem:[%s224 + $0xdc0] sm:$0xff]
        %v877 = vld [vmem:[%s224 + $0xdc8] sm:$0xff]
        %v878 = vld [vmem:[%s224 + $0xdd0] sm:$0xff]
        %v879 = vld [vmem:[%s224 + $0xdd8] sm:$0xff]
        %v880 = vld [vmem:[%s224 + $0xde0] sm:$0xff]
        %v881 = vld [vmem:[%s224 + $0xde8] sm:$0xff]
        %v882 = vld [vmem:[%s224 + $0xdf0] sm:$0xff]
        %v883 = vld [vmem:[%s224 + $0xdf8] sm:$0xff]
        %v884 = vld [vmem:[%s224 + $0xe00] sm:$0xff]
        %v885 = vld [vmem:[%s224 + $0xe08] sm:$0xff]
        %v886 = vld [vmem:[%s224 + $0xe10] sm:$0xff]
        %v887 = vld [vmem:[%s224 + $0xe18] sm:$0xff]
        %v888 = vld [vmem:[%s224 + $0xe20] sm:$0xff]
        %v889 = vld [vmem:[%s224 + $0xe28] sm:$0xff]
        %v890 = vld [vmem:[%s224 + $0xe30] sm:$0xff]
        %v891 = vld [vmem:[%s224 + $0xe38] sm:$0xff]
        %v892 = vld [vmem:[%s224 + $0xe40] sm:$0xff]
        %v893 = vld [vmem:[%s224 + $0xe48] sm:$0xff]
        %v894 = vld [vmem:[%s224 + $0xe50] sm:$0xff]
        %v895 = vld [vmem:[%s224 + $0xe58] sm:$0xff]
        %v896 = vld [vmem:[%s224 + $0xe60] sm:$0xff]
        %v897 = vld [vmem:[%s224 + $0xe68] sm:$0xff]
        %v898 = vld [vmem:[%s224 + $0xe70] sm:$0xff]
        %v899 = vld [vmem:[%s224 + $0xe78] sm:$0xff]
        %v900 = vld [vmem:[%s224 + $0xe80] sm:$0xff]
        %v901 = vld [vmem:[%s224 + $0xe88] sm:$0xff]
        %v902 = vld [vmem:[%s224 + $0xe90] sm:$0xff]
        %v903 = vld [vmem:[%s224 + $0xe98] sm:$0xff]
        %v904 = vld [vmem:[%s224 + $0xea0] sm:$0xff]
        %v905 = vld [vmem:[%s224 + $0xea8] sm:$0xff]
        %v906 = vld [vmem:[%s224 + $0xeb0] sm:$0xff]
        %v907 = vld [vmem:[%s224 + $0xeb8] sm:$0xff]
        %v908 = vld [vmem:[%s224 + $0xec0] sm:$0xff]
        %v909 = vld [vmem:[%s224 + $0xec8] sm:$0xff]
        %v910 = vld [vmem:[%s224 + $0xed0] sm:$0xff]
        %v911 = vld [vmem:[%s224 + $0xed8] sm:$0xff]
        %v912 = vld [vmem:[%s224 + $0xee0] sm:$0xff]
        %v913 = vld [vmem:[%s224 + $0xee8] sm:$0xff]
        %v914 = vld [vmem:[%s224 + $0xef0] sm:$0xff]
        %v915 = vld [vmem:[%s224 + $0xef8] sm:$0xff]
        %v916 = vld [vmem:[%s224 + $0xf00] sm:$0xff]
        %v917 = vld [vmem:[%s224 + $0xf08] sm:$0xff]
        %v918 = vld [vmem:[%s224 + $0xf10] sm:$0xff]
        %v919 = vld [vmem:[%s224 + $0xf18] sm:$0xff]
        %v920 = vld [vmem:[%s224 + $0xf20] sm:$0xff]
        %v921 = vld [vmem:[%s224 + $0xf28] sm:$0xff]
        %v922 = vld [vmem:[%s224 + $0xf30] sm:$0xff]
        %v923 = vld [vmem:[%s224 + $0xf38] sm:$0xff]
        %v924 = vld [vmem:[%s224 + $0xf40] sm:$0xff]
        %v925 = vld [vmem:[%s224 + $0xf48] sm:$0xff]
        %v926 = vld [vmem:[%s224 + $0xf50] sm:$0xff]
        %v927 = vld [vmem:[%s224 + $0xf58] sm:$0xff]
        %v928 = vld [vmem:[%s224 + $0xf60] sm:$0xff]
        %v929 = vld [vmem:[%s224 + $0xf68] sm:$0xff]
        %v930 = vld [vmem:[%s224 + $0xf70] sm:$0xff]
        %v931 = vld [vmem:[%s224 + $0xf78] sm:$0xff]
        %v932 = vld [vmem:[%s224 + $0xf80] sm:$0xff]
        %v933 = vld [vmem:[%s224 + $0xf88] sm:$0xff]
        %v934 = vld [vmem:[%s224 + $0xf90] sm:$0xff]
        %v935 = vld [vmem:[%s224 + $0xf98] sm:$0xff]
        %v936 = vld [vmem:[%s224 + $0xfa0] sm:$0xff]
        %v937 = vld [vmem:[%s224 + $0xfa8] sm:$0xff]
        %v938 = vld [vmem:[%s224 + $0xfb0] sm:$0xff]
        %v939 = vld [vmem:[%s224 + $0xfb8] sm:$0xff]
        %v940 = vld [vmem:[%s224 + $0xfc0] sm:$0xff]
        %v941 = vld [vmem:[%s224 + $0xfc8] sm:$0xff]
        %v942 = vld [vmem:[%s224 + $0xfd0] sm:$0xff]
        %v943 = vld [vmem:[%s224 + $0xfd8] sm:$0xff]
        %v944 = vld [vmem:[%s224 + $0xfe0] sm:$0xff]
        %v945 = vld [vmem:[%s224 + $0xfe8] sm:$0xff]
        %v946 = vld [vmem:[%s224 + $0xff0] sm:$0xff]
        %v947 = vld [vmem:[%s224 + $0xff8] sm:$0xff]
        %v952 = vunpack.c.l.b16 %v300
        %v953 = vunpack.c.h.b16 %v300
        %v954 = vunpack.c.l.b16 %v301
        %v955 = vunpack.c.h.b16 %v301
        %v956 = vunpack.c.l.b16 %v302
        %v957 = vunpack.c.h.b16 %v302
        %v958 = vunpack.c.l.b16 %v303
        %v959 = vunpack.c.h.b16 %v303
        %v960 = vpack.c.b16 %v952, %v952
        %v961 = vpack.c.b16 %v953, %v953
        %v962 = vpack.c.b16 %v954, %v954
        %v963 = vpack.c.b16 %v955, %v955
        %v964 = vpack.c.b16 %v956, %v956
        %v965 = vpack.c.b16 %v957, %v957
        %v966 = vpack.c.b16 %v958, %v958
        %v967 = vpack.c.b16 %v959, %v959
        %v1488 = vunpack.c.l.b16 %v436
        %v1489 = vunpack.c.h.b16 %v436
        %v1490 = vunpack.c.l.b16 %v437
        %v1491 = vunpack.c.h.b16 %v437
        %v1492 = vunpack.c.l.b16 %v438
        %v1493 = vunpack.c.h.b16 %v438
        %v1494 = vunpack.c.l.b16 %v439
        %v1495 = vunpack.c.h.b16 %v439
        %v1496 = vunpack.c.l.b16 %v440
        %v1497 = vunpack.c.h.b16 %v440
        %v1498 = vunpack.c.l.b16 %v441
        %v1499 = vunpack.c.h.b16 %v441
        %v1500 = vunpack.c.l.b16 %v442
        %v1501 = vunpack.c.h.b16 %v442
        %v1502 = vunpack.c.l.b16 %v443
        %v1503 = vunpack.c.h.b16 %v443
        %v1504 = vunpack.c.l.b16 %v444
        %v1505 = vunpack.c.h.b16 %v444
        %v1506 = vunpack.c.l.b16 %v445
        %v1507 = vunpack.c.h.b16 %v445
        %v1508 = vunpack.c.l.b16 %v446
        %v1509 = vunpack.c.h.b16 %v446
        %v1510 = vunpack.c.l.b16 %v447
        %v1511 = vunpack.c.h.b16 %v447
        %v1512 = vunpack.c.l.b16 %v448
        %v1513 = vunpack.c.h.b16 %v448
        %v1514 = vunpack.c.l.b16 %v449
        %v1515 = vunpack.c.h.b16 %v449
        %v1516 = vunpack.c.l.b16 %v450
        %v1517 = vunpack.c.h.b16 %v450
        %v1518 = vunpack.c.l.b16 %v451
        %v1519 = vunpack.c.h.b16 %v451
        %v1520 = vunpack.c.l.b16 %v452
        %v1521 = vunpack.c.h.b16 %v452
        %v1522 = vunpack.c.l.b16 %v453
        %v1523 = vunpack.c.h.b16 %v453
        %v1524 = vunpack.c.l.b16 %v454
        %v1525 = vunpack.c.h.b16 %v454
        %v1526 = vunpack.c.l.b16 %v455
        %v1527 = vunpack.c.h.b16 %v455
        %v1528 = vunpack.c.l.b16 %v456
        %v1529 = vunpack.c.h.b16 %v456
        %v1530 = vunpack.c.l.b16 %v457
        %v1531 = vunpack.c.h.b16 %v457
        %v1532 = vunpack.c.l.b16 %v458
        %v1533 = vunpack.c.h.b16 %v458
        %v1534 = vunpack.c.l.b16 %v459
        %v1535 = vunpack.c.h.b16 %v459
        %v1536 = vunpack.c.l.b16 %v460
        %v1537 = vunpack.c.h.b16 %v460
        %v1538 = vunpack.c.l.b16 %v461
        %v1539 = vunpack.c.h.b16 %v461
        %v1540 = vunpack.c.l.b16 %v462
        %v1541 = vunpack.c.h.b16 %v462
        %v1542 = vunpack.c.l.b16 %v463
        %v1543 = vunpack.c.h.b16 %v463
        %v1544 = vunpack.c.l.b16 %v464
        %v1545 = vunpack.c.h.b16 %v464
        %v1546 = vunpack.c.l.b16 %v465
        %v1547 = vunpack.c.h.b16 %v465
        %v1548 = vunpack.c.l.b16 %v466
        %v1549 = vunpack.c.h.b16 %v466
        %v1550 = vunpack.c.l.b16 %v467
        %v1551 = vunpack.c.h.b16 %v467
        %v1552 = vunpack.c.l.b16 %v468
        %v1553 = vunpack.c.h.b16 %v468
        %v1554 = vunpack.c.l.b16 %v469
        %v1555 = vunpack.c.h.b16 %v469
        %v1556 = vunpack.c.l.b16 %v470
        %v1557 = vunpack.c.h.b16 %v470
        %v1558 = vunpack.c.l.b16 %v471
        %v1559 = vunpack.c.h.b16 %v471
        %v1560 = vunpack.c.l.b16 %v472
        %v1561 = vunpack.c.h.b16 %v472
        %v1562 = vunpack.c.l.b16 %v473
        %v1563 = vunpack.c.h.b16 %v473
        %v1564 = vunpack.c.l.b16 %v474
        %v1565 = vunpack.c.h.b16 %v474
        %v1566 = vunpack.c.l.b16 %v475
        %v1567 = vunpack.c.h.b16 %v475
        %v1568 = vunpack.c.l.b16 %v476
        %v1569 = vunpack.c.h.b16 %v476
        %v1570 = vunpack.c.l.b16 %v477
        %v1571 = vunpack.c.h.b16 %v477
        %v1572 = vunpack.c.l.b16 %v478
        %v1573 = vunpack.c.h.b16 %v478
        %v1574 = vunpack.c.l.b16 %v479
        %v1575 = vunpack.c.h.b16 %v479
        %v1576 = vunpack.c.l.b16 %v480
        %v1577 = vunpack.c.h.b16 %v480
        %v1578 = vunpack.c.l.b16 %v481
        %v1579 = vunpack.c.h.b16 %v481
        %v1580 = vunpack.c.l.b16 %v482
        %v1581 = vunpack.c.h.b16 %v482
        %v1582 = vunpack.c.l.b16 %v483
        %v1583 = vunpack.c.h.b16 %v483
        %v1584 = vunpack.c.l.b16 %v484
        %v1585 = vunpack.c.h.b16 %v484
        %v1586 = vunpack.c.l.b16 %v485
        %v1587 = vunpack.c.h.b16 %v485
        %v1588 = vunpack.c.l.b16 %v486
        %v1589 = vunpack.c.h.b16 %v486
        %v1590 = vunpack.c.l.b16 %v487
        %v1591 = vunpack.c.h.b16 %v487
        %v1592 = vunpack.c.l.b16 %v488
        %v1593 = vunpack.c.h.b16 %v488
        %v1594 = vunpack.c.l.b16 %v489
        %v1595 = vunpack.c.h.b16 %v489
        %v1596 = vunpack.c.l.b16 %v490
        %v1597 = vunpack.c.h.b16 %v490
        %v1598 = vunpack.c.l.b16 %v491
        %v1599 = vunpack.c.h.b16 %v491
        %v1600 = vunpack.c.l.b16 %v492
        %v1601 = vunpack.c.h.b16 %v492
        %v1602 = vunpack.c.l.b16 %v493
        %v1603 = vunpack.c.h.b16 %v493
        %v1604 = vunpack.c.l.b16 %v494
        %v1605 = vunpack.c.h.b16 %v494
        %v1606 = vunpack.c.l.b16 %v495
        %v1607 = vunpack.c.h.b16 %v495
        %v1608 = vunpack.c.l.b16 %v496
        %v1609 = vunpack.c.h.b16 %v496
        %v1610 = vunpack.c.l.b16 %v497
        %v1611 = vunpack.c.h.b16 %v497
        %v1612 = vunpack.c.l.b16 %v498
        %v1613 = vunpack.c.h.b16 %v498
        %v1614 = vunpack.c.l.b16 %v499
        %v1615 = vunpack.c.h.b16 %v499
        %v1616 = vunpack.c.l.b16 %v500
        %v1617 = vunpack.c.h.b16 %v500
        %v1618 = vunpack.c.l.b16 %v501
        %v1619 = vunpack.c.h.b16 %v501
        %v1620 = vunpack.c.l.b16 %v502
        %v1621 = vunpack.c.h.b16 %v502
        %v1622 = vunpack.c.l.b16 %v503
        %v1623 = vunpack.c.h.b16 %v503
        %v1624 = vunpack.c.l.b16 %v504
        %v1625 = vunpack.c.h.b16 %v504
        %v1626 = vunpack.c.l.b16 %v505
        %v1627 = vunpack.c.h.b16 %v505
        %v1628 = vunpack.c.l.b16 %v506
        %v1629 = vunpack.c.h.b16 %v506
        %v1630 = vunpack.c.l.b16 %v507
        %v1631 = vunpack.c.h.b16 %v507
        %v1632 = vunpack.c.l.b16 %v508
        %v1633 = vunpack.c.h.b16 %v508
        %v1634 = vunpack.c.l.b16 %v509
        %v1635 = vunpack.c.h.b16 %v509
        %v1636 = vunpack.c.l.b16 %v510
        %v1637 = vunpack.c.h.b16 %v510
        %v1638 = vunpack.c.l.b16 %v511
        %v1639 = vunpack.c.h.b16 %v511
        %v1640 = vunpack.c.l.b16 %v512
        %v1641 = vunpack.c.h.b16 %v512
        %v1642 = vunpack.c.l.b16 %v513
        %v1643 = vunpack.c.h.b16 %v513
        %v1644 = vunpack.c.l.b16 %v514
        %v1645 = vunpack.c.h.b16 %v514
        %v1646 = vunpack.c.l.b16 %v515
        %v1647 = vunpack.c.h.b16 %v515
        %v1648 = vunpack.c.l.b16 %v516
        %v1649 = vunpack.c.h.b16 %v516
        %v1650 = vunpack.c.l.b16 %v517
        %v1651 = vunpack.c.h.b16 %v517
        %v1652 = vunpack.c.l.b16 %v518
        %v1653 = vunpack.c.h.b16 %v518
        %v1654 = vunpack.c.l.b16 %v519
        %v1655 = vunpack.c.h.b16 %v519
        %v1656 = vunpack.c.l.b16 %v520
        %v1657 = vunpack.c.h.b16 %v520
        %v1658 = vunpack.c.l.b16 %v521
        %v1659 = vunpack.c.h.b16 %v521
        %v1660 = vunpack.c.l.b16 %v522
        %v1661 = vunpack.c.h.b16 %v522
        %v1662 = vunpack.c.l.b16 %v523
        %v1663 = vunpack.c.h.b16 %v523
        %v1664 = vunpack.c.l.b16 %v524
        %v1665 = vunpack.c.h.b16 %v524
        %v1666 = vunpack.c.l.b16 %v525
        %v1667 = vunpack.c.h.b16 %v525
        %v1668 = vunpack.c.l.b16 %v526
        %v1669 = vunpack.c.h.b16 %v526
        %v1670 = vunpack.c.l.b16 %v527
        %v1671 = vunpack.c.h.b16 %v527
        %v1672 = vunpack.c.l.b16 %v528
        %v1673 = vunpack.c.h.b16 %v528
        %v1674 = vunpack.c.l.b16 %v529
        %v1675 = vunpack.c.h.b16 %v529
        %v1676 = vunpack.c.l.b16 %v530
        %v1677 = vunpack.c.h.b16 %v530
        %v1678 = vunpack.c.l.b16 %v531
        %v1679 = vunpack.c.h.b16 %v531
        %v1680 = vunpack.c.l.b16 %v532
        %v1681 = vunpack.c.h.b16 %v532
        %v1682 = vunpack.c.l.b16 %v533
        %v1683 = vunpack.c.h.b16 %v533
        %v1684 = vunpack.c.l.b16 %v534
        %v1685 = vunpack.c.h.b16 %v534
        %v1686 = vunpack.c.l.b16 %v535
        %v1687 = vunpack.c.h.b16 %v535
        %v1688 = vunpack.c.l.b16 %v536
        %v1689 = vunpack.c.h.b16 %v536
        %v1690 = vunpack.c.l.b16 %v537
        %v1691 = vunpack.c.h.b16 %v537
        %v1692 = vunpack.c.l.b16 %v538
        %v1693 = vunpack.c.h.b16 %v538
        %v1694 = vunpack.c.l.b16 %v539
        %v1695 = vunpack.c.h.b16 %v539
        %v1696 = vunpack.c.l.b16 %v540
        %v1697 = vunpack.c.h.b16 %v540
        %v1698 = vunpack.c.l.b16 %v541
        %v1699 = vunpack.c.h.b16 %v541
        %v1700 = vunpack.c.l.b16 %v542
        %v1701 = vunpack.c.h.b16 %v542
        %v1702 = vunpack.c.l.b16 %v543
        %v1703 = vunpack.c.h.b16 %v543
        %v1704 = vunpack.c.l.b16 %v544
        %v1705 = vunpack.c.h.b16 %v544
        %v1706 = vunpack.c.l.b16 %v545
        %v1707 = vunpack.c.h.b16 %v545
        %v1708 = vunpack.c.l.b16 %v546
        %v1709 = vunpack.c.h.b16 %v546
        %v1710 = vunpack.c.l.b16 %v547
        %v1711 = vunpack.c.h.b16 %v547
        %v1712 = vunpack.c.l.b16 %v548
        %v1713 = vunpack.c.h.b16 %v548
        %v1714 = vunpack.c.l.b16 %v549
        %v1715 = vunpack.c.h.b16 %v549
        %v1716 = vunpack.c.l.b16 %v550
        %v1717 = vunpack.c.h.b16 %v550
        %v1718 = vunpack.c.l.b16 %v551
        %v1719 = vunpack.c.h.b16 %v551
        %v1720 = vunpack.c.l.b16 %v552
        %v1721 = vunpack.c.h.b16 %v552
        %v1722 = vunpack.c.l.b16 %v553
        %v1723 = vunpack.c.h.b16 %v553
        %v1724 = vunpack.c.l.b16 %v554
        %v1725 = vunpack.c.h.b16 %v554
        %v1726 = vunpack.c.l.b16 %v555
        %v1727 = vunpack.c.h.b16 %v555
        %v1728 = vunpack.c.l.b16 %v556
        %v1729 = vunpack.c.h.b16 %v556
        %v1730 = vunpack.c.l.b16 %v557
        %v1731 = vunpack.c.h.b16 %v557
        %v1732 = vunpack.c.l.b16 %v558
        %v1733 = vunpack.c.h.b16 %v558
        %v1734 = vunpack.c.l.b16 %v559
        %v1735 = vunpack.c.h.b16 %v559
        %v1736 = vunpack.c.l.b16 %v560
        %v1737 = vunpack.c.h.b16 %v560
        %v1738 = vunpack.c.l.b16 %v561
        %v1739 = vunpack.c.h.b16 %v561
        %v1740 = vunpack.c.l.b16 %v562
        %v1741 = vunpack.c.h.b16 %v562
        %v1742 = vunpack.c.l.b16 %v563
        %v1743 = vunpack.c.h.b16 %v563
        %v1744 = vunpack.c.l.b16 %v564
        %v1745 = vunpack.c.h.b16 %v564
        %v1746 = vunpack.c.l.b16 %v565
        %v1747 = vunpack.c.h.b16 %v565
        %v1748 = vunpack.c.l.b16 %v566
        %v1749 = vunpack.c.h.b16 %v566
        %v1750 = vunpack.c.l.b16 %v567
        %v1751 = vunpack.c.h.b16 %v567
        %v1752 = vunpack.c.l.b16 %v568
        %v1753 = vunpack.c.h.b16 %v568
        %v1754 = vunpack.c.l.b16 %v569
        %v1755 = vunpack.c.h.b16 %v569
        %v1756 = vunpack.c.l.b16 %v570
        %v1757 = vunpack.c.h.b16 %v570
        %v1758 = vunpack.c.l.b16 %v571
        %v1759 = vunpack.c.h.b16 %v571
        %v1760 = vunpack.c.l.b16 %v572
        %v1761 = vunpack.c.h.b16 %v572
        %v1762 = vunpack.c.l.b16 %v573
        %v1763 = vunpack.c.h.b16 %v573
        %v1764 = vunpack.c.l.b16 %v574
        %v1765 = vunpack.c.h.b16 %v574
        %v1766 = vunpack.c.l.b16 %v575
        %v1767 = vunpack.c.h.b16 %v575
        %v1768 = vunpack.c.l.b16 %v576
        %v1769 = vunpack.c.h.b16 %v576
        %v1770 = vunpack.c.l.b16 %v577
        %v1771 = vunpack.c.h.b16 %v577
        %v1772 = vunpack.c.l.b16 %v578
        %v1773 = vunpack.c.h.b16 %v578
        %v1774 = vunpack.c.l.b16 %v579
        %v1775 = vunpack.c.h.b16 %v579
        %v1776 = vunpack.c.l.b16 %v580
        %v1777 = vunpack.c.h.b16 %v580
        %v1778 = vunpack.c.l.b16 %v581
        %v1779 = vunpack.c.h.b16 %v581
        %v1780 = vunpack.c.l.b16 %v582
        %v1781 = vunpack.c.h.b16 %v582
        %v1782 = vunpack.c.l.b16 %v583
        %v1783 = vunpack.c.h.b16 %v583
        %v1784 = vunpack.c.l.b16 %v584
        %v1785 = vunpack.c.h.b16 %v584
        %v1786 = vunpack.c.l.b16 %v585
        %v1787 = vunpack.c.h.b16 %v585
        %v1788 = vunpack.c.l.b16 %v586
        %v1789 = vunpack.c.h.b16 %v586
        %v1790 = vunpack.c.l.b16 %v587
        %v1791 = vunpack.c.h.b16 %v587
        %v1792 = vunpack.c.l.b16 %v588
        %v1793 = vunpack.c.h.b16 %v588
        %v1794 = vunpack.c.l.b16 %v589
        %v1795 = vunpack.c.h.b16 %v589
        %v1796 = vunpack.c.l.b16 %v590
        %v1797 = vunpack.c.h.b16 %v590
        %v1798 = vunpack.c.l.b16 %v591
        %v1799 = vunpack.c.h.b16 %v591
        %v1800 = vunpack.c.l.b16 %v592
        %v1801 = vunpack.c.h.b16 %v592
        %v1802 = vunpack.c.l.b16 %v593
        %v1803 = vunpack.c.h.b16 %v593
        %v1804 = vunpack.c.l.b16 %v594
        %v1805 = vunpack.c.h.b16 %v594
        %v1806 = vunpack.c.l.b16 %v595
        %v1807 = vunpack.c.h.b16 %v595
        %v1808 = vunpack.c.l.b16 %v596
        %v1809 = vunpack.c.h.b16 %v596
        %v1810 = vunpack.c.l.b16 %v597
        %v1811 = vunpack.c.h.b16 %v597
        %v1812 = vunpack.c.l.b16 %v598
        %v1813 = vunpack.c.h.b16 %v598
        %v1814 = vunpack.c.l.b16 %v599
        %v1815 = vunpack.c.h.b16 %v599
        %v1816 = vunpack.c.l.b16 %v600
        %v1817 = vunpack.c.h.b16 %v600
        %v1818 = vunpack.c.l.b16 %v601
        %v1819 = vunpack.c.h.b16 %v601
        %v1820 = vunpack.c.l.b16 %v602
        %v1821 = vunpack.c.h.b16 %v602
        %v1822 = vunpack.c.l.b16 %v603
        %v1823 = vunpack.c.h.b16 %v603
        %v1824 = vunpack.c.l.b16 %v604
        %v1825 = vunpack.c.h.b16 %v604
        %v1826 = vunpack.c.l.b16 %v605
        %v1827 = vunpack.c.h.b16 %v605
        %v1828 = vunpack.c.l.b16 %v606
        %v1829 = vunpack.c.h.b16 %v606
        %v1830 = vunpack.c.l.b16 %v607
        %v1831 = vunpack.c.h.b16 %v607
        %v1832 = vunpack.c.l.b16 %v608
        %v1833 = vunpack.c.h.b16 %v608
        %v1834 = vunpack.c.l.b16 %v609
        %v1835 = vunpack.c.h.b16 %v609
        %v1836 = vunpack.c.l.b16 %v610
        %v1837 = vunpack.c.h.b16 %v610
        %v1838 = vunpack.c.l.b16 %v611
        %v1839 = vunpack.c.h.b16 %v611
        %v1840 = vunpack.c.l.b16 %v612
        %v1841 = vunpack.c.h.b16 %v612
        %v1842 = vunpack.c.l.b16 %v613
        %v1843 = vunpack.c.h.b16 %v613
        %v1844 = vunpack.c.l.b16 %v614
        %v1845 = vunpack.c.h.b16 %v614
        %v1846 = vunpack.c.l.b16 %v615
        %v1847 = vunpack.c.h.b16 %v615
        %v1848 = vunpack.c.l.b16 %v616
        %v1849 = vunpack.c.h.b16 %v616
        %v1850 = vunpack.c.l.b16 %v617
        %v1851 = vunpack.c.h.b16 %v617
        %v1852 = vunpack.c.l.b16 %v618
        %v1853 = vunpack.c.h.b16 %v618
        %v1854 = vunpack.c.l.b16 %v619
        %v1855 = vunpack.c.h.b16 %v619
        %v1856 = vunpack.c.l.b16 %v620
        %v1857 = vunpack.c.h.b16 %v620
        %v1858 = vunpack.c.l.b16 %v621
        %v1859 = vunpack.c.h.b16 %v621
        %v1860 = vunpack.c.l.b16 %v622
        %v1861 = vunpack.c.h.b16 %v622
        %v1862 = vunpack.c.l.b16 %v623
        %v1863 = vunpack.c.h.b16 %v623
        %v1864 = vunpack.c.l.b16 %v624
        %v1865 = vunpack.c.h.b16 %v624
        %v1866 = vunpack.c.l.b16 %v625
        %v1867 = vunpack.c.h.b16 %v625
        %v1868 = vunpack.c.l.b16 %v626
        %v1869 = vunpack.c.h.b16 %v626
        %v1870 = vunpack.c.l.b16 %v627
        %v1871 = vunpack.c.h.b16 %v627
        %v1872 = vunpack.c.l.b16 %v628
        %v1873 = vunpack.c.h.b16 %v628
        %v1874 = vunpack.c.l.b16 %v629
        %v1875 = vunpack.c.h.b16 %v629
        %v1876 = vunpack.c.l.b16 %v630
        %v1877 = vunpack.c.h.b16 %v630
        %v1878 = vunpack.c.l.b16 %v631
        %v1879 = vunpack.c.h.b16 %v631
        %v1880 = vunpack.c.l.b16 %v632
        %v1881 = vunpack.c.h.b16 %v632
        %v1882 = vunpack.c.l.b16 %v633
        %v1883 = vunpack.c.h.b16 %v633
        %v1884 = vunpack.c.l.b16 %v634
        %v1885 = vunpack.c.h.b16 %v634
        %v1886 = vunpack.c.l.b16 %v635
        %v1887 = vunpack.c.h.b16 %v635
        %v1888 = vunpack.c.l.b16 %v636
        %v1889 = vunpack.c.h.b16 %v636
        %v1890 = vunpack.c.l.b16 %v637
        %v1891 = vunpack.c.h.b16 %v637
        %v1892 = vunpack.c.l.b16 %v638
        %v1893 = vunpack.c.h.b16 %v638
        %v1894 = vunpack.c.l.b16 %v639
        %v1895 = vunpack.c.h.b16 %v639
        %v1896 = vunpack.c.l.b16 %v640
        %v1897 = vunpack.c.h.b16 %v640
        %v1898 = vunpack.c.l.b16 %v641
        %v1899 = vunpack.c.h.b16 %v641
        %v1900 = vunpack.c.l.b16 %v642
        %v1901 = vunpack.c.h.b16 %v642
        %v1902 = vunpack.c.l.b16 %v643
        %v1903 = vunpack.c.h.b16 %v643
        %v1904 = vunpack.c.l.b16 %v644
        %v1905 = vunpack.c.h.b16 %v644
        %v1906 = vunpack.c.l.b16 %v645
        %v1907 = vunpack.c.h.b16 %v645
        %v1908 = vunpack.c.l.b16 %v646
        %v1909 = vunpack.c.h.b16 %v646
        %v1910 = vunpack.c.l.b16 %v647
        %v1911 = vunpack.c.h.b16 %v647
        %v1912 = vunpack.c.l.b16 %v648
        %v1913 = vunpack.c.h.b16 %v648
        %v1914 = vunpack.c.l.b16 %v649
        %v1915 = vunpack.c.h.b16 %v649
        %v1916 = vunpack.c.l.b16 %v650
        %v1917 = vunpack.c.h.b16 %v650
        %v1918 = vunpack.c.l.b16 %v651
        %v1919 = vunpack.c.h.b16 %v651
        %v1920 = vunpack.c.l.b16 %v652
        %v1921 = vunpack.c.h.b16 %v652
        %v1922 = vunpack.c.l.b16 %v653
        %v1923 = vunpack.c.h.b16 %v653
        %v1924 = vunpack.c.l.b16 %v654
        %v1925 = vunpack.c.h.b16 %v654
        %v1926 = vunpack.c.l.b16 %v655
        %v1927 = vunpack.c.h.b16 %v655
        %v1928 = vunpack.c.l.b16 %v656
        %v1929 = vunpack.c.h.b16 %v656
        %v1930 = vunpack.c.l.b16 %v657
        %v1931 = vunpack.c.h.b16 %v657
        %v1932 = vunpack.c.l.b16 %v658
        %v1933 = vunpack.c.h.b16 %v658
        %v1934 = vunpack.c.l.b16 %v659
        %v1935 = vunpack.c.h.b16 %v659
        %v1936 = vunpack.c.l.b16 %v660
        %v1937 = vunpack.c.h.b16 %v660
        %v1938 = vunpack.c.l.b16 %v661
        %v1939 = vunpack.c.h.b16 %v661
        %v1940 = vunpack.c.l.b16 %v662
        %v1941 = vunpack.c.h.b16 %v662
        %v1942 = vunpack.c.l.b16 %v663
        %v1943 = vunpack.c.h.b16 %v663
        %v1944 = vunpack.c.l.b16 %v664
        %v1945 = vunpack.c.h.b16 %v664
        %v1946 = vunpack.c.l.b16 %v665
        %v1947 = vunpack.c.h.b16 %v665
        %v1948 = vunpack.c.l.b16 %v666
        %v1949 = vunpack.c.h.b16 %v666
        %v1950 = vunpack.c.l.b16 %v667
        %v1951 = vunpack.c.h.b16 %v667
        %v1952 = vunpack.c.l.b16 %v668
        %v1953 = vunpack.c.h.b16 %v668
        %v1954 = vunpack.c.l.b16 %v669
        %v1955 = vunpack.c.h.b16 %v669
        %v1956 = vunpack.c.l.b16 %v670
        %v1957 = vunpack.c.h.b16 %v670
        %v1958 = vunpack.c.l.b16 %v671
        %v1959 = vunpack.c.h.b16 %v671
        %v1960 = vunpack.c.l.b16 %v672
        %v1961 = vunpack.c.h.b16 %v672
        %v1962 = vunpack.c.l.b16 %v673
        %v1963 = vunpack.c.h.b16 %v673
        %v1964 = vunpack.c.l.b16 %v674
        %v1965 = vunpack.c.h.b16 %v674
        %v1966 = vunpack.c.l.b16 %v675
        %v1967 = vunpack.c.h.b16 %v675
        %v1968 = vunpack.c.l.b16 %v676
        %v1969 = vunpack.c.h.b16 %v676
        %v1970 = vunpack.c.l.b16 %v677
        %v1971 = vunpack.c.h.b16 %v677
        %v1972 = vunpack.c.l.b16 %v678
        %v1973 = vunpack.c.h.b16 %v678
        %v1974 = vunpack.c.l.b16 %v679
        %v1975 = vunpack.c.h.b16 %v679
        %v1976 = vunpack.c.l.b16 %v680
        %v1977 = vunpack.c.h.b16 %v680
        %v1978 = vunpack.c.l.b16 %v681
        %v1979 = vunpack.c.h.b16 %v681
        %v1980 = vunpack.c.l.b16 %v682
        %v1981 = vunpack.c.h.b16 %v682
        %v1982 = vunpack.c.l.b16 %v683
        %v1983 = vunpack.c.h.b16 %v683
        %v1984 = vunpack.c.l.b16 %v684
        %v1985 = vunpack.c.h.b16 %v684
        %v1986 = vunpack.c.l.b16 %v685
        %v1987 = vunpack.c.h.b16 %v685
        %v1988 = vunpack.c.l.b16 %v686
        %v1989 = vunpack.c.h.b16 %v686
        %v1990 = vunpack.c.l.b16 %v687
        %v1991 = vunpack.c.h.b16 %v687
        %v1992 = vunpack.c.l.b16 %v688
        %v1993 = vunpack.c.h.b16 %v688
        %v1994 = vunpack.c.l.b16 %v689
        %v1995 = vunpack.c.h.b16 %v689
        %v1996 = vunpack.c.l.b16 %v690
        %v1997 = vunpack.c.h.b16 %v690
        %v1998 = vunpack.c.l.b16 %v691
        %v1999 = vunpack.c.h.b16 %v691
        %v2000 = vunpack.c.l.b16 %v692
        %v2001 = vunpack.c.h.b16 %v692
        %v2002 = vunpack.c.l.b16 %v693
        %v2003 = vunpack.c.h.b16 %v693
        %v2004 = vunpack.c.l.b16 %v694
        %v2005 = vunpack.c.h.b16 %v694
        %v2006 = vunpack.c.l.b16 %v695
        %v2007 = vunpack.c.h.b16 %v695
        %v2008 = vunpack.c.l.b16 %v696
        %v2009 = vunpack.c.h.b16 %v696
        %v2010 = vunpack.c.l.b16 %v697
        %v2011 = vunpack.c.h.b16 %v697
        %v2012 = vunpack.c.l.b16 %v698
        %v2013 = vunpack.c.h.b16 %v698
        %v2014 = vunpack.c.l.b16 %v699
        %v2015 = vunpack.c.h.b16 %v699
        %v2016 = vunpack.c.l.b16 %v700
        %v2017 = vunpack.c.h.b16 %v700
        %v2018 = vunpack.c.l.b16 %v701
        %v2019 = vunpack.c.h.b16 %v701
        %v2020 = vunpack.c.l.b16 %v702
        %v2021 = vunpack.c.h.b16 %v702
        %v2022 = vunpack.c.l.b16 %v703
        %v2023 = vunpack.c.h.b16 %v703
        %v2024 = vunpack.c.l.b16 %v704
        %v2025 = vunpack.c.h.b16 %v704
        %v2026 = vunpack.c.l.b16 %v705
        %v2027 = vunpack.c.h.b16 %v705
        %v2028 = vunpack.c.l.b16 %v706
        %v2029 = vunpack.c.h.b16 %v706
        %v2030 = vunpack.c.l.b16 %v707
        %v2031 = vunpack.c.h.b16 %v707
        %v2032 = vunpack.c.l.b16 %v708
        %v2033 = vunpack.c.h.b16 %v708
        %v2034 = vunpack.c.l.b16 %v709
        %v2035 = vunpack.c.h.b16 %v709
        %v2036 = vunpack.c.l.b16 %v710
        %v2037 = vunpack.c.h.b16 %v710
        %v2038 = vunpack.c.l.b16 %v711
        %v2039 = vunpack.c.h.b16 %v711
        %v2040 = vunpack.c.l.b16 %v712
        %v2041 = vunpack.c.h.b16 %v712
        %v2042 = vunpack.c.l.b16 %v713
        %v2043 = vunpack.c.h.b16 %v713
        %v2044 = vunpack.c.l.b16 %v714
        %v2045 = vunpack.c.h.b16 %v714
        %v2046 = vunpack.c.l.b16 %v715
        %v2047 = vunpack.c.h.b16 %v715
        %v2048 = vunpack.c.l.b16 %v716
        %v2049 = vunpack.c.h.b16 %v716
        %v2050 = vunpack.c.l.b16 %v717
        %v2051 = vunpack.c.h.b16 %v717
        %v2052 = vunpack.c.l.b16 %v718
        %v2053 = vunpack.c.h.b16 %v718
        %v2054 = vunpack.c.l.b16 %v719
        %v2055 = vunpack.c.h.b16 %v719
        %v2056 = vunpack.c.l.b16 %v720
        %v2057 = vunpack.c.h.b16 %v720
        %v2058 = vunpack.c.l.b16 %v721
        %v2059 = vunpack.c.h.b16 %v721
        %v2060 = vunpack.c.l.b16 %v722
        %v2061 = vunpack.c.h.b16 %v722
        %v2062 = vunpack.c.l.b16 %v723
        %v2063 = vunpack.c.h.b16 %v723
        %v2064 = vunpack.c.l.b16 %v724
        %v2065 = vunpack.c.h.b16 %v724
        %v2066 = vunpack.c.l.b16 %v725
        %v2067 = vunpack.c.h.b16 %v725
        %v2068 = vunpack.c.l.b16 %v726
        %v2069 = vunpack.c.h.b16 %v726
        %v2070 = vunpack.c.l.b16 %v727
        %v2071 = vunpack.c.h.b16 %v727
        %v2072 = vunpack.c.l.b16 %v728
        %v2073 = vunpack.c.h.b16 %v728
        %v2074 = vunpack.c.l.b16 %v729
        %v2075 = vunpack.c.h.b16 %v729
        %v2076 = vunpack.c.l.b16 %v730
        %v2077 = vunpack.c.h.b16 %v730
        %v2078 = vunpack.c.l.b16 %v731
        %v2079 = vunpack.c.h.b16 %v731
        %v2080 = vunpack.c.l.b16 %v732
        %v2081 = vunpack.c.h.b16 %v732
        %v2082 = vunpack.c.l.b16 %v733
        %v2083 = vunpack.c.h.b16 %v733
        %v2084 = vunpack.c.l.b16 %v734
        %v2085 = vunpack.c.h.b16 %v734
        %v2086 = vunpack.c.l.b16 %v735
        %v2087 = vunpack.c.h.b16 %v735
        %v2088 = vunpack.c.l.b16 %v736
        %v2089 = vunpack.c.h.b16 %v736
        %v2090 = vunpack.c.l.b16 %v737
        %v2091 = vunpack.c.h.b16 %v737
        %v2092 = vunpack.c.l.b16 %v738
        %v2093 = vunpack.c.h.b16 %v738
        %v2094 = vunpack.c.l.b16 %v739
        %v2095 = vunpack.c.h.b16 %v739
        %v2096 = vunpack.c.l.b16 %v740
        %v2097 = vunpack.c.h.b16 %v740
        %v2098 = vunpack.c.l.b16 %v741
        %v2099 = vunpack.c.h.b16 %v741
        %v2100 = vunpack.c.l.b16 %v742
        %v2101 = vunpack.c.h.b16 %v742
        %v2102 = vunpack.c.l.b16 %v743
        %v2103 = vunpack.c.h.b16 %v743
        %v2104 = vunpack.c.l.b16 %v744
        %v2105 = vunpack.c.h.b16 %v744
        %v2106 = vunpack.c.l.b16 %v745
        %v2107 = vunpack.c.h.b16 %v745
        %v2108 = vunpack.c.l.b16 %v746
        %v2109 = vunpack.c.h.b16 %v746
        %v2110 = vunpack.c.l.b16 %v747
        %v2111 = vunpack.c.h.b16 %v747
        %v2112 = vunpack.c.l.b16 %v748
        %v2113 = vunpack.c.h.b16 %v748
        %v2114 = vunpack.c.l.b16 %v749
        %v2115 = vunpack.c.h.b16 %v749
        %v2116 = vunpack.c.l.b16 %v750
        %v2117 = vunpack.c.h.b16 %v750
        %v2118 = vunpack.c.l.b16 %v751
        %v2119 = vunpack.c.h.b16 %v751
        %v2120 = vunpack.c.l.b16 %v752
        %v2121 = vunpack.c.h.b16 %v752
        %v2122 = vunpack.c.l.b16 %v753
        %v2123 = vunpack.c.h.b16 %v753
        %v2124 = vunpack.c.l.b16 %v754
        %v2125 = vunpack.c.h.b16 %v754
        %v2126 = vunpack.c.l.b16 %v755
        %v2127 = vunpack.c.h.b16 %v755
        %v2128 = vunpack.c.l.b16 %v756
        %v2129 = vunpack.c.h.b16 %v756
        %v2130 = vunpack.c.l.b16 %v757
        %v2131 = vunpack.c.h.b16 %v757
        %v2132 = vunpack.c.l.b16 %v758
        %v2133 = vunpack.c.h.b16 %v758
        %v2134 = vunpack.c.l.b16 %v759
        %v2135 = vunpack.c.h.b16 %v759
        %v2136 = vunpack.c.l.b16 %v760
        %v2137 = vunpack.c.h.b16 %v760
        %v2138 = vunpack.c.l.b16 %v761
        %v2139 = vunpack.c.h.b16 %v761
        %v2140 = vunpack.c.l.b16 %v762
        %v2141 = vunpack.c.h.b16 %v762
        %v2142 = vunpack.c.l.b16 %v763
        %v2143 = vunpack.c.h.b16 %v763
        %v2144 = vunpack.c.l.b16 %v764
        %v2145 = vunpack.c.h.b16 %v764
        %v2146 = vunpack.c.l.b16 %v765
        %v2147 = vunpack.c.h.b16 %v765
        %v2148 = vunpack.c.l.b16 %v766
        %v2149 = vunpack.c.h.b16 %v766
        %v2150 = vunpack.c.l.b16 %v767
        %v2151 = vunpack.c.h.b16 %v767
        %v2152 = vunpack.c.l.b16 %v768
        %v2153 = vunpack.c.h.b16 %v768
        %v2154 = vunpack.c.l.b16 %v769
        %v2155 = vunpack.c.h.b16 %v769
        %v2156 = vunpack.c.l.b16 %v770
        %v2157 = vunpack.c.h.b16 %v770
        %v2158 = vunpack.c.l.b16 %v771
        %v2159 = vunpack.c.h.b16 %v771
        %v2160 = vunpack.c.l.b16 %v772
        %v2161 = vunpack.c.h.b16 %v772
        %v2162 = vunpack.c.l.b16 %v773
        %v2163 = vunpack.c.h.b16 %v773
        %v2164 = vunpack.c.l.b16 %v774
        %v2165 = vunpack.c.h.b16 %v774
        %v2166 = vunpack.c.l.b16 %v775
        %v2167 = vunpack.c.h.b16 %v775
        %v2168 = vunpack.c.l.b16 %v776
        %v2169 = vunpack.c.h.b16 %v776
        %v2170 = vunpack.c.l.b16 %v777
        %v2171 = vunpack.c.h.b16 %v777
        %v2172 = vunpack.c.l.b16 %v778
        %v2173 = vunpack.c.h.b16 %v778
        %v2174 = vunpack.c.l.b16 %v779
        %v2175 = vunpack.c.h.b16 %v779
        %v2176 = vunpack.c.l.b16 %v780
        %v2177 = vunpack.c.h.b16 %v780
        %v2178 = vunpack.c.l.b16 %v781
        %v2179 = vunpack.c.h.b16 %v781
        %v2180 = vunpack.c.l.b16 %v782
        %v2181 = vunpack.c.h.b16 %v782
        %v2182 = vunpack.c.l.b16 %v783
        %v2183 = vunpack.c.h.b16 %v783
        %v2184 = vunpack.c.l.b16 %v784
        %v2185 = vunpack.c.h.b16 %v784
        %v2186 = vunpack.c.l.b16 %v785
        %v2187 = vunpack.c.h.b16 %v785
        %v2188 = vunpack.c.l.b16 %v786
        %v2189 = vunpack.c.h.b16 %v786
        %v2190 = vunpack.c.l.b16 %v787
        %v2191 = vunpack.c.h.b16 %v787
        %v2192 = vunpack.c.l.b16 %v788
        %v2193 = vunpack.c.h.b16 %v788
        %v2194 = vunpack.c.l.b16 %v789
        %v2195 = vunpack.c.h.b16 %v789
        %v2196 = vunpack.c.l.b16 %v790
        %v2197 = vunpack.c.h.b16 %v790
        %v2198 = vunpack.c.l.b16 %v791
        %v2199 = vunpack.c.h.b16 %v791
        %v2200 = vunpack.c.l.b16 %v792
        %v2201 = vunpack.c.h.b16 %v792
        %v2202 = vunpack.c.l.b16 %v793
        %v2203 = vunpack.c.h.b16 %v793
        %v2204 = vunpack.c.l.b16 %v794
        %v2205 = vunpack.c.h.b16 %v794
        %v2206 = vunpack.c.l.b16 %v795
        %v2207 = vunpack.c.h.b16 %v795
        %v2208 = vunpack.c.l.b16 %v796
        %v2209 = vunpack.c.h.b16 %v796
        %v2210 = vunpack.c.l.b16 %v797
        %v2211 = vunpack.c.h.b16 %v797
        %v2212 = vunpack.c.l.b16 %v798
        %v2213 = vunpack.c.h.b16 %v798
        %v2214 = vunpack.c.l.b16 %v799
        %v2215 = vunpack.c.h.b16 %v799
        %v2216 = vunpack.c.l.b16 %v800
        %v2217 = vunpack.c.h.b16 %v800
        %v2218 = vunpack.c.l.b16 %v801
        %v2219 = vunpack.c.h.b16 %v801
        %v2220 = vunpack.c.l.b16 %v802
        %v2221 = vunpack.c.h.b16 %v802
        %v2222 = vunpack.c.l.b16 %v803
        %v2223 = vunpack.c.h.b16 %v803
        %v2224 = vunpack.c.l.b16 %v804
        %v2225 = vunpack.c.h.b16 %v804
        %v2226 = vunpack.c.l.b16 %v805
        %v2227 = vunpack.c.h.b16 %v805
        %v2228 = vunpack.c.l.b16 %v806
        %v2229 = vunpack.c.h.b16 %v806
        %v2230 = vunpack.c.l.b16 %v807
        %v2231 = vunpack.c.h.b16 %v807
        %v2232 = vunpack.c.l.b16 %v808
        %v2233 = vunpack.c.h.b16 %v808
        %v2234 = vunpack.c.l.b16 %v809
        %v2235 = vunpack.c.h.b16 %v809
        %v2236 = vunpack.c.l.b16 %v810
        %v2237 = vunpack.c.h.b16 %v810
        %v2238 = vunpack.c.l.b16 %v811
        %v2239 = vunpack.c.h.b16 %v811
        %v2240 = vunpack.c.l.b16 %v812
        %v2241 = vunpack.c.h.b16 %v812
        %v2242 = vunpack.c.l.b16 %v813
        %v2243 = vunpack.c.h.b16 %v813
        %v2244 = vunpack.c.l.b16 %v814
        %v2245 = vunpack.c.h.b16 %v814
        %v2246 = vunpack.c.l.b16 %v815
        %v2247 = vunpack.c.h.b16 %v815
        %v2248 = vunpack.c.l.b16 %v816
        %v2249 = vunpack.c.h.b16 %v816
        %v2250 = vunpack.c.l.b16 %v817
        %v2251 = vunpack.c.h.b16 %v817
        %v2252 = vunpack.c.l.b16 %v818
        %v2253 = vunpack.c.h.b16 %v818
        %v2254 = vunpack.c.l.b16 %v819
        %v2255 = vunpack.c.h.b16 %v819
        %v2256 = vunpack.c.l.b16 %v820
        %v2257 = vunpack.c.h.b16 %v820
        %v2258 = vunpack.c.l.b16 %v821
        %v2259 = vunpack.c.h.b16 %v821
        %v2260 = vunpack.c.l.b16 %v822
        %v2261 = vunpack.c.h.b16 %v822
        %v2262 = vunpack.c.l.b16 %v823
        %v2263 = vunpack.c.h.b16 %v823
        %v2264 = vunpack.c.l.b16 %v824
        %v2265 = vunpack.c.h.b16 %v824
        %v2266 = vunpack.c.l.b16 %v825
        %v2267 = vunpack.c.h.b16 %v825
        %v2268 = vunpack.c.l.b16 %v826
        %v2269 = vunpack.c.h.b16 %v826
        %v2270 = vunpack.c.l.b16 %v827
        %v2271 = vunpack.c.h.b16 %v827
        %v2272 = vunpack.c.l.b16 %v828
        %v2273 = vunpack.c.h.b16 %v828
        %v2274 = vunpack.c.l.b16 %v829
        %v2275 = vunpack.c.h.b16 %v829
        %v2276 = vunpack.c.l.b16 %v830
        %v2277 = vunpack.c.h.b16 %v830
        %v2278 = vunpack.c.l.b16 %v831
        %v2279 = vunpack.c.h.b16 %v831
        %v2280 = vunpack.c.l.b16 %v832
        %v2281 = vunpack.c.h.b16 %v832
        %v2282 = vunpack.c.l.b16 %v833
        %v2283 = vunpack.c.h.b16 %v833
        %v2284 = vunpack.c.l.b16 %v834
        %v2285 = vunpack.c.h.b16 %v834
        %v2286 = vunpack.c.l.b16 %v835
        %v2287 = vunpack.c.h.b16 %v835
        %v2288 = vunpack.c.l.b16 %v836
        %v2289 = vunpack.c.h.b16 %v836
        %v2290 = vunpack.c.l.b16 %v837
        %v2291 = vunpack.c.h.b16 %v837
        %v2292 = vunpack.c.l.b16 %v838
        %v2293 = vunpack.c.h.b16 %v838
        %v2294 = vunpack.c.l.b16 %v839
        %v2295 = vunpack.c.h.b16 %v839
        %v2296 = vunpack.c.l.b16 %v840
        %v2297 = vunpack.c.h.b16 %v840
        %v2298 = vunpack.c.l.b16 %v841
        %v2299 = vunpack.c.h.b16 %v841
        %v2300 = vunpack.c.l.b16 %v842
        %v2301 = vunpack.c.h.b16 %v842
        %v2302 = vunpack.c.l.b16 %v843
        %v2303 = vunpack.c.h.b16 %v843
        %v2304 = vunpack.c.l.b16 %v844
        %v2305 = vunpack.c.h.b16 %v844
        %v2306 = vunpack.c.l.b16 %v845
        %v2307 = vunpack.c.h.b16 %v845
        %v2308 = vunpack.c.l.b16 %v846
        %v2309 = vunpack.c.h.b16 %v846
        %v2310 = vunpack.c.l.b16 %v847
        %v2311 = vunpack.c.h.b16 %v847
        %v2312 = vunpack.c.l.b16 %v848
        %v2313 = vunpack.c.h.b16 %v848
        %v2314 = vunpack.c.l.b16 %v849
        %v2315 = vunpack.c.h.b16 %v849
        %v2316 = vunpack.c.l.b16 %v850
        %v2317 = vunpack.c.h.b16 %v850
        %v2318 = vunpack.c.l.b16 %v851
        %v2319 = vunpack.c.h.b16 %v851
        %v2320 = vunpack.c.l.b16 %v852
        %v2321 = vunpack.c.h.b16 %v852
        %v2322 = vunpack.c.l.b16 %v853
        %v2323 = vunpack.c.h.b16 %v853
        %v2324 = vunpack.c.l.b16 %v854
        %v2325 = vunpack.c.h.b16 %v854
        %v2326 = vunpack.c.l.b16 %v855
        %v2327 = vunpack.c.h.b16 %v855
        %v2328 = vunpack.c.l.b16 %v856
        %v2329 = vunpack.c.h.b16 %v856
        %v2330 = vunpack.c.l.b16 %v857
        %v2331 = vunpack.c.h.b16 %v857
        %v2332 = vunpack.c.l.b16 %v858
        %v2333 = vunpack.c.h.b16 %v858
        %v2334 = vunpack.c.l.b16 %v859
        %v2335 = vunpack.c.h.b16 %v859
        %v2336 = vunpack.c.l.b16 %v860
        %v2337 = vunpack.c.h.b16 %v860
        %v2338 = vunpack.c.l.b16 %v861
        %v2339 = vunpack.c.h.b16 %v861
        %v2340 = vunpack.c.l.b16 %v862
        %v2341 = vunpack.c.h.b16 %v862
        %v2342 = vunpack.c.l.b16 %v863
        %v2343 = vunpack.c.h.b16 %v863
        %v2344 = vunpack.c.l.b16 %v864
        %v2345 = vunpack.c.h.b16 %v864
        %v2346 = vunpack.c.l.b16 %v865
        %v2347 = vunpack.c.h.b16 %v865
        %v2348 = vunpack.c.l.b16 %v866
        %v2349 = vunpack.c.h.b16 %v866
        %v2350 = vunpack.c.l.b16 %v867
        %v2351 = vunpack.c.h.b16 %v867
        %v2352 = vunpack.c.l.b16 %v868
        %v2353 = vunpack.c.h.b16 %v868
        %v2354 = vunpack.c.l.b16 %v869
        %v2355 = vunpack.c.h.b16 %v869
        %v2356 = vunpack.c.l.b16 %v870
        %v2357 = vunpack.c.h.b16 %v870
        %v2358 = vunpack.c.l.b16 %v871
        %v2359 = vunpack.c.h.b16 %v871
        %v2360 = vunpack.c.l.b16 %v872
        %v2361 = vunpack.c.h.b16 %v872
        %v2362 = vunpack.c.l.b16 %v873
        %v2363 = vunpack.c.h.b16 %v873
        %v2364 = vunpack.c.l.b16 %v874
        %v2365 = vunpack.c.h.b16 %v874
        %v2366 = vunpack.c.l.b16 %v875
        %v2367 = vunpack.c.h.b16 %v875
        %v2368 = vunpack.c.l.b16 %v876
        %v2369 = vunpack.c.h.b16 %v876
        %v2370 = vunpack.c.l.b16 %v877
        %v2371 = vunpack.c.h.b16 %v877
        %v2372 = vunpack.c.l.b16 %v878
        %v2373 = vunpack.c.h.b16 %v878
        %v2374 = vunpack.c.l.b16 %v879
        %v2375 = vunpack.c.h.b16 %v879
        %v2376 = vunpack.c.l.b16 %v880
        %v2377 = vunpack.c.h.b16 %v880
        %v2378 = vunpack.c.l.b16 %v881
        %v2379 = vunpack.c.h.b16 %v881
        %v2380 = vunpack.c.l.b16 %v882
        %v2381 = vunpack.c.h.b16 %v882
        %v2382 = vunpack.c.l.b16 %v883
        %v2383 = vunpack.c.h.b16 %v883
        %v2384 = vunpack.c.l.b16 %v884
        %v2385 = vunpack.c.h.b16 %v884
        %v2386 = vunpack.c.l.b16 %v885
        %v2387 = vunpack.c.h.b16 %v885
        %v2388 = vunpack.c.l.b16 %v886
        %v2389 = vunpack.c.h.b16 %v886
        %v2390 = vunpack.c.l.b16 %v887
        %v2391 = vunpack.c.h.b16 %v887
        %v2392 = vunpack.c.l.b16 %v888
        %v2393 = vunpack.c.h.b16 %v888
        %v2394 = vunpack.c.l.b16 %v889
        %v2395 = vunpack.c.h.b16 %v889
        %v2396 = vunpack.c.l.b16 %v890
        %v2397 = vunpack.c.h.b16 %v890
        %v2398 = vunpack.c.l.b16 %v891
        %v2399 = vunpack.c.h.b16 %v891
        %v2400 = vunpack.c.l.b16 %v892
        %v2401 = vunpack.c.h.b16 %v892
        %v2402 = vunpack.c.l.b16 %v893
        %v2403 = vunpack.c.h.b16 %v893
        %v2404 = vunpack.c.l.b16 %v894
        %v2405 = vunpack.c.h.b16 %v894
        %v2406 = vunpack.c.l.b16 %v895
        %v2407 = vunpack.c.h.b16 %v895
        %v2408 = vunpack.c.l.b16 %v896
        %v2409 = vunpack.c.h.b16 %v896
        %v2410 = vunpack.c.l.b16 %v897
        %v2411 = vunpack.c.h.b16 %v897
        %v2412 = vunpack.c.l.b16 %v898
        %v2413 = vunpack.c.h.b16 %v898
        %v2414 = vunpack.c.l.b16 %v899
        %v2415 = vunpack.c.h.b16 %v899
        %v2416 = vunpack.c.l.b16 %v900
        %v2417 = vunpack.c.h.b16 %v900
        %v2418 = vunpack.c.l.b16 %v901
        %v2419 = vunpack.c.h.b16 %v901
        %v2420 = vunpack.c.l.b16 %v902
        %v2421 = vunpack.c.h.b16 %v902
        %v2422 = vunpack.c.l.b16 %v903
        %v2423 = vunpack.c.h.b16 %v903
        %v2424 = vunpack.c.l.b16 %v904
        %v2425 = vunpack.c.h.b16 %v904
        %v2426 = vunpack.c.l.b16 %v905
        %v2427 = vunpack.c.h.b16 %v905
        %v2428 = vunpack.c.l.b16 %v906
        %v2429 = vunpack.c.h.b16 %v906
        %v2430 = vunpack.c.l.b16 %v907
        %v2431 = vunpack.c.h.b16 %v907
        %v2432 = vunpack.c.l.b16 %v908
        %v2433 = vunpack.c.h.b16 %v908
        %v2434 = vunpack.c.l.b16 %v909
        %v2435 = vunpack.c.h.b16 %v909
        %v2436 = vunpack.c.l.b16 %v910
        %v2437 = vunpack.c.h.b16 %v910
        %v2438 = vunpack.c.l.b16 %v911
        %v2439 = vunpack.c.h.b16 %v911
        %v2440 = vunpack.c.l.b16 %v912
        %v2441 = vunpack.c.h.b16 %v912
        %v2442 = vunpack.c.l.b16 %v913
        %v2443 = vunpack.c.h.b16 %v913
        %v2444 = vunpack.c.l.b16 %v914
        %v2445 = vunpack.c.h.b16 %v914
        %v2446 = vunpack.c.l.b16 %v915
        %v2447 = vunpack.c.h.b16 %v915
        %v2448 = vunpack.c.l.b16 %v916
        %v2449 = vunpack.c.h.b16 %v916
        %v2450 = vunpack.c.l.b16 %v917
        %v2451 = vunpack.c.h.b16 %v917
        %v2452 = vunpack.c.l.b16 %v918
        %v2453 = vunpack.c.h.b16 %v918
        %v2454 = vunpack.c.l.b16 %v919
        %v2455 = vunpack.c.h.b16 %v919
        %v2456 = vunpack.c.l.b16 %v920
        %v2457 = vunpack.c.h.b16 %v920
        %v2458 = vunpack.c.l.b16 %v921
        %v2459 = vunpack.c.h.b16 %v921
        %v2460 = vunpack.c.l.b16 %v922
        %v2461 = vunpack.c.h.b16 %v922
        %v2462 = vunpack.c.l.b16 %v923
        %v2463 = vunpack.c.h.b16 %v923
        %v2464 = vunpack.c.l.b16 %v924
        %v2465 = vunpack.c.h.b16 %v924
        %v2466 = vunpack.c.l.b16 %v925
        %v2467 = vunpack.c.h.b16 %v925
        %v2468 = vunpack.c.l.b16 %v926
        %v2469 = vunpack.c.h.b16 %v926
        %v2470 = vunpack.c.l.b16 %v927
        %v2471 = vunpack.c.h.b16 %v927
        %v2472 = vunpack.c.l.b16 %v928
        %v2473 = vunpack.c.h.b16 %v928
        %v2474 = vunpack.c.l.b16 %v929
        %v2475 = vunpack.c.h.b16 %v929
        %v2476 = vunpack.c.l.b16 %v930
        %v2477 = vunpack.c.h.b16 %v930
        %v2478 = vunpack.c.l.b16 %v931
        %v2479 = vunpack.c.h.b16 %v931
        %v2480 = vunpack.c.l.b16 %v932
        %v2481 = vunpack.c.h.b16 %v932
        %v2482 = vunpack.c.l.b16 %v933
        %v2483 = vunpack.c.h.b16 %v933
        %v2484 = vunpack.c.l.b16 %v934
        %v2485 = vunpack.c.h.b16 %v934
        %v2486 = vunpack.c.l.b16 %v935
        %v2487 = vunpack.c.h.b16 %v935
        %v2488 = vunpack.c.l.b16 %v936
        %v2489 = vunpack.c.h.b16 %v936
        %v2490 = vunpack.c.l.b16 %v937
        %v2491 = vunpack.c.h.b16 %v937
        %v2492 = vunpack.c.l.b16 %v938
        %v2493 = vunpack.c.h.b16 %v938
        %v2494 = vunpack.c.l.b16 %v939
        %v2495 = vunpack.c.h.b16 %v939
        %v2496 = vunpack.c.l.b16 %v940
        %v2497 = vunpack.c.h.b16 %v940
        %v2498 = vunpack.c.l.b16 %v941
        %v2499 = vunpack.c.h.b16 %v941
        %v2500 = vunpack.c.l.b16 %v942
        %v2501 = vunpack.c.h.b16 %v942
        %v2502 = vunpack.c.l.b16 %v943
        %v2503 = vunpack.c.h.b16 %v943
        %v2504 = vunpack.c.l.b16 %v944
        %v2505 = vunpack.c.h.b16 %v944
        %v2506 = vunpack.c.l.b16 %v945
        %v2507 = vunpack.c.h.b16 %v945
        %v2508 = vunpack.c.l.b16 %v946
        %v2509 = vunpack.c.h.b16 %v946
        %v2510 = vunpack.c.l.b16 %v947
        %v2511 = vunpack.c.h.b16 %v947
        %v2512 = vpack.c.b16 %v1496, %v1488
        %v2513 = vpack.c.b16 %v1497, %v1489
        %v2514 = vpack.c.b16 %v1498, %v1490
        %v2515 = vpack.c.b16 %v1499, %v1491
        %v2516 = vpack.c.b16 %v1500, %v1492
        %v2517 = vpack.c.b16 %v1501, %v1493
        %v2518 = vpack.c.b16 %v1502, %v1494
        %v2519 = vpack.c.b16 %v1503, %v1495
        %v2520 = vpack.c.b16 %v1512, %v1504
        %v2521 = vpack.c.b16 %v1513, %v1505
        %v2522 = vpack.c.b16 %v1514, %v1506
        %v2523 = vpack.c.b16 %v1515, %v1507
        %v2524 = vpack.c.b16 %v1516, %v1508
        %v2525 = vpack.c.b16 %v1517, %v1509
        %v2526 = vpack.c.b16 %v1518, %v1510
        %v2527 = vpack.c.b16 %v1519, %v1511
        %v2528 = vpack.c.b16 %v1528, %v1520
        %v2529 = vpack.c.b16 %v1529, %v1521
        %v2530 = vpack.c.b16 %v1530, %v1522
        %v2531 = vpack.c.b16 %v1531, %v1523
        %v2532 = vpack.c.b16 %v1532, %v1524
        %v2533 = vpack.c.b16 %v1533, %v1525
        %v2534 = vpack.c.b16 %v1534, %v1526
        %v2535 = vpack.c.b16 %v1535, %v1527
        %v2536 = vpack.c.b16 %v1544, %v1536
        %v2537 = vpack.c.b16 %v1545, %v1537
        %v2538 = vpack.c.b16 %v1546, %v1538
        %v2539 = vpack.c.b16 %v1547, %v1539
        %v2540 = vpack.c.b16 %v1548, %v1540
        %v2541 = vpack.c.b16 %v1549, %v1541
        %v2542 = vpack.c.b16 %v1550, %v1542
        %v2543 = vpack.c.b16 %v1551, %v1543
        %v2544 = vpack.c.b16 %v1560, %v1552
        %v2545 = vpack.c.b16 %v1561, %v1553
        %v2546 = vpack.c.b16 %v1562, %v1554
        %v2547 = vpack.c.b16 %v1563, %v1555
        %v2548 = vpack.c.b16 %v1564, %v1556
        %v2549 = vpack.c.b16 %v1565, %v1557
        %v2550 = vpack.c.b16 %v1566, %v1558
        %v2551 = vpack.c.b16 %v1567, %v1559
        %v2552 = vpack.c.b16 %v1576, %v1568
        %v2553 = vpack.c.b16 %v1577, %v1569
        %v2554 = vpack.c.b16 %v1578, %v1570
        %v2555 = vpack.c.b16 %v1579, %v1571
        %v2556 = vpack.c.b16 %v1580, %v1572
        %v2557 = vpack.c.b16 %v1581, %v1573
        %v2558 = vpack.c.b16 %v1582, %v1574
        %v2559 = vpack.c.b16 %v1583, %v1575
        %v2560 = vpack.c.b16 %v1592, %v1584
        %v2561 = vpack.c.b16 %v1593, %v1585
        %v2562 = vpack.c.b16 %v1594, %v1586
        %v2563 = vpack.c.b16 %v1595, %v1587
        %v2564 = vpack.c.b16 %v1596, %v1588
        %v2565 = vpack.c.b16 %v1597, %v1589
        %v2566 = vpack.c.b16 %v1598, %v1590
        %v2567 = vpack.c.b16 %v1599, %v1591
        %v2568 = vpack.c.b16 %v1608, %v1600
        %v2569 = vpack.c.b16 %v1609, %v1601
        %v2570 = vpack.c.b16 %v1610, %v1602
        %v2571 = vpack.c.b16 %v1611, %v1603
        %v2572 = vpack.c.b16 %v1612, %v1604
        %v2573 = vpack.c.b16 %v1613, %v1605
        %v2574 = vpack.c.b16 %v1614, %v1606
        %v2575 = vpack.c.b16 %v1615, %v1607
        %v2576 = vpack.c.b16 %v1624, %v1616
        %v2577 = vpack.c.b16 %v1625, %v1617
        %v2578 = vpack.c.b16 %v1626, %v1618
        %v2579 = vpack.c.b16 %v1627, %v1619
        %v2580 = vpack.c.b16 %v1628, %v1620
        %v2581 = vpack.c.b16 %v1629, %v1621
        %v2582 = vpack.c.b16 %v1630, %v1622
        %v2583 = vpack.c.b16 %v1631, %v1623
        %v2584 = vpack.c.b16 %v1640, %v1632
        %v2585 = vpack.c.b16 %v1641, %v1633
        %v2586 = vpack.c.b16 %v1642, %v1634
        %v2587 = vpack.c.b16 %v1643, %v1635
        %v2588 = vpack.c.b16 %v1644, %v1636
        %v2589 = vpack.c.b16 %v1645, %v1637
        %v2590 = vpack.c.b16 %v1646, %v1638
        %v2591 = vpack.c.b16 %v1647, %v1639
        %v2592 = vpack.c.b16 %v1656, %v1648
        %v2593 = vpack.c.b16 %v1657, %v1649
        %v2594 = vpack.c.b16 %v1658, %v1650
        %v2595 = vpack.c.b16 %v1659, %v1651
        %v2596 = vpack.c.b16 %v1660, %v1652
        %v2597 = vpack.c.b16 %v1661, %v1653
        %v2598 = vpack.c.b16 %v1662, %v1654
        %v2599 = vpack.c.b16 %v1663, %v1655
        %v2600 = vpack.c.b16 %v1672, %v1664
        %v2601 = vpack.c.b16 %v1673, %v1665
        %v2602 = vpack.c.b16 %v1674, %v1666
        %v2603 = vpack.c.b16 %v1675, %v1667
        %v2604 = vpack.c.b16 %v1676, %v1668
        %v2605 = vpack.c.b16 %v1677, %v1669
        %v2606 = vpack.c.b16 %v1678, %v1670
        %v2607 = vpack.c.b16 %v1679, %v1671
        %v2608 = vpack.c.b16 %v1688, %v1680
        %v2609 = vpack.c.b16 %v1689, %v1681
        %v2610 = vpack.c.b16 %v1690, %v1682
        %v2611 = vpack.c.b16 %v1691, %v1683
        %v2612 = vpack.c.b16 %v1692, %v1684
        %v2613 = vpack.c.b16 %v1693, %v1685
        %v2614 = vpack.c.b16 %v1694, %v1686
        %v2615 = vpack.c.b16 %v1695, %v1687
        %v2616 = vpack.c.b16 %v1704, %v1696
        %v2617 = vpack.c.b16 %v1705, %v1697
        %v2618 = vpack.c.b16 %v1706, %v1698
        %v2619 = vpack.c.b16 %v1707, %v1699
        %v2620 = vpack.c.b16 %v1708, %v1700
        %v2621 = vpack.c.b16 %v1709, %v1701
        %v2622 = vpack.c.b16 %v1710, %v1702
        %v2623 = vpack.c.b16 %v1711, %v1703
        %v2624 = vpack.c.b16 %v1720, %v1712
        %v2625 = vpack.c.b16 %v1721, %v1713
        %v2626 = vpack.c.b16 %v1722, %v1714
        %v2627 = vpack.c.b16 %v1723, %v1715
        %v2628 = vpack.c.b16 %v1724, %v1716
        %v2629 = vpack.c.b16 %v1725, %v1717
        %v2630 = vpack.c.b16 %v1726, %v1718
        %v2631 = vpack.c.b16 %v1727, %v1719
        %v2632 = vpack.c.b16 %v1736, %v1728
        %v2633 = vpack.c.b16 %v1737, %v1729
        %v2634 = vpack.c.b16 %v1738, %v1730
        %v2635 = vpack.c.b16 %v1739, %v1731
        %v2636 = vpack.c.b16 %v1740, %v1732
        %v2637 = vpack.c.b16 %v1741, %v1733
        %v2638 = vpack.c.b16 %v1742, %v1734
        %v2639 = vpack.c.b16 %v1743, %v1735
        %v2640 = vpack.c.b16 %v1752, %v1744
        %v2641 = vpack.c.b16 %v1753, %v1745
        %v2642 = vpack.c.b16 %v1754, %v1746
        %v2643 = vpack.c.b16 %v1755, %v1747
        %v2644 = vpack.c.b16 %v1756, %v1748
        %v2645 = vpack.c.b16 %v1757, %v1749
        %v2646 = vpack.c.b16 %v1758, %v1750
        %v2647 = vpack.c.b16 %v1759, %v1751
        %v2648 = vpack.c.b16 %v1768, %v1760
        %v2649 = vpack.c.b16 %v1769, %v1761
        %v2650 = vpack.c.b16 %v1770, %v1762
        %v2651 = vpack.c.b16 %v1771, %v1763
        %v2652 = vpack.c.b16 %v1772, %v1764
        %v2653 = vpack.c.b16 %v1773, %v1765
        %v2654 = vpack.c.b16 %v1774, %v1766
        %v2655 = vpack.c.b16 %v1775, %v1767
        %v2656 = vpack.c.b16 %v1784, %v1776
        %v2657 = vpack.c.b16 %v1785, %v1777
        %v2658 = vpack.c.b16 %v1786, %v1778
        %v2659 = vpack.c.b16 %v1787, %v1779
        %v2660 = vpack.c.b16 %v1788, %v1780
        %v2661 = vpack.c.b16 %v1789, %v1781
        %v2662 = vpack.c.b16 %v1790, %v1782
        %v2663 = vpack.c.b16 %v1791, %v1783
        %v2664 = vpack.c.b16 %v1800, %v1792
        %v2665 = vpack.c.b16 %v1801, %v1793
        %v2666 = vpack.c.b16 %v1802, %v1794
        %v2667 = vpack.c.b16 %v1803, %v1795
        %v2668 = vpack.c.b16 %v1804, %v1796
        %v2669 = vpack.c.b16 %v1805, %v1797
        %v2670 = vpack.c.b16 %v1806, %v1798
        %v2671 = vpack.c.b16 %v1807, %v1799
        %v2672 = vpack.c.b16 %v1816, %v1808
        %v2673 = vpack.c.b16 %v1817, %v1809
        %v2674 = vpack.c.b16 %v1818, %v1810
        %v2675 = vpack.c.b16 %v1819, %v1811
        %v2676 = vpack.c.b16 %v1820, %v1812
        %v2677 = vpack.c.b16 %v1821, %v1813
        %v2678 = vpack.c.b16 %v1822, %v1814
        %v2679 = vpack.c.b16 %v1823, %v1815
        %v2680 = vpack.c.b16 %v1832, %v1824
        %v2681 = vpack.c.b16 %v1833, %v1825
        %v2682 = vpack.c.b16 %v1834, %v1826
        %v2683 = vpack.c.b16 %v1835, %v1827
        %v2684 = vpack.c.b16 %v1836, %v1828
        %v2685 = vpack.c.b16 %v1837, %v1829
        %v2686 = vpack.c.b16 %v1838, %v1830
        %v2687 = vpack.c.b16 %v1839, %v1831
        %v2688 = vpack.c.b16 %v1848, %v1840
        %v2689 = vpack.c.b16 %v1849, %v1841
        %v2690 = vpack.c.b16 %v1850, %v1842
        %v2691 = vpack.c.b16 %v1851, %v1843
        %v2692 = vpack.c.b16 %v1852, %v1844
        %v2693 = vpack.c.b16 %v1853, %v1845
        %v2694 = vpack.c.b16 %v1854, %v1846
        %v2695 = vpack.c.b16 %v1855, %v1847
        %v2696 = vpack.c.b16 %v1864, %v1856
        %v2697 = vpack.c.b16 %v1865, %v1857
        %v2698 = vpack.c.b16 %v1866, %v1858
        %v2699 = vpack.c.b16 %v1867, %v1859
        %v2700 = vpack.c.b16 %v1868, %v1860
        %v2701 = vpack.c.b16 %v1869, %v1861
        %v2702 = vpack.c.b16 %v1870, %v1862
        %v2703 = vpack.c.b16 %v1871, %v1863
        %v2704 = vpack.c.b16 %v1880, %v1872
        %v2705 = vpack.c.b16 %v1881, %v1873
        %v2706 = vpack.c.b16 %v1882, %v1874
        %v2707 = vpack.c.b16 %v1883, %v1875
        %v2708 = vpack.c.b16 %v1884, %v1876
        %v2709 = vpack.c.b16 %v1885, %v1877
        %v2710 = vpack.c.b16 %v1886, %v1878
        %v2711 = vpack.c.b16 %v1887, %v1879
        %v2712 = vpack.c.b16 %v1896, %v1888
        %v2713 = vpack.c.b16 %v1897, %v1889
        %v2714 = vpack.c.b16 %v1898, %v1890
        %v2715 = vpack.c.b16 %v1899, %v1891
        %v2716 = vpack.c.b16 %v1900, %v1892
        %v2717 = vpack.c.b16 %v1901, %v1893
        %v2718 = vpack.c.b16 %v1902, %v1894
        %v2719 = vpack.c.b16 %v1903, %v1895
        %v2720 = vpack.c.b16 %v1912, %v1904
        %v2721 = vpack.c.b16 %v1913, %v1905
        %v2722 = vpack.c.b16 %v1914, %v1906
        %v2723 = vpack.c.b16 %v1915, %v1907
        %v2724 = vpack.c.b16 %v1916, %v1908
        %v2725 = vpack.c.b16 %v1917, %v1909
        %v2726 = vpack.c.b16 %v1918, %v1910
        %v2727 = vpack.c.b16 %v1919, %v1911
        %v2728 = vpack.c.b16 %v1928, %v1920
        %v2729 = vpack.c.b16 %v1929, %v1921
        %v2730 = vpack.c.b16 %v1930, %v1922
        %v2731 = vpack.c.b16 %v1931, %v1923
        %v2732 = vpack.c.b16 %v1932, %v1924
        %v2733 = vpack.c.b16 %v1933, %v1925
        %v2734 = vpack.c.b16 %v1934, %v1926
        %v2735 = vpack.c.b16 %v1935, %v1927
        %v2736 = vpack.c.b16 %v1944, %v1936
        %v2737 = vpack.c.b16 %v1945, %v1937
        %v2738 = vpack.c.b16 %v1946, %v1938
        %v2739 = vpack.c.b16 %v1947, %v1939
        %v2740 = vpack.c.b16 %v1948, %v1940
        %v2741 = vpack.c.b16 %v1949, %v1941
        %v2742 = vpack.c.b16 %v1950, %v1942
        %v2743 = vpack.c.b16 %v1951, %v1943
        %v2744 = vpack.c.b16 %v1960, %v1952
        %v2745 = vpack.c.b16 %v1961, %v1953
        %v2746 = vpack.c.b16 %v1962, %v1954
        %v2747 = vpack.c.b16 %v1963, %v1955
        %v2748 = vpack.c.b16 %v1964, %v1956
        %v2749 = vpack.c.b16 %v1965, %v1957
        %v2750 = vpack.c.b16 %v1966, %v1958
        %v2751 = vpack.c.b16 %v1967, %v1959
        %v2752 = vpack.c.b16 %v1976, %v1968
        %v2753 = vpack.c.b16 %v1977, %v1969
        %v2754 = vpack.c.b16 %v1978, %v1970
        %v2755 = vpack.c.b16 %v1979, %v1971
        %v2756 = vpack.c.b16 %v1980, %v1972
        %v2757 = vpack.c.b16 %v1981, %v1973
        %v2758 = vpack.c.b16 %v1982, %v1974
        %v2759 = vpack.c.b16 %v1983, %v1975
        %v2760 = vpack.c.b16 %v1992, %v1984
        %v2761 = vpack.c.b16 %v1993, %v1985
        %v2762 = vpack.c.b16 %v1994, %v1986
        %v2763 = vpack.c.b16 %v1995, %v1987
        %v2764 = vpack.c.b16 %v1996, %v1988
        %v2765 = vpack.c.b16 %v1997, %v1989
        %v2766 = vpack.c.b16 %v1998, %v1990
        %v2767 = vpack.c.b16 %v1999, %v1991
        %v2768 = vpack.c.b16 %v2008, %v2000
        %v2769 = vpack.c.b16 %v2009, %v2001
        %v2770 = vpack.c.b16 %v2010, %v2002
        %v2771 = vpack.c.b16 %v2011, %v2003
        %v2772 = vpack.c.b16 %v2012, %v2004
        %v2773 = vpack.c.b16 %v2013, %v2005
        %v2774 = vpack.c.b16 %v2014, %v2006
        %v2775 = vpack.c.b16 %v2015, %v2007
        %v2776 = vpack.c.b16 %v2024, %v2016
        %v2777 = vpack.c.b16 %v2025, %v2017
        %v2778 = vpack.c.b16 %v2026, %v2018
        %v2779 = vpack.c.b16 %v2027, %v2019
        %v2780 = vpack.c.b16 %v2028, %v2020
        %v2781 = vpack.c.b16 %v2029, %v2021
        %v2782 = vpack.c.b16 %v2030, %v2022
        %v2783 = vpack.c.b16 %v2031, %v2023
        %v2784 = vpack.c.b16 %v2040, %v2032
        %v2785 = vpack.c.b16 %v2041, %v2033
        %v2786 = vpack.c.b16 %v2042, %v2034
        %v2787 = vpack.c.b16 %v2043, %v2035
        %v2788 = vpack.c.b16 %v2044, %v2036
        %v2789 = vpack.c.b16 %v2045, %v2037
        %v2790 = vpack.c.b16 %v2046, %v2038
        %v2791 = vpack.c.b16 %v2047, %v2039
        %v2792 = vpack.c.b16 %v2056, %v2048
        %v2793 = vpack.c.b16 %v2057, %v2049
        %v2794 = vpack.c.b16 %v2058, %v2050
        %v2795 = vpack.c.b16 %v2059, %v2051
        %v2796 = vpack.c.b16 %v2060, %v2052
        %v2797 = vpack.c.b16 %v2061, %v2053
        %v2798 = vpack.c.b16 %v2062, %v2054
        %v2799 = vpack.c.b16 %v2063, %v2055
        %v2800 = vpack.c.b16 %v2072, %v2064
        %v2801 = vpack.c.b16 %v2073, %v2065
        %v2802 = vpack.c.b16 %v2074, %v2066
        %v2803 = vpack.c.b16 %v2075, %v2067
        %v2804 = vpack.c.b16 %v2076, %v2068
        %v2805 = vpack.c.b16 %v2077, %v2069
        %v2806 = vpack.c.b16 %v2078, %v2070
        %v2807 = vpack.c.b16 %v2079, %v2071
        %v2808 = vpack.c.b16 %v2088, %v2080
        %v2809 = vpack.c.b16 %v2089, %v2081
        %v2810 = vpack.c.b16 %v2090, %v2082
        %v2811 = vpack.c.b16 %v2091, %v2083
        %v2812 = vpack.c.b16 %v2092, %v2084
        %v2813 = vpack.c.b16 %v2093, %v2085
        %v2814 = vpack.c.b16 %v2094, %v2086
        %v2815 = vpack.c.b16 %v2095, %v2087
        %v2816 = vpack.c.b16 %v2104, %v2096
        %v2817 = vpack.c.b16 %v2105, %v2097
        %v2818 = vpack.c.b16 %v2106, %v2098
        %v2819 = vpack.c.b16 %v2107, %v2099
        %v2820 = vpack.c.b16 %v2108, %v2100
        %v2821 = vpack.c.b16 %v2109, %v2101
        %v2822 = vpack.c.b16 %v2110, %v2102
        %v2823 = vpack.c.b16 %v2111, %v2103
        %v2824 = vpack.c.b16 %v2120, %v2112
        %v2825 = vpack.c.b16 %v2121, %v2113
        %v2826 = vpack.c.b16 %v2122, %v2114
        %v2827 = vpack.c.b16 %v2123, %v2115
        %v2828 = vpack.c.b16 %v2124, %v2116
        %v2829 = vpack.c.b16 %v2125, %v2117
        %v2830 = vpack.c.b16 %v2126, %v2118
        %v2831 = vpack.c.b16 %v2127, %v2119
        %v2832 = vpack.c.b16 %v2136, %v2128
        %v2833 = vpack.c.b16 %v2137, %v2129
        %v2834 = vpack.c.b16 %v2138, %v2130
        %v2835 = vpack.c.b16 %v2139, %v2131
        %v2836 = vpack.c.b16 %v2140, %v2132
        %v2837 = vpack.c.b16 %v2141, %v2133
        %v2838 = vpack.c.b16 %v2142, %v2134
        %v2839 = vpack.c.b16 %v2143, %v2135
        %v2840 = vpack.c.b16 %v2152, %v2144
        %v2841 = vpack.c.b16 %v2153, %v2145
        %v2842 = vpack.c.b16 %v2154, %v2146
        %v2843 = vpack.c.b16 %v2155, %v2147
        %v2844 = vpack.c.b16 %v2156, %v2148
        %v2845 = vpack.c.b16 %v2157, %v2149
        %v2846 = vpack.c.b16 %v2158, %v2150
        %v2847 = vpack.c.b16 %v2159, %v2151
        %v2848 = vpack.c.b16 %v2168, %v2160
        %v2849 = vpack.c.b16 %v2169, %v2161
        %v2850 = vpack.c.b16 %v2170, %v2162
        %v2851 = vpack.c.b16 %v2171, %v2163
        %v2852 = vpack.c.b16 %v2172, %v2164
        %v2853 = vpack.c.b16 %v2173, %v2165
        %v2854 = vpack.c.b16 %v2174, %v2166
        %v2855 = vpack.c.b16 %v2175, %v2167
        %v2856 = vpack.c.b16 %v2184, %v2176
        %v2857 = vpack.c.b16 %v2185, %v2177
        %v2858 = vpack.c.b16 %v2186, %v2178
        %v2859 = vpack.c.b16 %v2187, %v2179
        %v2860 = vpack.c.b16 %v2188, %v2180
        %v2861 = vpack.c.b16 %v2189, %v2181
        %v2862 = vpack.c.b16 %v2190, %v2182
        %v2863 = vpack.c.b16 %v2191, %v2183
        %v2864 = vpack.c.b16 %v2200, %v2192
        %v2865 = vpack.c.b16 %v2201, %v2193
        %v2866 = vpack.c.b16 %v2202, %v2194
        %v2867 = vpack.c.b16 %v2203, %v2195
        %v2868 = vpack.c.b16 %v2204, %v2196
        %v2869 = vpack.c.b16 %v2205, %v2197
        %v2870 = vpack.c.b16 %v2206, %v2198
        %v2871 = vpack.c.b16 %v2207, %v2199
        %v2872 = vpack.c.b16 %v2216, %v2208
        %v2873 = vpack.c.b16 %v2217, %v2209
        %v2874 = vpack.c.b16 %v2218, %v2210
        %v2875 = vpack.c.b16 %v2219, %v2211
        %v2876 = vpack.c.b16 %v2220, %v2212
        %v2877 = vpack.c.b16 %v2221, %v2213
        %v2878 = vpack.c.b16 %v2222, %v2214
        %v2879 = vpack.c.b16 %v2223, %v2215
        %v2880 = vpack.c.b16 %v2232, %v2224
        %v2881 = vpack.c.b16 %v2233, %v2225
        %v2882 = vpack.c.b16 %v2234, %v2226
        %v2883 = vpack.c.b16 %v2235, %v2227
        %v2884 = vpack.c.b16 %v2236, %v2228
        %v2885 = vpack.c.b16 %v2237, %v2229
        %v2886 = vpack.c.b16 %v2238, %v2230
        %v2887 = vpack.c.b16 %v2239, %v2231
        %v2888 = vpack.c.b16 %v2248, %v2240
        %v2889 = vpack.c.b16 %v2249, %v2241
        %v2890 = vpack.c.b16 %v2250, %v2242
        %v2891 = vpack.c.b16 %v2251, %v2243
        %v2892 = vpack.c.b16 %v2252, %v2244
        %v2893 = vpack.c.b16 %v2253, %v2245
        %v2894 = vpack.c.b16 %v2254, %v2246
        %v2895 = vpack.c.b16 %v2255, %v2247
        %v2896 = vpack.c.b16 %v2264, %v2256
        %v2897 = vpack.c.b16 %v2265, %v2257
        %v2898 = vpack.c.b16 %v2266, %v2258
        %v2899 = vpack.c.b16 %v2267, %v2259
        %v2900 = vpack.c.b16 %v2268, %v2260
        %v2901 = vpack.c.b16 %v2269, %v2261
        %v2902 = vpack.c.b16 %v2270, %v2262
        %v2903 = vpack.c.b16 %v2271, %v2263
        %v2904 = vpack.c.b16 %v2280, %v2272
        %v2905 = vpack.c.b16 %v2281, %v2273
        %v2906 = vpack.c.b16 %v2282, %v2274
        %v2907 = vpack.c.b16 %v2283, %v2275
        %v2908 = vpack.c.b16 %v2284, %v2276
        %v2909 = vpack.c.b16 %v2285, %v2277
        %v2910 = vpack.c.b16 %v2286, %v2278
        %v2911 = vpack.c.b16 %v2287, %v2279
        %v2912 = vpack.c.b16 %v2296, %v2288
        %v2913 = vpack.c.b16 %v2297, %v2289
        %v2914 = vpack.c.b16 %v2298, %v2290
        %v2915 = vpack.c.b16 %v2299, %v2291
        %v2916 = vpack.c.b16 %v2300, %v2292
        %v2917 = vpack.c.b16 %v2301, %v2293
        %v2918 = vpack.c.b16 %v2302, %v2294
        %v2919 = vpack.c.b16 %v2303, %v2295
        %v2920 = vpack.c.b16 %v2312, %v2304
        %v2921 = vpack.c.b16 %v2313, %v2305
        %v2922 = vpack.c.b16 %v2314, %v2306
        %v2923 = vpack.c.b16 %v2315, %v2307
        %v2924 = vpack.c.b16 %v2316, %v2308
        %v2925 = vpack.c.b16 %v2317, %v2309
        %v2926 = vpack.c.b16 %v2318, %v2310
        %v2927 = vpack.c.b16 %v2319, %v2311
        %v2928 = vpack.c.b16 %v2328, %v2320
        %v2929 = vpack.c.b16 %v2329, %v2321
        %v2930 = vpack.c.b16 %v2330, %v2322
        %v2931 = vpack.c.b16 %v2331, %v2323
        %v2932 = vpack.c.b16 %v2332, %v2324
        %v2933 = vpack.c.b16 %v2333, %v2325
        %v2934 = vpack.c.b16 %v2334, %v2326
        %v2935 = vpack.c.b16 %v2335, %v2327
        %v2936 = vpack.c.b16 %v2344, %v2336
        %v2937 = vpack.c.b16 %v2345, %v2337
        %v2938 = vpack.c.b16 %v2346, %v2338
        %v2939 = vpack.c.b16 %v2347, %v2339
        %v2940 = vpack.c.b16 %v2348, %v2340
        %v2941 = vpack.c.b16 %v2349, %v2341
        %v2942 = vpack.c.b16 %v2350, %v2342
        %v2943 = vpack.c.b16 %v2351, %v2343
        %v2944 = vpack.c.b16 %v2360, %v2352
        %v2945 = vpack.c.b16 %v2361, %v2353
        %v2946 = vpack.c.b16 %v2362, %v2354
        %v2947 = vpack.c.b16 %v2363, %v2355
        %v2948 = vpack.c.b16 %v2364, %v2356
        %v2949 = vpack.c.b16 %v2365, %v2357
        %v2950 = vpack.c.b16 %v2366, %v2358
        %v2951 = vpack.c.b16 %v2367, %v2359
        %v2952 = vpack.c.b16 %v2376, %v2368
        %v2953 = vpack.c.b16 %v2377, %v2369
        %v2954 = vpack.c.b16 %v2378, %v2370
        %v2955 = vpack.c.b16 %v2379, %v2371
        %v2956 = vpack.c.b16 %v2380, %v2372
        %v2957 = vpack.c.b16 %v2381, %v2373
        %v2958 = vpack.c.b16 %v2382, %v2374
        %v2959 = vpack.c.b16 %v2383, %v2375
        %v2960 = vpack.c.b16 %v2392, %v2384
        %v2961 = vpack.c.b16 %v2393, %v2385
        %v2962 = vpack.c.b16 %v2394, %v2386
        %v2963 = vpack.c.b16 %v2395, %v2387
        %v2964 = vpack.c.b16 %v2396, %v2388
        %v2965 = vpack.c.b16 %v2397, %v2389
        %v2966 = vpack.c.b16 %v2398, %v2390
        %v2967 = vpack.c.b16 %v2399, %v2391
        %v2968 = vpack.c.b16 %v2408, %v2400
        %v2969 = vpack.c.b16 %v2409, %v2401
        %v2970 = vpack.c.b16 %v2410, %v2402
        %v2971 = vpack.c.b16 %v2411, %v2403
        %v2972 = vpack.c.b16 %v2412, %v2404
        %v2973 = vpack.c.b16 %v2413, %v2405
        %v2974 = vpack.c.b16 %v2414, %v2406
        %v2975 = vpack.c.b16 %v2415, %v2407
        %v2976 = vpack.c.b16 %v2424, %v2416
        %v2977 = vpack.c.b16 %v2425, %v2417
        %v2978 = vpack.c.b16 %v2426, %v2418
        %v2979 = vpack.c.b16 %v2427, %v2419
        %v2980 = vpack.c.b16 %v2428, %v2420
        %v2981 = vpack.c.b16 %v2429, %v2421
        %v2982 = vpack.c.b16 %v2430, %v2422
        %v2983 = vpack.c.b16 %v2431, %v2423
        %v2984 = vpack.c.b16 %v2440, %v2432
        %v2985 = vpack.c.b16 %v2441, %v2433
        %v2986 = vpack.c.b16 %v2442, %v2434
        %v2987 = vpack.c.b16 %v2443, %v2435
        %v2988 = vpack.c.b16 %v2444, %v2436
        %v2989 = vpack.c.b16 %v2445, %v2437
        %v2990 = vpack.c.b16 %v2446, %v2438
        %v2991 = vpack.c.b16 %v2447, %v2439
        %v2992 = vpack.c.b16 %v2456, %v2448
        %v2993 = vpack.c.b16 %v2457, %v2449
        %v2994 = vpack.c.b16 %v2458, %v2450
        %v2995 = vpack.c.b16 %v2459, %v2451
        %v2996 = vpack.c.b16 %v2460, %v2452
        %v2997 = vpack.c.b16 %v2461, %v2453
        %v2998 = vpack.c.b16 %v2462, %v2454
        %v2999 = vpack.c.b16 %v2463, %v2455
        %v3000 = vpack.c.b16 %v2472, %v2464
        %v3001 = vpack.c.b16 %v2473, %v2465
        %v3002 = vpack.c.b16 %v2474, %v2466
        %v3003 = vpack.c.b16 %v2475, %v2467
        %v3004 = vpack.c.b16 %v2476, %v2468
        %v3005 = vpack.c.b16 %v2477, %v2469
        %v3006 = vpack.c.b16 %v2478, %v2470
        %v3007 = vpack.c.b16 %v2479, %v2471
        %v3008 = vpack.c.b16 %v2488, %v2480
        %v3009 = vpack.c.b16 %v2489, %v2481
        %v3010 = vpack.c.b16 %v2490, %v2482
        %v3011 = vpack.c.b16 %v2491, %v2483
        %v3012 = vpack.c.b16 %v2492, %v2484
        %v3013 = vpack.c.b16 %v2493, %v2485
        %v3014 = vpack.c.b16 %v2494, %v2486
        %v3015 = vpack.c.b16 %v2495, %v2487
        %v3016 = vpack.c.b16 %v2504, %v2496
        %v3017 = vpack.c.b16 %v2505, %v2497
        %v3018 = vpack.c.b16 %v2506, %v2498
        %v3019 = vpack.c.b16 %v2507, %v2499
        %v3020 = vpack.c.b16 %v2508, %v2500
        %v3021 = vpack.c.b16 %v2509, %v2501
        %v3022 = vpack.c.b16 %v2510, %v2502
        %v3023 = vpack.c.b16 %v2511, %v2503
        %3536 = vmatprep.subr.bf16.mxu0 %v2569
        %3537 = vmatpush1.bf16.msra.mxu0 %v2568
        %3538 = vmatprep.subr.bf16.mxu0 %v2561
        %3539 = vmatpush1.bf16.msra.mxu0 %v2560
        %3540 = vmatprep.subr.bf16.mxu0 %v2553
        %3541 = vmatpush1.bf16.msra.mxu0 %v2552
        %3542 = vmatprep.subr.bf16.mxu0 %v2545
        %3543 = vmatpush1.bf16.msra.mxu0 %v2544
        %3544 = vmatprep.subr.bf16.mxu0 %v2537
        %3545 = vmatpush1.bf16.msra.mxu0 %v2536
        %3546 = vmatprep.subr.bf16.mxu0 %v2529
        %3547 = vmatpush1.bf16.msra.mxu0 %v2528
        %3548 = vmatprep.subr.bf16.mxu0 %v2521
        %3549 = vmatpush1.bf16.msra.mxu0 %v2520
        %3550 = vmatprep.subr.bf16.mxu0 %v2513
        %3551 = vmatpush1.bf16.msra.mxu0 %v2512
        %3552 = vmatprep.subr.bf16.mxu0 %v2633
        %3553 = vmatpush2.bf16.msra.mxu0 %v2632
        %3554 = vmatprep.subr.bf16.mxu0 %v2625
        %3555 = vmatpush2.bf16.msra.mxu0 %v2624
        %3556 = vmatprep.subr.bf16.mxu0 %v2617
        %3557 = vmatpush2.bf16.msra.mxu0 %v2616
        %3558 = vmatprep.subr.bf16.mxu0 %v2609
        %3559 = vmatpush2.bf16.msra.mxu0 %v2608
        %3560 = vmatprep.subr.bf16.mxu0 %v2601
        %3561 = vmatpush2.bf16.msra.mxu0 %v2600
        %3562 = vmatprep.subr.bf16.mxu0 %v2593
        %3563 = vmatpush2.bf16.msra.mxu0 %v2592
        %3564 = vmatprep.subr.bf16.mxu0 %v2585
        %3565 = vmatpush2.bf16.msra.mxu0 %v2584
        %3566 = vmatprep.subr.bf16.mxu0 %v2577
        %3567 = vmatpush2.bf16.msra.mxu0 %v2576
        %3568 = vmatprep.mubr.bf16.mxu0 %v961
        %3569 = vmatmul.mubr.bf16.gmra.mxu0 %v960
        %v3570 = vpop.f32.mrf.mxu0
        %v3571 = vadd.f32 0.0, %v3570
        %v3572 = vpop.f32.mrf.mxu0
        %v3573 = vadd.f32 0.0, %v3572
        %v3574 = vpop.f32.mrf.mxu0
        %v3575 = vpop.f32.mrf.mxu0
        %3576 = vdwg.mxu0
        %3577 = vmatprep.subr.bf16.mxu0 %v2697
        %3578 = vmatpush1.bf16.msra.mxu0 %v2696
        %3579 = vmatprep.subr.bf16.mxu0 %v2689
        %3580 = vmatpush1.bf16.msra.mxu0 %v2688
        %3581 = vmatprep.subr.bf16.mxu0 %v2681
        %3582 = vmatpush1.bf16.msra.mxu0 %v2680
        %3583 = vmatprep.subr.bf16.mxu0 %v2673
        %3584 = vmatpush1.bf16.msra.mxu0 %v2672
        %3585 = vmatprep.subr.bf16.mxu0 %v2665
        %3586 = vmatpush1.bf16.msra.mxu0 %v2664
        %3587 = vmatprep.subr.bf16.mxu0 %v2657
        %3588 = vmatpush1.bf16.msra.mxu0 %v2656
        %3589 = vmatprep.subr.bf16.mxu0 %v2649
        %3590 = vmatpush1.bf16.msra.mxu0 %v2648
        %3591 = vmatprep.subr.bf16.mxu0 %v2641
        %3592 = vmatpush1.bf16.msra.mxu0 %v2640
        %3593 = vmatprep.subr.bf16.mxu0 %v2761
        %3594 = vmatpush2.bf16.msra.mxu0 %v2760
        %3595 = vmatprep.subr.bf16.mxu0 %v2753
        %3596 = vmatpush2.bf16.msra.mxu0 %v2752
        %3597 = vmatprep.subr.bf16.mxu0 %v2745
        %3598 = vmatpush2.bf16.msra.mxu0 %v2744
        %3599 = vmatprep.subr.bf16.mxu0 %v2737
        %3600 = vmatpush2.bf16.msra.mxu0 %v2736
        %3601 = vmatprep.subr.bf16.mxu0 %v2729
        %3602 = vmatpush2.bf16.msra.mxu0 %v2728
        %3603 = vmatprep.subr.bf16.mxu0 %v2721
        %3604 = vmatpush2.bf16.msra.mxu0 %v2720
        %3605 = vmatprep.subr.bf16.mxu0 %v2713
        %3606 = vmatpush2.bf16.msra.mxu0 %v2712
        %3607 = vmatprep.subr.bf16.mxu0 %v2705
        %3608 = vmatpush2.bf16.msra.mxu0 %v2704
        %3609 = vmatprep.mubr.bf16.mxu0 %v963
        %3610 = vmatmul.mubr.bf16.gmra.mxu0 %v962
        %v3611 = vpop.f32.mrf.mxu0
        %v3612 = vadd.f32 %v3571, %v3611
        %v3613 = vpop.f32.mrf.mxu0
        %v3614 = vadd.f32 %v3573, %v3613
        %v3615 = vpop.f32.mrf.mxu0
        %v3616 = vpop.f32.mrf.mxu0
        %3617 = vdwg.mxu0
        %3618 = vmatprep.subr.bf16.mxu0 %v2825
        %3619 = vmatpush1.bf16.msra.mxu0 %v2824
        %3620 = vmatprep.subr.bf16.mxu0 %v2817
        %3621 = vmatpush1.bf16.msra.mxu0 %v2816
        %3622 = vmatprep.subr.bf16.mxu0 %v2809
        %3623 = vmatpush1.bf16.msra.mxu0 %v2808
        %3624 = vmatprep.subr.bf16.mxu0 %v2801
        %3625 = vmatpush1.bf16.msra.mxu0 %v2800
        %3626 = vmatprep.subr.bf16.mxu0 %v2793
        %3627 = vmatpush1.bf16.msra.mxu0 %v2792
        %3628 = vmatprep.subr.bf16.mxu0 %v2785
        %3629 = vmatpush1.bf16.msra.mxu0 %v2784
        %3630 = vmatprep.subr.bf16.mxu0 %v2777
        %3631 = vmatpush1.bf16.msra.mxu0 %v2776
        %3632 = vmatprep.subr.bf16.mxu0 %v2769
        %3633 = vmatpush1.bf16.msra.mxu0 %v2768
        %3634 = vmatprep.subr.bf16.mxu0 %v2889
        %3635 = vmatpush2.bf16.msra.mxu0 %v2888
        %3636 = vmatprep.subr.bf16.mxu0 %v2881
        %3637 = vmatpush2.bf16.msra.mxu0 %v2880
        %3638 = vmatprep.subr.bf16.mxu0 %v2873
        %3639 = vmatpush2.bf16.msra.mxu0 %v2872
        %3640 = vmatprep.subr.bf16.mxu0 %v2865
        %3641 = vmatpush2.bf16.msra.mxu0 %v2864
        %3642 = vmatprep.subr.bf16.mxu0 %v2857
        %3643 = vmatpush2.bf16.msra.mxu0 %v2856
        %3644 = vmatprep.subr.bf16.mxu0 %v2849
        %3645 = vmatpush2.bf16.msra.mxu0 %v2848
        %3646 = vmatprep.subr.bf16.mxu0 %v2841
        %3647 = vmatpush2.bf16.msra.mxu0 %v2840
        %3648 = vmatprep.subr.bf16.mxu0 %v2833
        %3649 = vmatpush2.bf16.msra.mxu0 %v2832
        %3650 = vmatprep.mubr.bf16.mxu0 %v965
        %3651 = vmatmul.mubr.bf16.gmra.mxu0 %v964
        %v3652 = vpop.f32.mrf.mxu0
        %v3653 = vadd.f32 %v3612, %v3652
        %v3654 = vpop.f32.mrf.mxu0
        %v3655 = vadd.f32 %v3614, %v3654
        %v3656 = vpop.f32.mrf.mxu0
        %v3657 = vpop.f32.mrf.mxu0
        %3658 = vdwg.mxu0
        %3659 = vmatprep.subr.bf16.mxu0 %v2953
        %3660 = vmatpush1.bf16.msra.mxu0 %v2952
        %3661 = vmatprep.subr.bf16.mxu0 %v2945
        %3662 = vmatpush1.bf16.msra.mxu0 %v2944
        %3663 = vmatprep.subr.bf16.mxu0 %v2937
        %3664 = vmatpush1.bf16.msra.mxu0 %v2936
        %3665 = vmatprep.subr.bf16.mxu0 %v2929
        %3666 = vmatpush1.bf16.msra.mxu0 %v2928
        %3667 = vmatprep.subr.bf16.mxu0 %v2921
        %3668 = vmatpush1.bf16.msra.mxu0 %v2920
        %3669 = vmatprep.subr.bf16.mxu0 %v2913
        %3670 = vmatpush1.bf16.msra.mxu0 %v2912
        %3671 = vmatprep.subr.bf16.mxu0 %v2905
        %3672 = vmatpush1.bf16.msra.mxu0 %v2904
        %3673 = vmatprep.subr.bf16.mxu0 %v2897
        %3674 = vmatpush1.bf16.msra.mxu0 %v2896
        %3675 = vmatprep.subr.bf16.mxu0 %v3017
        %3676 = vmatpush2.bf16.msra.mxu0 %v3016
        %3677 = vmatprep.subr.bf16.mxu0 %v3009
        %3678 = vmatpush2.bf16.msra.mxu0 %v3008
        %3679 = vmatprep.subr.bf16.mxu0 %v3001
        %3680 = vmatpush2.bf16.msra.mxu0 %v3000
        %3681 = vmatprep.subr.bf16.mxu0 %v2993
        %3682 = vmatpush2.bf16.msra.mxu0 %v2992
        %3683 = vmatprep.subr.bf16.mxu0 %v2985
        %3684 = vmatpush2.bf16.msra.mxu0 %v2984
        %3685 = vmatprep.subr.bf16.mxu0 %v2977
        %3686 = vmatpush2.bf16.msra.mxu0 %v2976
        %3687 = vmatprep.subr.bf16.mxu0 %v2969
        %3688 = vmatpush2.bf16.msra.mxu0 %v2968
        %3689 = vmatprep.subr.bf16.mxu0 %v2961
        %3690 = vmatpush2.bf16.msra.mxu0 %v2960
        %3691 = vmatprep.mubr.bf16.mxu0 %v967
        %3692 = vmatmul.mubr.bf16.gmra.mxu0 %v966
        %v3693 = vpop.f32.mrf.mxu0
        %v3694 = vadd.f32 %v3653, %v3693
        %v3695 = vpop.f32.mrf.mxu0
        %v3696 = vadd.f32 %v3655, %v3695
        %v3697 = vpop.f32.mrf.mxu0
        %v3698 = vpop.f32.mrf.mxu0
        %3699 = vdwg.mxu0
        %3700 = vmatprep.subr.bf16.mxu0 %v2571
        %3701 = vmatpush1.bf16.msra.mxu0 %v2570
        %3702 = vmatprep.subr.bf16.mxu0 %v2563
        %3703 = vmatpush1.bf16.msra.mxu0 %v2562
        %3704 = vmatprep.subr.bf16.mxu0 %v2555
        %3705 = vmatpush1.bf16.msra.mxu0 %v2554
        %3706 = vmatprep.subr.bf16.mxu0 %v2547
        %3707 = vmatpush1.bf16.msra.mxu0 %v2546
        %3708 = vmatprep.subr.bf16.mxu0 %v2539
        %3709 = vmatpush1.bf16.msra.mxu0 %v2538
        %3710 = vmatprep.subr.bf16.mxu0 %v2531
        %3711 = vmatpush1.bf16.msra.mxu0 %v2530
        %3712 = vmatprep.subr.bf16.mxu0 %v2523
        %3713 = vmatpush1.bf16.msra.mxu0 %v2522
        %3714 = vmatprep.subr.bf16.mxu0 %v2515
        %3715 = vmatpush1.bf16.msra.mxu0 %v2514
        %3716 = vmatprep.subr.bf16.mxu0 %v2635
        %3717 = vmatpush2.bf16.msra.mxu0 %v2634
        %3718 = vmatprep.subr.bf16.mxu0 %v2627
        %3719 = vmatpush2.bf16.msra.mxu0 %v2626
        %3720 = vmatprep.subr.bf16.mxu0 %v2619
        %3721 = vmatpush2.bf16.msra.mxu0 %v2618
        %3722 = vmatprep.subr.bf16.mxu0 %v2611
        %3723 = vmatpush2.bf16.msra.mxu0 %v2610
        %3724 = vmatprep.subr.bf16.mxu0 %v2603
        %3725 = vmatpush2.bf16.msra.mxu0 %v2602
        %3726 = vmatprep.subr.bf16.mxu0 %v2595
        %3727 = vmatpush2.bf16.msra.mxu0 %v2594
        %3728 = vmatprep.subr.bf16.mxu0 %v2587
        %3729 = vmatpush2.bf16.msra.mxu0 %v2586
        %3730 = vmatprep.subr.bf16.mxu0 %v2579
        %3731 = vmatpush2.bf16.msra.mxu0 %v2578
        %3732 = vmatprep.mubr.bf16.mxu0 %v961
        %3733 = vmatmul.mubr.bf16.gmra.mxu0 %v960
        %v3734 = vpop.f32.mrf.mxu0
        %v3735 = vadd.f32 0.0, %v3734
        %v3736 = vpop.f32.mrf.mxu0
        %v3737 = vadd.f32 0.0, %v3736
        %v3738 = vpop.f32.mrf.mxu0
        %v3739 = vpop.f32.mrf.mxu0
        %3740 = vdwg.mxu0
        %3741 = vmatprep.subr.bf16.mxu0 %v2699
        %3742 = vmatpush1.bf16.msra.mxu0 %v2698
        %3743 = vmatprep.subr.bf16.mxu0 %v2691
        %3744 = vmatpush1.bf16.msra.mxu0 %v2690
        %3745 = vmatprep.subr.bf16.mxu0 %v2683
        %3746 = vmatpush1.bf16.msra.mxu0 %v2682
        %3747 = vmatprep.subr.bf16.mxu0 %v2675
        %3748 = vmatpush1.bf16.msra.mxu0 %v2674
        %3749 = vmatprep.subr.bf16.mxu0 %v2667
        %3750 = vmatpush1.bf16.msra.mxu0 %v2666
        %3751 = vmatprep.subr.bf16.mxu0 %v2659
        %3752 = vmatpush1.bf16.msra.mxu0 %v2658
        %3753 = vmatprep.subr.bf16.mxu0 %v2651
        %3754 = vmatpush1.bf16.msra.mxu0 %v2650
        %3755 = vmatprep.subr.bf16.mxu0 %v2643
        %3756 = vmatpush1.bf16.msra.mxu0 %v2642
        %3757 = vmatprep.subr.bf16.mxu0 %v2763
        %3758 = vmatpush2.bf16.msra.mxu0 %v2762
        %3759 = vmatprep.subr.bf16.mxu0 %v2755
        %3760 = vmatpush2.bf16.msra.mxu0 %v2754
        %3761 = vmatprep.subr.bf16.mxu0 %v2747
        %3762 = vmatpush2.bf16.msra.mxu0 %v2746
        %3763 = vmatprep.subr.bf16.mxu0 %v2739
        %3764 = vmatpush2.bf16.msra.mxu0 %v2738
        %3765 = vmatprep.subr.bf16.mxu0 %v2731
        %3766 = vmatpush2.bf16.msra.mxu0 %v2730
        %3767 = vmatprep.subr.bf16.mxu0 %v2723
        %3768 = vmatpush2.bf16.msra.mxu0 %v2722
        %3769 = vmatprep.subr.bf16.mxu0 %v2715
        %3770 = vmatpush2.bf16.msra.mxu0 %v2714
        %3771 = vmatprep.subr.bf16.mxu0 %v2707
        %3772 = vmatpush2.bf16.msra.mxu0 %v2706
        %3773 = vmatprep.mubr.bf16.mxu0 %v963
        %3774 = vmatmul.mubr.bf16.gmra.mxu0 %v962
        %v3775 = vpop.f32.mrf.mxu0
        %v3776 = vadd.f32 %v3735, %v3775
        %v3777 = vpop.f32.mrf.mxu0
        %v3778 = vadd.f32 %v3737, %v3777
        %v3779 = vpop.f32.mrf.mxu0
        %v3780 = vpop.f32.mrf.mxu0
        %3781 = vdwg.mxu0
        %3782 = vmatprep.subr.bf16.mxu0 %v2827
        %3783 = vmatpush1.bf16.msra.mxu0 %v2826
        %3784 = vmatprep.subr.bf16.mxu0 %v2819
        %3785 = vmatpush1.bf16.msra.mxu0 %v2818
        %3786 = vmatprep.subr.bf16.mxu0 %v2811
        %3787 = vmatpush1.bf16.msra.mxu0 %v2810
        %3788 = vmatprep.subr.bf16.mxu0 %v2803
        %3789 = vmatpush1.bf16.msra.mxu0 %v2802
        %3790 = vmatprep.subr.bf16.mxu0 %v2795
        %3791 = vmatpush1.bf16.msra.mxu0 %v2794
        %3792 = vmatprep.subr.bf16.mxu0 %v2787
        %3793 = vmatpush1.bf16.msra.mxu0 %v2786
        %3794 = vmatprep.subr.bf16.mxu0 %v2779
        %3795 = vmatpush1.bf16.msra.mxu0 %v2778
        %3796 = vmatprep.subr.bf16.mxu0 %v2771
        %3797 = vmatpush1.bf16.msra.mxu0 %v2770
        %3798 = vmatprep.subr.bf16.mxu0 %v2891
        %3799 = vmatpush2.bf16.msra.mxu0 %v2890
        %3800 = vmatprep.subr.bf16.mxu0 %v2883
        %3801 = vmatpush2.bf16.msra.mxu0 %v2882
        %3802 = vmatprep.subr.bf16.mxu0 %v2875
        %3803 = vmatpush2.bf16.msra.mxu0 %v2874
        %3804 = vmatprep.subr.bf16.mxu0 %v2867
        %3805 = vmatpush2.bf16.msra.mxu0 %v2866
        %3806 = vmatprep.subr.bf16.mxu0 %v2859
        %3807 = vmatpush2.bf16.msra.mxu0 %v2858
        %3808 = vmatprep.subr.bf16.mxu0 %v2851
        %3809 = vmatpush2.bf16.msra.mxu0 %v2850
        %3810 = vmatprep.subr.bf16.mxu0 %v2843
        %3811 = vmatpush2.bf16.msra.mxu0 %v2842
        %3812 = vmatprep.subr.bf16.mxu0 %v2835
        %3813 = vmatpush2.bf16.msra.mxu0 %v2834
        %3814 = vmatprep.mubr.bf16.mxu0 %v965
        %3815 = vmatmul.mubr.bf16.gmra.mxu0 %v964
        %v3816 = vpop.f32.mrf.mxu0
        %v3817 = vadd.f32 %v3776, %v3816
        %v3818 = vpop.f32.mrf.mxu0
        %v3819 = vadd.f32 %v3778, %v3818
        %v3820 = vpop.f32.mrf.mxu0
        %v3821 = vpop.f32.mrf.mxu0
        %3822 = vdwg.mxu0
        %3823 = vmatprep.subr.bf16.mxu0 %v2955
        %3824 = vmatpush1.bf16.msra.mxu0 %v2954
        %3825 = vmatprep.subr.bf16.mxu0 %v2947
        %3826 = vmatpush1.bf16.msra.mxu0 %v2946
        %3827 = vmatprep.subr.bf16.mxu0 %v2939
        %3828 = vmatpush1.bf16.msra.mxu0 %v2938
        %3829 = vmatprep.subr.bf16.mxu0 %v2931
        %3830 = vmatpush1.bf16.msra.mxu0 %v2930
        %3831 = vmatprep.subr.bf16.mxu0 %v2923
        %3832 = vmatpush1.bf16.msra.mxu0 %v2922
        %3833 = vmatprep.subr.bf16.mxu0 %v2915
        %3834 = vmatpush1.bf16.msra.mxu0 %v2914
        %3835 = vmatprep.subr.bf16.mxu0 %v2907
        %3836 = vmatpush1.bf16.msra.mxu0 %v2906
        %3837 = vmatprep.subr.bf16.mxu0 %v2899
        %3838 = vmatpush1.bf16.msra.mxu0 %v2898
        %3839 = vmatprep.subr.bf16.mxu0 %v3019
        %3840 = vmatpush2.bf16.msra.mxu0 %v3018
        %3841 = vmatprep.subr.bf16.mxu0 %v3011
        %3842 = vmatpush2.bf16.msra.mxu0 %v3010
        %3843 = vmatprep.subr.bf16.mxu0 %v3003
        %3844 = vmatpush2.bf16.msra.mxu0 %v3002
        %3845 = vmatprep.subr.bf16.mxu0 %v2995
        %3846 = vmatpush2.bf16.msra.mxu0 %v2994
        %3847 = vmatprep.subr.bf16.mxu0 %v2987
        %3848 = vmatpush2.bf16.msra.mxu0 %v2986
        %3849 = vmatprep.subr.bf16.mxu0 %v2979
        %3850 = vmatpush2.bf16.msra.mxu0 %v2978
        %3851 = vmatprep.subr.bf16.mxu0 %v2971
        %3852 = vmatpush2.bf16.msra.mxu0 %v2970
        %3853 = vmatprep.subr.bf16.mxu0 %v2963
        %3854 = vmatpush2.bf16.msra.mxu0 %v2962
        %3855 = vmatprep.mubr.bf16.mxu0 %v967
        %3856 = vmatmul.mubr.bf16.gmra.mxu0 %v966
        %v3857 = vpop.f32.mrf.mxu0
        %v3858 = vadd.f32 %v3817, %v3857
        %v3859 = vpop.f32.mrf.mxu0
        %v3860 = vadd.f32 %v3819, %v3859
        %v3861 = vpop.f32.mrf.mxu0
        %v3862 = vpop.f32.mrf.mxu0
        %3863 = vdwg.mxu0
        %3864 = vmatprep.subr.bf16.mxu0 %v2573
        %3865 = vmatpush1.bf16.msra.mxu0 %v2572
        %3866 = vmatprep.subr.bf16.mxu0 %v2565
        %3867 = vmatpush1.bf16.msra.mxu0 %v2564
        %3868 = vmatprep.subr.bf16.mxu0 %v2557
        %3869 = vmatpush1.bf16.msra.mxu0 %v2556
        %3870 = vmatprep.subr.bf16.mxu0 %v2549
        %3871 = vmatpush1.bf16.msra.mxu0 %v2548
        %3872 = vmatprep.subr.bf16.mxu0 %v2541
        %3873 = vmatpush1.bf16.msra.mxu0 %v2540
        %3874 = vmatprep.subr.bf16.mxu0 %v2533
        %3875 = vmatpush1.bf16.msra.mxu0 %v2532
        %3876 = vmatprep.subr.bf16.mxu0 %v2525
        %3877 = vmatpush1.bf16.msra.mxu0 %v2524
        %3878 = vmatprep.subr.bf16.mxu0 %v2517
        %3879 = vmatpush1.bf16.msra.mxu0 %v2516
        %3880 = vmatprep.subr.bf16.mxu0 %v2637
        %3881 = vmatpush2.bf16.msra.mxu0 %v2636
        %3882 = vmatprep.subr.bf16.mxu0 %v2629
        %3883 = vmatpush2.bf16.msra.mxu0 %v2628
        %3884 = vmatprep.subr.bf16.mxu0 %v2621
        %3885 = vmatpush2.bf16.msra.mxu0 %v2620
        %3886 = vmatprep.subr.bf16.mxu0 %v2613
        %3887 = vmatpush2.bf16.msra.mxu0 %v2612
        %3888 = vmatprep.subr.bf16.mxu0 %v2605
        %3889 = vmatpush2.bf16.msra.mxu0 %v2604
        %3890 = vmatprep.subr.bf16.mxu0 %v2597
        %3891 = vmatpush2.bf16.msra.mxu0 %v2596
        %3892 = vmatprep.subr.bf16.mxu0 %v2589
        %3893 = vmatpush2.bf16.msra.mxu0 %v2588
        %3894 = vmatprep.subr.bf16.mxu0 %v2581
        %3895 = vmatpush2.bf16.msra.mxu0 %v2580
        %3896 = vmatprep.mubr.bf16.mxu0 %v961
        %3897 = vmatmul.mubr.bf16.gmra.mxu0 %v960
        %v3898 = vpop.f32.mrf.mxu0
        %v3899 = vadd.f32 0.0, %v3898
        %v3900 = vpop.f32.mrf.mxu0
        %v3901 = vadd.f32 0.0, %v3900
        %v3902 = vpop.f32.mrf.mxu0
        %v3903 = vpop.f32.mrf.mxu0
        %3904 = vdwg.mxu0
        %3905 = vmatprep.subr.bf16.mxu0 %v2701
        %3906 = vmatpush1.bf16.msra.mxu0 %v2700
        %3907 = vmatprep.subr.bf16.mxu0 %v2693
        %3908 = vmatpush1.bf16.msra.mxu0 %v2692
        %3909 = vmatprep.subr.bf16.mxu0 %v2685
        %3910 = vmatpush1.bf16.msra.mxu0 %v2684
        %3911 = vmatprep.subr.bf16.mxu0 %v2677
        %3912 = vmatpush1.bf16.msra.mxu0 %v2676
        %3913 = vmatprep.subr.bf16.mxu0 %v2669
        %3914 = vmatpush1.bf16.msra.mxu0 %v2668
        %3915 = vmatprep.subr.bf16.mxu0 %v2661
        %3916 = vmatpush1.bf16.msra.mxu0 %v2660
        %3917 = vmatprep.subr.bf16.mxu0 %v2653
        %3918 = vmatpush1.bf16.msra.mxu0 %v2652
        %3919 = vmatprep.subr.bf16.mxu0 %v2645
        %3920 = vmatpush1.bf16.msra.mxu0 %v2644
        %3921 = vmatprep.subr.bf16.mxu0 %v2765
        %3922 = vmatpush2.bf16.msra.mxu0 %v2764
        %3923 = vmatprep.subr.bf16.mxu0 %v2757
        %3924 = vmatpush2.bf16.msra.mxu0 %v2756
        %3925 = vmatprep.subr.bf16.mxu0 %v2749
        %3926 = vmatpush2.bf16.msra.mxu0 %v2748
        %3927 = vmatprep.subr.bf16.mxu0 %v2741
        %3928 = vmatpush2.bf16.msra.mxu0 %v2740
        %3929 = vmatprep.subr.bf16.mxu0 %v2733
        %3930 = vmatpush2.bf16.msra.mxu0 %v2732
        %3931 = vmatprep.subr.bf16.mxu0 %v2725
        %3932 = vmatpush2.bf16.msra.mxu0 %v2724
        %3933 = vmatprep.subr.bf16.mxu0 %v2717
        %3934 = vmatpush2.bf16.msra.mxu0 %v2716
        %3935 = vmatprep.subr.bf16.mxu0 %v2709
        %3936 = vmatpush2.bf16.msra.mxu0 %v2708
        %3937 = vmatprep.mubr.bf16.mxu0 %v963
        %3938 = vmatmul.mubr.bf16.gmra.mxu0 %v962
        %v3939 = vpop.f32.mrf.mxu0
        %v3940 = vadd.f32 %v3899, %v3939
        %v3941 = vpop.f32.mrf.mxu0
        %v3942 = vadd.f32 %v3901, %v3941
        %v3943 = vpop.f32.mrf.mxu0
        %v3944 = vpop.f32.mrf.mxu0
        %3945 = vdwg.mxu0
        %3946 = vmatprep.subr.bf16.mxu0 %v2829
        %3947 = vmatpush1.bf16.msra.mxu0 %v2828
        %3948 = vmatprep.subr.bf16.mxu0 %v2821
        %3949 = vmatpush1.bf16.msra.mxu0 %v2820
        %3950 = vmatprep.subr.bf16.mxu0 %v2813
        %3951 = vmatpush1.bf16.msra.mxu0 %v2812
        %3952 = vmatprep.subr.bf16.mxu0 %v2805
        %3953 = vmatpush1.bf16.msra.mxu0 %v2804
        %3954 = vmatprep.subr.bf16.mxu0 %v2797
        %3955 = vmatpush1.bf16.msra.mxu0 %v2796
        %3956 = vmatprep.subr.bf16.mxu0 %v2789
        %3957 = vmatpush1.bf16.msra.mxu0 %v2788
        %3958 = vmatprep.subr.bf16.mxu0 %v2781
        %3959 = vmatpush1.bf16.msra.mxu0 %v2780
        %3960 = vmatprep.subr.bf16.mxu0 %v2773
        %3961 = vmatpush1.bf16.msra.mxu0 %v2772
        %3962 = vmatprep.subr.bf16.mxu0 %v2893
        %3963 = vmatpush2.bf16.msra.mxu0 %v2892
        %3964 = vmatprep.subr.bf16.mxu0 %v2885
        %3965 = vmatpush2.bf16.msra.mxu0 %v2884
        %3966 = vmatprep.subr.bf16.mxu0 %v2877
        %3967 = vmatpush2.bf16.msra.mxu0 %v2876
        %3968 = vmatprep.subr.bf16.mxu0 %v2869
        %3969 = vmatpush2.bf16.msra.mxu0 %v2868
        %3970 = vmatprep.subr.bf16.mxu0 %v2861
        %3971 = vmatpush2.bf16.msra.mxu0 %v2860
        %3972 = vmatprep.subr.bf16.mxu0 %v2853
        %3973 = vmatpush2.bf16.msra.mxu0 %v2852
        %3974 = vmatprep.subr.bf16.mxu0 %v2845
        %3975 = vmatpush2.bf16.msra.mxu0 %v2844
        %3976 = vmatprep.subr.bf16.mxu0 %v2837
        %3977 = vmatpush2.bf16.msra.mxu0 %v2836
        %3978 = vmatprep.mubr.bf16.mxu0 %v965
        %3979 = vmatmul.mubr.bf16.gmra.mxu0 %v964
        %v3980 = vpop.f32.mrf.mxu0
        %v3981 = vadd.f32 %v3940, %v3980
        %v3982 = vpop.f32.mrf.mxu0
        %v3983 = vadd.f32 %v3942, %v3982
        %v3984 = vpop.f32.mrf.mxu0
        %v3985 = vpop.f32.mrf.mxu0
        %3986 = vdwg.mxu0
        %3987 = vmatprep.subr.bf16.mxu0 %v2957
        %3988 = vmatpush1.bf16.msra.mxu0 %v2956
        %3989 = vmatprep.subr.bf16.mxu0 %v2949
        %3990 = vmatpush1.bf16.msra.mxu0 %v2948
        %3991 = vmatprep.subr.bf16.mxu0 %v2941
        %3992 = vmatpush1.bf16.msra.mxu0 %v2940
        %3993 = vmatprep.subr.bf16.mxu0 %v2933
        %3994 = vmatpush1.bf16.msra.mxu0 %v2932
        %3995 = vmatprep.subr.bf16.mxu0 %v2925
        %3996 = vmatpush1.bf16.msra.mxu0 %v2924
        %3997 = vmatprep.subr.bf16.mxu0 %v2917
        %3998 = vmatpush1.bf16.msra.mxu0 %v2916
        %3999 = vmatprep.subr.bf16.mxu0 %v2909
        %4000 = vmatpush1.bf16.msra.mxu0 %v2908
        %4001 = vmatprep.subr.bf16.mxu0 %v2901
        %4002 = vmatpush1.bf16.msra.mxu0 %v2900
        %4003 = vmatprep.subr.bf16.mxu0 %v3021
        %4004 = vmatpush2.bf16.msra.mxu0 %v3020
        %4005 = vmatprep.subr.bf16.mxu0 %v3013
        %4006 = vmatpush2.bf16.msra.mxu0 %v3012
        %4007 = vmatprep.subr.bf16.mxu0 %v3005
        %4008 = vmatpush2.bf16.msra.mxu0 %v3004
        %4009 = vmatprep.subr.bf16.mxu0 %v2997
        %4010 = vmatpush2.bf16.msra.mxu0 %v2996
        %4011 = vmatprep.subr.bf16.mxu0 %v2989
        %4012 = vmatpush2.bf16.msra.mxu0 %v2988
        %4013 = vmatprep.subr.bf16.mxu0 %v2981
        %4014 = vmatpush2.bf16.msra.mxu0 %v2980
        %4015 = vmatprep.subr.bf16.mxu0 %v2973
        %4016 = vmatpush2.bf16.msra.mxu0 %v2972
        %4017 = vmatprep.subr.bf16.mxu0 %v2965
        %4018 = vmatpush2.bf16.msra.mxu0 %v2964
        %4019 = vmatprep.mubr.bf16.mxu0 %v967
        %4020 = vmatmul.mubr.bf16.gmra.mxu0 %v966
        %v4021 = vpop.f32.mrf.mxu0
        %v4022 = vadd.f32 %v3981, %v4021
        %v4023 = vpop.f32.mrf.mxu0
        %v4024 = vadd.f32 %v3983, %v4023
        %v4025 = vpop.f32.mrf.mxu0
        %v4026 = vpop.f32.mrf.mxu0
        %4027 = vdwg.mxu0
        %4028 = vmatprep.subr.bf16.mxu0 %v2575
        %4029 = vmatpush1.bf16.msra.mxu0 %v2574
        %4030 = vmatprep.subr.bf16.mxu0 %v2567
        %4031 = vmatpush1.bf16.msra.mxu0 %v2566
        %4032 = vmatprep.subr.bf16.mxu0 %v2559
        %4033 = vmatpush1.bf16.msra.mxu0 %v2558
        %4034 = vmatprep.subr.bf16.mxu0 %v2551
        %4035 = vmatpush1.bf16.msra.mxu0 %v2550
        %4036 = vmatprep.subr.bf16.mxu0 %v2543
        %4037 = vmatpush1.bf16.msra.mxu0 %v2542
        %4038 = vmatprep.subr.bf16.mxu0 %v2535
        %4039 = vmatpush1.bf16.msra.mxu0 %v2534
        %4040 = vmatprep.subr.bf16.mxu0 %v2527
        %4041 = vmatpush1.bf16.msra.mxu0 %v2526
        %4042 = vmatprep.subr.bf16.mxu0 %v2519
        %4043 = vmatpush1.bf16.msra.mxu0 %v2518
        %4044 = vmatprep.subr.bf16.mxu0 %v2639
        %4045 = vmatpush2.bf16.msra.mxu0 %v2638
        %4046 = vmatprep.subr.bf16.mxu0 %v2631
        %4047 = vmatpush2.bf16.msra.mxu0 %v2630
        %4048 = vmatprep.subr.bf16.mxu0 %v2623
        %4049 = vmatpush2.bf16.msra.mxu0 %v2622
        %4050 = vmatprep.subr.bf16.mxu0 %v2615
        %4051 = vmatpush2.bf16.msra.mxu0 %v2614
        %4052 = vmatprep.subr.bf16.mxu0 %v2607
        %4053 = vmatpush2.bf16.msra.mxu0 %v2606
        %4054 = vmatprep.subr.bf16.mxu0 %v2599
        %4055 = vmatpush2.bf16.msra.mxu0 %v2598
        %4056 = vmatprep.subr.bf16.mxu0 %v2591
        %4057 = vmatpush2.bf16.msra.mxu0 %v2590
        %4058 = vmatprep.subr.bf16.mxu0 %v2583
        %4059 = vmatpush2.bf16.msra.mxu0 %v2582
        %4060 = vmatprep.mubr.bf16.mxu0 %v961
        %4061 = vmatmul.mubr.bf16.gmra.mxu0 %v960
        %v4062 = vpop.f32.mrf.mxu0
        %v4063 = vadd.f32 0.0, %v4062
        %v4064 = vpop.f32.mrf.mxu0
        %v4065 = vadd.f32 0.0, %v4064
        %v4066 = vpop.f32.mrf.mxu0
        %v4067 = vpop.f32.mrf.mxu0
        %4068 = vdwg.mxu0
        %4069 = vmatprep.subr.bf16.mxu0 %v2703
        %4070 = vmatpush1.bf16.msra.mxu0 %v2702
        %4071 = vmatprep.subr.bf16.mxu0 %v2695
        %4072 = vmatpush1.bf16.msra.mxu0 %v2694
        %4073 = vmatprep.subr.bf16.mxu0 %v2687
        %4074 = vmatpush1.bf16.msra.mxu0 %v2686
        %4075 = vmatprep.subr.bf16.mxu0 %v2679
        %4076 = vmatpush1.bf16.msra.mxu0 %v2678
        %4077 = vmatprep.subr.bf16.mxu0 %v2671
        %4078 = vmatpush1.bf16.msra.mxu0 %v2670
        %4079 = vmatprep.subr.bf16.mxu0 %v2663
        %4080 = vmatpush1.bf16.msra.mxu0 %v2662
        %4081 = vmatprep.subr.bf16.mxu0 %v2655
        %4082 = vmatpush1.bf16.msra.mxu0 %v2654
        %4083 = vmatprep.subr.bf16.mxu0 %v2647
        %4084 = vmatpush1.bf16.msra.mxu0 %v2646
        %4085 = vmatprep.subr.bf16.mxu0 %v2767
        %4086 = vmatpush2.bf16.msra.mxu0 %v2766
        %4087 = vmatprep.subr.bf16.mxu0 %v2759
        %4088 = vmatpush2.bf16.msra.mxu0 %v2758
        %4089 = vmatprep.subr.bf16.mxu0 %v2751
        %4090 = vmatpush2.bf16.msra.mxu0 %v2750
        %4091 = vmatprep.subr.bf16.mxu0 %v2743
        %4092 = vmatpush2.bf16.msra.mxu0 %v2742
        %4093 = vmatprep.subr.bf16.mxu0 %v2735
        %4094 = vmatpush2.bf16.msra.mxu0 %v2734
        %4095 = vmatprep.subr.bf16.mxu0 %v2727
        %4096 = vmatpush2.bf16.msra.mxu0 %v2726
        %4097 = vmatprep.subr.bf16.mxu0 %v2719
        %4098 = vmatpush2.bf16.msra.mxu0 %v2718
        %4099 = vmatprep.subr.bf16.mxu0 %v2711
        %4100 = vmatpush2.bf16.msra.mxu0 %v2710
        %4101 = vmatprep.mubr.bf16.mxu0 %v963
        %4102 = vmatmul.mubr.bf16.gmra.mxu0 %v962
        %v4103 = vpop.f32.mrf.mxu0
        %v4104 = vadd.f32 %v4063, %v4103
        %v4105 = vpop.f32.mrf.mxu0
        %v4106 = vadd.f32 %v4065, %v4105
        %v4107 = vpop.f32.mrf.mxu0
        %v4108 = vpop.f32.mrf.mxu0
        %4109 = vdwg.mxu0
        %4110 = vmatprep.subr.bf16.mxu0 %v2831
        %4111 = vmatpush1.bf16.msra.mxu0 %v2830
        %4112 = vmatprep.subr.bf16.mxu0 %v2823
        %4113 = vmatpush1.bf16.msra.mxu0 %v2822
        %4114 = vmatprep.subr.bf16.mxu0 %v2815
        %4115 = vmatpush1.bf16.msra.mxu0 %v2814
        %4116 = vmatprep.subr.bf16.mxu0 %v2807
        %4117 = vmatpush1.bf16.msra.mxu0 %v2806
        %4118 = vmatprep.subr.bf16.mxu0 %v2799
        %4119 = vmatpush1.bf16.msra.mxu0 %v2798
        %4120 = vmatprep.subr.bf16.mxu0 %v2791
        %4121 = vmatpush1.bf16.msra.mxu0 %v2790
        %4122 = vmatprep.subr.bf16.mxu0 %v2783
        %4123 = vmatpush1.bf16.msra.mxu0 %v2782
        %4124 = vmatprep.subr.bf16.mxu0 %v2775
        %4125 = vmatpush1.bf16.msra.mxu0 %v2774
        %4126 = vmatprep.subr.bf16.mxu0 %v2895
        %4127 = vmatpush2.bf16.msra.mxu0 %v2894
        %4128 = vmatprep.subr.bf16.mxu0 %v2887
        %4129 = vmatpush2.bf16.msra.mxu0 %v2886
        %4130 = vmatprep.subr.bf16.mxu0 %v2879
        %4131 = vmatpush2.bf16.msra.mxu0 %v2878
        %4132 = vmatprep.subr.bf16.mxu0 %v2871
        %4133 = vmatpush2.bf16.msra.mxu0 %v2870
        %4134 = vmatprep.subr.bf16.mxu0 %v2863
        %4135 = vmatpush2.bf16.msra.mxu0 %v2862
        %4136 = vmatprep.subr.bf16.mxu0 %v2855
        %4137 = vmatpush2.bf16.msra.mxu0 %v2854
        %4138 = vmatprep.subr.bf16.mxu0 %v2847
        %4139 = vmatpush2.bf16.msra.mxu0 %v2846
        %4140 = vmatprep.subr.bf16.mxu0 %v2839
        %4141 = vmatpush2.bf16.msra.mxu0 %v2838
        %4142 = vmatprep.mubr.bf16.mxu0 %v965
        %4143 = vmatmul.mubr.bf16.gmra.mxu0 %v964
        %v4144 = vpop.f32.mrf.mxu0
        %v4145 = vadd.f32 %v4104, %v4144
        %v4146 = vpop.f32.mrf.mxu0
        %v4147 = vadd.f32 %v4106, %v4146
        %v4148 = vpop.f32.mrf.mxu0
        %v4149 = vpop.f32.mrf.mxu0
        %4150 = vdwg.mxu0
        %4151 = vmatprep.subr.bf16.mxu0 %v2959
        %4152 = vmatpush1.bf16.msra.mxu0 %v2958
        %4153 = vmatprep.subr.bf16.mxu0 %v2951
        %4154 = vmatpush1.bf16.msra.mxu0 %v2950
        %4155 = vmatprep.subr.bf16.mxu0 %v2943
        %4156 = vmatpush1.bf16.msra.mxu0 %v2942
        %4157 = vmatprep.subr.bf16.mxu0 %v2935
        %4158 = vmatpush1.bf16.msra.mxu0 %v2934
        %4159 = vmatprep.subr.bf16.mxu0 %v2927
        %4160 = vmatpush1.bf16.msra.mxu0 %v2926
        %4161 = vmatprep.subr.bf16.mxu0 %v2919
        %4162 = vmatpush1.bf16.msra.mxu0 %v2918
        %4163 = vmatprep.subr.bf16.mxu0 %v2911
        %4164 = vmatpush1.bf16.msra.mxu0 %v2910
        %4165 = vmatprep.subr.bf16.mxu0 %v2903
        %4166 = vmatpush1.bf16.msra.mxu0 %v2902
        %4167 = vmatprep.subr.bf16.mxu0 %v3023
        %4168 = vmatpush2.bf16.msra.mxu0 %v3022
        %4169 = vmatprep.subr.bf16.mxu0 %v3015
        %4170 = vmatpush2.bf16.msra.mxu0 %v3014
        %4171 = vmatprep.subr.bf16.mxu0 %v3007
        %4172 = vmatpush2.bf16.msra.mxu0 %v3006
        %4173 = vmatprep.subr.bf16.mxu0 %v2999
        %4174 = vmatpush2.bf16.msra.mxu0 %v2998
        %4175 = vmatprep.subr.bf16.mxu0 %v2991
        %4176 = vmatpush2.bf16.msra.mxu0 %v2990
        %4177 = vmatprep.subr.bf16.mxu0 %v2983
        %4178 = vmatpush2.bf16.msra.mxu0 %v2982
        %4179 = vmatprep.subr.bf16.mxu0 %v2975
        %4180 = vmatpush2.bf16.msra.mxu0 %v2974
        %4181 = vmatprep.subr.bf16.mxu0 %v2967
        %4182 = vmatpush2.bf16.msra.mxu0 %v2966
        %4183 = vmatprep.mubr.bf16.mxu0 %v967
        %4184 = vmatmul.mubr.bf16.gmra.mxu0 %v966
        %v4185 = vpop.f32.mrf.mxu0
        %v4186 = vadd.f32 %v4145, %v4185
        %v4187 = vpop.f32.mrf.mxu0
        %v4188 = vadd.f32 %v4147, %v4187
        %v4189 = vpop.f32.mrf.mxu0
        %v4190 = vpop.f32.mrf.mxu0
        %4191 = vdwg.mxu0
        %v4192 = vadd.f32 %v428, %v3694
        %v4193 = vadd.f32 %v429, %v3696
        %v4194 = vadd.f32 %v430, %v3858
        %v4195 = vadd.f32 %v431, %v3860
        %v4196 = vadd.f32 %v432, %v4022
        %v4197 = vadd.f32 %v433, %v4024
        %v4198 = vadd.f32 %v434, %v4186
        %v4199 = vadd.f32 %v435, %v4188
        %4200 = vst [vmem:[#allocation2] sm:$0xff] %v4192
        %4201 = vst [vmem:[#allocation2 + $0x8] sm:$0xff] %v4193
        %4202 = vst [vmem:[#allocation2 + $0x10] sm:$0xff] %v4194
        %4203 = vst [vmem:[#allocation2 + $0x18] sm:$0xff] %v4195
        %4204 = vst [vmem:[#allocation2 + $0x20] sm:$0xff] %v4196
        %4205 = vst [vmem:[#allocation2 + $0x28] sm:$0xff] %v4197
        %4206 = vst [vmem:[#allocation2 + $0x30] sm:$0xff] %v4198
        %4207 = vst [vmem:[#allocation2 + $0x38] sm:$0xff] %v4199
        %p4208 = scmp.eq.s32.totalorder %s27, 3
        // Predicated region
        $region45: #{net_forward.1} parent=27 // pred_check
          %p4209 = pneg %p4208
        $region46: #{net_forward.1} parent=27 // pred_check_branch
          %4211 = sbr.rel (%p4209) target = $region48
        $region47: #{net_forward.1} parent=27 // pred_region
          %s4212 = smul.u32 4, 128
          %s4213 = smul.u32 %s4212, 8
          %s4214 = sshll.u32 %s4213, 4
          %4215 = dma.done [#allocation5], %s4214
          %s4216 = scalar_lea.sflag [#allocation5], 1
          %s4217 = smul.u32 %s4212, 1
          %s4218 = sshll.u32 %s4217, 4
          %4219 = dma.done %s4216, %s4218
          %v4220 = vld [vmem:[#allocation2] sm:$0xff]
          %v4221 = vld [vmem:[#allocation2 + $0x8] sm:$0xff]
          %v4222 = vld [vmem:[#allocation2 + $0x10] sm:$0xff]
          %v4223 = vld [vmem:[#allocation2 + $0x18] sm:$0xff]
          %v4224 = vld [vmem:[#allocation2 + $0x20] sm:$0xff]
          %v4225 = vld [vmem:[#allocation2 + $0x28] sm:$0xff]
          %v4226 = vld [vmem:[#allocation2 + $0x30] sm:$0xff]
          %v4227 = vld [vmem:[#allocation2 + $0x38] sm:$0xff]
          %v4228 = vmax.f32 %v4220, 0.0
          %v4229 = vmax.f32 %v4221, 0.0
          %v4230 = vmax.f32 %v4222, 0.0
          %v4231 = vmax.f32 %v4223, 0.0
          %v4232 = vmax.f32 %v4224, 0.0
          %v4233 = vmax.f32 %v4225, 0.0
          %v4234 = vmax.f32 %v4226, 0.0
          %v4235 = vmax.f32 %v4227, 0.0
          %v4236 = vrot.slane %v4228, 4
          %v4237 = vadd.f32 %v4228, %v4236
          %v4238 = vrot.slane %v4237, 2
          %v4239 = vadd.f32 %v4237, %v4238
          %v4240 = vrot.slane %v4239, 1
          %v4241 = vadd.f32 %v4239, %v4240
          %v4242 = vrot.slane %v4229, 4
          %v4243 = vadd.f32 %v4229, %v4242
          %v4244 = vrot.slane %v4243, 2
          %v4245 = vadd.f32 %v4243, %v4244
          %v4246 = vrot.slane %v4245, 1
          %v4247 = vadd.f32 %v4245, %v4246
          %v4248 = vrot.slane %v4230, 4
          %v4249 = vadd.f32 %v4230, %v4248
          %v4250 = vrot.slane %v4249, 2
          %v4251 = vadd.f32 %v4249, %v4250
          %v4252 = vrot.slane %v4251, 1
          %v4253 = vadd.f32 %v4251, %v4252
          %v4254 = vrot.slane %v4231, 4
          %v4255 = vadd.f32 %v4231, %v4254
          %v4256 = vrot.slane %v4255, 2
          %v4257 = vadd.f32 %v4255, %v4256
          %v4258 = vrot.slane %v4257, 1
          %v4259 = vadd.f32 %v4257, %v4258
          %v4260 = vrot.slane %v4232, 4
          %v4261 = vadd.f32 %v4232, %v4260
          %v4262 = vrot.slane %v4261, 2
          %v4263 = vadd.f32 %v4261, %v4262
          %v4264 = vrot.slane %v4263, 1
          %v4265 = vadd.f32 %v4263, %v4264
          %v4266 = vrot.slane %v4233, 4
          %v4267 = vadd.f32 %v4233, %v4266
          %v4268 = vrot.slane %v4267, 2
          %v4269 = vadd.f32 %v4267, %v4268
          %v4270 = vrot.slane %v4269, 1
          %v4271 = vadd.f32 %v4269, %v4270
          %v4272 = vrot.slane %v4234, 4
          %v4273 = vadd.f32 %v4234, %v4272
          %v4274 = vrot.slane %v4273, 2
          %v4275 = vadd.f32 %v4273, %v4274
          %v4276 = vrot.slane %v4275, 1
          %v4277 = vadd.f32 %v4275, %v4276
          %v4278 = vrot.slane %v4235, 4
          %v4279 = vadd.f32 %v4235, %v4278
          %v4280 = vrot.slane %v4279, 2
          %v4281 = vadd.f32 %v4279, %v4280
          %v4282 = vrot.slane %v4281, 1
          %v4283 = vadd.f32 %v4281, %v4282
          %v4284 = vmul.f32 %v4241, %v360
          %v4285 = vmul.f32 %v4247, %v360
          %v4286 = vmul.f32 %v4253, %v360
          %v4287 = vmul.f32 %v4259, %v360
          %v4288 = vmul.f32 %v4265, %v360
          %v4289 = vmul.f32 %v4271, %v360
          %v4290 = vmul.f32 %v4277, %v360
          %v4291 = vmul.f32 %v4283, %v360
          %v4300 = vcombine.low %v4284, %v4285
          %v4301 = vcombine.low %v4286, %v4287
          %v4302 = vcombine.low %v4288, %v4289
          %v4303 = vcombine.low %v4290, %v4291
          %v4305 = vunpack.c.l.s4 1966171168
          %v4306 = vunpack.c.0.s8 %v4305
          %v4307 = vlaneseq
          %v4308 = vshrl.u32 %v4307, 7
          %v4309 = vsub.s32 %v4306, %v4308
          %v4310 = vrot.slane %v4300, %v4309
          %v4312 = vunpack.c.l.s4 1966171168
          %v4313 = vunpack.c.0.s8 %v4312
          %v4314 = vlaneseq
          %v4315 = vshrl.u32 %v4314, 7
          %v4316 = vsub.s32 %v4313, %v4315
          %v4317 = vrot.slane %v4301, %v4316
          %v4319 = vunpack.c.l.s4 1966171168
          %v4320 = vunpack.c.0.s8 %v4319
          %v4321 = vlaneseq
          %v4322 = vshrl.u32 %v4321, 7
          %v4323 = vsub.s32 %v4320, %v4322
          %v4324 = vrot.slane %v4302, %v4323
          %v4326 = vunpack.c.l.s4 1966171168
          %v4327 = vunpack.c.0.s8 %v4326
          %v4328 = vlaneseq
          %v4329 = vshrl.u32 %v4328, 7
          %v4330 = vsub.s32 %v4327, %v4329
          %v4331 = vrot.slane %v4303, %v4330
          %v4332 = vcombine.low %v4310, %v4317
          %v4333 = vcombine.low %v4324, %v4331
          %v4335 = vunpack.c.l.s4 1966171168
          %v4336 = vunpack.c.0.s8 %v4335
          %v4337 = vlaneseq
          %v4338 = vshrl.u32 %v4337, 7
          %v4339 = vsub.s32 %v4336, %v4338
          %v4340 = vrot.slane %v4332, %v4339
          %v4342 = vunpack.c.l.s4 1966171168
          %v4343 = vunpack.c.0.s8 %v4342
          %v4344 = vlaneseq
          %v4345 = vshrl.u32 %v4344, 7
          %v4346 = vsub.s32 %v4343, %v4345
          %v4347 = vrot.slane %v4333, %v4346
          %v4348 = vcombine.low %v4340, %v4347
          %4350 = vst [vmem:[#allocation12] sm:$0xff] %v4348
          %v4351 = vpack.c.bf16 %v4228, %v4228
          %v4352 = vpack.c.bf16 %v4229, %v4229
          %v4353 = vpack.c.bf16 %v4230, %v4230
          %v4354 = vpack.c.bf16 %v4231, %v4231
          %v4355 = vpack.c.bf16 %v4232, %v4232
          %v4356 = vpack.c.bf16 %v4233, %v4233
          %v4357 = vpack.c.bf16 %v4234, %v4234
          %v4358 = vpack.c.bf16 %v4235, %v4235
          %v4359 = vld [vmem:[#allocation3] sm:$0xff]
          %v4360 = vld [vmem:[#allocation3 + $0x8] sm:$0xff]
          %v4361 = vld [vmem:[#allocation3 + $0x10] sm:$0xff]
          %v4362 = vld [vmem:[#allocation3 + $0x18] sm:$0xff]
          %v4363 = vld [vmem:[#allocation3 + $0x20] sm:$0xff]
          %v4364 = vld [vmem:[#allocation3 + $0x28] sm:$0xff]
          %v4365 = vld [vmem:[#allocation3 + $0x30] sm:$0xff]
          %v4366 = vld [vmem:[#allocation3 + $0x38] sm:$0xff]
          %v4367 = vld [vmem:[#allocation3 + $0x40] sm:$0xff]
          %v4368 = vld [vmem:[#allocation3 + $0x48] sm:$0xff]
          %v4369 = vld [vmem:[#allocation3 + $0x50] sm:$0xff]
          %v4370 = vld [vmem:[#allocation3 + $0x58] sm:$0xff]
          %v4371 = vld [vmem:[#allocation3 + $0x60] sm:$0xff]
          %v4372 = vld [vmem:[#allocation3 + $0x68] sm:$0xff]
          %v4373 = vld [vmem:[#allocation3 + $0x70] sm:$0xff]
          %v4374 = vld [vmem:[#allocation3 + $0x78] sm:$0xff]
          %v4375 = vld [vmem:[#allocation3 + $0x80] sm:$0xff]
          %v4376 = vld [vmem:[#allocation3 + $0x88] sm:$0xff]
          %v4377 = vld [vmem:[#allocation3 + $0x90] sm:$0xff]
          %v4378 = vld [vmem:[#allocation3 + $0x98] sm:$0xff]
          %v4379 = vld [vmem:[#allocation3 + $0xa0] sm:$0xff]
          %v4380 = vld [vmem:[#allocation3 + $0xa8] sm:$0xff]
          %v4381 = vld [vmem:[#allocation3 + $0xb0] sm:$0xff]
          %v4382 = vld [vmem:[#allocation3 + $0xb8] sm:$0xff]
          %v4383 = vld [vmem:[#allocation3 + $0xc0] sm:$0xff]
          %v4384 = vld [vmem:[#allocation3 + $0xc8] sm:$0xff]
          %v4385 = vld [vmem:[#allocation3 + $0xd0] sm:$0xff]
          %v4386 = vld [vmem:[#allocation3 + $0xd8] sm:$0xff]
          %v4387 = vld [vmem:[#allocation3 + $0xe0] sm:$0xff]
          %v4388 = vld [vmem:[#allocation3 + $0xe8] sm:$0xff]
          %v4389 = vld [vmem:[#allocation3 + $0xf0] sm:$0xff]
          %v4390 = vld [vmem:[#allocation3 + $0xf8] sm:$0xff]
          %v4391 = vld [vmem:[#allocation3 + $0x100] sm:$0xff]
          %v4392 = vld [vmem:[#allocation3 + $0x108] sm:$0xff]
          %v4393 = vld [vmem:[#allocation3 + $0x110] sm:$0xff]
          %v4394 = vld [vmem:[#allocation3 + $0x118] sm:$0xff]
          %v4395 = vld [vmem:[#allocation3 + $0x120] sm:$0xff]
          %v4396 = vld [vmem:[#allocation3 + $0x128] sm:$0xff]
          %v4397 = vld [vmem:[#allocation3 + $0x130] sm:$0xff]
          %v4398 = vld [vmem:[#allocation3 + $0x138] sm:$0xff]
          %v4399 = vld [vmem:[#allocation3 + $0x140] sm:$0xff]
          %v4400 = vld [vmem:[#allocation3 + $0x148] sm:$0xff]
          %v4401 = vld [vmem:[#allocation3 + $0x150] sm:$0xff]
          %v4402 = vld [vmem:[#allocation3 + $0x158] sm:$0xff]
          %v4403 = vld [vmem:[#allocation3 + $0x160] sm:$0xff]
          %v4404 = vld [vmem:[#allocation3 + $0x168] sm:$0xff]
          %v4405 = vld [vmem:[#allocation3 + $0x170] sm:$0xff]
          %v4406 = vld [vmem:[#allocation3 + $0x178] sm:$0xff]
          %v4407 = vld [vmem:[#allocation3 + $0x180] sm:$0xff]
          %v4408 = vld [vmem:[#allocation3 + $0x188] sm:$0xff]
          %v4409 = vld [vmem:[#allocation3 + $0x190] sm:$0xff]
          %v4410 = vld [vmem:[#allocation3 + $0x198] sm:$0xff]
          %v4411 = vld [vmem:[#allocation3 + $0x1a0] sm:$0xff]
          %v4412 = vld [vmem:[#allocation3 + $0x1a8] sm:$0xff]
          %v4413 = vld [vmem:[#allocation3 + $0x1b0] sm:$0xff]
          %v4414 = vld [vmem:[#allocation3 + $0x1b8] sm:$0xff]
          %v4415 = vld [vmem:[#allocation3 + $0x1c0] sm:$0xff]
          %v4416 = vld [vmem:[#allocation3 + $0x1c8] sm:$0xff]
          %v4417 = vld [vmem:[#allocation3 + $0x1d0] sm:$0xff]
          %v4418 = vld [vmem:[#allocation3 + $0x1d8] sm:$0xff]
          %v4419 = vld [vmem:[#allocation3 + $0x1e0] sm:$0xff]
          %v4420 = vld [vmem:[#allocation3 + $0x1e8] sm:$0xff]
          %v4421 = vld [vmem:[#allocation3 + $0x1f0] sm:$0xff]
          %v4422 = vld [vmem:[#allocation3 + $0x1f8] sm:$0xff]
          %v4423 = vld [vmem:[#allocation3 + $0x200] sm:$0xff]
          %v4424 = vld [vmem:[#allocation3 + $0x208] sm:$0xff]
          %v4425 = vld [vmem:[#allocation3 + $0x210] sm:$0xff]
          %v4426 = vld [vmem:[#allocation3 + $0x218] sm:$0xff]
          %v4427 = vld [vmem:[#allocation3 + $0x220] sm:$0xff]
          %v4428 = vld [vmem:[#allocation3 + $0x228] sm:$0xff]
          %v4429 = vld [vmem:[#allocation3 + $0x230] sm:$0xff]
          %v4430 = vld [vmem:[#allocation3 + $0x238] sm:$0xff]
          %v4431 = vld [vmem:[#allocation3 + $0x240] sm:$0xff]
          %v4432 = vld [vmem:[#allocation3 + $0x248] sm:$0xff]
          %v4433 = vld [vmem:[#allocation3 + $0x250] sm:$0xff]
          %v4434 = vld [vmem:[#allocation3 + $0x258] sm:$0xff]
          %v4435 = vld [vmem:[#allocation3 + $0x260] sm:$0xff]
          %v4436 = vld [vmem:[#allocation3 + $0x268] sm:$0xff]
          %v4437 = vld [vmem:[#allocation3 + $0x270] sm:$0xff]
          %v4438 = vld [vmem:[#allocation3 + $0x278] sm:$0xff]
          %v4439 = vld [vmem:[#allocation3 + $0x280] sm:$0xff]
          %v4440 = vld [vmem:[#allocation3 + $0x288] sm:$0xff]
          %v4441 = vld [vmem:[#allocation3 + $0x290] sm:$0xff]
          %v4442 = vld [vmem:[#allocation3 + $0x298] sm:$0xff]
          %v4443 = vld [vmem:[#allocation3 + $0x2a0] sm:$0xff]
          %v4444 = vld [vmem:[#allocation3 + $0x2a8] sm:$0xff]
          %v4445 = vld [vmem:[#allocation3 + $0x2b0] sm:$0xff]
          %v4446 = vld [vmem:[#allocation3 + $0x2b8] sm:$0xff]
          %v4447 = vld [vmem:[#allocation3 + $0x2c0] sm:$0xff]
          %v4448 = vld [vmem:[#allocation3 + $0x2c8] sm:$0xff]
          %v4449 = vld [vmem:[#allocation3 + $0x2d0] sm:$0xff]
          %v4450 = vld [vmem:[#allocation3 + $0x2d8] sm:$0xff]
          %v4451 = vld [vmem:[#allocation3 + $0x2e0] sm:$0xff]
          %v4452 = vld [vmem:[#allocation3 + $0x2e8] sm:$0xff]
          %v4453 = vld [vmem:[#allocation3 + $0x2f0] sm:$0xff]
          %v4454 = vld [vmem:[#allocation3 + $0x2f8] sm:$0xff]
          %v4455 = vld [vmem:[#allocation3 + $0x300] sm:$0xff]
          %v4456 = vld [vmem:[#allocation3 + $0x308] sm:$0xff]
          %v4457 = vld [vmem:[#allocation3 + $0x310] sm:$0xff]
          %v4458 = vld [vmem:[#allocation3 + $0x318] sm:$0xff]
          %v4459 = vld [vmem:[#allocation3 + $0x320] sm:$0xff]
          %v4460 = vld [vmem:[#allocation3 + $0x328] sm:$0xff]
          %v4461 = vld [vmem:[#allocation3 + $0x330] sm:$0xff]
          %v4462 = vld [vmem:[#allocation3 + $0x338] sm:$0xff]
          %v4463 = vld [vmem:[#allocation3 + $0x340] sm:$0xff]
          %v4464 = vld [vmem:[#allocation3 + $0x348] sm:$0xff]
          %v4465 = vld [vmem:[#allocation3 + $0x350] sm:$0xff]
          %v4466 = vld [vmem:[#allocation3 + $0x358] sm:$0xff]
          %v4467 = vld [vmem:[#allocation3 + $0x360] sm:$0xff]
          %v4468 = vld [vmem:[#allocation3 + $0x368] sm:$0xff]
          %v4469 = vld [vmem:[#allocation3 + $0x370] sm:$0xff]
          %v4470 = vld [vmem:[#allocation3 + $0x378] sm:$0xff]
          %v4471 = vld [vmem:[#allocation3 + $0x380] sm:$0xff]
          %v4472 = vld [vmem:[#allocation3 + $0x388] sm:$0xff]
          %v4473 = vld [vmem:[#allocation3 + $0x390] sm:$0xff]
          %v4474 = vld [vmem:[#allocation3 + $0x398] sm:$0xff]
          %v4475 = vld [vmem:[#allocation3 + $0x3a0] sm:$0xff]
          %v4476 = vld [vmem:[#allocation3 + $0x3a8] sm:$0xff]
          %v4477 = vld [vmem:[#allocation3 + $0x3b0] sm:$0xff]
          %v4478 = vld [vmem:[#allocation3 + $0x3b8] sm:$0xff]
          %v4479 = vld [vmem:[#allocation3 + $0x3c0] sm:$0xff]
          %v4480 = vld [vmem:[#allocation3 + $0x3c8] sm:$0xff]
          %v4481 = vld [vmem:[#allocation3 + $0x3d0] sm:$0xff]
          %v4482 = vld [vmem:[#allocation3 + $0x3d8] sm:$0xff]
          %v4483 = vld [vmem:[#allocation3 + $0x3e0] sm:$0xff]
          %v4484 = vld [vmem:[#allocation3 + $0x3e8] sm:$0xff]
          %v4485 = vld [vmem:[#allocation3 + $0x3f0] sm:$0xff]
          %v4486 = vld [vmem:[#allocation3 + $0x3f8] sm:$0xff]
          %v4487 = vld [vmem:[#allocation3 + $0x400] sm:$0xff]
          %v4488 = vld [vmem:[#allocation3 + $0x408] sm:$0xff]
          %v4489 = vld [vmem:[#allocation3 + $0x410] sm:$0xff]
          %v4490 = vld [vmem:[#allocation3 + $0x418] sm:$0xff]
          %v4491 = vld [vmem:[#allocation3 + $0x420] sm:$0xff]
          %v4492 = vld [vmem:[#allocation3 + $0x428] sm:$0xff]
          %v4493 = vld [vmem:[#allocation3 + $0x430] sm:$0xff]
          %v4494 = vld [vmem:[#allocation3 + $0x438] sm:$0xff]
          %v4495 = vld [vmem:[#allocation3 + $0x440] sm:$0xff]
          %v4496 = vld [vmem:[#allocation3 + $0x448] sm:$0xff]
          %v4497 = vld [vmem:[#allocation3 + $0x450] sm:$0xff]
          %v4498 = vld [vmem:[#allocation3 + $0x458] sm:$0xff]
          %v4499 = vld [vmem:[#allocation3 + $0x460] sm:$0xff]
          %v4500 = vld [vmem:[#allocation3 + $0x468] sm:$0xff]
          %v4501 = vld [vmem:[#allocation3 + $0x470] sm:$0xff]
          %v4502 = vld [vmem:[#allocation3 + $0x478] sm:$0xff]
          %v4503 = vld [vmem:[#allocation3 + $0x480] sm:$0xff]
          %v4504 = vld [vmem:[#allocation3 + $0x488] sm:$0xff]
          %v4505 = vld [vmem:[#allocation3 + $0x490] sm:$0xff]
          %v4506 = vld [vmem:[#allocation3 + $0x498] sm:$0xff]
          %v4507 = vld [vmem:[#allocation3 + $0x4a0] sm:$0xff]
          %v4508 = vld [vmem:[#allocation3 + $0x4a8] sm:$0xff]
          %v4509 = vld [vmem:[#allocation3 + $0x4b0] sm:$0xff]
          %v4510 = vld [vmem:[#allocation3 + $0x4b8] sm:$0xff]
          %v4511 = vld [vmem:[#allocation3 + $0x4c0] sm:$0xff]
          %v4512 = vld [vmem:[#allocation3 + $0x4c8] sm:$0xff]
          %v4513 = vld [vmem:[#allocation3 + $0x4d0] sm:$0xff]
          %v4514 = vld [vmem:[#allocation3 + $0x4d8] sm:$0xff]
          %v4515 = vld [vmem:[#allocation3 + $0x4e0] sm:$0xff]
          %v4516 = vld [vmem:[#allocation3 + $0x4e8] sm:$0xff]
          %v4517 = vld [vmem:[#allocation3 + $0x4f0] sm:$0xff]
          %v4518 = vld [vmem:[#allocation3 + $0x4f8] sm:$0xff]
          %v4519 = vld [vmem:[#allocation3 + $0x500] sm:$0xff]
          %v4520 = vld [vmem:[#allocation3 + $0x508] sm:$0xff]
          %v4521 = vld [vmem:[#allocation3 + $0x510] sm:$0xff]
          %v4522 = vld [vmem:[#allocation3 + $0x518] sm:$0xff]
          %v4523 = vld [vmem:[#allocation3 + $0x520] sm:$0xff]
          %v4524 = vld [vmem:[#allocation3 + $0x528] sm:$0xff]
          %v4525 = vld [vmem:[#allocation3 + $0x530] sm:$0xff]
          %v4526 = vld [vmem:[#allocation3 + $0x538] sm:$0xff]
          %v4527 = vld [vmem:[#allocation3 + $0x540] sm:$0xff]
          %v4528 = vld [vmem:[#allocation3 + $0x548] sm:$0xff]
          %v4529 = vld [vmem:[#allocation3 + $0x550] sm:$0xff]
          %v4530 = vld [vmem:[#allocation3 + $0x558] sm:$0xff]
          %v4531 = vld [vmem:[#allocation3 + $0x560] sm:$0xff]
          %v4532 = vld [vmem:[#allocation3 + $0x568] sm:$0xff]
          %v4533 = vld [vmem:[#allocation3 + $0x570] sm:$0xff]
          %v4534 = vld [vmem:[#allocation3 + $0x578] sm:$0xff]
          %v4535 = vld [vmem:[#allocation3 + $0x580] sm:$0xff]
          %v4536 = vld [vmem:[#allocation3 + $0x588] sm:$0xff]
          %v4537 = vld [vmem:[#allocation3 + $0x590] sm:$0xff]
          %v4538 = vld [vmem:[#allocation3 + $0x598] sm:$0xff]
          %v4539 = vld [vmem:[#allocation3 + $0x5a0] sm:$0xff]
          %v4540 = vld [vmem:[#allocation3 + $0x5a8] sm:$0xff]
          %v4541 = vld [vmem:[#allocation3 + $0x5b0] sm:$0xff]
          %v4542 = vld [vmem:[#allocation3 + $0x5b8] sm:$0xff]
          %v4543 = vld [vmem:[#allocation3 + $0x5c0] sm:$0xff]
          %v4544 = vld [vmem:[#allocation3 + $0x5c8] sm:$0xff]
          %v4545 = vld [vmem:[#allocation3 + $0x5d0] sm:$0xff]
          %v4546 = vld [vmem:[#allocation3 + $0x5d8] sm:$0xff]
          %v4547 = vld [vmem:[#allocation3 + $0x5e0] sm:$0xff]
          %v4548 = vld [vmem:[#allocation3 + $0x5e8] sm:$0xff]
          %v4549 = vld [vmem:[#allocation3 + $0x5f0] sm:$0xff]
          %v4550 = vld [vmem:[#allocation3 + $0x5f8] sm:$0xff]
          %v4551 = vld [vmem:[#allocation3 + $0x600] sm:$0xff]
          %v4552 = vld [vmem:[#allocation3 + $0x608] sm:$0xff]
          %v4553 = vld [vmem:[#allocation3 + $0x610] sm:$0xff]
          %v4554 = vld [vmem:[#allocation3 + $0x618] sm:$0xff]
          %v4555 = vld [vmem:[#allocation3 + $0x620] sm:$0xff]
          %v4556 = vld [vmem:[#allocation3 + $0x628] sm:$0xff]
          %v4557 = vld [vmem:[#allocation3 + $0x630] sm:$0xff]
          %v4558 = vld [vmem:[#allocation3 + $0x638] sm:$0xff]
          %v4559 = vld [vmem:[#allocation3 + $0x640] sm:$0xff]
          %v4560 = vld [vmem:[#allocation3 + $0x648] sm:$0xff]
          %v4561 = vld [vmem:[#allocation3 + $0x650] sm:$0xff]
          %v4562 = vld [vmem:[#allocation3 + $0x658] sm:$0xff]
          %v4563 = vld [vmem:[#allocation3 + $0x660] sm:$0xff]
          %v4564 = vld [vmem:[#allocation3 + $0x668] sm:$0xff]
          %v4565 = vld [vmem:[#allocation3 + $0x670] sm:$0xff]
          %v4566 = vld [vmem:[#allocation3 + $0x678] sm:$0xff]
          %v4567 = vld [vmem:[#allocation3 + $0x680] sm:$0xff]
          %v4568 = vld [vmem:[#allocation3 + $0x688] sm:$0xff]
          %v4569 = vld [vmem:[#allocation3 + $0x690] sm:$0xff]
          %v4570 = vld [vmem:[#allocation3 + $0x698] sm:$0xff]
          %v4571 = vld [vmem:[#allocation3 + $0x6a0] sm:$0xff]
          %v4572 = vld [vmem:[#allocation3 + $0x6a8] sm:$0xff]
          %v4573 = vld [vmem:[#allocation3 + $0x6b0] sm:$0xff]
          %v4574 = vld [vmem:[#allocation3 + $0x6b8] sm:$0xff]
          %v4575 = vld [vmem:[#allocation3 + $0x6c0] sm:$0xff]
          %v4576 = vld [vmem:[#allocation3 + $0x6c8] sm:$0xff]
          %v4577 = vld [vmem:[#allocation3 + $0x6d0] sm:$0xff]
          %v4578 = vld [vmem:[#allocation3 + $0x6d8] sm:$0xff]
          %v4579 = vld [vmem:[#allocation3 + $0x6e0] sm:$0xff]
          %v4580 = vld [vmem:[#allocation3 + $0x6e8] sm:$0xff]
          %v4581 = vld [vmem:[#allocation3 + $0x6f0] sm:$0xff]
          %v4582 = vld [vmem:[#allocation3 + $0x6f8] sm:$0xff]
          %v4583 = vld [vmem:[#allocation3 + $0x700] sm:$0xff]
          %v4584 = vld [vmem:[#allocation3 + $0x708] sm:$0xff]
          %v4585 = vld [vmem:[#allocation3 + $0x710] sm:$0xff]
          %v4586 = vld [vmem:[#allocation3 + $0x718] sm:$0xff]
          %v4587 = vld [vmem:[#allocation3 + $0x720] sm:$0xff]
          %v4588 = vld [vmem:[#allocation3 + $0x728] sm:$0xff]
          %v4589 = vld [vmem:[#allocation3 + $0x730] sm:$0xff]
          %v4590 = vld [vmem:[#allocation3 + $0x738] sm:$0xff]
          %v4591 = vld [vmem:[#allocation3 + $0x740] sm:$0xff]
          %v4592 = vld [vmem:[#allocation3 + $0x748] sm:$0xff]
          %v4593 = vld [vmem:[#allocation3 + $0x750] sm:$0xff]
          %v4594 = vld [vmem:[#allocation3 + $0x758] sm:$0xff]
          %v4595 = vld [vmem:[#allocation3 + $0x760] sm:$0xff]
          %v4596 = vld [vmem:[#allocation3 + $0x768] sm:$0xff]
          %v4597 = vld [vmem:[#allocation3 + $0x770] sm:$0xff]
          %v4598 = vld [vmem:[#allocation3 + $0x778] sm:$0xff]
          %v4599 = vld [vmem:[#allocation3 + $0x780] sm:$0xff]
          %v4600 = vld [vmem:[#allocation3 + $0x788] sm:$0xff]
          %v4601 = vld [vmem:[#allocation3 + $0x790] sm:$0xff]
          %v4602 = vld [vmem:[#allocation3 + $0x798] sm:$0xff]
          %v4603 = vld [vmem:[#allocation3 + $0x7a0] sm:$0xff]
          %v4604 = vld [vmem:[#allocation3 + $0x7a8] sm:$0xff]
          %v4605 = vld [vmem:[#allocation3 + $0x7b0] sm:$0xff]
          %v4606 = vld [vmem:[#allocation3 + $0x7b8] sm:$0xff]
          %v4607 = vld [vmem:[#allocation3 + $0x7c0] sm:$0xff]
          %v4608 = vld [vmem:[#allocation3 + $0x7c8] sm:$0xff]
          %v4609 = vld [vmem:[#allocation3 + $0x7d0] sm:$0xff]
          %v4610 = vld [vmem:[#allocation3 + $0x7d8] sm:$0xff]
          %v4611 = vld [vmem:[#allocation3 + $0x7e0] sm:$0xff]
          %v4612 = vld [vmem:[#allocation3 + $0x7e8] sm:$0xff]
          %v4613 = vld [vmem:[#allocation3 + $0x7f0] sm:$0xff]
          %v4614 = vld [vmem:[#allocation3 + $0x7f8] sm:$0xff]
          %v4615 = vld [vmem:[#allocation3 + $0x800] sm:$0xff]
          %v4616 = vld [vmem:[#allocation3 + $0x808] sm:$0xff]
          %v4617 = vld [vmem:[#allocation3 + $0x810] sm:$0xff]
          %v4618 = vld [vmem:[#allocation3 + $0x818] sm:$0xff]
          %v4619 = vld [vmem:[#allocation3 + $0x820] sm:$0xff]
          %v4620 = vld [vmem:[#allocation3 + $0x828] sm:$0xff]
          %v4621 = vld [vmem:[#allocation3 + $0x830] sm:$0xff]
          %v4622 = vld [vmem:[#allocation3 + $0x838] sm:$0xff]
          %v4623 = vld [vmem:[#allocation3 + $0x840] sm:$0xff]
          %v4624 = vld [vmem:[#allocation3 + $0x848] sm:$0xff]
          %v4625 = vld [vmem:[#allocation3 + $0x850] sm:$0xff]
          %v4626 = vld [vmem:[#allocation3 + $0x858] sm:$0xff]
          %v4627 = vld [vmem:[#allocation3 + $0x860] sm:$0xff]
          %v4628 = vld [vmem:[#allocation3 + $0x868] sm:$0xff]
          %v4629 = vld [vmem:[#allocation3 + $0x870] sm:$0xff]
          %v4630 = vld [vmem:[#allocation3 + $0x878] sm:$0xff]
          %v4631 = vld [vmem:[#allocation3 + $0x880] sm:$0xff]
          %v4632 = vld [vmem:[#allocation3 + $0x888] sm:$0xff]
          %v4633 = vld [vmem:[#allocation3 + $0x890] sm:$0xff]
          %v4634 = vld [vmem:[#allocation3 + $0x898] sm:$0xff]
          %v4635 = vld [vmem:[#allocation3 + $0x8a0] sm:$0xff]
          %v4636 = vld [vmem:[#allocation3 + $0x8a8] sm:$0xff]
          %v4637 = vld [vmem:[#allocation3 + $0x8b0] sm:$0xff]
          %v4638 = vld [vmem:[#allocation3 + $0x8b8] sm:$0xff]
          %v4639 = vld [vmem:[#allocation3 + $0x8c0] sm:$0xff]
          %v4640 = vld [vmem:[#allocation3 + $0x8c8] sm:$0xff]
          %v4641 = vld [vmem:[#allocation3 + $0x8d0] sm:$0xff]
          %v4642 = vld [vmem:[#allocation3 + $0x8d8] sm:$0xff]
          %v4643 = vld [vmem:[#allocation3 + $0x8e0] sm:$0xff]
          %v4644 = vld [vmem:[#allocation3 + $0x8e8] sm:$0xff]
          %v4645 = vld [vmem:[#allocation3 + $0x8f0] sm:$0xff]
          %v4646 = vld [vmem:[#allocation3 + $0x8f8] sm:$0xff]
          %v4647 = vld [vmem:[#allocation3 + $0x900] sm:$0xff]
          %v4648 = vld [vmem:[#allocation3 + $0x908] sm:$0xff]
          %v4649 = vld [vmem:[#allocation3 + $0x910] sm:$0xff]
          %v4650 = vld [vmem:[#allocation3 + $0x918] sm:$0xff]
          %v4651 = vld [vmem:[#allocation3 + $0x920] sm:$0xff]
          %v4652 = vld [vmem:[#allocation3 + $0x928] sm:$0xff]
          %v4653 = vld [vmem:[#allocation3 + $0x930] sm:$0xff]
          %v4654 = vld [vmem:[#allocation3 + $0x938] sm:$0xff]
          %v4655 = vld [vmem:[#allocation3 + $0x940] sm:$0xff]
          %v4656 = vld [vmem:[#allocation3 + $0x948] sm:$0xff]
          %v4657 = vld [vmem:[#allocation3 + $0x950] sm:$0xff]
          %v4658 = vld [vmem:[#allocation3 + $0x958] sm:$0xff]
          %v4659 = vld [vmem:[#allocation3 + $0x960] sm:$0xff]
          %v4660 = vld [vmem:[#allocation3 + $0x968] sm:$0xff]
          %v4661 = vld [vmem:[#allocation3 + $0x970] sm:$0xff]
          %v4662 = vld [vmem:[#allocation3 + $0x978] sm:$0xff]
          %v4663 = vld [vmem:[#allocation3 + $0x980] sm:$0xff]
          %v4664 = vld [vmem:[#allocation3 + $0x988] sm:$0xff]
          %v4665 = vld [vmem:[#allocation3 + $0x990] sm:$0xff]
          %v4666 = vld [vmem:[#allocation3 + $0x998] sm:$0xff]
          %v4667 = vld [vmem:[#allocation3 + $0x9a0] sm:$0xff]
          %v4668 = vld [vmem:[#allocation3 + $0x9a8] sm:$0xff]
          %v4669 = vld [vmem:[#allocation3 + $0x9b0] sm:$0xff]
          %v4670 = vld [vmem:[#allocation3 + $0x9b8] sm:$0xff]
          %v4671 = vld [vmem:[#allocation3 + $0x9c0] sm:$0xff]
          %v4672 = vld [vmem:[#allocation3 + $0x9c8] sm:$0xff]
          %v4673 = vld [vmem:[#allocation3 + $0x9d0] sm:$0xff]
          %v4674 = vld [vmem:[#allocation3 + $0x9d8] sm:$0xff]
          %v4675 = vld [vmem:[#allocation3 + $0x9e0] sm:$0xff]
          %v4676 = vld [vmem:[#allocation3 + $0x9e8] sm:$0xff]
          %v4677 = vld [vmem:[#allocation3 + $0x9f0] sm:$0xff]
          %v4678 = vld [vmem:[#allocation3 + $0x9f8] sm:$0xff]
          %v4679 = vld [vmem:[#allocation3 + $0xa00] sm:$0xff]
          %v4680 = vld [vmem:[#allocation3 + $0xa08] sm:$0xff]
          %v4681 = vld [vmem:[#allocation3 + $0xa10] sm:$0xff]
          %v4682 = vld [vmem:[#allocation3 + $0xa18] sm:$0xff]
          %v4683 = vld [vmem:[#allocation3 + $0xa20] sm:$0xff]
          %v4684 = vld [vmem:[#allocation3 + $0xa28] sm:$0xff]
          %v4685 = vld [vmem:[#allocation3 + $0xa30] sm:$0xff]
          %v4686 = vld [vmem:[#allocation3 + $0xa38] sm:$0xff]
          %v4687 = vld [vmem:[#allocation3 + $0xa40] sm:$0xff]
          %v4688 = vld [vmem:[#allocation3 + $0xa48] sm:$0xff]
          %v4689 = vld [vmem:[#allocation3 + $0xa50] sm:$0xff]
          %v4690 = vld [vmem:[#allocation3 + $0xa58] sm:$0xff]
          %v4691 = vld [vmem:[#allocation3 + $0xa60] sm:$0xff]
          %v4692 = vld [vmem:[#allocation3 + $0xa68] sm:$0xff]
          %v4693 = vld [vmem:[#allocation3 + $0xa70] sm:$0xff]
          %v4694 = vld [vmem:[#allocation3 + $0xa78] sm:$0xff]
          %v4695 = vld [vmem:[#allocation3 + $0xa80] sm:$0xff]
          %v4696 = vld [vmem:[#allocation3 + $0xa88] sm:$0xff]
          %v4697 = vld [vmem:[#allocation3 + $0xa90] sm:$0xff]
          %v4698 = vld [vmem:[#allocation3 + $0xa98] sm:$0xff]
          %v4699 = vld [vmem:[#allocation3 + $0xaa0] sm:$0xff]
          %v4700 = vld [vmem:[#allocation3 + $0xaa8] sm:$0xff]
          %v4701 = vld [vmem:[#allocation3 + $0xab0] sm:$0xff]
          %v4702 = vld [vmem:[#allocation3 + $0xab8] sm:$0xff]
          %v4703 = vld [vmem:[#allocation3 + $0xac0] sm:$0xff]
          %v4704 = vld [vmem:[#allocation3 + $0xac8] sm:$0xff]
          %v4705 = vld [vmem:[#allocation3 + $0xad0] sm:$0xff]
          %v4706 = vld [vmem:[#allocation3 + $0xad8] sm:$0xff]
          %v4707 = vld [vmem:[#allocation3 + $0xae0] sm:$0xff]
          %v4708 = vld [vmem:[#allocation3 + $0xae8] sm:$0xff]
          %v4709 = vld [vmem:[#allocation3 + $0xaf0] sm:$0xff]
          %v4710 = vld [vmem:[#allocation3 + $0xaf8] sm:$0xff]
          %v4711 = vld [vmem:[#allocation3 + $0xb00] sm:$0xff]
          %v4712 = vld [vmem:[#allocation3 + $0xb08] sm:$0xff]
          %v4713 = vld [vmem:[#allocation3 + $0xb10] sm:$0xff]
          %v4714 = vld [vmem:[#allocation3 + $0xb18] sm:$0xff]
          %v4715 = vld [vmem:[#allocation3 + $0xb20] sm:$0xff]
          %v4716 = vld [vmem:[#allocation3 + $0xb28] sm:$0xff]
          %v4717 = vld [vmem:[#allocation3 + $0xb30] sm:$0xff]
          %v4718 = vld [vmem:[#allocation3 + $0xb38] sm:$0xff]
          %v4719 = vld [vmem:[#allocation3 + $0xb40] sm:$0xff]
          %v4720 = vld [vmem:[#allocation3 + $0xb48] sm:$0xff]
          %v4721 = vld [vmem:[#allocation3 + $0xb50] sm:$0xff]
          %v4722 = vld [vmem:[#allocation3 + $0xb58] sm:$0xff]
          %v4723 = vld [vmem:[#allocation3 + $0xb60] sm:$0xff]
          %v4724 = vld [vmem:[#allocation3 + $0xb68] sm:$0xff]
          %v4725 = vld [vmem:[#allocation3 + $0xb70] sm:$0xff]
          %v4726 = vld [vmem:[#allocation3 + $0xb78] sm:$0xff]
          %v4727 = vld [vmem:[#allocation3 + $0xb80] sm:$0xff]
          %v4728 = vld [vmem:[#allocation3 + $0xb88] sm:$0xff]
          %v4729 = vld [vmem:[#allocation3 + $0xb90] sm:$0xff]
          %v4730 = vld [vmem:[#allocation3 + $0xb98] sm:$0xff]
          %v4731 = vld [vmem:[#allocation3 + $0xba0] sm:$0xff]
          %v4732 = vld [vmem:[#allocation3 + $0xba8] sm:$0xff]
          %v4733 = vld [vmem:[#allocation3 + $0xbb0] sm:$0xff]
          %v4734 = vld [vmem:[#allocation3 + $0xbb8] sm:$0xff]
          %v4735 = vld [vmem:[#allocation3 + $0xbc0] sm:$0xff]
          %v4736 = vld [vmem:[#allocation3 + $0xbc8] sm:$0xff]
          %v4737 = vld [vmem:[#allocation3 + $0xbd0] sm:$0xff]
          %v4738 = vld [vmem:[#allocation3 + $0xbd8] sm:$0xff]
          %v4739 = vld [vmem:[#allocation3 + $0xbe0] sm:$0xff]
          %v4740 = vld [vmem:[#allocation3 + $0xbe8] sm:$0xff]
          %v4741 = vld [vmem:[#allocation3 + $0xbf0] sm:$0xff]
          %v4742 = vld [vmem:[#allocation3 + $0xbf8] sm:$0xff]
          %v4743 = vld [vmem:[#allocation3 + $0xc00] sm:$0xff]
          %v4744 = vld [vmem:[#allocation3 + $0xc08] sm:$0xff]
          %v4745 = vld [vmem:[#allocation3 + $0xc10] sm:$0xff]
          %v4746 = vld [vmem:[#allocation3 + $0xc18] sm:$0xff]
          %v4747 = vld [vmem:[#allocation3 + $0xc20] sm:$0xff]
          %v4748 = vld [vmem:[#allocation3 + $0xc28] sm:$0xff]
          %v4749 = vld [vmem:[#allocation3 + $0xc30] sm:$0xff]
          %v4750 = vld [vmem:[#allocation3 + $0xc38] sm:$0xff]
          %v4751 = vld [vmem:[#allocation3 + $0xc40] sm:$0xff]
          %v4752 = vld [vmem:[#allocation3 + $0xc48] sm:$0xff]
          %v4753 = vld [vmem:[#allocation3 + $0xc50] sm:$0xff]
          %v4754 = vld [vmem:[#allocation3 + $0xc58] sm:$0xff]
          %v4755 = vld [vmem:[#allocation3 + $0xc60] sm:$0xff]
          %v4756 = vld [vmem:[#allocation3 + $0xc68] sm:$0xff]
          %v4757 = vld [vmem:[#allocation3 + $0xc70] sm:$0xff]
          %v4758 = vld [vmem:[#allocation3 + $0xc78] sm:$0xff]
          %v4759 = vld [vmem:[#allocation3 + $0xc80] sm:$0xff]
          %v4760 = vld [vmem:[#allocation3 + $0xc88] sm:$0xff]
          %v4761 = vld [vmem:[#allocation3 + $0xc90] sm:$0xff]
          %v4762 = vld [vmem:[#allocation3 + $0xc98] sm:$0xff]
          %v4763 = vld [vmem:[#allocation3 + $0xca0] sm:$0xff]
          %v4764 = vld [vmem:[#allocation3 + $0xca8] sm:$0xff]
          %v4765 = vld [vmem:[#allocation3 + $0xcb0] sm:$0xff]
          %v4766 = vld [vmem:[#allocation3 + $0xcb8] sm:$0xff]
          %v4767 = vld [vmem:[#allocation3 + $0xcc0] sm:$0xff]
          %v4768 = vld [vmem:[#allocation3 + $0xcc8] sm:$0xff]
          %v4769 = vld [vmem:[#allocation3 + $0xcd0] sm:$0xff]
          %v4770 = vld [vmem:[#allocation3 + $0xcd8] sm:$0xff]
          %v4771 = vld [vmem:[#allocation3 + $0xce0] sm:$0xff]
          %v4772 = vld [vmem:[#allocation3 + $0xce8] sm:$0xff]
          %v4773 = vld [vmem:[#allocation3 + $0xcf0] sm:$0xff]
          %v4774 = vld [vmem:[#allocation3 + $0xcf8] sm:$0xff]
          %v4775 = vld [vmem:[#allocation3 + $0xd00] sm:$0xff]
          %v4776 = vld [vmem:[#allocation3 + $0xd08] sm:$0xff]
          %v4777 = vld [vmem:[#allocation3 + $0xd10] sm:$0xff]
          %v4778 = vld [vmem:[#allocation3 + $0xd18] sm:$0xff]
          %v4779 = vld [vmem:[#allocation3 + $0xd20] sm:$0xff]
          %v4780 = vld [vmem:[#allocation3 + $0xd28] sm:$0xff]
          %v4781 = vld [vmem:[#allocation3 + $0xd30] sm:$0xff]
          %v4782 = vld [vmem:[#allocation3 + $0xd38] sm:$0xff]
          %v4783 = vld [vmem:[#allocation3 + $0xd40] sm:$0xff]
          %v4784 = vld [vmem:[#allocation3 + $0xd48] sm:$0xff]
          %v4785 = vld [vmem:[#allocation3 + $0xd50] sm:$0xff]
          %v4786 = vld [vmem:[#allocation3 + $0xd58] sm:$0xff]
          %v4787 = vld [vmem:[#allocation3 + $0xd60] sm:$0xff]
          %v4788 = vld [vmem:[#allocation3 + $0xd68] sm:$0xff]
          %v4789 = vld [vmem:[#allocation3 + $0xd70] sm:$0xff]
          %v4790 = vld [vmem:[#allocation3 + $0xd78] sm:$0xff]
          %v4791 = vld [vmem:[#allocation3 + $0xd80] sm:$0xff]
          %v4792 = vld [vmem:[#allocation3 + $0xd88] sm:$0xff]
          %v4793 = vld [vmem:[#allocation3 + $0xd90] sm:$0xff]
          %v4794 = vld [vmem:[#allocation3 + $0xd98] sm:$0xff]
          %v4795 = vld [vmem:[#allocation3 + $0xda0] sm:$0xff]
          %v4796 = vld [vmem:[#allocation3 + $0xda8] sm:$0xff]
          %v4797 = vld [vmem:[#allocation3 + $0xdb0] sm:$0xff]
          %v4798 = vld [vmem:[#allocation3 + $0xdb8] sm:$0xff]
          %v4799 = vld [vmem:[#allocation3 + $0xdc0] sm:$0xff]
          %v4800 = vld [vmem:[#allocation3 + $0xdc8] sm:$0xff]
          %v4801 = vld [vmem:[#allocation3 + $0xdd0] sm:$0xff]
          %v4802 = vld [vmem:[#allocation3 + $0xdd8] sm:$0xff]
          %v4803 = vld [vmem:[#allocation3 + $0xde0] sm:$0xff]
          %v4804 = vld [vmem:[#allocation3 + $0xde8] sm:$0xff]
          %v4805 = vld [vmem:[#allocation3 + $0xdf0] sm:$0xff]
          %v4806 = vld [vmem:[#allocation3 + $0xdf8] sm:$0xff]
          %v4807 = vld [vmem:[#allocation3 + $0xe00] sm:$0xff]
          %v4808 = vld [vmem:[#allocation3 + $0xe08] sm:$0xff]
          %v4809 = vld [vmem:[#allocation3 + $0xe10] sm:$0xff]
          %v4810 = vld [vmem:[#allocation3 + $0xe18] sm:$0xff]
          %v4811 = vld [vmem:[#allocation3 + $0xe20] sm:$0xff]
          %v4812 = vld [vmem:[#allocation3 + $0xe28] sm:$0xff]
          %v4813 = vld [vmem:[#allocation3 + $0xe30] sm:$0xff]
          %v4814 = vld [vmem:[#allocation3 + $0xe38] sm:$0xff]
          %v4815 = vld [vmem:[#allocation3 + $0xe40] sm:$0xff]
          %v4816 = vld [vmem:[#allocation3 + $0xe48] sm:$0xff]
          %v4817 = vld [vmem:[#allocation3 + $0xe50] sm:$0xff]
          %v4818 = vld [vmem:[#allocation3 + $0xe58] sm:$0xff]
          %v4819 = vld [vmem:[#allocation3 + $0xe60] sm:$0xff]
          %v4820 = vld [vmem:[#allocation3 + $0xe68] sm:$0xff]
          %v4821 = vld [vmem:[#allocation3 + $0xe70] sm:$0xff]
          %v4822 = vld [vmem:[#allocation3 + $0xe78] sm:$0xff]
          %v4823 = vld [vmem:[#allocation3 + $0xe80] sm:$0xff]
          %v4824 = vld [vmem:[#allocation3 + $0xe88] sm:$0xff]
          %v4825 = vld [vmem:[#allocation3 + $0xe90] sm:$0xff]
          %v4826 = vld [vmem:[#allocation3 + $0xe98] sm:$0xff]
          %v4827 = vld [vmem:[#allocation3 + $0xea0] sm:$0xff]
          %v4828 = vld [vmem:[#allocation3 + $0xea8] sm:$0xff]
          %v4829 = vld [vmem:[#allocation3 + $0xeb0] sm:$0xff]
          %v4830 = vld [vmem:[#allocation3 + $0xeb8] sm:$0xff]
          %v4831 = vld [vmem:[#allocation3 + $0xec0] sm:$0xff]
          %v4832 = vld [vmem:[#allocation3 + $0xec8] sm:$0xff]
          %v4833 = vld [vmem:[#allocation3 + $0xed0] sm:$0xff]
          %v4834 = vld [vmem:[#allocation3 + $0xed8] sm:$0xff]
          %v4835 = vld [vmem:[#allocation3 + $0xee0] sm:$0xff]
          %v4836 = vld [vmem:[#allocation3 + $0xee8] sm:$0xff]
          %v4837 = vld [vmem:[#allocation3 + $0xef0] sm:$0xff]
          %v4838 = vld [vmem:[#allocation3 + $0xef8] sm:$0xff]
          %v4839 = vld [vmem:[#allocation3 + $0xf00] sm:$0xff]
          %v4840 = vld [vmem:[#allocation3 + $0xf08] sm:$0xff]
          %v4841 = vld [vmem:[#allocation3 + $0xf10] sm:$0xff]
          %v4842 = vld [vmem:[#allocation3 + $0xf18] sm:$0xff]
          %v4843 = vld [vmem:[#allocation3 + $0xf20] sm:$0xff]
          %v4844 = vld [vmem:[#allocation3 + $0xf28] sm:$0xff]
          %v4845 = vld [vmem:[#allocation3 + $0xf30] sm:$0xff]
          %v4846 = vld [vmem:[#allocation3 + $0xf38] sm:$0xff]
          %v4847 = vld [vmem:[#allocation3 + $0xf40] sm:$0xff]
          %v4848 = vld [vmem:[#allocation3 + $0xf48] sm:$0xff]
          %v4849 = vld [vmem:[#allocation3 + $0xf50] sm:$0xff]
          %v4850 = vld [vmem:[#allocation3 + $0xf58] sm:$0xff]
          %v4851 = vld [vmem:[#allocation3 + $0xf60] sm:$0xff]
          %v4852 = vld [vmem:[#allocation3 + $0xf68] sm:$0xff]
          %v4853 = vld [vmem:[#allocation3 + $0xf70] sm:$0xff]
          %v4854 = vld [vmem:[#allocation3 + $0xf78] sm:$0xff]
          %v4855 = vld [vmem:[#allocation3 + $0xf80] sm:$0xff]
          %v4856 = vld [vmem:[#allocation3 + $0xf88] sm:$0xff]
          %v4857 = vld [vmem:[#allocation3 + $0xf90] sm:$0xff]
          %v4858 = vld [vmem:[#allocation3 + $0xf98] sm:$0xff]
          %v4859 = vld [vmem:[#allocation3 + $0xfa0] sm:$0xff]
          %v4860 = vld [vmem:[#allocation3 + $0xfa8] sm:$0xff]
          %v4861 = vld [vmem:[#allocation3 + $0xfb0] sm:$0xff]
          %v4862 = vld [vmem:[#allocation3 + $0xfb8] sm:$0xff]
          %v4863 = vld [vmem:[#allocation3 + $0xfc0] sm:$0xff]
          %v4864 = vld [vmem:[#allocation3 + $0xfc8] sm:$0xff]
          %v4865 = vld [vmem:[#allocation3 + $0xfd0] sm:$0xff]
          %v4866 = vld [vmem:[#allocation3 + $0xfd8] sm:$0xff]
          %v4867 = vld [vmem:[#allocation3 + $0xfe0] sm:$0xff]
          %v4868 = vld [vmem:[#allocation3 + $0xfe8] sm:$0xff]
          %v4869 = vld [vmem:[#allocation3 + $0xff0] sm:$0xff]
          %v4870 = vld [vmem:[#allocation3 + $0xff8] sm:$0xff]
          %v5383 = vunpack.c.l.b16 %v4359
          %v5384 = vunpack.c.h.b16 %v4359
          %v5385 = vunpack.c.l.b16 %v4360
          %v5386 = vunpack.c.h.b16 %v4360
          %v5387 = vunpack.c.l.b16 %v4361
          %v5388 = vunpack.c.h.b16 %v4361
          %v5389 = vunpack.c.l.b16 %v4362
          %v5390 = vunpack.c.h.b16 %v4362
          %v5391 = vunpack.c.l.b16 %v4363
          %v5392 = vunpack.c.h.b16 %v4363
          %v5393 = vunpack.c.l.b16 %v4364
          %v5394 = vunpack.c.h.b16 %v4364
          %v5395 = vunpack.c.l.b16 %v4365
          %v5396 = vunpack.c.h.b16 %v4365
          %v5397 = vunpack.c.l.b16 %v4366
          %v5398 = vunpack.c.h.b16 %v4366
          %v5399 = vunpack.c.l.b16 %v4367
          %v5400 = vunpack.c.h.b16 %v4367
          %v5401 = vunpack.c.l.b16 %v4368
          %v5402 = vunpack.c.h.b16 %v4368
          %v5403 = vunpack.c.l.b16 %v4369
          %v5404 = vunpack.c.h.b16 %v4369
          %v5405 = vunpack.c.l.b16 %v4370
          %v5406 = vunpack.c.h.b16 %v4370
          %v5407 = vunpack.c.l.b16 %v4371
          %v5408 = vunpack.c.h.b16 %v4371
          %v5409 = vunpack.c.l.b16 %v4372
          %v5410 = vunpack.c.h.b16 %v4372
          %v5411 = vunpack.c.l.b16 %v4373
          %v5412 = vunpack.c.h.b16 %v4373
          %v5413 = vunpack.c.l.b16 %v4374
          %v5414 = vunpack.c.h.b16 %v4374
          %v5415 = vunpack.c.l.b16 %v4375
          %v5416 = vunpack.c.h.b16 %v4375
          %v5417 = vunpack.c.l.b16 %v4376
          %v5418 = vunpack.c.h.b16 %v4376
          %v5419 = vunpack.c.l.b16 %v4377
          %v5420 = vunpack.c.h.b16 %v4377
          %v5421 = vunpack.c.l.b16 %v4378
          %v5422 = vunpack.c.h.b16 %v4378
          %v5423 = vunpack.c.l.b16 %v4379
          %v5424 = vunpack.c.h.b16 %v4379
          %v5425 = vunpack.c.l.b16 %v4380
          %v5426 = vunpack.c.h.b16 %v4380
          %v5427 = vunpack.c.l.b16 %v4381
          %v5428 = vunpack.c.h.b16 %v4381
          %v5429 = vunpack.c.l.b16 %v4382
          %v5430 = vunpack.c.h.b16 %v4382
          %v5431 = vunpack.c.l.b16 %v4383
          %v5432 = vunpack.c.h.b16 %v4383
          %v5433 = vunpack.c.l.b16 %v4384
          %v5434 = vunpack.c.h.b16 %v4384
          %v5435 = vunpack.c.l.b16 %v4385
          %v5436 = vunpack.c.h.b16 %v4385
          %v5437 = vunpack.c.l.b16 %v4386
          %v5438 = vunpack.c.h.b16 %v4386
          %v5439 = vunpack.c.l.b16 %v4387
          %v5440 = vunpack.c.h.b16 %v4387
          %v5441 = vunpack.c.l.b16 %v4388
          %v5442 = vunpack.c.h.b16 %v4388
          %v5443 = vunpack.c.l.b16 %v4389
          %v5444 = vunpack.c.h.b16 %v4389
          %v5445 = vunpack.c.l.b16 %v4390
          %v5446 = vunpack.c.h.b16 %v4390
          %v5447 = vunpack.c.l.b16 %v4391
          %v5448 = vunpack.c.h.b16 %v4391
          %v5449 = vunpack.c.l.b16 %v4392
          %v5450 = vunpack.c.h.b16 %v4392
          %v5451 = vunpack.c.l.b16 %v4393
          %v5452 = vunpack.c.h.b16 %v4393
          %v5453 = vunpack.c.l.b16 %v4394
          %v5454 = vunpack.c.h.b16 %v4394
          %v5455 = vunpack.c.l.b16 %v4395
          %v5456 = vunpack.c.h.b16 %v4395
          %v5457 = vunpack.c.l.b16 %v4396
          %v5458 = vunpack.c.h.b16 %v4396
          %v5459 = vunpack.c.l.b16 %v4397
          %v5460 = vunpack.c.h.b16 %v4397
          %v5461 = vunpack.c.l.b16 %v4398
          %v5462 = vunpack.c.h.b16 %v4398
          %v5463 = vunpack.c.l.b16 %v4399
          %v5464 = vunpack.c.h.b16 %v4399
          %v5465 = vunpack.c.l.b16 %v4400
          %v5466 = vunpack.c.h.b16 %v4400
          %v5467 = vunpack.c.l.b16 %v4401
          %v5468 = vunpack.c.h.b16 %v4401
          %v5469 = vunpack.c.l.b16 %v4402
          %v5470 = vunpack.c.h.b16 %v4402
          %v5471 = vunpack.c.l.b16 %v4403
          %v5472 = vunpack.c.h.b16 %v4403
          %v5473 = vunpack.c.l.b16 %v4404
          %v5474 = vunpack.c.h.b16 %v4404
          %v5475 = vunpack.c.l.b16 %v4405
          %v5476 = vunpack.c.h.b16 %v4405
          %v5477 = vunpack.c.l.b16 %v4406
          %v5478 = vunpack.c.h.b16 %v4406
          %v5479 = vunpack.c.l.b16 %v4407
          %v5480 = vunpack.c.h.b16 %v4407
          %v5481 = vunpack.c.l.b16 %v4408
          %v5482 = vunpack.c.h.b16 %v4408
          %v5483 = vunpack.c.l.b16 %v4409
          %v5484 = vunpack.c.h.b16 %v4409
          %v5485 = vunpack.c.l.b16 %v4410
          %v5486 = vunpack.c.h.b16 %v4410
          %v5487 = vunpack.c.l.b16 %v4411
          %v5488 = vunpack.c.h.b16 %v4411
          %v5489 = vunpack.c.l.b16 %v4412
          %v5490 = vunpack.c.h.b16 %v4412
          %v5491 = vunpack.c.l.b16 %v4413
          %v5492 = vunpack.c.h.b16 %v4413
          %v5493 = vunpack.c.l.b16 %v4414
          %v5494 = vunpack.c.h.b16 %v4414
          %v5495 = vunpack.c.l.b16 %v4415
          %v5496 = vunpack.c.h.b16 %v4415
          %v5497 = vunpack.c.l.b16 %v4416
          %v5498 = vunpack.c.h.b16 %v4416
          %v5499 = vunpack.c.l.b16 %v4417
          %v5500 = vunpack.c.h.b16 %v4417
          %v5501 = vunpack.c.l.b16 %v4418
          %v5502 = vunpack.c.h.b16 %v4418
          %v5503 = vunpack.c.l.b16 %v4419
          %v5504 = vunpack.c.h.b16 %v4419
          %v5505 = vunpack.c.l.b16 %v4420
          %v5506 = vunpack.c.h.b16 %v4420
          %v5507 = vunpack.c.l.b16 %v4421
          %v5508 = vunpack.c.h.b16 %v4421
          %v5509 = vunpack.c.l.b16 %v4422
          %v5510 = vunpack.c.h.b16 %v4422
          %v5511 = vunpack.c.l.b16 %v4423
          %v5512 = vunpack.c.h.b16 %v4423
          %v5513 = vunpack.c.l.b16 %v4424
          %v5514 = vunpack.c.h.b16 %v4424
          %v5515 = vunpack.c.l.b16 %v4425
          %v5516 = vunpack.c.h.b16 %v4425
          %v5517 = vunpack.c.l.b16 %v4426
          %v5518 = vunpack.c.h.b16 %v4426
          %v5519 = vunpack.c.l.b16 %v4427
          %v5520 = vunpack.c.h.b16 %v4427
          %v5521 = vunpack.c.l.b16 %v4428
          %v5522 = vunpack.c.h.b16 %v4428
          %v5523 = vunpack.c.l.b16 %v4429
          %v5524 = vunpack.c.h.b16 %v4429
          %v5525 = vunpack.c.l.b16 %v4430
          %v5526 = vunpack.c.h.b16 %v4430
          %v5527 = vunpack.c.l.b16 %v4431
          %v5528 = vunpack.c.h.b16 %v4431
          %v5529 = vunpack.c.l.b16 %v4432
          %v5530 = vunpack.c.h.b16 %v4432
          %v5531 = vunpack.c.l.b16 %v4433
          %v5532 = vunpack.c.h.b16 %v4433
          %v5533 = vunpack.c.l.b16 %v4434
          %v5534 = vunpack.c.h.b16 %v4434
          %v5535 = vunpack.c.l.b16 %v4435
          %v5536 = vunpack.c.h.b16 %v4435
          %v5537 = vunpack.c.l.b16 %v4436
          %v5538 = vunpack.c.h.b16 %v4436
          %v5539 = vunpack.c.l.b16 %v4437
          %v5540 = vunpack.c.h.b16 %v4437
          %v5541 = vunpack.c.l.b16 %v4438
          %v5542 = vunpack.c.h.b16 %v4438
          %v5543 = vunpack.c.l.b16 %v4439
          %v5544 = vunpack.c.h.b16 %v4439
          %v5545 = vunpack.c.l.b16 %v4440
          %v5546 = vunpack.c.h.b16 %v4440
          %v5547 = vunpack.c.l.b16 %v4441
          %v5548 = vunpack.c.h.b16 %v4441
          %v5549 = vunpack.c.l.b16 %v4442
          %v5550 = vunpack.c.h.b16 %v4442
          %v5551 = vunpack.c.l.b16 %v4443
          %v5552 = vunpack.c.h.b16 %v4443
          %v5553 = vunpack.c.l.b16 %v4444
          %v5554 = vunpack.c.h.b16 %v4444
          %v5555 = vunpack.c.l.b16 %v4445
          %v5556 = vunpack.c.h.b16 %v4445
          %v5557 = vunpack.c.l.b16 %v4446
          %v5558 = vunpack.c.h.b16 %v4446
          %v5559 = vunpack.c.l.b16 %v4447
          %v5560 = vunpack.c.h.b16 %v4447
          %v5561 = vunpack.c.l.b16 %v4448
          %v5562 = vunpack.c.h.b16 %v4448
          %v5563 = vunpack.c.l.b16 %v4449
          %v5564 = vunpack.c.h.b16 %v4449
          %v5565 = vunpack.c.l.b16 %v4450
          %v5566 = vunpack.c.h.b16 %v4450
          %v5567 = vunpack.c.l.b16 %v4451
          %v5568 = vunpack.c.h.b16 %v4451
          %v5569 = vunpack.c.l.b16 %v4452
          %v5570 = vunpack.c.h.b16 %v4452
          %v5571 = vunpack.c.l.b16 %v4453
          %v5572 = vunpack.c.h.b16 %v4453
          %v5573 = vunpack.c.l.b16 %v4454
          %v5574 = vunpack.c.h.b16 %v4454
          %v5575 = vunpack.c.l.b16 %v4455
          %v5576 = vunpack.c.h.b16 %v4455
          %v5577 = vunpack.c.l.b16 %v4456
          %v5578 = vunpack.c.h.b16 %v4456
          %v5579 = vunpack.c.l.b16 %v4457
          %v5580 = vunpack.c.h.b16 %v4457
          %v5581 = vunpack.c.l.b16 %v4458
          %v5582 = vunpack.c.h.b16 %v4458
          %v5583 = vunpack.c.l.b16 %v4459
          %v5584 = vunpack.c.h.b16 %v4459
          %v5585 = vunpack.c.l.b16 %v4460
          %v5586 = vunpack.c.h.b16 %v4460
          %v5587 = vunpack.c.l.b16 %v4461
          %v5588 = vunpack.c.h.b16 %v4461
          %v5589 = vunpack.c.l.b16 %v4462
          %v5590 = vunpack.c.h.b16 %v4462
          %v5591 = vunpack.c.l.b16 %v4463
          %v5592 = vunpack.c.h.b16 %v4463
          %v5593 = vunpack.c.l.b16 %v4464
          %v5594 = vunpack.c.h.b16 %v4464
          %v5595 = vunpack.c.l.b16 %v4465
          %v5596 = vunpack.c.h.b16 %v4465
          %v5597 = vunpack.c.l.b16 %v4466
          %v5598 = vunpack.c.h.b16 %v4466
          %v5599 = vunpack.c.l.b16 %v4467
          %v5600 = vunpack.c.h.b16 %v4467
          %v5601 = vunpack.c.l.b16 %v4468
          %v5602 = vunpack.c.h.b16 %v4468
          %v5603 = vunpack.c.l.b16 %v4469
          %v5604 = vunpack.c.h.b16 %v4469
          %v5605 = vunpack.c.l.b16 %v4470
          %v5606 = vunpack.c.h.b16 %v4470
          %v5607 = vunpack.c.l.b16 %v4471
          %v5608 = vunpack.c.h.b16 %v4471
          %v5609 = vunpack.c.l.b16 %v4472
          %v5610 = vunpack.c.h.b16 %v4472
          %v5611 = vunpack.c.l.b16 %v4473
          %v5612 = vunpack.c.h.b16 %v4473
          %v5613 = vunpack.c.l.b16 %v4474
          %v5614 = vunpack.c.h.b16 %v4474
          %v5615 = vunpack.c.l.b16 %v4475
          %v5616 = vunpack.c.h.b16 %v4475
          %v5617 = vunpack.c.l.b16 %v4476
          %v5618 = vunpack.c.h.b16 %v4476
          %v5619 = vunpack.c.l.b16 %v4477
          %v5620 = vunpack.c.h.b16 %v4477
          %v5621 = vunpack.c.l.b16 %v4478
          %v5622 = vunpack.c.h.b16 %v4478
          %v5623 = vunpack.c.l.b16 %v4479
          %v5624 = vunpack.c.h.b16 %v4479
          %v5625 = vunpack.c.l.b16 %v4480
          %v5626 = vunpack.c.h.b16 %v4480
          %v5627 = vunpack.c.l.b16 %v4481
          %v5628 = vunpack.c.h.b16 %v4481
          %v5629 = vunpack.c.l.b16 %v4482
          %v5630 = vunpack.c.h.b16 %v4482
          %v5631 = vunpack.c.l.b16 %v4483
          %v5632 = vunpack.c.h.b16 %v4483
          %v5633 = vunpack.c.l.b16 %v4484
          %v5634 = vunpack.c.h.b16 %v4484
          %v5635 = vunpack.c.l.b16 %v4485
          %v5636 = vunpack.c.h.b16 %v4485
          %v5637 = vunpack.c.l.b16 %v4486
          %v5638 = vunpack.c.h.b16 %v4486
          %v5639 = vunpack.c.l.b16 %v4487
          %v5640 = vunpack.c.h.b16 %v4487
          %v5641 = vunpack.c.l.b16 %v4488
          %v5642 = vunpack.c.h.b16 %v4488
          %v5643 = vunpack.c.l.b16 %v4489
          %v5644 = vunpack.c.h.b16 %v4489
          %v5645 = vunpack.c.l.b16 %v4490
          %v5646 = vunpack.c.h.b16 %v4490
          %v5647 = vunpack.c.l.b16 %v4491
          %v5648 = vunpack.c.h.b16 %v4491
          %v5649 = vunpack.c.l.b16 %v4492
          %v5650 = vunpack.c.h.b16 %v4492
          %v5651 = vunpack.c.l.b16 %v4493
          %v5652 = vunpack.c.h.b16 %v4493
          %v5653 = vunpack.c.l.b16 %v4494
          %v5654 = vunpack.c.h.b16 %v4494
          %v5655 = vunpack.c.l.b16 %v4495
          %v5656 = vunpack.c.h.b16 %v4495
          %v5657 = vunpack.c.l.b16 %v4496
          %v5658 = vunpack.c.h.b16 %v4496
          %v5659 = vunpack.c.l.b16 %v4497
          %v5660 = vunpack.c.h.b16 %v4497
          %v5661 = vunpack.c.l.b16 %v4498
          %v5662 = vunpack.c.h.b16 %v4498
          %v5663 = vunpack.c.l.b16 %v4499
          %v5664 = vunpack.c.h.b16 %v4499
          %v5665 = vunpack.c.l.b16 %v4500
          %v5666 = vunpack.c.h.b16 %v4500
          %v5667 = vunpack.c.l.b16 %v4501
          %v5668 = vunpack.c.h.b16 %v4501
          %v5669 = vunpack.c.l.b16 %v4502
          %v5670 = vunpack.c.h.b16 %v4502
          %v5671 = vunpack.c.l.b16 %v4503
          %v5672 = vunpack.c.h.b16 %v4503
          %v5673 = vunpack.c.l.b16 %v4504
          %v5674 = vunpack.c.h.b16 %v4504
          %v5675 = vunpack.c.l.b16 %v4505
          %v5676 = vunpack.c.h.b16 %v4505
          %v5677 = vunpack.c.l.b16 %v4506
          %v5678 = vunpack.c.h.b16 %v4506
          %v5679 = vunpack.c.l.b16 %v4507
          %v5680 = vunpack.c.h.b16 %v4507
          %v5681 = vunpack.c.l.b16 %v4508
          %v5682 = vunpack.c.h.b16 %v4508
          %v5683 = vunpack.c.l.b16 %v4509
          %v5684 = vunpack.c.h.b16 %v4509
          %v5685 = vunpack.c.l.b16 %v4510
          %v5686 = vunpack.c.h.b16 %v4510
          %v5687 = vunpack.c.l.b16 %v4511
          %v5688 = vunpack.c.h.b16 %v4511
          %v5689 = vunpack.c.l.b16 %v4512
          %v5690 = vunpack.c.h.b16 %v4512
          %v5691 = vunpack.c.l.b16 %v4513
          %v5692 = vunpack.c.h.b16 %v4513
          %v5693 = vunpack.c.l.b16 %v4514
          %v5694 = vunpack.c.h.b16 %v4514
          %v5695 = vunpack.c.l.b16 %v4515
          %v5696 = vunpack.c.h.b16 %v4515
          %v5697 = vunpack.c.l.b16 %v4516
          %v5698 = vunpack.c.h.b16 %v4516
          %v5699 = vunpack.c.l.b16 %v4517
          %v5700 = vunpack.c.h.b16 %v4517
          %v5701 = vunpack.c.l.b16 %v4518
          %v5702 = vunpack.c.h.b16 %v4518
          %v5703 = vunpack.c.l.b16 %v4519
          %v5704 = vunpack.c.h.b16 %v4519
          %v5705 = vunpack.c.l.b16 %v4520
          %v5706 = vunpack.c.h.b16 %v4520
          %v5707 = vunpack.c.l.b16 %v4521
          %v5708 = vunpack.c.h.b16 %v4521
          %v5709 = vunpack.c.l.b16 %v4522
          %v5710 = vunpack.c.h.b16 %v4522
          %v5711 = vunpack.c.l.b16 %v4523
          %v5712 = vunpack.c.h.b16 %v4523
          %v5713 = vunpack.c.l.b16 %v4524
          %v5714 = vunpack.c.h.b16 %v4524
          %v5715 = vunpack.c.l.b16 %v4525
          %v5716 = vunpack.c.h.b16 %v4525
          %v5717 = vunpack.c.l.b16 %v4526
          %v5718 = vunpack.c.h.b16 %v4526
          %v5719 = vunpack.c.l.b16 %v4527
          %v5720 = vunpack.c.h.b16 %v4527
          %v5721 = vunpack.c.l.b16 %v4528
          %v5722 = vunpack.c.h.b16 %v4528
          %v5723 = vunpack.c.l.b16 %v4529
          %v5724 = vunpack.c.h.b16 %v4529
          %v5725 = vunpack.c.l.b16 %v4530
          %v5726 = vunpack.c.h.b16 %v4530
          %v5727 = vunpack.c.l.b16 %v4531
          %v5728 = vunpack.c.h.b16 %v4531
          %v5729 = vunpack.c.l.b16 %v4532
          %v5730 = vunpack.c.h.b16 %v4532
          %v5731 = vunpack.c.l.b16 %v4533
          %v5732 = vunpack.c.h.b16 %v4533
          %v5733 = vunpack.c.l.b16 %v4534
          %v5734 = vunpack.c.h.b16 %v4534
          %v5735 = vunpack.c.l.b16 %v4535
          %v5736 = vunpack.c.h.b16 %v4535
          %v5737 = vunpack.c.l.b16 %v4536
          %v5738 = vunpack.c.h.b16 %v4536
          %v5739 = vunpack.c.l.b16 %v4537
          %v5740 = vunpack.c.h.b16 %v4537
          %v5741 = vunpack.c.l.b16 %v4538
          %v5742 = vunpack.c.h.b16 %v4538
          %v5743 = vunpack.c.l.b16 %v4539
          %v5744 = vunpack.c.h.b16 %v4539
          %v5745 = vunpack.c.l.b16 %v4540
          %v5746 = vunpack.c.h.b16 %v4540
          %v5747 = vunpack.c.l.b16 %v4541
          %v5748 = vunpack.c.h.b16 %v4541
          %v5749 = vunpack.c.l.b16 %v4542
          %v5750 = vunpack.c.h.b16 %v4542
          %v5751 = vunpack.c.l.b16 %v4543
          %v5752 = vunpack.c.h.b16 %v4543
          %v5753 = vunpack.c.l.b16 %v4544
          %v5754 = vunpack.c.h.b16 %v4544
          %v5755 = vunpack.c.l.b16 %v4545
          %v5756 = vunpack.c.h.b16 %v4545
          %v5757 = vunpack.c.l.b16 %v4546
          %v5758 = vunpack.c.h.b16 %v4546
          %v5759 = vunpack.c.l.b16 %v4547
          %v5760 = vunpack.c.h.b16 %v4547
          %v5761 = vunpack.c.l.b16 %v4548
          %v5762 = vunpack.c.h.b16 %v4548
          %v5763 = vunpack.c.l.b16 %v4549
          %v5764 = vunpack.c.h.b16 %v4549
          %v5765 = vunpack.c.l.b16 %v4550
          %v5766 = vunpack.c.h.b16 %v4550
          %v5767 = vunpack.c.l.b16 %v4551
          %v5768 = vunpack.c.h.b16 %v4551
          %v5769 = vunpack.c.l.b16 %v4552
          %v5770 = vunpack.c.h.b16 %v4552
          %v5771 = vunpack.c.l.b16 %v4553
          %v5772 = vunpack.c.h.b16 %v4553
          %v5773 = vunpack.c.l.b16 %v4554
          %v5774 = vunpack.c.h.b16 %v4554
          %v5775 = vunpack.c.l.b16 %v4555
          %v5776 = vunpack.c.h.b16 %v4555
          %v5777 = vunpack.c.l.b16 %v4556
          %v5778 = vunpack.c.h.b16 %v4556
          %v5779 = vunpack.c.l.b16 %v4557
          %v5780 = vunpack.c.h.b16 %v4557
          %v5781 = vunpack.c.l.b16 %v4558
          %v5782 = vunpack.c.h.b16 %v4558
          %v5783 = vunpack.c.l.b16 %v4559
          %v5784 = vunpack.c.h.b16 %v4559
          %v5785 = vunpack.c.l.b16 %v4560
          %v5786 = vunpack.c.h.b16 %v4560
          %v5787 = vunpack.c.l.b16 %v4561
          %v5788 = vunpack.c.h.b16 %v4561
          %v5789 = vunpack.c.l.b16 %v4562
          %v5790 = vunpack.c.h.b16 %v4562
          %v5791 = vunpack.c.l.b16 %v4563
          %v5792 = vunpack.c.h.b16 %v4563
          %v5793 = vunpack.c.l.b16 %v4564
          %v5794 = vunpack.c.h.b16 %v4564
          %v5795 = vunpack.c.l.b16 %v4565
          %v5796 = vunpack.c.h.b16 %v4565
          %v5797 = vunpack.c.l.b16 %v4566
          %v5798 = vunpack.c.h.b16 %v4566
          %v5799 = vunpack.c.l.b16 %v4567
          %v5800 = vunpack.c.h.b16 %v4567
          %v5801 = vunpack.c.l.b16 %v4568
          %v5802 = vunpack.c.h.b16 %v4568
          %v5803 = vunpack.c.l.b16 %v4569
          %v5804 = vunpack.c.h.b16 %v4569
          %v5805 = vunpack.c.l.b16 %v4570
          %v5806 = vunpack.c.h.b16 %v4570
          %v5807 = vunpack.c.l.b16 %v4571
          %v5808 = vunpack.c.h.b16 %v4571
          %v5809 = vunpack.c.l.b16 %v4572
          %v5810 = vunpack.c.h.b16 %v4572
          %v5811 = vunpack.c.l.b16 %v4573
          %v5812 = vunpack.c.h.b16 %v4573
          %v5813 = vunpack.c.l.b16 %v4574
          %v5814 = vunpack.c.h.b16 %v4574
          %v5815 = vunpack.c.l.b16 %v4575
          %v5816 = vunpack.c.h.b16 %v4575
          %v5817 = vunpack.c.l.b16 %v4576
          %v5818 = vunpack.c.h.b16 %v4576
          %v5819 = vunpack.c.l.b16 %v4577
          %v5820 = vunpack.c.h.b16 %v4577
          %v5821 = vunpack.c.l.b16 %v4578
          %v5822 = vunpack.c.h.b16 %v4578
          %v5823 = vunpack.c.l.b16 %v4579
          %v5824 = vunpack.c.h.b16 %v4579
          %v5825 = vunpack.c.l.b16 %v4580
          %v5826 = vunpack.c.h.b16 %v4580
          %v5827 = vunpack.c.l.b16 %v4581
          %v5828 = vunpack.c.h.b16 %v4581
          %v5829 = vunpack.c.l.b16 %v4582
          %v5830 = vunpack.c.h.b16 %v4582
          %v5831 = vunpack.c.l.b16 %v4583
          %v5832 = vunpack.c.h.b16 %v4583
          %v5833 = vunpack.c.l.b16 %v4584
          %v5834 = vunpack.c.h.b16 %v4584
          %v5835 = vunpack.c.l.b16 %v4585
          %v5836 = vunpack.c.h.b16 %v4585
          %v5837 = vunpack.c.l.b16 %v4586
          %v5838 = vunpack.c.h.b16 %v4586
          %v5839 = vunpack.c.l.b16 %v4587
          %v5840 = vunpack.c.h.b16 %v4587
          %v5841 = vunpack.c.l.b16 %v4588
          %v5842 = vunpack.c.h.b16 %v4588
          %v5843 = vunpack.c.l.b16 %v4589
          %v5844 = vunpack.c.h.b16 %v4589
          %v5845 = vunpack.c.l.b16 %v4590
          %v5846 = vunpack.c.h.b16 %v4590
          %v5847 = vunpack.c.l.b16 %v4591
          %v5848 = vunpack.c.h.b16 %v4591
          %v5849 = vunpack.c.l.b16 %v4592
          %v5850 = vunpack.c.h.b16 %v4592
          %v5851 = vunpack.c.l.b16 %v4593
          %v5852 = vunpack.c.h.b16 %v4593
          %v5853 = vunpack.c.l.b16 %v4594
          %v5854 = vunpack.c.h.b16 %v4594
          %v5855 = vunpack.c.l.b16 %v4595
          %v5856 = vunpack.c.h.b16 %v4595
          %v5857 = vunpack.c.l.b16 %v4596
          %v5858 = vunpack.c.h.b16 %v4596
          %v5859 = vunpack.c.l.b16 %v4597
          %v5860 = vunpack.c.h.b16 %v4597
          %v5861 = vunpack.c.l.b16 %v4598
          %v5862 = vunpack.c.h.b16 %v4598
          %v5863 = vunpack.c.l.b16 %v4599
          %v5864 = vunpack.c.h.b16 %v4599
          %v5865 = vunpack.c.l.b16 %v4600
          %v5866 = vunpack.c.h.b16 %v4600
          %v5867 = vunpack.c.l.b16 %v4601
          %v5868 = vunpack.c.h.b16 %v4601
          %v5869 = vunpack.c.l.b16 %v4602
          %v5870 = vunpack.c.h.b16 %v4602
          %v5871 = vunpack.c.l.b16 %v4603
          %v5872 = vunpack.c.h.b16 %v4603
          %v5873 = vunpack.c.l.b16 %v4604
          %v5874 = vunpack.c.h.b16 %v4604
          %v5875 = vunpack.c.l.b16 %v4605
          %v5876 = vunpack.c.h.b16 %v4605
          %v5877 = vunpack.c.l.b16 %v4606
          %v5878 = vunpack.c.h.b16 %v4606
          %v5879 = vunpack.c.l.b16 %v4607
          %v5880 = vunpack.c.h.b16 %v4607
          %v5881 = vunpack.c.l.b16 %v4608
          %v5882 = vunpack.c.h.b16 %v4608
          %v5883 = vunpack.c.l.b16 %v4609
          %v5884 = vunpack.c.h.b16 %v4609
          %v5885 = vunpack.c.l.b16 %v4610
          %v5886 = vunpack.c.h.b16 %v4610
          %v5887 = vunpack.c.l.b16 %v4611
          %v5888 = vunpack.c.h.b16 %v4611
          %v5889 = vunpack.c.l.b16 %v4612
          %v5890 = vunpack.c.h.b16 %v4612
          %v5891 = vunpack.c.l.b16 %v4613
          %v5892 = vunpack.c.h.b16 %v4613
          %v5893 = vunpack.c.l.b16 %v4614
          %v5894 = vunpack.c.h.b16 %v4614
          %v5895 = vunpack.c.l.b16 %v4615
          %v5896 = vunpack.c.h.b16 %v4615
          %v5897 = vunpack.c.l.b16 %v4616
          %v5898 = vunpack.c.h.b16 %v4616
          %v5899 = vunpack.c.l.b16 %v4617
          %v5900 = vunpack.c.h.b16 %v4617
          %v5901 = vunpack.c.l.b16 %v4618
          %v5902 = vunpack.c.h.b16 %v4618
          %v5903 = vunpack.c.l.b16 %v4619
          %v5904 = vunpack.c.h.b16 %v4619
          %v5905 = vunpack.c.l.b16 %v4620
          %v5906 = vunpack.c.h.b16 %v4620
          %v5907 = vunpack.c.l.b16 %v4621
          %v5908 = vunpack.c.h.b16 %v4621
          %v5909 = vunpack.c.l.b16 %v4622
          %v5910 = vunpack.c.h.b16 %v4622
          %v5911 = vunpack.c.l.b16 %v4623
          %v5912 = vunpack.c.h.b16 %v4623
          %v5913 = vunpack.c.l.b16 %v4624
          %v5914 = vunpack.c.h.b16 %v4624
          %v5915 = vunpack.c.l.b16 %v4625
          %v5916 = vunpack.c.h.b16 %v4625
          %v5917 = vunpack.c.l.b16 %v4626
          %v5918 = vunpack.c.h.b16 %v4626
          %v5919 = vunpack.c.l.b16 %v4627
          %v5920 = vunpack.c.h.b16 %v4627
          %v5921 = vunpack.c.l.b16 %v4628
          %v5922 = vunpack.c.h.b16 %v4628
          %v5923 = vunpack.c.l.b16 %v4629
          %v5924 = vunpack.c.h.b16 %v4629
          %v5925 = vunpack.c.l.b16 %v4630
          %v5926 = vunpack.c.h.b16 %v4630
          %v5927 = vunpack.c.l.b16 %v4631
          %v5928 = vunpack.c.h.b16 %v4631
          %v5929 = vunpack.c.l.b16 %v4632
          %v5930 = vunpack.c.h.b16 %v4632
          %v5931 = vunpack.c.l.b16 %v4633
          %v5932 = vunpack.c.h.b16 %v4633
          %v5933 = vunpack.c.l.b16 %v4634
          %v5934 = vunpack.c.h.b16 %v4634
          %v5935 = vunpack.c.l.b16 %v4635
          %v5936 = vunpack.c.h.b16 %v4635
          %v5937 = vunpack.c.l.b16 %v4636
          %v5938 = vunpack.c.h.b16 %v4636
          %v5939 = vunpack.c.l.b16 %v4637
          %v5940 = vunpack.c.h.b16 %v4637
          %v5941 = vunpack.c.l.b16 %v4638
          %v5942 = vunpack.c.h.b16 %v4638
          %v5943 = vunpack.c.l.b16 %v4639
          %v5944 = vunpack.c.h.b16 %v4639
          %v5945 = vunpack.c.l.b16 %v4640
          %v5946 = vunpack.c.h.b16 %v4640
          %v5947 = vunpack.c.l.b16 %v4641
          %v5948 = vunpack.c.h.b16 %v4641
          %v5949 = vunpack.c.l.b16 %v4642
          %v5950 = vunpack.c.h.b16 %v4642
          %v5951 = vunpack.c.l.b16 %v4643
          %v5952 = vunpack.c.h.b16 %v4643
          %v5953 = vunpack.c.l.b16 %v4644
          %v5954 = vunpack.c.h.b16 %v4644
          %v5955 = vunpack.c.l.b16 %v4645
          %v5956 = vunpack.c.h.b16 %v4645
          %v5957 = vunpack.c.l.b16 %v4646
          %v5958 = vunpack.c.h.b16 %v4646
          %v5959 = vunpack.c.l.b16 %v4647
          %v5960 = vunpack.c.h.b16 %v4647
          %v5961 = vunpack.c.l.b16 %v4648
          %v5962 = vunpack.c.h.b16 %v4648
          %v5963 = vunpack.c.l.b16 %v4649
          %v5964 = vunpack.c.h.b16 %v4649
          %v5965 = vunpack.c.l.b16 %v4650
          %v5966 = vunpack.c.h.b16 %v4650
          %v5967 = vunpack.c.l.b16 %v4651
          %v5968 = vunpack.c.h.b16 %v4651
          %v5969 = vunpack.c.l.b16 %v4652
          %v5970 = vunpack.c.h.b16 %v4652
          %v5971 = vunpack.c.l.b16 %v4653
          %v5972 = vunpack.c.h.b16 %v4653
          %v5973 = vunpack.c.l.b16 %v4654
          %v5974 = vunpack.c.h.b16 %v4654
          %v5975 = vunpack.c.l.b16 %v4655
          %v5976 = vunpack.c.h.b16 %v4655
          %v5977 = vunpack.c.l.b16 %v4656
          %v5978 = vunpack.c.h.b16 %v4656
          %v5979 = vunpack.c.l.b16 %v4657
          %v5980 = vunpack.c.h.b16 %v4657
          %v5981 = vunpack.c.l.b16 %v4658
          %v5982 = vunpack.c.h.b16 %v4658
          %v5983 = vunpack.c.l.b16 %v4659
          %v5984 = vunpack.c.h.b16 %v4659
          %v5985 = vunpack.c.l.b16 %v4660
          %v5986 = vunpack.c.h.b16 %v4660
          %v5987 = vunpack.c.l.b16 %v4661
          %v5988 = vunpack.c.h.b16 %v4661
          %v5989 = vunpack.c.l.b16 %v4662
          %v5990 = vunpack.c.h.b16 %v4662
          %v5991 = vunpack.c.l.b16 %v4663
          %v5992 = vunpack.c.h.b16 %v4663
          %v5993 = vunpack.c.l.b16 %v4664
          %v5994 = vunpack.c.h.b16 %v4664
          %v5995 = vunpack.c.l.b16 %v4665
          %v5996 = vunpack.c.h.b16 %v4665
          %v5997 = vunpack.c.l.b16 %v4666
          %v5998 = vunpack.c.h.b16 %v4666
          %v5999 = vunpack.c.l.b16 %v4667
          %v6000 = vunpack.c.h.b16 %v4667
          %v6001 = vunpack.c.l.b16 %v4668
          %v6002 = vunpack.c.h.b16 %v4668
          %v6003 = vunpack.c.l.b16 %v4669
          %v6004 = vunpack.c.h.b16 %v4669
          %v6005 = vunpack.c.l.b16 %v4670
          %v6006 = vunpack.c.h.b16 %v4670
          %v6007 = vunpack.c.l.b16 %v4671
          %v6008 = vunpack.c.h.b16 %v4671
          %v6009 = vunpack.c.l.b16 %v4672
          %v6010 = vunpack.c.h.b16 %v4672
          %v6011 = vunpack.c.l.b16 %v4673
          %v6012 = vunpack.c.h.b16 %v4673
          %v6013 = vunpack.c.l.b16 %v4674
          %v6014 = vunpack.c.h.b16 %v4674
          %v6015 = vunpack.c.l.b16 %v4675
          %v6016 = vunpack.c.h.b16 %v4675
          %v6017 = vunpack.c.l.b16 %v4676
          %v6018 = vunpack.c.h.b16 %v4676
          %v6019 = vunpack.c.l.b16 %v4677
          %v6020 = vunpack.c.h.b16 %v4677
          %v6021 = vunpack.c.l.b16 %v4678
          %v6022 = vunpack.c.h.b16 %v4678
          %v6023 = vunpack.c.l.b16 %v4679
          %v6024 = vunpack.c.h.b16 %v4679
          %v6025 = vunpack.c.l.b16 %v4680
          %v6026 = vunpack.c.h.b16 %v4680
          %v6027 = vunpack.c.l.b16 %v4681
          %v6028 = vunpack.c.h.b16 %v4681
          %v6029 = vunpack.c.l.b16 %v4682
          %v6030 = vunpack.c.h.b16 %v4682
          %v6031 = vunpack.c.l.b16 %v4683
          %v6032 = vunpack.c.h.b16 %v4683
          %v6033 = vunpack.c.l.b16 %v4684
          %v6034 = vunpack.c.h.b16 %v4684
          %v6035 = vunpack.c.l.b16 %v4685
          %v6036 = vunpack.c.h.b16 %v4685
          %v6037 = vunpack.c.l.b16 %v4686
          %v6038 = vunpack.c.h.b16 %v4686
          %v6039 = vunpack.c.l.b16 %v4687
          %v6040 = vunpack.c.h.b16 %v4687
          %v6041 = vunpack.c.l.b16 %v4688
          %v6042 = vunpack.c.h.b16 %v4688
          %v6043 = vunpack.c.l.b16 %v4689
          %v6044 = vunpack.c.h.b16 %v4689
          %v6045 = vunpack.c.l.b16 %v4690
          %v6046 = vunpack.c.h.b16 %v4690
          %v6047 = vunpack.c.l.b16 %v4691
          %v6048 = vunpack.c.h.b16 %v4691
          %v6049 = vunpack.c.l.b16 %v4692
          %v6050 = vunpack.c.h.b16 %v4692
          %v6051 = vunpack.c.l.b16 %v4693
          %v6052 = vunpack.c.h.b16 %v4693
          %v6053 = vunpack.c.l.b16 %v4694
          %v6054 = vunpack.c.h.b16 %v4694
          %v6055 = vunpack.c.l.b16 %v4695
          %v6056 = vunpack.c.h.b16 %v4695
          %v6057 = vunpack.c.l.b16 %v4696
          %v6058 = vunpack.c.h.b16 %v4696
          %v6059 = vunpack.c.l.b16 %v4697
          %v6060 = vunpack.c.h.b16 %v4697
          %v6061 = vunpack.c.l.b16 %v4698
          %v6062 = vunpack.c.h.b16 %v4698
          %v6063 = vunpack.c.l.b16 %v4699
          %v6064 = vunpack.c.h.b16 %v4699
          %v6065 = vunpack.c.l.b16 %v4700
          %v6066 = vunpack.c.h.b16 %v4700
          %v6067 = vunpack.c.l.b16 %v4701
          %v6068 = vunpack.c.h.b16 %v4701
          %v6069 = vunpack.c.l.b16 %v4702
          %v6070 = vunpack.c.h.b16 %v4702
          %v6071 = vunpack.c.l.b16 %v4703
          %v6072 = vunpack.c.h.b16 %v4703
          %v6073 = vunpack.c.l.b16 %v4704
          %v6074 = vunpack.c.h.b16 %v4704
          %v6075 = vunpack.c.l.b16 %v4705
          %v6076 = vunpack.c.h.b16 %v4705
          %v6077 = vunpack.c.l.b16 %v4706
          %v6078 = vunpack.c.h.b16 %v4706
          %v6079 = vunpack.c.l.b16 %v4707
          %v6080 = vunpack.c.h.b16 %v4707
          %v6081 = vunpack.c.l.b16 %v4708
          %v6082 = vunpack.c.h.b16 %v4708
          %v6083 = vunpack.c.l.b16 %v4709
          %v6084 = vunpack.c.h.b16 %v4709
          %v6085 = vunpack.c.l.b16 %v4710
          %v6086 = vunpack.c.h.b16 %v4710
          %v6087 = vunpack.c.l.b16 %v4711
          %v6088 = vunpack.c.h.b16 %v4711
          %v6089 = vunpack.c.l.b16 %v4712
          %v6090 = vunpack.c.h.b16 %v4712
          %v6091 = vunpack.c.l.b16 %v4713
          %v6092 = vunpack.c.h.b16 %v4713
          %v6093 = vunpack.c.l.b16 %v4714
          %v6094 = vunpack.c.h.b16 %v4714
          %v6095 = vunpack.c.l.b16 %v4715
          %v6096 = vunpack.c.h.b16 %v4715
          %v6097 = vunpack.c.l.b16 %v4716
          %v6098 = vunpack.c.h.b16 %v4716
          %v6099 = vunpack.c.l.b16 %v4717
          %v6100 = vunpack.c.h.b16 %v4717
          %v6101 = vunpack.c.l.b16 %v4718
          %v6102 = vunpack.c.h.b16 %v4718
          %v6103 = vunpack.c.l.b16 %v4719
          %v6104 = vunpack.c.h.b16 %v4719
          %v6105 = vunpack.c.l.b16 %v4720
          %v6106 = vunpack.c.h.b16 %v4720
          %v6107 = vunpack.c.l.b16 %v4721
          %v6108 = vunpack.c.h.b16 %v4721
          %v6109 = vunpack.c.l.b16 %v4722
          %v6110 = vunpack.c.h.b16 %v4722
          %v6111 = vunpack.c.l.b16 %v4723
          %v6112 = vunpack.c.h.b16 %v4723
          %v6113 = vunpack.c.l.b16 %v4724
          %v6114 = vunpack.c.h.b16 %v4724
          %v6115 = vunpack.c.l.b16 %v4725
          %v6116 = vunpack.c.h.b16 %v4725
          %v6117 = vunpack.c.l.b16 %v4726
          %v6118 = vunpack.c.h.b16 %v4726
          %v6119 = vunpack.c.l.b16 %v4727
          %v6120 = vunpack.c.h.b16 %v4727
          %v6121 = vunpack.c.l.b16 %v4728
          %v6122 = vunpack.c.h.b16 %v4728
          %v6123 = vunpack.c.l.b16 %v4729
          %v6124 = vunpack.c.h.b16 %v4729
          %v6125 = vunpack.c.l.b16 %v4730
          %v6126 = vunpack.c.h.b16 %v4730
          %v6127 = vunpack.c.l.b16 %v4731
          %v6128 = vunpack.c.h.b16 %v4731
          %v6129 = vunpack.c.l.b16 %v4732
          %v6130 = vunpack.c.h.b16 %v4732
          %v6131 = vunpack.c.l.b16 %v4733
          %v6132 = vunpack.c.h.b16 %v4733
          %v6133 = vunpack.c.l.b16 %v4734
          %v6134 = vunpack.c.h.b16 %v4734
          %v6135 = vunpack.c.l.b16 %v4735
          %v6136 = vunpack.c.h.b16 %v4735
          %v6137 = vunpack.c.l.b16 %v4736
          %v6138 = vunpack.c.h.b16 %v4736
          %v6139 = vunpack.c.l.b16 %v4737
          %v6140 = vunpack.c.h.b16 %v4737
          %v6141 = vunpack.c.l.b16 %v4738
          %v6142 = vunpack.c.h.b16 %v4738
          %v6143 = vunpack.c.l.b16 %v4739
          %v6144 = vunpack.c.h.b16 %v4739
          %v6145 = vunpack.c.l.b16 %v4740
          %v6146 = vunpack.c.h.b16 %v4740
          %v6147 = vunpack.c.l.b16 %v4741
          %v6148 = vunpack.c.h.b16 %v4741
          %v6149 = vunpack.c.l.b16 %v4742
          %v6150 = vunpack.c.h.b16 %v4742
          %v6151 = vunpack.c.l.b16 %v4743
          %v6152 = vunpack.c.h.b16 %v4743
          %v6153 = vunpack.c.l.b16 %v4744
          %v6154 = vunpack.c.h.b16 %v4744
          %v6155 = vunpack.c.l.b16 %v4745
          %v6156 = vunpack.c.h.b16 %v4745
          %v6157 = vunpack.c.l.b16 %v4746
          %v6158 = vunpack.c.h.b16 %v4746
          %v6159 = vunpack.c.l.b16 %v4747
          %v6160 = vunpack.c.h.b16 %v4747
          %v6161 = vunpack.c.l.b16 %v4748
          %v6162 = vunpack.c.h.b16 %v4748
          %v6163 = vunpack.c.l.b16 %v4749
          %v6164 = vunpack.c.h.b16 %v4749
          %v6165 = vunpack.c.l.b16 %v4750
          %v6166 = vunpack.c.h.b16 %v4750
          %v6167 = vunpack.c.l.b16 %v4751
          %v6168 = vunpack.c.h.b16 %v4751
          %v6169 = vunpack.c.l.b16 %v4752
          %v6170 = vunpack.c.h.b16 %v4752
          %v6171 = vunpack.c.l.b16 %v4753
          %v6172 = vunpack.c.h.b16 %v4753
          %v6173 = vunpack.c.l.b16 %v4754
          %v6174 = vunpack.c.h.b16 %v4754
          %v6175 = vunpack.c.l.b16 %v4755
          %v6176 = vunpack.c.h.b16 %v4755
          %v6177 = vunpack.c.l.b16 %v4756
          %v6178 = vunpack.c.h.b16 %v4756
          %v6179 = vunpack.c.l.b16 %v4757
          %v6180 = vunpack.c.h.b16 %v4757
          %v6181 = vunpack.c.l.b16 %v4758
          %v6182 = vunpack.c.h.b16 %v4758
          %v6183 = vunpack.c.l.b16 %v4759
          %v6184 = vunpack.c.h.b16 %v4759
          %v6185 = vunpack.c.l.b16 %v4760
          %v6186 = vunpack.c.h.b16 %v4760
          %v6187 = vunpack.c.l.b16 %v4761
          %v6188 = vunpack.c.h.b16 %v4761
          %v6189 = vunpack.c.l.b16 %v4762
          %v6190 = vunpack.c.h.b16 %v4762
          %v6191 = vunpack.c.l.b16 %v4763
          %v6192 = vunpack.c.h.b16 %v4763
          %v6193 = vunpack.c.l.b16 %v4764
          %v6194 = vunpack.c.h.b16 %v4764
          %v6195 = vunpack.c.l.b16 %v4765
          %v6196 = vunpack.c.h.b16 %v4765
          %v6197 = vunpack.c.l.b16 %v4766
          %v6198 = vunpack.c.h.b16 %v4766
          %v6199 = vunpack.c.l.b16 %v4767
          %v6200 = vunpack.c.h.b16 %v4767
          %v6201 = vunpack.c.l.b16 %v4768
          %v6202 = vunpack.c.h.b16 %v4768
          %v6203 = vunpack.c.l.b16 %v4769
          %v6204 = vunpack.c.h.b16 %v4769
          %v6205 = vunpack.c.l.b16 %v4770
          %v6206 = vunpack.c.h.b16 %v4770
          %v6207 = vunpack.c.l.b16 %v4771
          %v6208 = vunpack.c.h.b16 %v4771
          %v6209 = vunpack.c.l.b16 %v4772
          %v6210 = vunpack.c.h.b16 %v4772
          %v6211 = vunpack.c.l.b16 %v4773
          %v6212 = vunpack.c.h.b16 %v4773
          %v6213 = vunpack.c.l.b16 %v4774
          %v6214 = vunpack.c.h.b16 %v4774
          %v6215 = vunpack.c.l.b16 %v4775
          %v6216 = vunpack.c.h.b16 %v4775
          %v6217 = vunpack.c.l.b16 %v4776
          %v6218 = vunpack.c.h.b16 %v4776
          %v6219 = vunpack.c.l.b16 %v4777
          %v6220 = vunpack.c.h.b16 %v4777
          %v6221 = vunpack.c.l.b16 %v4778
          %v6222 = vunpack.c.h.b16 %v4778
          %v6223 = vunpack.c.l.b16 %v4779
          %v6224 = vunpack.c.h.b16 %v4779
          %v6225 = vunpack.c.l.b16 %v4780
          %v6226 = vunpack.c.h.b16 %v4780
          %v6227 = vunpack.c.l.b16 %v4781
          %v6228 = vunpack.c.h.b16 %v4781
          %v6229 = vunpack.c.l.b16 %v4782
          %v6230 = vunpack.c.h.b16 %v4782
          %v6231 = vunpack.c.l.b16 %v4783
          %v6232 = vunpack.c.h.b16 %v4783
          %v6233 = vunpack.c.l.b16 %v4784
          %v6234 = vunpack.c.h.b16 %v4784
          %v6235 = vunpack.c.l.b16 %v4785
          %v6236 = vunpack.c.h.b16 %v4785
          %v6237 = vunpack.c.l.b16 %v4786
          %v6238 = vunpack.c.h.b16 %v4786
          %v6239 = vunpack.c.l.b16 %v4787
          %v6240 = vunpack.c.h.b16 %v4787
          %v6241 = vunpack.c.l.b16 %v4788
          %v6242 = vunpack.c.h.b16 %v4788
          %v6243 = vunpack.c.l.b16 %v4789
          %v6244 = vunpack.c.h.b16 %v4789
          %v6245 = vunpack.c.l.b16 %v4790
          %v6246 = vunpack.c.h.b16 %v4790
          %v6247 = vunpack.c.l.b16 %v4791
          %v6248 = vunpack.c.h.b16 %v4791
          %v6249 = vunpack.c.l.b16 %v4792
          %v6250 = vunpack.c.h.b16 %v4792
          %v6251 = vunpack.c.l.b16 %v4793
          %v6252 = vunpack.c.h.b16 %v4793
          %v6253 = vunpack.c.l.b16 %v4794
          %v6254 = vunpack.c.h.b16 %v4794
          %v6255 = vunpack.c.l.b16 %v4795
          %v6256 = vunpack.c.h.b16 %v4795
          %v6257 = vunpack.c.l.b16 %v4796
          %v6258 = vunpack.c.h.b16 %v4796
          %v6259 = vunpack.c.l.b16 %v4797
          %v6260 = vunpack.c.h.b16 %v4797
          %v6261 = vunpack.c.l.b16 %v4798
          %v6262 = vunpack.c.h.b16 %v4798
          %v6263 = vunpack.c.l.b16 %v4799
          %v6264 = vunpack.c.h.b16 %v4799
          %v6265 = vunpack.c.l.b16 %v4800
          %v6266 = vunpack.c.h.b16 %v4800
          %v6267 = vunpack.c.l.b16 %v4801
          %v6268 = vunpack.c.h.b16 %v4801
          %v6269 = vunpack.c.l.b16 %v4802
          %v6270 = vunpack.c.h.b16 %v4802
          %v6271 = vunpack.c.l.b16 %v4803
          %v6272 = vunpack.c.h.b16 %v4803
          %v6273 = vunpack.c.l.b16 %v4804
          %v6274 = vunpack.c.h.b16 %v4804
          %v6275 = vunpack.c.l.b16 %v4805
          %v6276 = vunpack.c.h.b16 %v4805
          %v6277 = vunpack.c.l.b16 %v4806
          %v6278 = vunpack.c.h.b16 %v4806
          %v6279 = vunpack.c.l.b16 %v4807
          %v6280 = vunpack.c.h.b16 %v4807
          %v6281 = vunpack.c.l.b16 %v4808
          %v6282 = vunpack.c.h.b16 %v4808
          %v6283 = vunpack.c.l.b16 %v4809
          %v6284 = vunpack.c.h.b16 %v4809
          %v6285 = vunpack.c.l.b16 %v4810
          %v6286 = vunpack.c.h.b16 %v4810
          %v6287 = vunpack.c.l.b16 %v4811
          %v6288 = vunpack.c.h.b16 %v4811
          %v6289 = vunpack.c.l.b16 %v4812
          %v6290 = vunpack.c.h.b16 %v4812
          %v6291 = vunpack.c.l.b16 %v4813
          %v6292 = vunpack.c.h.b16 %v4813
          %v6293 = vunpack.c.l.b16 %v4814
          %v6294 = vunpack.c.h.b16 %v4814
          %v6295 = vunpack.c.l.b16 %v4815
          %v6296 = vunpack.c.h.b16 %v4815
          %v6297 = vunpack.c.l.b16 %v4816
          %v6298 = vunpack.c.h.b16 %v4816
          %v6299 = vunpack.c.l.b16 %v4817
          %v6300 = vunpack.c.h.b16 %v4817
          %v6301 = vunpack.c.l.b16 %v4818
          %v6302 = vunpack.c.h.b16 %v4818
          %v6303 = vunpack.c.l.b16 %v4819
          %v6304 = vunpack.c.h.b16 %v4819
          %v6305 = vunpack.c.l.b16 %v4820
          %v6306 = vunpack.c.h.b16 %v4820
          %v6307 = vunpack.c.l.b16 %v4821
          %v6308 = vunpack.c.h.b16 %v4821
          %v6309 = vunpack.c.l.b16 %v4822
          %v6310 = vunpack.c.h.b16 %v4822
          %v6311 = vunpack.c.l.b16 %v4823
          %v6312 = vunpack.c.h.b16 %v4823
          %v6313 = vunpack.c.l.b16 %v4824
          %v6314 = vunpack.c.h.b16 %v4824
          %v6315 = vunpack.c.l.b16 %v4825
          %v6316 = vunpack.c.h.b16 %v4825
          %v6317 = vunpack.c.l.b16 %v4826
          %v6318 = vunpack.c.h.b16 %v4826
          %v6319 = vunpack.c.l.b16 %v4827
          %v6320 = vunpack.c.h.b16 %v4827
          %v6321 = vunpack.c.l.b16 %v4828
          %v6322 = vunpack.c.h.b16 %v4828
          %v6323 = vunpack.c.l.b16 %v4829
          %v6324 = vunpack.c.h.b16 %v4829
          %v6325 = vunpack.c.l.b16 %v4830
          %v6326 = vunpack.c.h.b16 %v4830
          %v6327 = vunpack.c.l.b16 %v4831
          %v6328 = vunpack.c.h.b16 %v4831
          %v6329 = vunpack.c.l.b16 %v4832
          %v6330 = vunpack.c.h.b16 %v4832
          %v6331 = vunpack.c.l.b16 %v4833
          %v6332 = vunpack.c.h.b16 %v4833
          %v6333 = vunpack.c.l.b16 %v4834
          %v6334 = vunpack.c.h.b16 %v4834
          %v6335 = vunpack.c.l.b16 %v4835
          %v6336 = vunpack.c.h.b16 %v4835
          %v6337 = vunpack.c.l.b16 %v4836
          %v6338 = vunpack.c.h.b16 %v4836
          %v6339 = vunpack.c.l.b16 %v4837
          %v6340 = vunpack.c.h.b16 %v4837
          %v6341 = vunpack.c.l.b16 %v4838
          %v6342 = vunpack.c.h.b16 %v4838
          %v6343 = vunpack.c.l.b16 %v4839
          %v6344 = vunpack.c.h.b16 %v4839
          %v6345 = vunpack.c.l.b16 %v4840
          %v6346 = vunpack.c.h.b16 %v4840
          %v6347 = vunpack.c.l.b16 %v4841
          %v6348 = vunpack.c.h.b16 %v4841
          %v6349 = vunpack.c.l.b16 %v4842
          %v6350 = vunpack.c.h.b16 %v4842
          %v6351 = vunpack.c.l.b16 %v4843
          %v6352 = vunpack.c.h.b16 %v4843
          %v6353 = vunpack.c.l.b16 %v4844
          %v6354 = vunpack.c.h.b16 %v4844
          %v6355 = vunpack.c.l.b16 %v4845
          %v6356 = vunpack.c.h.b16 %v4845
          %v6357 = vunpack.c.l.b16 %v4846
          %v6358 = vunpack.c.h.b16 %v4846
          %v6359 = vunpack.c.l.b16 %v4847
          %v6360 = vunpack.c.h.b16 %v4847
          %v6361 = vunpack.c.l.b16 %v4848
          %v6362 = vunpack.c.h.b16 %v4848
          %v6363 = vunpack.c.l.b16 %v4849
          %v6364 = vunpack.c.h.b16 %v4849
          %v6365 = vunpack.c.l.b16 %v4850
          %v6366 = vunpack.c.h.b16 %v4850
          %v6367 = vunpack.c.l.b16 %v4851
          %v6368 = vunpack.c.h.b16 %v4851
          %v6369 = vunpack.c.l.b16 %v4852
          %v6370 = vunpack.c.h.b16 %v4852
          %v6371 = vunpack.c.l.b16 %v4853
          %v6372 = vunpack.c.h.b16 %v4853
          %v6373 = vunpack.c.l.b16 %v4854
          %v6374 = vunpack.c.h.b16 %v4854
          %v6375 = vunpack.c.l.b16 %v4855
          %v6376 = vunpack.c.h.b16 %v4855
          %v6377 = vunpack.c.l.b16 %v4856
          %v6378 = vunpack.c.h.b16 %v4856
          %v6379 = vunpack.c.l.b16 %v4857
          %v6380 = vunpack.c.h.b16 %v4857
          %v6381 = vunpack.c.l.b16 %v4858
          %v6382 = vunpack.c.h.b16 %v4858
          %v6383 = vunpack.c.l.b16 %v4859
          %v6384 = vunpack.c.h.b16 %v4859
          %v6385 = vunpack.c.l.b16 %v4860
          %v6386 = vunpack.c.h.b16 %v4860
          %v6387 = vunpack.c.l.b16 %v4861
          %v6388 = vunpack.c.h.b16 %v4861
          %v6389 = vunpack.c.l.b16 %v4862
          %v6390 = vunpack.c.h.b16 %v4862
          %v6391 = vunpack.c.l.b16 %v4863
          %v6392 = vunpack.c.h.b16 %v4863
          %v6393 = vunpack.c.l.b16 %v4864
          %v6394 = vunpack.c.h.b16 %v4864
          %v6395 = vunpack.c.l.b16 %v4865
          %v6396 = vunpack.c.h.b16 %v4865
          %v6397 = vunpack.c.l.b16 %v4866
          %v6398 = vunpack.c.h.b16 %v4866
          %v6399 = vunpack.c.l.b16 %v4867
          %v6400 = vunpack.c.h.b16 %v4867
          %v6401 = vunpack.c.l.b16 %v4868
          %v6402 = vunpack.c.h.b16 %v4868
          %v6403 = vunpack.c.l.b16 %v4869
          %v6404 = vunpack.c.h.b16 %v4869
          %v6405 = vunpack.c.l.b16 %v4870
          %v6406 = vunpack.c.h.b16 %v4870
          %v6407 = vpack.c.b16 %v5391, %v5383
          %v6408 = vpack.c.b16 %v5392, %v5384
          %v6409 = vpack.c.b16 %v5393, %v5385
          %v6410 = vpack.c.b16 %v5394, %v5386
          %v6411 = vpack.c.b16 %v5395, %v5387
          %v6412 = vpack.c.b16 %v5396, %v5388
          %v6413 = vpack.c.b16 %v5397, %v5389
          %v6414 = vpack.c.b16 %v5398, %v5390
          %v6415 = vpack.c.b16 %v5407, %v5399
          %v6416 = vpack.c.b16 %v5408, %v5400
          %v6417 = vpack.c.b16 %v5409, %v5401
          %v6418 = vpack.c.b16 %v5410, %v5402
          %v6419 = vpack.c.b16 %v5411, %v5403
          %v6420 = vpack.c.b16 %v5412, %v5404
          %v6421 = vpack.c.b16 %v5413, %v5405
          %v6422 = vpack.c.b16 %v5414, %v5406
          %v6423 = vpack.c.b16 %v5423, %v5415
          %v6424 = vpack.c.b16 %v5424, %v5416
          %v6425 = vpack.c.b16 %v5425, %v5417
          %v6426 = vpack.c.b16 %v5426, %v5418
          %v6427 = vpack.c.b16 %v5427, %v5419
          %v6428 = vpack.c.b16 %v5428, %v5420
          %v6429 = vpack.c.b16 %v5429, %v5421
          %v6430 = vpack.c.b16 %v5430, %v5422
          %v6431 = vpack.c.b16 %v5439, %v5431
          %v6432 = vpack.c.b16 %v5440, %v5432
          %v6433 = vpack.c.b16 %v5441, %v5433
          %v6434 = vpack.c.b16 %v5442, %v5434
          %v6435 = vpack.c.b16 %v5443, %v5435
          %v6436 = vpack.c.b16 %v5444, %v5436
          %v6437 = vpack.c.b16 %v5445, %v5437
          %v6438 = vpack.c.b16 %v5446, %v5438
          %v6439 = vpack.c.b16 %v5455, %v5447
          %v6440 = vpack.c.b16 %v5456, %v5448
          %v6441 = vpack.c.b16 %v5457, %v5449
          %v6442 = vpack.c.b16 %v5458, %v5450
          %v6443 = vpack.c.b16 %v5459, %v5451
          %v6444 = vpack.c.b16 %v5460, %v5452
          %v6445 = vpack.c.b16 %v5461, %v5453
          %v6446 = vpack.c.b16 %v5462, %v5454
          %v6447 = vpack.c.b16 %v5471, %v5463
          %v6448 = vpack.c.b16 %v5472, %v5464
          %v6449 = vpack.c.b16 %v5473, %v5465
          %v6450 = vpack.c.b16 %v5474, %v5466
          %v6451 = vpack.c.b16 %v5475, %v5467
          %v6452 = vpack.c.b16 %v5476, %v5468
          %v6453 = vpack.c.b16 %v5477, %v5469
          %v6454 = vpack.c.b16 %v5478, %v5470
          %v6455 = vpack.c.b16 %v5487, %v5479
          %v6456 = vpack.c.b16 %v5488, %v5480
          %v6457 = vpack.c.b16 %v5489, %v5481
          %v6458 = vpack.c.b16 %v5490, %v5482
          %v6459 = vpack.c.b16 %v5491, %v5483
          %v6460 = vpack.c.b16 %v5492, %v5484
          %v6461 = vpack.c.b16 %v5493, %v5485
          %v6462 = vpack.c.b16 %v5494, %v5486
          %v6463 = vpack.c.b16 %v5503, %v5495
          %v6464 = vpack.c.b16 %v5504, %v5496
          %v6465 = vpack.c.b16 %v5505, %v5497
          %v6466 = vpack.c.b16 %v5506, %v5498
          %v6467 = vpack.c.b16 %v5507, %v5499
          %v6468 = vpack.c.b16 %v5508, %v5500
          %v6469 = vpack.c.b16 %v5509, %v5501
          %v6470 = vpack.c.b16 %v5510, %v5502
          %v6471 = vpack.c.b16 %v5519, %v5511
          %v6472 = vpack.c.b16 %v5520, %v5512
          %v6473 = vpack.c.b16 %v5521, %v5513
          %v6474 = vpack.c.b16 %v5522, %v5514
          %v6475 = vpack.c.b16 %v5523, %v5515
          %v6476 = vpack.c.b16 %v5524, %v5516
          %v6477 = vpack.c.b16 %v5525, %v5517
          %v6478 = vpack.c.b16 %v5526, %v5518
          %v6479 = vpack.c.b16 %v5535, %v5527
          %v6480 = vpack.c.b16 %v5536, %v5528
          %v6481 = vpack.c.b16 %v5537, %v5529
          %v6482 = vpack.c.b16 %v5538, %v5530
          %v6483 = vpack.c.b16 %v5539, %v5531
          %v6484 = vpack.c.b16 %v5540, %v5532
          %v6485 = vpack.c.b16 %v5541, %v5533
          %v6486 = vpack.c.b16 %v5542, %v5534
          %v6487 = vpack.c.b16 %v5551, %v5543
          %v6488 = vpack.c.b16 %v5552, %v5544
          %v6489 = vpack.c.b16 %v5553, %v5545
          %v6490 = vpack.c.b16 %v5554, %v5546
          %v6491 = vpack.c.b16 %v5555, %v5547
          %v6492 = vpack.c.b16 %v5556, %v5548
          %v6493 = vpack.c.b16 %v5557, %v5549
          %v6494 = vpack.c.b16 %v5558, %v5550
          %v6495 = vpack.c.b16 %v5567, %v5559
          %v6496 = vpack.c.b16 %v5568, %v5560
          %v6497 = vpack.c.b16 %v5569, %v5561
          %v6498 = vpack.c.b16 %v5570, %v5562
          %v6499 = vpack.c.b16 %v5571, %v5563
          %v6500 = vpack.c.b16 %v5572, %v5564
          %v6501 = vpack.c.b16 %v5573, %v5565
          %v6502 = vpack.c.b16 %v5574, %v5566
          %v6503 = vpack.c.b16 %v5583, %v5575
          %v6504 = vpack.c.b16 %v5584, %v5576
          %v6505 = vpack.c.b16 %v5585, %v5577
          %v6506 = vpack.c.b16 %v5586, %v5578
          %v6507 = vpack.c.b16 %v5587, %v5579
          %v6508 = vpack.c.b16 %v5588, %v5580
          %v6509 = vpack.c.b16 %v5589, %v5581
          %v6510 = vpack.c.b16 %v5590, %v5582
          %v6511 = vpack.c.b16 %v5599, %v5591
          %v6512 = vpack.c.b16 %v5600, %v5592
          %v6513 = vpack.c.b16 %v5601, %v5593
          %v6514 = vpack.c.b16 %v5602, %v5594
          %v6515 = vpack.c.b16 %v5603, %v5595
          %v6516 = vpack.c.b16 %v5604, %v5596
          %v6517 = vpack.c.b16 %v5605, %v5597
          %v6518 = vpack.c.b16 %v5606, %v5598
          %v6519 = vpack.c.b16 %v5615, %v5607
          %v6520 = vpack.c.b16 %v5616, %v5608
          %v6521 = vpack.c.b16 %v5617, %v5609
          %v6522 = vpack.c.b16 %v5618, %v5610
          %v6523 = vpack.c.b16 %v5619, %v5611
          %v6524 = vpack.c.b16 %v5620, %v5612
          %v6525 = vpack.c.b16 %v5621, %v5613
          %v6526 = vpack.c.b16 %v5622, %v5614
          %v6527 = vpack.c.b16 %v5631, %v5623
          %v6528 = vpack.c.b16 %v5632, %v5624
          %v6529 = vpack.c.b16 %v5633, %v5625
          %v6530 = vpack.c.b16 %v5634, %v5626
          %v6531 = vpack.c.b16 %v5635, %v5627
          %v6532 = vpack.c.b16 %v5636, %v5628
          %v6533 = vpack.c.b16 %v5637, %v5629
          %v6534 = vpack.c.b16 %v5638, %v5630
          %v6535 = vpack.c.b16 %v5647, %v5639
          %v6536 = vpack.c.b16 %v5648, %v5640
          %v6537 = vpack.c.b16 %v5649, %v5641
          %v6538 = vpack.c.b16 %v5650, %v5642
          %v6539 = vpack.c.b16 %v5651, %v5643
          %v6540 = vpack.c.b16 %v5652, %v5644
          %v6541 = vpack.c.b16 %v5653, %v5645
          %v6542 = vpack.c.b16 %v5654, %v5646
          %v6543 = vpack.c.b16 %v5663, %v5655
          %v6544 = vpack.c.b16 %v5664, %v5656
          %v6545 = vpack.c.b16 %v5665, %v5657
          %v6546 = vpack.c.b16 %v5666, %v5658
          %v6547 = vpack.c.b16 %v5667, %v5659
          %v6548 = vpack.c.b16 %v5668, %v5660
          %v6549 = vpack.c.b16 %v5669, %v5661
          %v6550 = vpack.c.b16 %v5670, %v5662
          %v6551 = vpack.c.b16 %v5679, %v5671
          %v6552 = vpack.c.b16 %v5680, %v5672
          %v6553 = vpack.c.b16 %v5681, %v5673
          %v6554 = vpack.c.b16 %v5682, %v5674
          %v6555 = vpack.c.b16 %v5683, %v5675
          %v6556 = vpack.c.b16 %v5684, %v5676
          %v6557 = vpack.c.b16 %v5685, %v5677
          %v6558 = vpack.c.b16 %v5686, %v5678
          %v6559 = vpack.c.b16 %v5695, %v5687
          %v6560 = vpack.c.b16 %v5696, %v5688
          %v6561 = vpack.c.b16 %v5697, %v5689
          %v6562 = vpack.c.b16 %v5698, %v5690
          %v6563 = vpack.c.b16 %v5699, %v5691
          %v6564 = vpack.c.b16 %v5700, %v5692
          %v6565 = vpack.c.b16 %v5701, %v5693
          %v6566 = vpack.c.b16 %v5702, %v5694
          %v6567 = vpack.c.b16 %v5711, %v5703
          %v6568 = vpack.c.b16 %v5712, %v5704
          %v6569 = vpack.c.b16 %v5713, %v5705
          %v6570 = vpack.c.b16 %v5714, %v5706
          %v6571 = vpack.c.b16 %v5715, %v5707
          %v6572 = vpack.c.b16 %v5716, %v5708
          %v6573 = vpack.c.b16 %v5717, %v5709
          %v6574 = vpack.c.b16 %v5718, %v5710
          %v6575 = vpack.c.b16 %v5727, %v5719
          %v6576 = vpack.c.b16 %v5728, %v5720
          %v6577 = vpack.c.b16 %v5729, %v5721
          %v6578 = vpack.c.b16 %v5730, %v5722
          %v6579 = vpack.c.b16 %v5731, %v5723
          %v6580 = vpack.c.b16 %v5732, %v5724
          %v6581 = vpack.c.b16 %v5733, %v5725
          %v6582 = vpack.c.b16 %v5734, %v5726
          %v6583 = vpack.c.b16 %v5743, %v5735
          %v6584 = vpack.c.b16 %v5744, %v5736
          %v6585 = vpack.c.b16 %v5745, %v5737
          %v6586 = vpack.c.b16 %v5746, %v5738
          %v6587 = vpack.c.b16 %v5747, %v5739
          %v6588 = vpack.c.b16 %v5748, %v5740
          %v6589 = vpack.c.b16 %v5749, %v5741
          %v6590 = vpack.c.b16 %v5750, %v5742
          %v6591 = vpack.c.b16 %v5759, %v5751
          %v6592 = vpack.c.b16 %v5760, %v5752
          %v6593 = vpack.c.b16 %v5761, %v5753
          %v6594 = vpack.c.b16 %v5762, %v5754
          %v6595 = vpack.c.b16 %v5763, %v5755
          %v6596 = vpack.c.b16 %v5764, %v5756
          %v6597 = vpack.c.b16 %v5765, %v5757
          %v6598 = vpack.c.b16 %v5766, %v5758
          %v6599 = vpack.c.b16 %v5775, %v5767
          %v6600 = vpack.c.b16 %v5776, %v5768
          %v6601 = vpack.c.b16 %v5777, %v5769
          %v6602 = vpack.c.b16 %v5778, %v5770
          %v6603 = vpack.c.b16 %v5779, %v5771
          %v6604 = vpack.c.b16 %v5780, %v5772
          %v6605 = vpack.c.b16 %v5781, %v5773
          %v6606 = vpack.c.b16 %v5782, %v5774
          %v6607 = vpack.c.b16 %v5791, %v5783
          %v6608 = vpack.c.b16 %v5792, %v5784
          %v6609 = vpack.c.b16 %v5793, %v5785
          %v6610 = vpack.c.b16 %v5794, %v5786
          %v6611 = vpack.c.b16 %v5795, %v5787
          %v6612 = vpack.c.b16 %v5796, %v5788
          %v6613 = vpack.c.b16 %v5797, %v5789
          %v6614 = vpack.c.b16 %v5798, %v5790
          %v6615 = vpack.c.b16 %v5807, %v5799
          %v6616 = vpack.c.b16 %v5808, %v5800
          %v6617 = vpack.c.b16 %v5809, %v5801
          %v6618 = vpack.c.b16 %v5810, %v5802
          %v6619 = vpack.c.b16 %v5811, %v5803
          %v6620 = vpack.c.b16 %v5812, %v5804
          %v6621 = vpack.c.b16 %v5813, %v5805
          %v6622 = vpack.c.b16 %v5814, %v5806
          %v6623 = vpack.c.b16 %v5823, %v5815
          %v6624 = vpack.c.b16 %v5824, %v5816
          %v6625 = vpack.c.b16 %v5825, %v5817
          %v6626 = vpack.c.b16 %v5826, %v5818
          %v6627 = vpack.c.b16 %v5827, %v5819
          %v6628 = vpack.c.b16 %v5828, %v5820
          %v6629 = vpack.c.b16 %v5829, %v5821
          %v6630 = vpack.c.b16 %v5830, %v5822
          %v6631 = vpack.c.b16 %v5839, %v5831
          %v6632 = vpack.c.b16 %v5840, %v5832
          %v6633 = vpack.c.b16 %v5841, %v5833
          %v6634 = vpack.c.b16 %v5842, %v5834
          %v6635 = vpack.c.b16 %v5843, %v5835
          %v6636 = vpack.c.b16 %v5844, %v5836
          %v6637 = vpack.c.b16 %v5845, %v5837
          %v6638 = vpack.c.b16 %v5846, %v5838
          %v6639 = vpack.c.b16 %v5855, %v5847
          %v6640 = vpack.c.b16 %v5856, %v5848
          %v6641 = vpack.c.b16 %v5857, %v5849
          %v6642 = vpack.c.b16 %v5858, %v5850
          %v6643 = vpack.c.b16 %v5859, %v5851
          %v6644 = vpack.c.b16 %v5860, %v5852
          %v6645 = vpack.c.b16 %v5861, %v5853
          %v6646 = vpack.c.b16 %v5862, %v5854
          %v6647 = vpack.c.b16 %v5871, %v5863
          %v6648 = vpack.c.b16 %v5872, %v5864
          %v6649 = vpack.c.b16 %v5873, %v5865
          %v6650 = vpack.c.b16 %v5874, %v5866
          %v6651 = vpack.c.b16 %v5875, %v5867
          %v6652 = vpack.c.b16 %v5876, %v5868
          %v6653 = vpack.c.b16 %v5877, %v5869
          %v6654 = vpack.c.b16 %v5878, %v5870
          %v6655 = vpack.c.b16 %v5887, %v5879
          %v6656 = vpack.c.b16 %v5888, %v5880
          %v6657 = vpack.c.b16 %v5889, %v5881
          %v6658 = vpack.c.b16 %v5890, %v5882
          %v6659 = vpack.c.b16 %v5891, %v5883
          %v6660 = vpack.c.b16 %v5892, %v5884
          %v6661 = vpack.c.b16 %v5893, %v5885
          %v6662 = vpack.c.b16 %v5894, %v5886
          %v6663 = vpack.c.b16 %v5903, %v5895
          %v6664 = vpack.c.b16 %v5904, %v5896
          %v6665 = vpack.c.b16 %v5905, %v5897
          %v6666 = vpack.c.b16 %v5906, %v5898
          %v6667 = vpack.c.b16 %v5907, %v5899
          %v6668 = vpack.c.b16 %v5908, %v5900
          %v6669 = vpack.c.b16 %v5909, %v5901
          %v6670 = vpack.c.b16 %v5910, %v5902
          %v6671 = vpack.c.b16 %v5919, %v5911
          %v6672 = vpack.c.b16 %v5920, %v5912
          %v6673 = vpack.c.b16 %v5921, %v5913
          %v6674 = vpack.c.b16 %v5922, %v5914
          %v6675 = vpack.c.b16 %v5923, %v5915
          %v6676 = vpack.c.b16 %v5924, %v5916
          %v6677 = vpack.c.b16 %v5925, %v5917
          %v6678 = vpack.c.b16 %v5926, %v5918
          %v6679 = vpack.c.b16 %v5935, %v5927
          %v6680 = vpack.c.b16 %v5936, %v5928
          %v6681 = vpack.c.b16 %v5937, %v5929
          %v6682 = vpack.c.b16 %v5938, %v5930
          %v6683 = vpack.c.b16 %v5939, %v5931
          %v6684 = vpack.c.b16 %v5940, %v5932
          %v6685 = vpack.c.b16 %v5941, %v5933
          %v6686 = vpack.c.b16 %v5942, %v5934
          %v6687 = vpack.c.b16 %v5951, %v5943
          %v6688 = vpack.c.b16 %v5952, %v5944
          %v6689 = vpack.c.b16 %v5953, %v5945
          %v6690 = vpack.c.b16 %v5954, %v5946
          %v6691 = vpack.c.b16 %v5955, %v5947
          %v6692 = vpack.c.b16 %v5956, %v5948
          %v6693 = vpack.c.b16 %v5957, %v5949
          %v6694 = vpack.c.b16 %v5958, %v5950
          %v6695 = vpack.c.b16 %v5967, %v5959
          %v6696 = vpack.c.b16 %v5968, %v5960
          %v6697 = vpack.c.b16 %v5969, %v5961
          %v6698 = vpack.c.b16 %v5970, %v5962
          %v6699 = vpack.c.b16 %v5971, %v5963
          %v6700 = vpack.c.b16 %v5972, %v5964
          %v6701 = vpack.c.b16 %v5973, %v5965
          %v6702 = vpack.c.b16 %v5974, %v5966
          %v6703 = vpack.c.b16 %v5983, %v5975
          %v6704 = vpack.c.b16 %v5984, %v5976
          %v6705 = vpack.c.b16 %v5985, %v5977
          %v6706 = vpack.c.b16 %v5986, %v5978
          %v6707 = vpack.c.b16 %v5987, %v5979
          %v6708 = vpack.c.b16 %v5988, %v5980
          %v6709 = vpack.c.b16 %v5989, %v5981
          %v6710 = vpack.c.b16 %v5990, %v5982
          %v6711 = vpack.c.b16 %v5999, %v5991
          %v6712 = vpack.c.b16 %v6000, %v5992
          %v6713 = vpack.c.b16 %v6001, %v5993
          %v6714 = vpack.c.b16 %v6002, %v5994
          %v6715 = vpack.c.b16 %v6003, %v5995
          %v6716 = vpack.c.b16 %v6004, %v5996
          %v6717 = vpack.c.b16 %v6005, %v5997
          %v6718 = vpack.c.b16 %v6006, %v5998
          %v6719 = vpack.c.b16 %v6015, %v6007
          %v6720 = vpack.c.b16 %v6016, %v6008
          %v6721 = vpack.c.b16 %v6017, %v6009
          %v6722 = vpack.c.b16 %v6018, %v6010
          %v6723 = vpack.c.b16 %v6019, %v6011
          %v6724 = vpack.c.b16 %v6020, %v6012
          %v6725 = vpack.c.b16 %v6021, %v6013
          %v6726 = vpack.c.b16 %v6022, %v6014
          %v6727 = vpack.c.b16 %v6031, %v6023
          %v6728 = vpack.c.b16 %v6032, %v6024
          %v6729 = vpack.c.b16 %v6033, %v6025
          %v6730 = vpack.c.b16 %v6034, %v6026
          %v6731 = vpack.c.b16 %v6035, %v6027
          %v6732 = vpack.c.b16 %v6036, %v6028
          %v6733 = vpack.c.b16 %v6037, %v6029
          %v6734 = vpack.c.b16 %v6038, %v6030
          %v6735 = vpack.c.b16 %v6047, %v6039
          %v6736 = vpack.c.b16 %v6048, %v6040
          %v6737 = vpack.c.b16 %v6049, %v6041
          %v6738 = vpack.c.b16 %v6050, %v6042
          %v6739 = vpack.c.b16 %v6051, %v6043
          %v6740 = vpack.c.b16 %v6052, %v6044
          %v6741 = vpack.c.b16 %v6053, %v6045
          %v6742 = vpack.c.b16 %v6054, %v6046
          %v6743 = vpack.c.b16 %v6063, %v6055
          %v6744 = vpack.c.b16 %v6064, %v6056
          %v6745 = vpack.c.b16 %v6065, %v6057
          %v6746 = vpack.c.b16 %v6066, %v6058
          %v6747 = vpack.c.b16 %v6067, %v6059
          %v6748 = vpack.c.b16 %v6068, %v6060
          %v6749 = vpack.c.b16 %v6069, %v6061
          %v6750 = vpack.c.b16 %v6070, %v6062
          %v6751 = vpack.c.b16 %v6079, %v6071
          %v6752 = vpack.c.b16 %v6080, %v6072
          %v6753 = vpack.c.b16 %v6081, %v6073
          %v6754 = vpack.c.b16 %v6082, %v6074
          %v6755 = vpack.c.b16 %v6083, %v6075
          %v6756 = vpack.c.b16 %v6084, %v6076
          %v6757 = vpack.c.b16 %v6085, %v6077
          %v6758 = vpack.c.b16 %v6086, %v6078
          %v6759 = vpack.c.b16 %v6095, %v6087
          %v6760 = vpack.c.b16 %v6096, %v6088
          %v6761 = vpack.c.b16 %v6097, %v6089
          %v6762 = vpack.c.b16 %v6098, %v6090
          %v6763 = vpack.c.b16 %v6099, %v6091
          %v6764 = vpack.c.b16 %v6100, %v6092
          %v6765 = vpack.c.b16 %v6101, %v6093
          %v6766 = vpack.c.b16 %v6102, %v6094
          %v6767 = vpack.c.b16 %v6111, %v6103
          %v6768 = vpack.c.b16 %v6112, %v6104
          %v6769 = vpack.c.b16 %v6113, %v6105
          %v6770 = vpack.c.b16 %v6114, %v6106
          %v6771 = vpack.c.b16 %v6115, %v6107
          %v6772 = vpack.c.b16 %v6116, %v6108
          %v6773 = vpack.c.b16 %v6117, %v6109
          %v6774 = vpack.c.b16 %v6118, %v6110
          %v6775 = vpack.c.b16 %v6127, %v6119
          %v6776 = vpack.c.b16 %v6128, %v6120
          %v6777 = vpack.c.b16 %v6129, %v6121
          %v6778 = vpack.c.b16 %v6130, %v6122
          %v6779 = vpack.c.b16 %v6131, %v6123
          %v6780 = vpack.c.b16 %v6132, %v6124
          %v6781 = vpack.c.b16 %v6133, %v6125
          %v6782 = vpack.c.b16 %v6134, %v6126
          %v6783 = vpack.c.b16 %v6143, %v6135
          %v6784 = vpack.c.b16 %v6144, %v6136
          %v6785 = vpack.c.b16 %v6145, %v6137
          %v6786 = vpack.c.b16 %v6146, %v6138
          %v6787 = vpack.c.b16 %v6147, %v6139
          %v6788 = vpack.c.b16 %v6148, %v6140
          %v6789 = vpack.c.b16 %v6149, %v6141
          %v6790 = vpack.c.b16 %v6150, %v6142
          %v6791 = vpack.c.b16 %v6159, %v6151
          %v6792 = vpack.c.b16 %v6160, %v6152
          %v6793 = vpack.c.b16 %v6161, %v6153
          %v6794 = vpack.c.b16 %v6162, %v6154
          %v6795 = vpack.c.b16 %v6163, %v6155
          %v6796 = vpack.c.b16 %v6164, %v6156
          %v6797 = vpack.c.b16 %v6165, %v6157
          %v6798 = vpack.c.b16 %v6166, %v6158
          %v6799 = vpack.c.b16 %v6175, %v6167
          %v6800 = vpack.c.b16 %v6176, %v6168
          %v6801 = vpack.c.b16 %v6177, %v6169
          %v6802 = vpack.c.b16 %v6178, %v6170
          %v6803 = vpack.c.b16 %v6179, %v6171
          %v6804 = vpack.c.b16 %v6180, %v6172
          %v6805 = vpack.c.b16 %v6181, %v6173
          %v6806 = vpack.c.b16 %v6182, %v6174
          %v6807 = vpack.c.b16 %v6191, %v6183
          %v6808 = vpack.c.b16 %v6192, %v6184
          %v6809 = vpack.c.b16 %v6193, %v6185
          %v6810 = vpack.c.b16 %v6194, %v6186
          %v6811 = vpack.c.b16 %v6195, %v6187
          %v6812 = vpack.c.b16 %v6196, %v6188
          %v6813 = vpack.c.b16 %v6197, %v6189
          %v6814 = vpack.c.b16 %v6198, %v6190
          %v6815 = vpack.c.b16 %v6207, %v6199
          %v6816 = vpack.c.b16 %v6208, %v6200
          %v6817 = vpack.c.b16 %v6209, %v6201
          %v6818 = vpack.c.b16 %v6210, %v6202
          %v6819 = vpack.c.b16 %v6211, %v6203
          %v6820 = vpack.c.b16 %v6212, %v6204
          %v6821 = vpack.c.b16 %v6213, %v6205
          %v6822 = vpack.c.b16 %v6214, %v6206
          %v6823 = vpack.c.b16 %v6223, %v6215
          %v6824 = vpack.c.b16 %v6224, %v6216
          %v6825 = vpack.c.b16 %v6225, %v6217
          %v6826 = vpack.c.b16 %v6226, %v6218
          %v6827 = vpack.c.b16 %v6227, %v6219
          %v6828 = vpack.c.b16 %v6228, %v6220
          %v6829 = vpack.c.b16 %v6229, %v6221
          %v6830 = vpack.c.b16 %v6230, %v6222
          %v6831 = vpack.c.b16 %v6239, %v6231
          %v6832 = vpack.c.b16 %v6240, %v6232
          %v6833 = vpack.c.b16 %v6241, %v6233
          %v6834 = vpack.c.b16 %v6242, %v6234
          %v6835 = vpack.c.b16 %v6243, %v6235
          %v6836 = vpack.c.b16 %v6244, %v6236
          %v6837 = vpack.c.b16 %v6245, %v6237
          %v6838 = vpack.c.b16 %v6246, %v6238
          %v6839 = vpack.c.b16 %v6255, %v6247
          %v6840 = vpack.c.b16 %v6256, %v6248
          %v6841 = vpack.c.b16 %v6257, %v6249
          %v6842 = vpack.c.b16 %v6258, %v6250
          %v6843 = vpack.c.b16 %v6259, %v6251
          %v6844 = vpack.c.b16 %v6260, %v6252
          %v6845 = vpack.c.b16 %v6261, %v6253
          %v6846 = vpack.c.b16 %v6262, %v6254
          %v6847 = vpack.c.b16 %v6271, %v6263
          %v6848 = vpack.c.b16 %v6272, %v6264
          %v6849 = vpack.c.b16 %v6273, %v6265
          %v6850 = vpack.c.b16 %v6274, %v6266
          %v6851 = vpack.c.b16 %v6275, %v6267
          %v6852 = vpack.c.b16 %v6276, %v6268
          %v6853 = vpack.c.b16 %v6277, %v6269
          %v6854 = vpack.c.b16 %v6278, %v6270
          %v6855 = vpack.c.b16 %v6287, %v6279
          %v6856 = vpack.c.b16 %v6288, %v6280
          %v6857 = vpack.c.b16 %v6289, %v6281
          %v6858 = vpack.c.b16 %v6290, %v6282
          %v6859 = vpack.c.b16 %v6291, %v6283
          %v6860 = vpack.c.b16 %v6292, %v6284
          %v6861 = vpack.c.b16 %v6293, %v6285
          %v6862 = vpack.c.b16 %v6294, %v6286
          %v6863 = vpack.c.b16 %v6303, %v6295
          %v6864 = vpack.c.b16 %v6304, %v6296
          %v6865 = vpack.c.b16 %v6305, %v6297
          %v6866 = vpack.c.b16 %v6306, %v6298
          %v6867 = vpack.c.b16 %v6307, %v6299
          %v6868 = vpack.c.b16 %v6308, %v6300
          %v6869 = vpack.c.b16 %v6309, %v6301
          %v6870 = vpack.c.b16 %v6310, %v6302
          %v6871 = vpack.c.b16 %v6319, %v6311
          %v6872 = vpack.c.b16 %v6320, %v6312
          %v6873 = vpack.c.b16 %v6321, %v6313
          %v6874 = vpack.c.b16 %v6322, %v6314
          %v6875 = vpack.c.b16 %v6323, %v6315
          %v6876 = vpack.c.b16 %v6324, %v6316
          %v6877 = vpack.c.b16 %v6325, %v6317
          %v6878 = vpack.c.b16 %v6326, %v6318
          %v6879 = vpack.c.b16 %v6335, %v6327
          %v6880 = vpack.c.b16 %v6336, %v6328
          %v6881 = vpack.c.b16 %v6337, %v6329
          %v6882 = vpack.c.b16 %v6338, %v6330
          %v6883 = vpack.c.b16 %v6339, %v6331
          %v6884 = vpack.c.b16 %v6340, %v6332
          %v6885 = vpack.c.b16 %v6341, %v6333
          %v6886 = vpack.c.b16 %v6342, %v6334
          %v6887 = vpack.c.b16 %v6351, %v6343
          %v6888 = vpack.c.b16 %v6352, %v6344
          %v6889 = vpack.c.b16 %v6353, %v6345
          %v6890 = vpack.c.b16 %v6354, %v6346
          %v6891 = vpack.c.b16 %v6355, %v6347
          %v6892 = vpack.c.b16 %v6356, %v6348
          %v6893 = vpack.c.b16 %v6357, %v6349
          %v6894 = vpack.c.b16 %v6358, %v6350
          %v6895 = vpack.c.b16 %v6367, %v6359
          %v6896 = vpack.c.b16 %v6368, %v6360
          %v6897 = vpack.c.b16 %v6369, %v6361
          %v6898 = vpack.c.b16 %v6370, %v6362
          %v6899 = vpack.c.b16 %v6371, %v6363
          %v6900 = vpack.c.b16 %v6372, %v6364
          %v6901 = vpack.c.b16 %v6373, %v6365
          %v6902 = vpack.c.b16 %v6374, %v6366
          %v6903 = vpack.c.b16 %v6383, %v6375
          %v6904 = vpack.c.b16 %v6384, %v6376
          %v6905 = vpack.c.b16 %v6385, %v6377
          %v6906 = vpack.c.b16 %v6386, %v6378
          %v6907 = vpack.c.b16 %v6387, %v6379
          %v6908 = vpack.c.b16 %v6388, %v6380
          %v6909 = vpack.c.b16 %v6389, %v6381
          %v6910 = vpack.c.b16 %v6390, %v6382
          %v6911 = vpack.c.b16 %v6399, %v6391
          %v6912 = vpack.c.b16 %v6400, %v6392
          %v6913 = vpack.c.b16 %v6401, %v6393
          %v6914 = vpack.c.b16 %v6402, %v6394
          %v6915 = vpack.c.b16 %v6403, %v6395
          %v6916 = vpack.c.b16 %v6404, %v6396
          %v6917 = vpack.c.b16 %v6405, %v6397
          %v6918 = vpack.c.b16 %v6406, %v6398
          %7431 = vmatprep.subr.bf16.mxu0 %v6464
          %7432 = vmatpush1.bf16.msra.mxu0 %v6463
          %7433 = vmatprep.subr.bf16.mxu0 %v6456
          %7434 = vmatpush1.bf16.msra.mxu0 %v6455
          %7435 = vmatprep.subr.bf16.mxu0 %v6448
          %7436 = vmatpush1.bf16.msra.mxu0 %v6447
          %7437 = vmatprep.subr.bf16.mxu0 %v6440
          %7438 = vmatpush1.bf16.msra.mxu0 %v6439
          %7439 = vmatprep.subr.bf16.mxu0 %v6432
          %7440 = vmatpush1.bf16.msra.mxu0 %v6431
          %7441 = vmatprep.subr.bf16.mxu0 %v6424
          %7442 = vmatpush1.bf16.msra.mxu0 %v6423
          %7443 = vmatprep.subr.bf16.mxu0 %v6416
          %7444 = vmatpush1.bf16.msra.mxu0 %v6415
          %7445 = vmatprep.subr.bf16.mxu0 %v6408
          %7446 = vmatpush1.bf16.msra.mxu0 %v6407
          %7447 = vmatprep.subr.bf16.mxu0 %v6528
          %7448 = vmatpush2.bf16.msra.mxu0 %v6527
          %7449 = vmatprep.subr.bf16.mxu0 %v6520
          %7450 = vmatpush2.bf16.msra.mxu0 %v6519
          %7451 = vmatprep.subr.bf16.mxu0 %v6512
          %7452 = vmatpush2.bf16.msra.mxu0 %v6511
          %7453 = vmatprep.subr.bf16.mxu0 %v6504
          %7454 = vmatpush2.bf16.msra.mxu0 %v6503
          %7455 = vmatprep.subr.bf16.mxu0 %v6496
          %7456 = vmatpush2.bf16.msra.mxu0 %v6495
          %7457 = vmatprep.subr.bf16.mxu0 %v6488
          %7458 = vmatpush2.bf16.msra.mxu0 %v6487
          %7459 = vmatprep.subr.bf16.mxu0 %v6480
          %7460 = vmatpush2.bf16.msra.mxu0 %v6479
          %7461 = vmatprep.subr.bf16.mxu0 %v6472
          %7462 = vmatpush2.bf16.msra.mxu0 %v6471
          %7463 = vmatprep.mubr.bf16.mxu0 %v4352
          %7464 = vmatmul.mubr.bf16.gmra.mxu0 %v4351
          %v7465 = vpop.f32.mrf.mxu0
          %v7466 = vadd.f32 0.0, %v7465
          %v7467 = vpop.f32.mrf.mxu0
          %v7468 = vadd.f32 0.0, %v7467
          %v7469 = vpop.f32.mrf.mxu0
          %v7470 = vpop.f32.mrf.mxu0
          %7471 = vdwg.mxu0
          %7472 = vmatprep.subr.bf16.mxu0 %v6592
          %7473 = vmatpush1.bf16.msra.mxu0 %v6591
          %7474 = vmatprep.subr.bf16.mxu0 %v6584
          %7475 = vmatpush1.bf16.msra.mxu0 %v6583
          %7476 = vmatprep.subr.bf16.mxu0 %v6576
          %7477 = vmatpush1.bf16.msra.mxu0 %v6575
          %7478 = vmatprep.subr.bf16.mxu0 %v6568
          %7479 = vmatpush1.bf16.msra.mxu0 %v6567
          %7480 = vmatprep.subr.bf16.mxu0 %v6560
          %7481 = vmatpush1.bf16.msra.mxu0 %v6559
          %7482 = vmatprep.subr.bf16.mxu0 %v6552
          %7483 = vmatpush1.bf16.msra.mxu0 %v6551
          %7484 = vmatprep.subr.bf16.mxu0 %v6544
          %7485 = vmatpush1.bf16.msra.mxu0 %v6543
          %7486 = vmatprep.subr.bf16.mxu0 %v6536
          %7487 = vmatpush1.bf16.msra.mxu0 %v6535
          %7488 = vmatprep.subr.bf16.mxu0 %v6656
          %7489 = vmatpush2.bf16.msra.mxu0 %v6655
          %7490 = vmatprep.subr.bf16.mxu0 %v6648
          %7491 = vmatpush2.bf16.msra.mxu0 %v6647
          %7492 = vmatprep.subr.bf16.mxu0 %v6640
          %7493 = vmatpush2.bf16.msra.mxu0 %v6639
          %7494 = vmatprep.subr.bf16.mxu0 %v6632
          %7495 = vmatpush2.bf16.msra.mxu0 %v6631
          %7496 = vmatprep.subr.bf16.mxu0 %v6624
          %7497 = vmatpush2.bf16.msra.mxu0 %v6623
          %7498 = vmatprep.subr.bf16.mxu0 %v6616
          %7499 = vmatpush2.bf16.msra.mxu0 %v6615
          %7500 = vmatprep.subr.bf16.mxu0 %v6608
          %7501 = vmatpush2.bf16.msra.mxu0 %v6607
          %7502 = vmatprep.subr.bf16.mxu0 %v6600
          %7503 = vmatpush2.bf16.msra.mxu0 %v6599
          %7504 = vmatprep.mubr.bf16.mxu0 %v4354
          %7505 = vmatmul.mubr.bf16.gmra.mxu0 %v4353
          %v7506 = vpop.f32.mrf.mxu0
          %v7507 = vadd.f32 %v7466, %v7506
          %v7508 = vpop.f32.mrf.mxu0
          %v7509 = vadd.f32 %v7468, %v7508
          %v7510 = vpop.f32.mrf.mxu0
          %v7511 = vpop.f32.mrf.mxu0
          %7512 = vdwg.mxu0
          %7513 = vmatprep.subr.bf16.mxu0 %v6720
          %7514 = vmatpush1.bf16.msra.mxu0 %v6719
          %7515 = vmatprep.subr.bf16.mxu0 %v6712
          %7516 = vmatpush1.bf16.msra.mxu0 %v6711
          %7517 = vmatprep.subr.bf16.mxu0 %v6704
          %7518 = vmatpush1.bf16.msra.mxu0 %v6703
          %7519 = vmatprep.subr.bf16.mxu0 %v6696
          %7520 = vmatpush1.bf16.msra.mxu0 %v6695
          %7521 = vmatprep.subr.bf16.mxu0 %v6688
          %7522 = vmatpush1.bf16.msra.mxu0 %v6687
          %7523 = vmatprep.subr.bf16.mxu0 %v6680
          %7524 = vmatpush1.bf16.msra.mxu0 %v6679
          %7525 = vmatprep.subr.bf16.mxu0 %v6672
          %7526 = vmatpush1.bf16.msra.mxu0 %v6671
          %7527 = vmatprep.subr.bf16.mxu0 %v6664
          %7528 = vmatpush1.bf16.msra.mxu0 %v6663
          %7529 = vmatprep.subr.bf16.mxu0 %v6784
          %7530 = vmatpush2.bf16.msra.mxu0 %v6783
          %7531 = vmatprep.subr.bf16.mxu0 %v6776
          %7532 = vmatpush2.bf16.msra.mxu0 %v6775
          %7533 = vmatprep.subr.bf16.mxu0 %v6768
          %7534 = vmatpush2.bf16.msra.mxu0 %v6767
          %7535 = vmatprep.subr.bf16.mxu0 %v6760
          %7536 = vmatpush2.bf16.msra.mxu0 %v6759
          %7537 = vmatprep.subr.bf16.mxu0 %v6752
          %7538 = vmatpush2.bf16.msra.mxu0 %v6751
          %7539 = vmatprep.subr.bf16.mxu0 %v6744
          %7540 = vmatpush2.bf16.msra.mxu0 %v6743
          %7541 = vmatprep.subr.bf16.mxu0 %v6736
          %7542 = vmatpush2.bf16.msra.mxu0 %v6735
          %7543 = vmatprep.subr.bf16.mxu0 %v6728
          %7544 = vmatpush2.bf16.msra.mxu0 %v6727
          %7545 = vmatprep.mubr.bf16.mxu0 %v4356
          %7546 = vmatmul.mubr.bf16.gmra.mxu0 %v4355
          %v7547 = vpop.f32.mrf.mxu0
          %v7548 = vadd.f32 %v7507, %v7547
          %v7549 = vpop.f32.mrf.mxu0
          %v7550 = vadd.f32 %v7509, %v7549
          %v7551 = vpop.f32.mrf.mxu0
          %v7552 = vpop.f32.mrf.mxu0
          %7553 = vdwg.mxu0
          %7554 = vmatprep.subr.bf16.mxu0 %v6848
          %7555 = vmatpush1.bf16.msra.mxu0 %v6847
          %7556 = vmatprep.subr.bf16.mxu0 %v6840
          %7557 = vmatpush1.bf16.msra.mxu0 %v6839
          %7558 = vmatprep.subr.bf16.mxu0 %v6832
          %7559 = vmatpush1.bf16.msra.mxu0 %v6831
          %7560 = vmatprep.subr.bf16.mxu0 %v6824
          %7561 = vmatpush1.bf16.msra.mxu0 %v6823
          %7562 = vmatprep.subr.bf16.mxu0 %v6816
          %7563 = vmatpush1.bf16.msra.mxu0 %v6815
          %7564 = vmatprep.subr.bf16.mxu0 %v6808
          %7565 = vmatpush1.bf16.msra.mxu0 %v6807
          %7566 = vmatprep.subr.bf16.mxu0 %v6800
          %7567 = vmatpush1.bf16.msra.mxu0 %v6799
          %7568 = vmatprep.subr.bf16.mxu0 %v6792
          %7569 = vmatpush1.bf16.msra.mxu0 %v6791
          %7570 = vmatprep.subr.bf16.mxu0 %v6912
          %7571 = vmatpush2.bf16.msra.mxu0 %v6911
          %7572 = vmatprep.subr.bf16.mxu0 %v6904
          %7573 = vmatpush2.bf16.msra.mxu0 %v6903
          %7574 = vmatprep.subr.bf16.mxu0 %v6896
          %7575 = vmatpush2.bf16.msra.mxu0 %v6895
          %7576 = vmatprep.subr.bf16.mxu0 %v6888
          %7577 = vmatpush2.bf16.msra.mxu0 %v6887
          %7578 = vmatprep.subr.bf16.mxu0 %v6880
          %7579 = vmatpush2.bf16.msra.mxu0 %v6879
          %7580 = vmatprep.subr.bf16.mxu0 %v6872
          %7581 = vmatpush2.bf16.msra.mxu0 %v6871
          %7582 = vmatprep.subr.bf16.mxu0 %v6864
          %7583 = vmatpush2.bf16.msra.mxu0 %v6863
          %7584 = vmatprep.subr.bf16.mxu0 %v6856
          %7585 = vmatpush2.bf16.msra.mxu0 %v6855
          %7586 = vmatprep.mubr.bf16.mxu0 %v4358
          %7587 = vmatmul.mubr.bf16.gmra.mxu0 %v4357
          %v7588 = vpop.f32.mrf.mxu0
          %v7589 = vadd.f32 %v7548, %v7588
          %v7590 = vpop.f32.mrf.mxu0
          %v7591 = vadd.f32 %v7550, %v7590
          %v7592 = vpop.f32.mrf.mxu0
          %v7593 = vpop.f32.mrf.mxu0
          %7594 = vdwg.mxu0
          %7595 = vmatprep.subr.bf16.mxu0 %v6466
          %7596 = vmatpush1.bf16.msra.mxu0 %v6465
          %7597 = vmatprep.subr.bf16.mxu0 %v6458
          %7598 = vmatpush1.bf16.msra.mxu0 %v6457
          %7599 = vmatprep.subr.bf16.mxu0 %v6450
          %7600 = vmatpush1.bf16.msra.mxu0 %v6449
          %7601 = vmatprep.subr.bf16.mxu0 %v6442
          %7602 = vmatpush1.bf16.msra.mxu0 %v6441
          %7603 = vmatprep.subr.bf16.mxu0 %v6434
          %7604 = vmatpush1.bf16.msra.mxu0 %v6433
          %7605 = vmatprep.subr.bf16.mxu0 %v6426
          %7606 = vmatpush1.bf16.msra.mxu0 %v6425
          %7607 = vmatprep.subr.bf16.mxu0 %v6418
          %7608 = vmatpush1.bf16.msra.mxu0 %v6417
          %7609 = vmatprep.subr.bf16.mxu0 %v6410
          %7610 = vmatpush1.bf16.msra.mxu0 %v6409
          %7611 = vmatprep.subr.bf16.mxu0 %v6530
          %7612 = vmatpush2.bf16.msra.mxu0 %v6529
          %7613 = vmatprep.subr.bf16.mxu0 %v6522
          %7614 = vmatpush2.bf16.msra.mxu0 %v6521
          %7615 = vmatprep.subr.bf16.mxu0 %v6514
          %7616 = vmatpush2.bf16.msra.mxu0 %v6513
          %7617 = vmatprep.subr.bf16.mxu0 %v6506
          %7618 = vmatpush2.bf16.msra.mxu0 %v6505
          %7619 = vmatprep.subr.bf16.mxu0 %v6498
          %7620 = vmatpush2.bf16.msra.mxu0 %v6497
          %7621 = vmatprep.subr.bf16.mxu0 %v6490
          %7622 = vmatpush2.bf16.msra.mxu0 %v6489
          %7623 = vmatprep.subr.bf16.mxu0 %v6482
          %7624 = vmatpush2.bf16.msra.mxu0 %v6481
          %7625 = vmatprep.subr.bf16.mxu0 %v6474
          %7626 = vmatpush2.bf16.msra.mxu0 %v6473
          %7627 = vmatprep.mubr.bf16.mxu0 %v4352
          %7628 = vmatmul.mubr.bf16.gmra.mxu0 %v4351
          %v7629 = vpop.f32.mrf.mxu0
          %v7630 = vadd.f32 0.0, %v7629
          %v7631 = vpop.f32.mrf.mxu0
          %v7632 = vadd.f32 0.0, %v7631
          %v7633 = vpop.f32.mrf.mxu0
          %v7634 = vpop.f32.mrf.mxu0
          %7635 = vdwg.mxu0
          %7636 = vmatprep.subr.bf16.mxu0 %v6594
          %7637 = vmatpush1.bf16.msra.mxu0 %v6593
          %7638 = vmatprep.subr.bf16.mxu0 %v6586
          %7639 = vmatpush1.bf16.msra.mxu0 %v6585
          %7640 = vmatprep.subr.bf16.mxu0 %v6578
          %7641 = vmatpush1.bf16.msra.mxu0 %v6577
          %7642 = vmatprep.subr.bf16.mxu0 %v6570
          %7643 = vmatpush1.bf16.msra.mxu0 %v6569
          %7644 = vmatprep.subr.bf16.mxu0 %v6562
          %7645 = vmatpush1.bf16.msra.mxu0 %v6561
          %7646 = vmatprep.subr.bf16.mxu0 %v6554
          %7647 = vmatpush1.bf16.msra.mxu0 %v6553
          %7648 = vmatprep.subr.bf16.mxu0 %v6546
          %7649 = vmatpush1.bf16.msra.mxu0 %v6545
          %7650 = vmatprep.subr.bf16.mxu0 %v6538
          %7651 = vmatpush1.bf16.msra.mxu0 %v6537
          %7652 = vmatprep.subr.bf16.mxu0 %v6658
          %7653 = vmatpush2.bf16.msra.mxu0 %v6657
          %7654 = vmatprep.subr.bf16.mxu0 %v6650
          %7655 = vmatpush2.bf16.msra.mxu0 %v6649
          %7656 = vmatprep.subr.bf16.mxu0 %v6642
          %7657 = vmatpush2.bf16.msra.mxu0 %v6641
          %7658 = vmatprep.subr.bf16.mxu0 %v6634
          %7659 = vmatpush2.bf16.msra.mxu0 %v6633
          %7660 = vmatprep.subr.bf16.mxu0 %v6626
          %7661 = vmatpush2.bf16.msra.mxu0 %v6625
          %7662 = vmatprep.subr.bf16.mxu0 %v6618
          %7663 = vmatpush2.bf16.msra.mxu0 %v6617
          %7664 = vmatprep.subr.bf16.mxu0 %v6610
          %7665 = vmatpush2.bf16.msra.mxu0 %v6609
          %7666 = vmatprep.subr.bf16.mxu0 %v6602
          %7667 = vmatpush2.bf16.msra.mxu0 %v6601
          %7668 = vmatprep.mubr.bf16.mxu0 %v4354
          %7669 = vmatmul.mubr.bf16.gmra.mxu0 %v4353
          %v7670 = vpop.f32.mrf.mxu0
          %v7671 = vadd.f32 %v7630, %v7670
          %v7672 = vpop.f32.mrf.mxu0
          %v7673 = vadd.f32 %v7632, %v7672
          %v7674 = vpop.f32.mrf.mxu0
          %v7675 = vpop.f32.mrf.mxu0
          %7676 = vdwg.mxu0
          %7677 = vmatprep.subr.bf16.mxu0 %v6722
          %7678 = vmatpush1.bf16.msra.mxu0 %v6721
          %7679 = vmatprep.subr.bf16.mxu0 %v6714
          %7680 = vmatpush1.bf16.msra.mxu0 %v6713
          %7681 = vmatprep.subr.bf16.mxu0 %v6706
          %7682 = vmatpush1.bf16.msra.mxu0 %v6705
          %7683 = vmatprep.subr.bf16.mxu0 %v6698
          %7684 = vmatpush1.bf16.msra.mxu0 %v6697
          %7685 = vmatprep.subr.bf16.mxu0 %v6690
          %7686 = vmatpush1.bf16.msra.mxu0 %v6689
          %7687 = vmatprep.subr.bf16.mxu0 %v6682
          %7688 = vmatpush1.bf16.msra.mxu0 %v6681
          %7689 = vmatprep.subr.bf16.mxu0 %v6674
          %7690 = vmatpush1.bf16.msra.mxu0 %v6673
          %7691 = vmatprep.subr.bf16.mxu0 %v6666
          %7692 = vmatpush1.bf16.msra.mxu0 %v6665
          %7693 = vmatprep.subr.bf16.mxu0 %v6786
          %7694 = vmatpush2.bf16.msra.mxu0 %v6785
          %7695 = vmatprep.subr.bf16.mxu0 %v6778
          %7696 = vmatpush2.bf16.msra.mxu0 %v6777
          %7697 = vmatprep.subr.bf16.mxu0 %v6770
          %7698 = vmatpush2.bf16.msra.mxu0 %v6769
          %7699 = vmatprep.subr.bf16.mxu0 %v6762
          %7700 = vmatpush2.bf16.msra.mxu0 %v6761
          %7701 = vmatprep.subr.bf16.mxu0 %v6754
          %7702 = vmatpush2.bf16.msra.mxu0 %v6753
          %7703 = vmatprep.subr.bf16.mxu0 %v6746
          %7704 = vmatpush2.bf16.msra.mxu0 %v6745
          %7705 = vmatprep.subr.bf16.mxu0 %v6738
          %7706 = vmatpush2.bf16.msra.mxu0 %v6737
          %7707 = vmatprep.subr.bf16.mxu0 %v6730
          %7708 = vmatpush2.bf16.msra.mxu0 %v6729
          %7709 = vmatprep.mubr.bf16.mxu0 %v4356
          %7710 = vmatmul.mubr.bf16.gmra.mxu0 %v4355
          %v7711 = vpop.f32.mrf.mxu0
          %v7712 = vadd.f32 %v7671, %v7711
          %v7713 = vpop.f32.mrf.mxu0
          %v7714 = vadd.f32 %v7673, %v7713
          %v7715 = vpop.f32.mrf.mxu0
          %v7716 = vpop.f32.mrf.mxu0
          %7717 = vdwg.mxu0
          %7718 = vmatprep.subr.bf16.mxu0 %v6850
          %7719 = vmatpush1.bf16.msra.mxu0 %v6849
          %7720 = vmatprep.subr.bf16.mxu0 %v6842
          %7721 = vmatpush1.bf16.msra.mxu0 %v6841
          %7722 = vmatprep.subr.bf16.mxu0 %v6834
          %7723 = vmatpush1.bf16.msra.mxu0 %v6833
          %7724 = vmatprep.subr.bf16.mxu0 %v6826
          %7725 = vmatpush1.bf16.msra.mxu0 %v6825
          %7726 = vmatprep.subr.bf16.mxu0 %v6818
          %7727 = vmatpush1.bf16.msra.mxu0 %v6817
          %7728 = vmatprep.subr.bf16.mxu0 %v6810
          %7729 = vmatpush1.bf16.msra.mxu0 %v6809
          %7730 = vmatprep.subr.bf16.mxu0 %v6802
          %7731 = vmatpush1.bf16.msra.mxu0 %v6801
          %7732 = vmatprep.subr.bf16.mxu0 %v6794
          %7733 = vmatpush1.bf16.msra.mxu0 %v6793
          %7734 = vmatprep.subr.bf16.mxu0 %v6914
          %7735 = vmatpush2.bf16.msra.mxu0 %v6913
          %7736 = vmatprep.subr.bf16.mxu0 %v6906
          %7737 = vmatpush2.bf16.msra.mxu0 %v6905
          %7738 = vmatprep.subr.bf16.mxu0 %v6898
          %7739 = vmatpush2.bf16.msra.mxu0 %v6897
          %7740 = vmatprep.subr.bf16.mxu0 %v6890
          %7741 = vmatpush2.bf16.msra.mxu0 %v6889
          %7742 = vmatprep.subr.bf16.mxu0 %v6882
          %7743 = vmatpush2.bf16.msra.mxu0 %v6881
          %7744 = vmatprep.subr.bf16.mxu0 %v6874
          %7745 = vmatpush2.bf16.msra.mxu0 %v6873
          %7746 = vmatprep.subr.bf16.mxu0 %v6866
          %7747 = vmatpush2.bf16.msra.mxu0 %v6865
          %7748 = vmatprep.subr.bf16.mxu0 %v6858
          %7749 = vmatpush2.bf16.msra.mxu0 %v6857
          %7750 = vmatprep.mubr.bf16.mxu0 %v4358
          %7751 = vmatmul.mubr.bf16.gmra.mxu0 %v4357
          %v7752 = vpop.f32.mrf.mxu0
          %v7753 = vadd.f32 %v7712, %v7752
          %v7754 = vpop.f32.mrf.mxu0
          %v7755 = vadd.f32 %v7714, %v7754
          %v7756 = vpop.f32.mrf.mxu0
          %v7757 = vpop.f32.mrf.mxu0
          %7758 = vdwg.mxu0
          %7759 = vmatprep.subr.bf16.mxu0 %v6468
          %7760 = vmatpush1.bf16.msra.mxu0 %v6467
          %7761 = vmatprep.subr.bf16.mxu0 %v6460
          %7762 = vmatpush1.bf16.msra.mxu0 %v6459
          %7763 = vmatprep.subr.bf16.mxu0 %v6452
          %7764 = vmatpush1.bf16.msra.mxu0 %v6451
          %7765 = vmatprep.subr.bf16.mxu0 %v6444
          %7766 = vmatpush1.bf16.msra.mxu0 %v6443
          %7767 = vmatprep.subr.bf16.mxu0 %v6436
          %7768 = vmatpush1.bf16.msra.mxu0 %v6435
          %7769 = vmatprep.subr.bf16.mxu0 %v6428
          %7770 = vmatpush1.bf16.msra.mxu0 %v6427
          %7771 = vmatprep.subr.bf16.mxu0 %v6420
          %7772 = vmatpush1.bf16.msra.mxu0 %v6419
          %7773 = vmatprep.subr.bf16.mxu0 %v6412
          %7774 = vmatpush1.bf16.msra.mxu0 %v6411
          %7775 = vmatprep.subr.bf16.mxu0 %v6532
          %7776 = vmatpush2.bf16.msra.mxu0 %v6531
          %7777 = vmatprep.subr.bf16.mxu0 %v6524
          %7778 = vmatpush2.bf16.msra.mxu0 %v6523
          %7779 = vmatprep.subr.bf16.mxu0 %v6516
          %7780 = vmatpush2.bf16.msra.mxu0 %v6515
          %7781 = vmatprep.subr.bf16.mxu0 %v6508
          %7782 = vmatpush2.bf16.msra.mxu0 %v6507
          %7783 = vmatprep.subr.bf16.mxu0 %v6500
          %7784 = vmatpush2.bf16.msra.mxu0 %v6499
          %7785 = vmatprep.subr.bf16.mxu0 %v6492
          %7786 = vmatpush2.bf16.msra.mxu0 %v6491
          %7787 = vmatprep.subr.bf16.mxu0 %v6484
          %7788 = vmatpush2.bf16.msra.mxu0 %v6483
          %7789 = vmatprep.subr.bf16.mxu0 %v6476
          %7790 = vmatpush2.bf16.msra.mxu0 %v6475
          %7791 = vmatprep.mubr.bf16.mxu0 %v4352
          %7792 = vmatmul.mubr.bf16.gmra.mxu0 %v4351
          %v7793 = vpop.f32.mrf.mxu0
          %v7794 = vadd.f32 0.0, %v7793
          %v7795 = vpop.f32.mrf.mxu0
          %v7796 = vadd.f32 0.0, %v7795
          %v7797 = vpop.f32.mrf.mxu0
          %v7798 = vpop.f32.mrf.mxu0
          %7799 = vdwg.mxu0
          %7800 = vmatprep.subr.bf16.mxu0 %v6596
          %7801 = vmatpush1.bf16.msra.mxu0 %v6595
          %7802 = vmatprep.subr.bf16.mxu0 %v6588
          %7803 = vmatpush1.bf16.msra.mxu0 %v6587
          %7804 = vmatprep.subr.bf16.mxu0 %v6580
          %7805 = vmatpush1.bf16.msra.mxu0 %v6579
          %7806 = vmatprep.subr.bf16.mxu0 %v6572
          %7807 = vmatpush1.bf16.msra.mxu0 %v6571
          %7808 = vmatprep.subr.bf16.mxu0 %v6564
          %7809 = vmatpush1.bf16.msra.mxu0 %v6563
          %7810 = vmatprep.subr.bf16.mxu0 %v6556
          %7811 = vmatpush1.bf16.msra.mxu0 %v6555
          %7812 = vmatprep.subr.bf16.mxu0 %v6548
          %7813 = vmatpush1.bf16.msra.mxu0 %v6547
          %7814 = vmatprep.subr.bf16.mxu0 %v6540
          %7815 = vmatpush1.bf16.msra.mxu0 %v6539
          %7816 = vmatprep.subr.bf16.mxu0 %v6660
          %7817 = vmatpush2.bf16.msra.mxu0 %v6659
          %7818 = vmatprep.subr.bf16.mxu0 %v6652
          %7819 = vmatpush2.bf16.msra.mxu0 %v6651
          %7820 = vmatprep.subr.bf16.mxu0 %v6644
          %7821 = vmatpush2.bf16.msra.mxu0 %v6643
          %7822 = vmatprep.subr.bf16.mxu0 %v6636
          %7823 = vmatpush2.bf16.msra.mxu0 %v6635
          %7824 = vmatprep.subr.bf16.mxu0 %v6628
          %7825 = vmatpush2.bf16.msra.mxu0 %v6627
          %7826 = vmatprep.subr.bf16.mxu0 %v6620
          %7827 = vmatpush2.bf16.msra.mxu0 %v6619
          %7828 = vmatprep.subr.bf16.mxu0 %v6612
          %7829 = vmatpush2.bf16.msra.mxu0 %v6611
          %7830 = vmatprep.subr.bf16.mxu0 %v6604
          %7831 = vmatpush2.bf16.msra.mxu0 %v6603
          %7832 = vmatprep.mubr.bf16.mxu0 %v4354
          %7833 = vmatmul.mubr.bf16.gmra.mxu0 %v4353
          %v7834 = vpop.f32.mrf.mxu0
          %v7835 = vadd.f32 %v7794, %v7834
          %v7836 = vpop.f32.mrf.mxu0
          %v7837 = vadd.f32 %v7796, %v7836
          %v7838 = vpop.f32.mrf.mxu0
          %v7839 = vpop.f32.mrf.mxu0
          %7840 = vdwg.mxu0
          %7841 = vmatprep.subr.bf16.mxu0 %v6724
          %7842 = vmatpush1.bf16.msra.mxu0 %v6723
          %7843 = vmatprep.subr.bf16.mxu0 %v6716
          %7844 = vmatpush1.bf16.msra.mxu0 %v6715
          %7845 = vmatprep.subr.bf16.mxu0 %v6708
          %7846 = vmatpush1.bf16.msra.mxu0 %v6707
          %7847 = vmatprep.subr.bf16.mxu0 %v6700
          %7848 = vmatpush1.bf16.msra.mxu0 %v6699
          %7849 = vmatprep.subr.bf16.mxu0 %v6692
          %7850 = vmatpush1.bf16.msra.mxu0 %v6691
          %7851 = vmatprep.subr.bf16.mxu0 %v6684
          %7852 = vmatpush1.bf16.msra.mxu0 %v6683
          %7853 = vmatprep.subr.bf16.mxu0 %v6676
          %7854 = vmatpush1.bf16.msra.mxu0 %v6675
          %7855 = vmatprep.subr.bf16.mxu0 %v6668
          %7856 = vmatpush1.bf16.msra.mxu0 %v6667
          %7857 = vmatprep.subr.bf16.mxu0 %v6788
          %7858 = vmatpush2.bf16.msra.mxu0 %v6787
          %7859 = vmatprep.subr.bf16.mxu0 %v6780
          %7860 = vmatpush2.bf16.msra.mxu0 %v6779
          %7861 = vmatprep.subr.bf16.mxu0 %v6772
          %7862 = vmatpush2.bf16.msra.mxu0 %v6771
          %7863 = vmatprep.subr.bf16.mxu0 %v6764
          %7864 = vmatpush2.bf16.msra.mxu0 %v6763
          %7865 = vmatprep.subr.bf16.mxu0 %v6756
          %7866 = vmatpush2.bf16.msra.mxu0 %v6755
          %7867 = vmatprep.subr.bf16.mxu0 %v6748
          %7868 = vmatpush2.bf16.msra.mxu0 %v6747
          %7869 = vmatprep.subr.bf16.mxu0 %v6740
          %7870 = vmatpush2.bf16.msra.mxu0 %v6739
          %7871 = vmatprep.subr.bf16.mxu0 %v6732
          %7872 = vmatpush2.bf16.msra.mxu0 %v6731
          %7873 = vmatprep.mubr.bf16.mxu0 %v4356
          %7874 = vmatmul.mubr.bf16.gmra.mxu0 %v4355
          %v7875 = vpop.f32.mrf.mxu0
          %v7876 = vadd.f32 %v7835, %v7875
          %v7877 = vpop.f32.mrf.mxu0
          %v7878 = vadd.f32 %v7837, %v7877
          %v7879 = vpop.f32.mrf.mxu0
          %v7880 = vpop.f32.mrf.mxu0
          %7881 = vdwg.mxu0
          %7882 = vmatprep.subr.bf16.mxu0 %v6852
          %7883 = vmatpush1.bf16.msra.mxu0 %v6851
          %7884 = vmatprep.subr.bf16.mxu0 %v6844
          %7885 = vmatpush1.bf16.msra.mxu0 %v6843
          %7886 = vmatprep.subr.bf16.mxu0 %v6836
          %7887 = vmatpush1.bf16.msra.mxu0 %v6835
          %7888 = vmatprep.subr.bf16.mxu0 %v6828
          %7889 = vmatpush1.bf16.msra.mxu0 %v6827
          %7890 = vmatprep.subr.bf16.mxu0 %v6820
          %7891 = vmatpush1.bf16.msra.mxu0 %v6819
          %7892 = vmatprep.subr.bf16.mxu0 %v6812
          %7893 = vmatpush1.bf16.msra.mxu0 %v6811
          %7894 = vmatprep.subr.bf16.mxu0 %v6804
          %7895 = vmatpush1.bf16.msra.mxu0 %v6803
          %7896 = vmatprep.subr.bf16.mxu0 %v6796
          %7897 = vmatpush1.bf16.msra.mxu0 %v6795
          %7898 = vmatprep.subr.bf16.mxu0 %v6916
          %7899 = vmatpush2.bf16.msra.mxu0 %v6915
          %7900 = vmatprep.subr.bf16.mxu0 %v6908
          %7901 = vmatpush2.bf16.msra.mxu0 %v6907
          %7902 = vmatprep.subr.bf16.mxu0 %v6900
          %7903 = vmatpush2.bf16.msra.mxu0 %v6899
          %7904 = vmatprep.subr.bf16.mxu0 %v6892
          %7905 = vmatpush2.bf16.msra.mxu0 %v6891
          %7906 = vmatprep.subr.bf16.mxu0 %v6884
          %7907 = vmatpush2.bf16.msra.mxu0 %v6883
          %7908 = vmatprep.subr.bf16.mxu0 %v6876
          %7909 = vmatpush2.bf16.msra.mxu0 %v6875
          %7910 = vmatprep.subr.bf16.mxu0 %v6868
          %7911 = vmatpush2.bf16.msra.mxu0 %v6867
          %7912 = vmatprep.subr.bf16.mxu0 %v6860
          %7913 = vmatpush2.bf16.msra.mxu0 %v6859
          %7914 = vmatprep.mubr.bf16.mxu0 %v4358
          %7915 = vmatmul.mubr.bf16.gmra.mxu0 %v4357
          %v7916 = vpop.f32.mrf.mxu0
          %v7917 = vadd.f32 %v7876, %v7916
          %v7918 = vpop.f32.mrf.mxu0
          %v7919 = vadd.f32 %v7878, %v7918
          %v7920 = vpop.f32.mrf.mxu0
          %v7921 = vpop.f32.mrf.mxu0
          %7922 = vdwg.mxu0
          %7923 = vmatprep.subr.bf16.mxu0 %v6470
          %7924 = vmatpush1.bf16.msra.mxu0 %v6469
          %7925 = vmatprep.subr.bf16.mxu0 %v6462
          %7926 = vmatpush1.bf16.msra.mxu0 %v6461
          %7927 = vmatprep.subr.bf16.mxu0 %v6454
          %7928 = vmatpush1.bf16.msra.mxu0 %v6453
          %7929 = vmatprep.subr.bf16.mxu0 %v6446
          %7930 = vmatpush1.bf16.msra.mxu0 %v6445
          %7931 = vmatprep.subr.bf16.mxu0 %v6438
          %7932 = vmatpush1.bf16.msra.mxu0 %v6437
          %7933 = vmatprep.subr.bf16.mxu0 %v6430
          %7934 = vmatpush1.bf16.msra.mxu0 %v6429
          %7935 = vmatprep.subr.bf16.mxu0 %v6422
          %7936 = vmatpush1.bf16.msra.mxu0 %v6421
          %7937 = vmatprep.subr.bf16.mxu0 %v6414
          %7938 = vmatpush1.bf16.msra.mxu0 %v6413
          %7939 = vmatprep.subr.bf16.mxu0 %v6534
          %7940 = vmatpush2.bf16.msra.mxu0 %v6533
          %7941 = vmatprep.subr.bf16.mxu0 %v6526
          %7942 = vmatpush2.bf16.msra.mxu0 %v6525
          %7943 = vmatprep.subr.bf16.mxu0 %v6518
          %7944 = vmatpush2.bf16.msra.mxu0 %v6517
          %7945 = vmatprep.subr.bf16.mxu0 %v6510
          %7946 = vmatpush2.bf16.msra.mxu0 %v6509
          %7947 = vmatprep.subr.bf16.mxu0 %v6502
          %7948 = vmatpush2.bf16.msra.mxu0 %v6501
          %7949 = vmatprep.subr.bf16.mxu0 %v6494
          %7950 = vmatpush2.bf16.msra.mxu0 %v6493
          %7951 = vmatprep.subr.bf16.mxu0 %v6486
          %7952 = vmatpush2.bf16.msra.mxu0 %v6485
          %7953 = vmatprep.subr.bf16.mxu0 %v6478
          %7954 = vmatpush2.bf16.msra.mxu0 %v6477
          %7955 = vmatprep.mubr.bf16.mxu0 %v4352
          %7956 = vmatmul.mubr.bf16.gmra.mxu0 %v4351
          %v7957 = vpop.f32.mrf.mxu0
          %v7958 = vadd.f32 0.0, %v7957
          %v7959 = vpop.f32.mrf.mxu0
          %v7960 = vadd.f32 0.0, %v7959
          %v7961 = vpop.f32.mrf.mxu0
          %v7962 = vpop.f32.mrf.mxu0
          %7963 = vdwg.mxu0
          %7964 = vmatprep.subr.bf16.mxu0 %v6598
          %7965 = vmatpush1.bf16.msra.mxu0 %v6597
          %7966 = vmatprep.subr.bf16.mxu0 %v6590
          %7967 = vmatpush1.bf16.msra.mxu0 %v6589
          %7968 = vmatprep.subr.bf16.mxu0 %v6582
          %7969 = vmatpush1.bf16.msra.mxu0 %v6581
          %7970 = vmatprep.subr.bf16.mxu0 %v6574
          %7971 = vmatpush1.bf16.msra.mxu0 %v6573
          %7972 = vmatprep.subr.bf16.mxu0 %v6566
          %7973 = vmatpush1.bf16.msra.mxu0 %v6565
          %7974 = vmatprep.subr.bf16.mxu0 %v6558
          %7975 = vmatpush1.bf16.msra.mxu0 %v6557
          %7976 = vmatprep.subr.bf16.mxu0 %v6550
          %7977 = vmatpush1.bf16.msra.mxu0 %v6549
          %7978 = vmatprep.subr.bf16.mxu0 %v6542
          %7979 = vmatpush1.bf16.msra.mxu0 %v6541
          %7980 = vmatprep.subr.bf16.mxu0 %v6662
          %7981 = vmatpush2.bf16.msra.mxu0 %v6661
          %7982 = vmatprep.subr.bf16.mxu0 %v6654
          %7983 = vmatpush2.bf16.msra.mxu0 %v6653
          %7984 = vmatprep.subr.bf16.mxu0 %v6646
          %7985 = vmatpush2.bf16.msra.mxu0 %v6645
          %7986 = vmatprep.subr.bf16.mxu0 %v6638
          %7987 = vmatpush2.bf16.msra.mxu0 %v6637
          %7988 = vmatprep.subr.bf16.mxu0 %v6630
          %7989 = vmatpush2.bf16.msra.mxu0 %v6629
          %7990 = vmatprep.subr.bf16.mxu0 %v6622
          %7991 = vmatpush2.bf16.msra.mxu0 %v6621
          %7992 = vmatprep.subr.bf16.mxu0 %v6614
          %7993 = vmatpush2.bf16.msra.mxu0 %v6613
          %7994 = vmatprep.subr.bf16.mxu0 %v6606
          %7995 = vmatpush2.bf16.msra.mxu0 %v6605
          %7996 = vmatprep.mubr.bf16.mxu0 %v4354
          %7997 = vmatmul.mubr.bf16.gmra.mxu0 %v4353
          %v7998 = vpop.f32.mrf.mxu0
          %v7999 = vadd.f32 %v7958, %v7998
          %v8000 = vpop.f32.mrf.mxu0
          %v8001 = vadd.f32 %v7960, %v8000
          %v8002 = vpop.f32.mrf.mxu0
          %v8003 = vpop.f32.mrf.mxu0
          %8004 = vdwg.mxu0
          %8005 = vmatprep.subr.bf16.mxu0 %v6726
          %8006 = vmatpush1.bf16.msra.mxu0 %v6725
          %8007 = vmatprep.subr.bf16.mxu0 %v6718
          %8008 = vmatpush1.bf16.msra.mxu0 %v6717
          %8009 = vmatprep.subr.bf16.mxu0 %v6710
          %8010 = vmatpush1.bf16.msra.mxu0 %v6709
          %8011 = vmatprep.subr.bf16.mxu0 %v6702
          %8012 = vmatpush1.bf16.msra.mxu0 %v6701
          %8013 = vmatprep.subr.bf16.mxu0 %v6694
          %8014 = vmatpush1.bf16.msra.mxu0 %v6693
          %8015 = vmatprep.subr.bf16.mxu0 %v6686
          %8016 = vmatpush1.bf16.msra.mxu0 %v6685
          %8017 = vmatprep.subr.bf16.mxu0 %v6678
          %8018 = vmatpush1.bf16.msra.mxu0 %v6677
          %8019 = vmatprep.subr.bf16.mxu0 %v6670
          %8020 = vmatpush1.bf16.msra.mxu0 %v6669
          %8021 = vmatprep.subr.bf16.mxu0 %v6790
          %8022 = vmatpush2.bf16.msra.mxu0 %v6789
          %8023 = vmatprep.subr.bf16.mxu0 %v6782
          %8024 = vmatpush2.bf16.msra.mxu0 %v6781
          %8025 = vmatprep.subr.bf16.mxu0 %v6774
          %8026 = vmatpush2.bf16.msra.mxu0 %v6773
          %8027 = vmatprep.subr.bf16.mxu0 %v6766
          %8028 = vmatpush2.bf16.msra.mxu0 %v6765
          %8029 = vmatprep.subr.bf16.mxu0 %v6758
          %8030 = vmatpush2.bf16.msra.mxu0 %v6757
          %8031 = vmatprep.subr.bf16.mxu0 %v6750
          %8032 = vmatpush2.bf16.msra.mxu0 %v6749
          %8033 = vmatprep.subr.bf16.mxu0 %v6742
          %8034 = vmatpush2.bf16.msra.mxu0 %v6741
          %8035 = vmatprep.subr.bf16.mxu0 %v6734
          %8036 = vmatpush2.bf16.msra.mxu0 %v6733
          %8037 = vmatprep.mubr.bf16.mxu0 %v4356
          %8038 = vmatmul.mubr.bf16.gmra.mxu0 %v4355
          %v8039 = vpop.f32.mrf.mxu0
          %v8040 = vadd.f32 %v7999, %v8039
          %v8041 = vpop.f32.mrf.mxu0
          %v8042 = vadd.f32 %v8001, %v8041
          %v8043 = vpop.f32.mrf.mxu0
          %v8044 = vpop.f32.mrf.mxu0
          %8045 = vdwg.mxu0
          %8046 = vmatprep.subr.bf16.mxu0 %v6854
          %8047 = vmatpush1.bf16.msra.mxu0 %v6853
          %8048 = vmatprep.subr.bf16.mxu0 %v6846
          %8049 = vmatpush1.bf16.msra.mxu0 %v6845
          %8050 = vmatprep.subr.bf16.mxu0 %v6838
          %8051 = vmatpush1.bf16.msra.mxu0 %v6837
          %8052 = vmatprep.subr.bf16.mxu0 %v6830
          %8053 = vmatpush1.bf16.msra.mxu0 %v6829
          %8054 = vmatprep.subr.bf16.mxu0 %v6822
          %8055 = vmatpush1.bf16.msra.mxu0 %v6821
          %8056 = vmatprep.subr.bf16.mxu0 %v6814
          %8057 = vmatpush1.bf16.msra.mxu0 %v6813
          %8058 = vmatprep.subr.bf16.mxu0 %v6806
          %8059 = vmatpush1.bf16.msra.mxu0 %v6805
          %8060 = vmatprep.subr.bf16.mxu0 %v6798
          %8061 = vmatpush1.bf16.msra.mxu0 %v6797
          %8062 = vmatprep.subr.bf16.mxu0 %v6918
          %8063 = vmatpush2.bf16.msra.mxu0 %v6917
          %8064 = vmatprep.subr.bf16.mxu0 %v6910
          %8065 = vmatpush2.bf16.msra.mxu0 %v6909
          %8066 = vmatprep.subr.bf16.mxu0 %v6902
          %8067 = vmatpush2.bf16.msra.mxu0 %v6901
          %8068 = vmatprep.subr.bf16.mxu0 %v6894
          %8069 = vmatpush2.bf16.msra.mxu0 %v6893
          %8070 = vmatprep.subr.bf16.mxu0 %v6886
          %8071 = vmatpush2.bf16.msra.mxu0 %v6885
          %8072 = vmatprep.subr.bf16.mxu0 %v6878
          %8073 = vmatpush2.bf16.msra.mxu0 %v6877
          %8074 = vmatprep.subr.bf16.mxu0 %v6870
          %8075 = vmatpush2.bf16.msra.mxu0 %v6869
          %8076 = vmatprep.subr.bf16.mxu0 %v6862
          %8077 = vmatpush2.bf16.msra.mxu0 %v6861
          %8078 = vmatprep.mubr.bf16.mxu0 %v4358
          %8079 = vmatmul.mubr.bf16.gmra.mxu0 %v4357
          %v8080 = vpop.f32.mrf.mxu0
          %v8081 = vadd.f32 %v8040, %v8080
          %v8082 = vpop.f32.mrf.mxu0
          %v8083 = vadd.f32 %v8042, %v8082
          %v8084 = vpop.f32.mrf.mxu0
          %v8085 = vpop.f32.mrf.mxu0
          %8086 = vdwg.mxu0
          %v8087 = vmax.f32 %v7589, 0.0
          %v8088 = vmax.f32 %v7591, 0.0
          %v8089 = vmax.f32 %v7753, 0.0
          %v8090 = vmax.f32 %v7755, 0.0
          %v8091 = vmax.f32 %v7917, 0.0
          %v8092 = vmax.f32 %v7919, 0.0
          %v8093 = vmax.f32 %v8081, 0.0
          %v8094 = vmax.f32 %v8083, 0.0
          %v8095 = vrot.slane %v8087, 4
          %v8096 = vadd.f32 %v8087, %v8095
          %v8097 = vrot.slane %v8096, 2
          %v8098 = vadd.f32 %v8096, %v8097
          %v8099 = vrot.slane %v8098, 1
          %v8100 = vadd.f32 %v8098, %v8099
          %v8101 = vrot.slane %v8088, 4
          %v8102 = vadd.f32 %v8088, %v8101
          %v8103 = vrot.slane %v8102, 2
          %v8104 = vadd.f32 %v8102, %v8103
          %v8105 = vrot.slane %v8104, 1
          %v8106 = vadd.f32 %v8104, %v8105
          %v8107 = vrot.slane %v8089, 4
          %v8108 = vadd.f32 %v8089, %v8107
          %v8109 = vrot.slane %v8108, 2
          %v8110 = vadd.f32 %v8108, %v8109
          %v8111 = vrot.slane %v8110, 1
          %v8112 = vadd.f32 %v8110, %v8111
          %v8113 = vrot.slane %v8090, 4
          %v8114 = vadd.f32 %v8090, %v8113
          %v8115 = vrot.slane %v8114, 2
          %v8116 = vadd.f32 %v8114, %v8115
          %v8117 = vrot.slane %v8116, 1
          %v8118 = vadd.f32 %v8116, %v8117
          %v8119 = vrot.slane %v8091, 4
          %v8120 = vadd.f32 %v8091, %v8119
          %v8121 = vrot.slane %v8120, 2
          %v8122 = vadd.f32 %v8120, %v8121
          %v8123 = vrot.slane %v8122, 1
          %v8124 = vadd.f32 %v8122, %v8123
          %v8125 = vrot.slane %v8092, 4
          %v8126 = vadd.f32 %v8092, %v8125
          %v8127 = vrot.slane %v8126, 2
          %v8128 = vadd.f32 %v8126, %v8127
          %v8129 = vrot.slane %v8128, 1
          %v8130 = vadd.f32 %v8128, %v8129
          %v8131 = vrot.slane %v8093, 4
          %v8132 = vadd.f32 %v8093, %v8131
          %v8133 = vrot.slane %v8132, 2
          %v8134 = vadd.f32 %v8132, %v8133
          %v8135 = vrot.slane %v8134, 1
          %v8136 = vadd.f32 %v8134, %v8135
          %v8137 = vrot.slane %v8094, 4
          %v8138 = vadd.f32 %v8094, %v8137
          %v8139 = vrot.slane %v8138, 2
          %v8140 = vadd.f32 %v8138, %v8139
          %v8141 = vrot.slane %v8140, 1
          %v8142 = vadd.f32 %v8140, %v8141
          %v8143 = vmul.f32 %v8100, %v360
          %v8144 = vmul.f32 %v8106, %v360
          %v8145 = vmul.f32 %v8112, %v360
          %v8146 = vmul.f32 %v8118, %v360
          %v8147 = vmul.f32 %v8124, %v360
          %v8148 = vmul.f32 %v8130, %v360
          %v8149 = vmul.f32 %v8136, %v360
          %v8150 = vmul.f32 %v8142, %v360
          %v8159 = vcombine.low %v8143, %v8144
          %v8160 = vcombine.low %v8145, %v8146
          %v8161 = vcombine.low %v8147, %v8148
          %v8162 = vcombine.low %v8149, %v8150
          %v8164 = vunpack.c.l.s4 1966171168
          %v8165 = vunpack.c.0.s8 %v8164
          %v8166 = vlaneseq
          %v8167 = vshrl.u32 %v8166, 7
          %v8168 = vsub.s32 %v8165, %v8167
          %v8169 = vrot.slane %v8159, %v8168
          %v8171 = vunpack.c.l.s4 1966171168
          %v8172 = vunpack.c.0.s8 %v8171
          %v8173 = vlaneseq
          %v8174 = vshrl.u32 %v8173, 7
          %v8175 = vsub.s32 %v8172, %v8174
          %v8176 = vrot.slane %v8160, %v8175
          %v8178 = vunpack.c.l.s4 1966171168
          %v8179 = vunpack.c.0.s8 %v8178
          %v8180 = vlaneseq
          %v8181 = vshrl.u32 %v8180, 7
          %v8182 = vsub.s32 %v8179, %v8181
          %v8183 = vrot.slane %v8161, %v8182
          %v8185 = vunpack.c.l.s4 1966171168
          %v8186 = vunpack.c.0.s8 %v8185
          %v8187 = vlaneseq
          %v8188 = vshrl.u32 %v8187, 7
          %v8189 = vsub.s32 %v8186, %v8188
          %v8190 = vrot.slane %v8162, %v8189
          %v8191 = vcombine.low %v8169, %v8176
          %v8192 = vcombine.low %v8183, %v8190
          %v8194 = vunpack.c.l.s4 1966171168
          %v8195 = vunpack.c.0.s8 %v8194
          %v8196 = vlaneseq
          %v8197 = vshrl.u32 %v8196, 7
          %v8198 = vsub.s32 %v8195, %v8197
          %v8199 = vrot.slane %v8191, %v8198
          %v8201 = vunpack.c.l.s4 1966171168
          %v8202 = vunpack.c.0.s8 %v8201
          %v8203 = vlaneseq
          %v8204 = vshrl.u32 %v8203, 7
          %v8205 = vsub.s32 %v8202, %v8204
          %v8206 = vrot.slane %v8192, %v8205
          %v8207 = vcombine.low %v8199, %v8206
          %8209 = vst [vmem:[#allocation13] sm:$0xff] %v8207
          %v8210 = vpack.c.bf16 %v8087, %v8087
          %v8211 = vpack.c.bf16 %v8088, %v8088
          %v8212 = vpack.c.bf16 %v8089, %v8089
          %v8213 = vpack.c.bf16 %v8090, %v8090
          %v8214 = vpack.c.bf16 %v8091, %v8091
          %v8215 = vpack.c.bf16 %v8092, %v8092
          %v8216 = vpack.c.bf16 %v8093, %v8093
          %v8217 = vpack.c.bf16 %v8094, %v8094
          %v8218 = vld [vmem:[#allocation4] sm:$0xf]
          %v8219 = vld [vmem:[#allocation4 + $0x4] sm:$0xf]
          %v8220 = vld [vmem:[#allocation4 + $0x8] sm:$0xf]
          %v8221 = vld [vmem:[#allocation4 + $0xc] sm:$0xf]
          %v8222 = vld [vmem:[#allocation4 + $0x10] sm:$0xf]
          %v8223 = vld [vmem:[#allocation4 + $0x14] sm:$0xf]
          %v8224 = vld [vmem:[#allocation4 + $0x18] sm:$0xf]
          %v8225 = vld [vmem:[#allocation4 + $0x1c] sm:$0xf]
          %v8226 = vld [vmem:[#allocation4 + $0x20] sm:$0xf]
          %v8227 = vld [vmem:[#allocation4 + $0x24] sm:$0xf]
          %v8228 = vld [vmem:[#allocation4 + $0x28] sm:$0xf]
          %v8229 = vld [vmem:[#allocation4 + $0x2c] sm:$0xf]
          %v8230 = vld [vmem:[#allocation4 + $0x30] sm:$0xf]
          %v8231 = vld [vmem:[#allocation4 + $0x34] sm:$0xf]
          %v8232 = vld [vmem:[#allocation4 + $0x38] sm:$0xf]
          %v8233 = vld [vmem:[#allocation4 + $0x3c] sm:$0xf]
          %v8234 = vld [vmem:[#allocation4 + $0x40] sm:$0xf]
          %v8235 = vld [vmem:[#allocation4 + $0x44] sm:$0xf]
          %v8236 = vld [vmem:[#allocation4 + $0x48] sm:$0xf]
          %v8237 = vld [vmem:[#allocation4 + $0x4c] sm:$0xf]
          %v8238 = vld [vmem:[#allocation4 + $0x50] sm:$0xf]
          %v8239 = vld [vmem:[#allocation4 + $0x54] sm:$0xf]
          %v8240 = vld [vmem:[#allocation4 + $0x58] sm:$0xf]
          %v8241 = vld [vmem:[#allocation4 + $0x5c] sm:$0xf]
          %v8242 = vld [vmem:[#allocation4 + $0x60] sm:$0xf]
          %v8243 = vld [vmem:[#allocation4 + $0x64] sm:$0xf]
          %v8244 = vld [vmem:[#allocation4 + $0x68] sm:$0xf]
          %v8245 = vld [vmem:[#allocation4 + $0x6c] sm:$0xf]
          %v8246 = vld [vmem:[#allocation4 + $0x70] sm:$0xf]
          %v8247 = vld [vmem:[#allocation4 + $0x74] sm:$0xf]
          %v8248 = vld [vmem:[#allocation4 + $0x78] sm:$0xf]
          %v8249 = vld [vmem:[#allocation4 + $0x7c] sm:$0xf]
          %v8250 = vld [vmem:[#allocation4 + $0x80] sm:$0xf]
          %v8251 = vld [vmem:[#allocation4 + $0x84] sm:$0xf]
          %v8252 = vld [vmem:[#allocation4 + $0x88] sm:$0xf]
          %v8253 = vld [vmem:[#allocation4 + $0x8c] sm:$0xf]
          %v8254 = vld [vmem:[#allocation4 + $0x90] sm:$0xf]
          %v8255 = vld [vmem:[#allocation4 + $0x94] sm:$0xf]
          %v8256 = vld [vmem:[#allocation4 + $0x98] sm:$0xf]
          %v8257 = vld [vmem:[#allocation4 + $0x9c] sm:$0xf]
          %v8258 = vld [vmem:[#allocation4 + $0xa0] sm:$0xf]
          %v8259 = vld [vmem:[#allocation4 + $0xa4] sm:$0xf]
          %v8260 = vld [vmem:[#allocation4 + $0xa8] sm:$0xf]
          %v8261 = vld [vmem:[#allocation4 + $0xac] sm:$0xf]
          %v8262 = vld [vmem:[#allocation4 + $0xb0] sm:$0xf]
          %v8263 = vld [vmem:[#allocation4 + $0xb4] sm:$0xf]
          %v8264 = vld [vmem:[#allocation4 + $0xb8] sm:$0xf]
          %v8265 = vld [vmem:[#allocation4 + $0xbc] sm:$0xf]
          %v8266 = vld [vmem:[#allocation4 + $0xc0] sm:$0xf]
          %v8267 = vld [vmem:[#allocation4 + $0xc4] sm:$0xf]
          %v8268 = vld [vmem:[#allocation4 + $0xc8] sm:$0xf]
          %v8269 = vld [vmem:[#allocation4 + $0xcc] sm:$0xf]
          %v8270 = vld [vmem:[#allocation4 + $0xd0] sm:$0xf]
          %v8271 = vld [vmem:[#allocation4 + $0xd4] sm:$0xf]
          %v8272 = vld [vmem:[#allocation4 + $0xd8] sm:$0xf]
          %v8273 = vld [vmem:[#allocation4 + $0xdc] sm:$0xf]
          %v8274 = vld [vmem:[#allocation4 + $0xe0] sm:$0xf]
          %v8275 = vld [vmem:[#allocation4 + $0xe4] sm:$0xf]
          %v8276 = vld [vmem:[#allocation4 + $0xe8] sm:$0xf]
          %v8277 = vld [vmem:[#allocation4 + $0xec] sm:$0xf]
          %v8278 = vld [vmem:[#allocation4 + $0xf0] sm:$0xf]
          %v8279 = vld [vmem:[#allocation4 + $0xf4] sm:$0xf]
          %v8280 = vld [vmem:[#allocation4 + $0xf8] sm:$0xf]
          %v8281 = vld [vmem:[#allocation4 + $0xfc] sm:$0xf]
          %v8282 = vld [vmem:[#allocation4 + $0x100] sm:$0xf]
          %v8283 = vld [vmem:[#allocation4 + $0x104] sm:$0xf]
          %v8284 = vld [vmem:[#allocation4 + $0x108] sm:$0xf]
          %v8285 = vld [vmem:[#allocation4 + $0x10c] sm:$0xf]
          %v8286 = vld [vmem:[#allocation4 + $0x110] sm:$0xf]
          %v8287 = vld [vmem:[#allocation4 + $0x114] sm:$0xf]
          %v8288 = vld [vmem:[#allocation4 + $0x118] sm:$0xf]
          %v8289 = vld [vmem:[#allocation4 + $0x11c] sm:$0xf]
          %v8290 = vld [vmem:[#allocation4 + $0x120] sm:$0xf]
          %v8291 = vld [vmem:[#allocation4 + $0x124] sm:$0xf]
          %v8292 = vld [vmem:[#allocation4 + $0x128] sm:$0xf]
          %v8293 = vld [vmem:[#allocation4 + $0x12c] sm:$0xf]
          %v8294 = vld [vmem:[#allocation4 + $0x130] sm:$0xf]
          %v8295 = vld [vmem:[#allocation4 + $0x134] sm:$0xf]
          %v8296 = vld [vmem:[#allocation4 + $0x138] sm:$0xf]
          %v8297 = vld [vmem:[#allocation4 + $0x13c] sm:$0xf]
          %v8298 = vld [vmem:[#allocation4 + $0x140] sm:$0xf]
          %v8299 = vld [vmem:[#allocation4 + $0x144] sm:$0xf]
          %v8300 = vld [vmem:[#allocation4 + $0x148] sm:$0xf]
          %v8301 = vld [vmem:[#allocation4 + $0x14c] sm:$0xf]
          %v8302 = vld [vmem:[#allocation4 + $0x150] sm:$0xf]
          %v8303 = vld [vmem:[#allocation4 + $0x154] sm:$0xf]
          %v8304 = vld [vmem:[#allocation4 + $0x158] sm:$0xf]
          %v8305 = vld [vmem:[#allocation4 + $0x15c] sm:$0xf]
          %v8306 = vld [vmem:[#allocation4 + $0x160] sm:$0xf]
          %v8307 = vld [vmem:[#allocation4 + $0x164] sm:$0xf]
          %v8308 = vld [vmem:[#allocation4 + $0x168] sm:$0xf]
          %v8309 = vld [vmem:[#allocation4 + $0x16c] sm:$0xf]
          %v8310 = vld [vmem:[#allocation4 + $0x170] sm:$0xf]
          %v8311 = vld [vmem:[#allocation4 + $0x174] sm:$0xf]
          %v8312 = vld [vmem:[#allocation4 + $0x178] sm:$0xf]
          %v8313 = vld [vmem:[#allocation4 + $0x17c] sm:$0xf]
          %v8314 = vld [vmem:[#allocation4 + $0x180] sm:$0xf]
          %v8315 = vld [vmem:[#allocation4 + $0x184] sm:$0xf]
          %v8316 = vld [vmem:[#allocation4 + $0x188] sm:$0xf]
          %v8317 = vld [vmem:[#allocation4 + $0x18c] sm:$0xf]
          %v8318 = vld [vmem:[#allocation4 + $0x190] sm:$0xf]
          %v8319 = vld [vmem:[#allocation4 + $0x194] sm:$0xf]
          %v8320 = vld [vmem:[#allocation4 + $0x198] sm:$0xf]
          %v8321 = vld [vmem:[#allocation4 + $0x19c] sm:$0xf]
          %v8322 = vld [vmem:[#allocation4 + $0x1a0] sm:$0xf]
          %v8323 = vld [vmem:[#allocation4 + $0x1a4] sm:$0xf]
          %v8324 = vld [vmem:[#allocation4 + $0x1a8] sm:$0xf]
          %v8325 = vld [vmem:[#allocation4 + $0x1ac] sm:$0xf]
          %v8326 = vld [vmem:[#allocation4 + $0x1b0] sm:$0xf]
          %v8327 = vld [vmem:[#allocation4 + $0x1b4] sm:$0xf]
          %v8328 = vld [vmem:[#allocation4 + $0x1b8] sm:$0xf]
          %v8329 = vld [vmem:[#allocation4 + $0x1bc] sm:$0xf]
          %v8330 = vld [vmem:[#allocation4 + $0x1c0] sm:$0xf]
          %v8331 = vld [vmem:[#allocation4 + $0x1c4] sm:$0xf]
          %v8332 = vld [vmem:[#allocation4 + $0x1c8] sm:$0xf]
          %v8333 = vld [vmem:[#allocation4 + $0x1cc] sm:$0xf]
          %v8334 = vld [vmem:[#allocation4 + $0x1d0] sm:$0xf]
          %v8335 = vld [vmem:[#allocation4 + $0x1d4] sm:$0xf]
          %v8336 = vld [vmem:[#allocation4 + $0x1d8] sm:$0xf]
          %v8337 = vld [vmem:[#allocation4 + $0x1dc] sm:$0xf]
          %v8338 = vld [vmem:[#allocation4 + $0x1e0] sm:$0xf]
          %v8339 = vld [vmem:[#allocation4 + $0x1e4] sm:$0xf]
          %v8340 = vld [vmem:[#allocation4 + $0x1e8] sm:$0xf]
          %v8341 = vld [vmem:[#allocation4 + $0x1ec] sm:$0xf]
          %v8342 = vld [vmem:[#allocation4 + $0x1f0] sm:$0xf]
          %v8343 = vld [vmem:[#allocation4 + $0x1f4] sm:$0xf]
          %v8344 = vld [vmem:[#allocation4 + $0x1f8] sm:$0xf]
          %v8345 = vld [vmem:[#allocation4 + $0x1fc] sm:$0xf]
          %v8474 = vunpack.c.l.b16 %v8218
          %v8475 = vunpack.c.l.b16 %v8219
          %v8476 = vunpack.c.l.b16 %v8220
          %v8477 = vunpack.c.l.b16 %v8221
          %v8478 = vunpack.c.l.b16 %v8222
          %v8479 = vunpack.c.l.b16 %v8223
          %v8480 = vunpack.c.l.b16 %v8224
          %v8481 = vunpack.c.l.b16 %v8225
          %v8482 = vunpack.c.l.b16 %v8226
          %v8483 = vunpack.c.l.b16 %v8227
          %v8484 = vunpack.c.l.b16 %v8228
          %v8485 = vunpack.c.l.b16 %v8229
          %v8486 = vunpack.c.l.b16 %v8230
          %v8487 = vunpack.c.l.b16 %v8231
          %v8488 = vunpack.c.l.b16 %v8232
          %v8489 = vunpack.c.l.b16 %v8233
          %v8490 = vunpack.c.l.b16 %v8234
          %v8491 = vunpack.c.l.b16 %v8235
          %v8492 = vunpack.c.l.b16 %v8236
          %v8493 = vunpack.c.l.b16 %v8237
          %v8494 = vunpack.c.l.b16 %v8238
          %v8495 = vunpack.c.l.b16 %v8239
          %v8496 = vunpack.c.l.b16 %v8240
          %v8497 = vunpack.c.l.b16 %v8241
          %v8498 = vunpack.c.l.b16 %v8242
          %v8499 = vunpack.c.l.b16 %v8243
          %v8500 = vunpack.c.l.b16 %v8244
          %v8501 = vunpack.c.l.b16 %v8245
          %v8502 = vunpack.c.l.b16 %v8246
          %v8503 = vunpack.c.l.b16 %v8247
          %v8504 = vunpack.c.l.b16 %v8248
          %v8505 = vunpack.c.l.b16 %v8249
          %v8506 = vunpack.c.l.b16 %v8250
          %v8507 = vunpack.c.l.b16 %v8251
          %v8508 = vunpack.c.l.b16 %v8252
          %v8509 = vunpack.c.l.b16 %v8253
          %v8510 = vunpack.c.l.b16 %v8254
          %v8511 = vunpack.c.l.b16 %v8255
          %v8512 = vunpack.c.l.b16 %v8256
          %v8513 = vunpack.c.l.b16 %v8257
          %v8514 = vunpack.c.l.b16 %v8258
          %v8515 = vunpack.c.l.b16 %v8259
          %v8516 = vunpack.c.l.b16 %v8260
          %v8517 = vunpack.c.l.b16 %v8261
          %v8518 = vunpack.c.l.b16 %v8262
          %v8519 = vunpack.c.l.b16 %v8263
          %v8520 = vunpack.c.l.b16 %v8264
          %v8521 = vunpack.c.l.b16 %v8265
          %v8522 = vunpack.c.l.b16 %v8266
          %v8523 = vunpack.c.l.b16 %v8267
          %v8524 = vunpack.c.l.b16 %v8268
          %v8525 = vunpack.c.l.b16 %v8269
          %v8526 = vunpack.c.l.b16 %v8270
          %v8527 = vunpack.c.l.b16 %v8271
          %v8528 = vunpack.c.l.b16 %v8272
          %v8529 = vunpack.c.l.b16 %v8273
          %v8530 = vunpack.c.l.b16 %v8274
          %v8531 = vunpack.c.l.b16 %v8275
          %v8532 = vunpack.c.l.b16 %v8276
          %v8533 = vunpack.c.l.b16 %v8277
          %v8534 = vunpack.c.l.b16 %v8278
          %v8535 = vunpack.c.l.b16 %v8279
          %v8536 = vunpack.c.l.b16 %v8280
          %v8537 = vunpack.c.l.b16 %v8281
          %v8538 = vunpack.c.l.b16 %v8282
          %v8539 = vunpack.c.l.b16 %v8283
          %v8540 = vunpack.c.l.b16 %v8284
          %v8541 = vunpack.c.l.b16 %v8285
          %v8542 = vunpack.c.l.b16 %v8286
          %v8543 = vunpack.c.l.b16 %v8287
          %v8544 = vunpack.c.l.b16 %v8288
          %v8545 = vunpack.c.l.b16 %v8289
          %v8546 = vunpack.c.l.b16 %v8290
          %v8547 = vunpack.c.l.b16 %v8291
          %v8548 = vunpack.c.l.b16 %v8292
          %v8549 = vunpack.c.l.b16 %v8293
          %v8550 = vunpack.c.l.b16 %v8294
          %v8551 = vunpack.c.l.b16 %v8295
          %v8552 = vunpack.c.l.b16 %v8296
          %v8553 = vunpack.c.l.b16 %v8297
          %v8554 = vunpack.c.l.b16 %v8298
          %v8555 = vunpack.c.l.b16 %v8299
          %v8556 = vunpack.c.l.b16 %v8300
          %v8557 = vunpack.c.l.b16 %v8301
          %v8558 = vunpack.c.l.b16 %v8302
          %v8559 = vunpack.c.l.b16 %v8303
          %v8560 = vunpack.c.l.b16 %v8304
          %v8561 = vunpack.c.l.b16 %v8305
          %v8562 = vunpack.c.l.b16 %v8306
          %v8563 = vunpack.c.l.b16 %v8307
          %v8564 = vunpack.c.l.b16 %v8308
          %v8565 = vunpack.c.l.b16 %v8309
          %v8566 = vunpack.c.l.b16 %v8310
          %v8567 = vunpack.c.l.b16 %v8311
          %v8568 = vunpack.c.l.b16 %v8312
          %v8569 = vunpack.c.l.b16 %v8313
          %v8570 = vunpack.c.l.b16 %v8314
          %v8571 = vunpack.c.l.b16 %v8315
          %v8572 = vunpack.c.l.b16 %v8316
          %v8573 = vunpack.c.l.b16 %v8317
          %v8574 = vunpack.c.l.b16 %v8318
          %v8575 = vunpack.c.l.b16 %v8319
          %v8576 = vunpack.c.l.b16 %v8320
          %v8577 = vunpack.c.l.b16 %v8321
          %v8578 = vunpack.c.l.b16 %v8322
          %v8579 = vunpack.c.l.b16 %v8323
          %v8580 = vunpack.c.l.b16 %v8324
          %v8581 = vunpack.c.l.b16 %v8325
          %v8582 = vunpack.c.l.b16 %v8326
          %v8583 = vunpack.c.l.b16 %v8327
          %v8584 = vunpack.c.l.b16 %v8328
          %v8585 = vunpack.c.l.b16 %v8329
          %v8586 = vunpack.c.l.b16 %v8330
          %v8587 = vunpack.c.l.b16 %v8331
          %v8588 = vunpack.c.l.b16 %v8332
          %v8589 = vunpack.c.l.b16 %v8333
          %v8590 = vunpack.c.l.b16 %v8334
          %v8591 = vunpack.c.l.b16 %v8335
          %v8592 = vunpack.c.l.b16 %v8336
          %v8593 = vunpack.c.l.b16 %v8337
          %v8594 = vunpack.c.l.b16 %v8338
          %v8595 = vunpack.c.l.b16 %v8339
          %v8596 = vunpack.c.l.b16 %v8340
          %v8597 = vunpack.c.l.b16 %v8341
          %v8598 = vunpack.c.l.b16 %v8342
          %v8599 = vunpack.c.l.b16 %v8343
          %v8600 = vunpack.c.l.b16 %v8344
          %v8601 = vunpack.c.l.b16 %v8345
          %v8602 = vpack.c.b16 %v8475, %v8474
          %v8603 = vpack.c.b16 %v8477, %v8476
          %v8604 = vpack.c.b16 %v8479, %v8478
          %v8605 = vpack.c.b16 %v8481, %v8480
          %v8606 = vpack.c.b16 %v8483, %v8482
          %v8607 = vpack.c.b16 %v8485, %v8484
          %v8608 = vpack.c.b16 %v8487, %v8486
          %v8609 = vpack.c.b16 %v8489, %v8488
          %v8610 = vpack.c.b16 %v8491, %v8490
          %v8611 = vpack.c.b16 %v8493, %v8492
          %v8612 = vpack.c.b16 %v8495, %v8494
          %v8613 = vpack.c.b16 %v8497, %v8496
          %v8614 = vpack.c.b16 %v8499, %v8498
          %v8615 = vpack.c.b16 %v8501, %v8500
          %v8616 = vpack.c.b16 %v8503, %v8502
          %v8617 = vpack.c.b16 %v8505, %v8504
          %v8618 = vpack.c.b16 %v8507, %v8506
          %v8619 = vpack.c.b16 %v8509, %v8508
          %v8620 = vpack.c.b16 %v8511, %v8510
          %v8621 = vpack.c.b16 %v8513, %v8512
          %v8622 = vpack.c.b16 %v8515, %v8514
          %v8623 = vpack.c.b16 %v8517, %v8516
          %v8624 = vpack.c.b16 %v8519, %v8518
          %v8625 = vpack.c.b16 %v8521, %v8520
          %v8626 = vpack.c.b16 %v8523, %v8522
          %v8627 = vpack.c.b16 %v8525, %v8524
          %v8628 = vpack.c.b16 %v8527, %v8526
          %v8629 = vpack.c.b16 %v8529, %v8528
          %v8630 = vpack.c.b16 %v8531, %v8530
          %v8631 = vpack.c.b16 %v8533, %v8532
          %v8632 = vpack.c.b16 %v8535, %v8534
          %v8633 = vpack.c.b16 %v8537, %v8536
          %v8634 = vpack.c.b16 %v8539, %v8538
          %v8635 = vpack.c.b16 %v8541, %v8540
          %v8636 = vpack.c.b16 %v8543, %v8542
          %v8637 = vpack.c.b16 %v8545, %v8544
          %v8638 = vpack.c.b16 %v8547, %v8546
          %v8639 = vpack.c.b16 %v8549, %v8548
          %v8640 = vpack.c.b16 %v8551, %v8550
          %v8641 = vpack.c.b16 %v8553, %v8552
          %v8642 = vpack.c.b16 %v8555, %v8554
          %v8643 = vpack.c.b16 %v8557, %v8556
          %v8644 = vpack.c.b16 %v8559, %v8558
          %v8645 = vpack.c.b16 %v8561, %v8560
          %v8646 = vpack.c.b16 %v8563, %v8562
          %v8647 = vpack.c.b16 %v8565, %v8564
          %v8648 = vpack.c.b16 %v8567, %v8566
          %v8649 = vpack.c.b16 %v8569, %v8568
          %v8650 = vpack.c.b16 %v8571, %v8570
          %v8651 = vpack.c.b16 %v8573, %v8572
          %v8652 = vpack.c.b16 %v8575, %v8574
          %v8653 = vpack.c.b16 %v8577, %v8576
          %v8654 = vpack.c.b16 %v8579, %v8578
          %v8655 = vpack.c.b16 %v8581, %v8580
          %v8656 = vpack.c.b16 %v8583, %v8582
          %v8657 = vpack.c.b16 %v8585, %v8584
          %v8658 = vpack.c.b16 %v8587, %v8586
          %v8659 = vpack.c.b16 %v8589, %v8588
          %v8660 = vpack.c.b16 %v8591, %v8590
          %v8661 = vpack.c.b16 %v8593, %v8592
          %v8662 = vpack.c.b16 %v8595, %v8594
          %v8663 = vpack.c.b16 %v8597, %v8596
          %v8664 = vpack.c.b16 %v8599, %v8598
          %v8665 = vpack.c.b16 %v8601, %v8600
          %8730 = vmatprep.subr.bf16.mxu0 0
          %8731 = vmatpush1.bf16.msra.mxu0 %v8609
          %8732 = vmatprep.subr.bf16.mxu0 0
          %8733 = vmatpush1.bf16.msra.mxu0 %v8608
          %8734 = vmatprep.subr.bf16.mxu0 0
          %8735 = vmatpush1.bf16.msra.mxu0 %v8607
          %8736 = vmatprep.subr.bf16.mxu0 0
          %8737 = vmatpush1.bf16.msra.mxu0 %v8606
          %8738 = vmatprep.subr.bf16.mxu0 0
          %8739 = vmatpush1.bf16.msra.mxu0 %v8605
          %8740 = vmatprep.subr.bf16.mxu0 0
          %8741 = vmatpush1.bf16.msra.mxu0 %v8604
          %8742 = vmatprep.subr.bf16.mxu0 0
          %8743 = vmatpush1.bf16.msra.mxu0 %v8603
          %8744 = vmatprep.subr.bf16.mxu0 0
          %8745 = vmatpush1.bf16.msra.mxu0 %v8602
          %8746 = vmatprep.subr.bf16.mxu0 0
          %8747 = vmatpush2.bf16.msra.mxu0 %v8617
          %8748 = vmatprep.subr.bf16.mxu0 0
          %8749 = vmatpush2.bf16.msra.mxu0 %v8616
          %8750 = vmatprep.subr.bf16.mxu0 0
          %8751 = vmatpush2.bf16.msra.mxu0 %v8615
          %8752 = vmatprep.subr.bf16.mxu0 0
          %8753 = vmatpush2.bf16.msra.mxu0 %v8614
          %8754 = vmatprep.subr.bf16.mxu0 0
          %8755 = vmatpush2.bf16.msra.mxu0 %v8613
          %8756 = vmatprep.subr.bf16.mxu0 0
          %8757 = vmatpush2.bf16.msra.mxu0 %v8612
          %8758 = vmatprep.subr.bf16.mxu0 0
          %8759 = vmatpush2.bf16.msra.mxu0 %v8611
          %8760 = vmatprep.subr.bf16.mxu0 0
          %8761 = vmatpush2.bf16.msra.mxu0 %v8610
          %8762 = vmatprep.mubr.bf16.mxu0 %v8211
          %8763 = vmatmul.mubr.bf16.gmra.mxu0 %v8210
          %v8764 = vpop.f32.mrf.mxu0
          %v8765 = vadd.f32 0.0, %v8764
          %v8766 = vpop.f32.mrf.mxu0
          %v8767 = vpop.f32.mrf.mxu0
          %v8768 = vpop.f32.mrf.mxu0
          %8769 = vdwg.mxu0
          %8770 = vmatprep.subr.bf16.mxu0 0
          %8771 = vmatpush1.bf16.msra.mxu0 %v8625
          %8772 = vmatprep.subr.bf16.mxu0 0
          %8773 = vmatpush1.bf16.msra.mxu0 %v8624
          %8774 = vmatprep.subr.bf16.mxu0 0
          %8775 = vmatpush1.bf16.msra.mxu0 %v8623
          %8776 = vmatprep.subr.bf16.mxu0 0
          %8777 = vmatpush1.bf16.msra.mxu0 %v8622
          %8778 = vmatprep.subr.bf16.mxu0 0
          %8779 = vmatpush1.bf16.msra.mxu0 %v8621
          %8780 = vmatprep.subr.bf16.mxu0 0
          %8781 = vmatpush1.bf16.msra.mxu0 %v8620
          %8782 = vmatprep.subr.bf16.mxu0 0
          %8783 = vmatpush1.bf16.msra.mxu0 %v8619
          %8784 = vmatprep.subr.bf16.mxu0 0
          %8785 = vmatpush1.bf16.msra.mxu0 %v8618
          %8786 = vmatprep.subr.bf16.mxu0 0
          %8787 = vmatpush2.bf16.msra.mxu0 %v8633
          %8788 = vmatprep.subr.bf16.mxu0 0
          %8789 = vmatpush2.bf16.msra.mxu0 %v8632
          %8790 = vmatprep.subr.bf16.mxu0 0
          %8791 = vmatpush2.bf16.msra.mxu0 %v8631
          %8792 = vmatprep.subr.bf16.mxu0 0
          %8793 = vmatpush2.bf16.msra.mxu0 %v8630
          %8794 = vmatprep.subr.bf16.mxu0 0
          %8795 = vmatpush2.bf16.msra.mxu0 %v8629
          %8796 = vmatprep.subr.bf16.mxu0 0
          %8797 = vmatpush2.bf16.msra.mxu0 %v8628
          %8798 = vmatprep.subr.bf16.mxu0 0
          %8799 = vmatpush2.bf16.msra.mxu0 %v8627
          %8800 = vmatprep.subr.bf16.mxu0 0
          %8801 = vmatpush2.bf16.msra.mxu0 %v8626
          %8802 = vmatprep.mubr.bf16.mxu0 %v8213
          %8803 = vmatmul.mubr.bf16.gmra.mxu0 %v8212
          %v8804 = vpop.f32.mrf.mxu0
          %v8805 = vadd.f32 %v8765, %v8804
          %v8806 = vpop.f32.mrf.mxu0
          %v8807 = vpop.f32.mrf.mxu0
          %v8808 = vpop.f32.mrf.mxu0
          %8809 = vdwg.mxu0
          %8810 = vmatprep.subr.bf16.mxu0 0
          %8811 = vmatpush1.bf16.msra.mxu0 %v8641
          %8812 = vmatprep.subr.bf16.mxu0 0
          %8813 = vmatpush1.bf16.msra.mxu0 %v8640
          %8814 = vmatprep.subr.bf16.mxu0 0
          %8815 = vmatpush1.bf16.msra.mxu0 %v8639
          %8816 = vmatprep.subr.bf16.mxu0 0
          %8817 = vmatpush1.bf16.msra.mxu0 %v8638
          %8818 = vmatprep.subr.bf16.mxu0 0
          %8819 = vmatpush1.bf16.msra.mxu0 %v8637
          %8820 = vmatprep.subr.bf16.mxu0 0
          %8821 = vmatpush1.bf16.msra.mxu0 %v8636
          %8822 = vmatprep.subr.bf16.mxu0 0
          %8823 = vmatpush1.bf16.msra.mxu0 %v8635
          %8824 = vmatprep.subr.bf16.mxu0 0
          %8825 = vmatpush1.bf16.msra.mxu0 %v8634
          %8826 = vmatprep.subr.bf16.mxu0 0
          %8827 = vmatpush2.bf16.msra.mxu0 %v8649
          %8828 = vmatprep.subr.bf16.mxu0 0
          %8829 = vmatpush2.bf16.msra.mxu0 %v8648
          %8830 = vmatprep.subr.bf16.mxu0 0
          %8831 = vmatpush2.bf16.msra.mxu0 %v8647
          %8832 = vmatprep.subr.bf16.mxu0 0
          %8833 = vmatpush2.bf16.msra.mxu0 %v8646
          %8834 = vmatprep.subr.bf16.mxu0 0
          %8835 = vmatpush2.bf16.msra.mxu0 %v8645
          %8836 = vmatprep.subr.bf16.mxu0 0
          %8837 = vmatpush2.bf16.msra.mxu0 %v8644
          %8838 = vmatprep.subr.bf16.mxu0 0
          %8839 = vmatpush2.bf16.msra.mxu0 %v8643
          %8840 = vmatprep.subr.bf16.mxu0 0
          %8841 = vmatpush2.bf16.msra.mxu0 %v8642
          %8842 = vmatprep.mubr.bf16.mxu0 %v8215
          %8843 = vmatmul.mubr.bf16.gmra.mxu0 %v8214
          %v8844 = vpop.f32.mrf.mxu0
          %v8845 = vadd.f32 %v8805, %v8844
          %v8846 = vpop.f32.mrf.mxu0
          %v8847 = vpop.f32.mrf.mxu0
          %v8848 = vpop.f32.mrf.mxu0
          %8849 = vdwg.mxu0
          %8850 = vmatprep.subr.bf16.mxu0 0
          %8851 = vmatpush1.bf16.msra.mxu0 %v8657
          %8852 = vmatprep.subr.bf16.mxu0 0
          %8853 = vmatpush1.bf16.msra.mxu0 %v8656
          %8854 = vmatprep.subr.bf16.mxu0 0
          %8855 = vmatpush1.bf16.msra.mxu0 %v8655
          %8856 = vmatprep.subr.bf16.mxu0 0
          %8857 = vmatpush1.bf16.msra.mxu0 %v8654
          %8858 = vmatprep.subr.bf16.mxu0 0
          %8859 = vmatpush1.bf16.msra.mxu0 %v8653
          %8860 = vmatprep.subr.bf16.mxu0 0
          %8861 = vmatpush1.bf16.msra.mxu0 %v8652
          %8862 = vmatprep.subr.bf16.mxu0 0
          %8863 = vmatpush1.bf16.msra.mxu0 %v8651
          %8864 = vmatprep.subr.bf16.mxu0 0
          %8865 = vmatpush1.bf16.msra.mxu0 %v8650
          %8866 = vmatprep.subr.bf16.mxu0 0
          %8867 = vmatpush2.bf16.msra.mxu0 %v8665
          %8868 = vmatprep.subr.bf16.mxu0 0
          %8869 = vmatpush2.bf16.msra.mxu0 %v8664
          %8870 = vmatprep.subr.bf16.mxu0 0
          %8871 = vmatpush2.bf16.msra.mxu0 %v8663
          %8872 = vmatprep.subr.bf16.mxu0 0
          %8873 = vmatpush2.bf16.msra.mxu0 %v8662
          %8874 = vmatprep.subr.bf16.mxu0 0
          %8875 = vmatpush2.bf16.msra.mxu0 %v8661
          %8876 = vmatprep.subr.bf16.mxu0 0
          %8877 = vmatpush2.bf16.msra.mxu0 %v8660
          %8878 = vmatprep.subr.bf16.mxu0 0
          %8879 = vmatpush2.bf16.msra.mxu0 %v8659
          %8880 = vmatprep.subr.bf16.mxu0 0
          %8881 = vmatpush2.bf16.msra.mxu0 %v8658
          %8882 = vmatprep.mubr.bf16.mxu0 %v8217
          %8883 = vmatmul.mubr.bf16.gmra.mxu0 %v8216
          %v8884 = vpop.f32.mrf.mxu0
          %v8885 = vadd.f32 %v8845, %v8884
          %v8886 = vpop.f32.mrf.mxu0
          %v8887 = vpop.f32.mrf.mxu0
          %v8888 = vpop.f32.mrf.mxu0
          %8889 = vdwg.mxu0
          %8890 = vst [vmem:[#allocation9] sm:$0xff] %v8885
        $region48: #{net_forward.1} parent=27 // pred_fallthru
          _
        %s8891 = sand.u32 %s27, 1
        %s8892 = scalar_lea.sflag [#allocation11], %s8891
        %s8893 = sand.u32 %s108, 1
        %s8894 = smul.addr %s8893, 8
        %s8895 = scalar_lea.vmem [#allocation10], %s8894
        // Predicated region
        $region49: #{net_forward.1} parent=27 // pred_check
          %p8896 = pneg %p92
        $region50: #{net_forward.1} parent=27 // pred_check_branch
          %8898 = sbr.rel (%p8896) target = $region52
        $region51: #{net_forward.1} parent=27 // pred_region
          %s8900 = ssub.s32 128, 128
          %8901 = vsyncadd [#allocation8], %s8900
          %s8903 = sshll.u32 [#allocation9], 4
          %s8904 = int_to_ptr.vmem [resolvable:$true] %s8903
          %8906 = dma.vmem_to_hbm [thread:$0]  %s8904, 128, %s4, [#allocation8]
        $region52: #{net_forward.1} parent=27 // pred_fallthru
          _
        // Predicated region
        $region53: #{net_forward.1} parent=27 // pred_check
          %p8907 = pneg %p118
        $region54: #{net_forward.1} parent=27 // pred_check_branch
          %8909 = sbr.rel (%p8907) target = $region56
        $region55: #{net_forward.1} parent=27 // pred_region
          %s8910 = smul.u32 8, %s27
          %s8912 = ssub.s32 128, 128
          %8913 = vsyncadd %s8892, %s8912
          %s8914 = smul.addr %s8910, 16
          %s8915 = scalar_lea.hbm %s5, %s8914
          %s8917 = sshll.u32 %s8895, 4
          %s8918 = int_to_ptr.vmem [resolvable:$true] %s8917
          %8920 = dma.vmem_to_hbm [thread:$0]  %s8918, 128, %s8915, %s8892
        $region56: #{net_forward.1} parent=27 // pred_fallthru
          _
        // Predicated region
        $region57: #{net_forward.1} parent=27 // pred_check
          %p8921 = pneg %p139
        $region58: #{net_forward.1} parent=27 // pred_check_branch
          %8923 = sbr.rel (%p8921) target = $region60
        $region59: #{net_forward.1} parent=27 // pred_region
          %s8925 = ssub.s32 128, 128
          %8926 = vsyncadd [#allocation11], %s8925
          %s8928 = sshll.u32 [#allocation12], 4
          %s8929 = int_to_ptr.vmem [resolvable:$true] %s8928
          %8931 = dma.vmem_to_hbm [thread:$0]  %s8929, 128, %s6, [#allocation11]
        $region60: #{net_forward.1} parent=27 // pred_fallthru
          _
        // Predicated region
        $region61: #{net_forward.1} parent=27 // pred_check
          %p8932 = pneg %p160
        $region62: #{net_forward.1} parent=27 // pred_check_branch
          %8934 = sbr.rel (%p8932) target = $region64
        $region63: #{net_forward.1} parent=27 // pred_region
          %s8936 = ssub.s32 128, 128
          %8937 = vsyncadd [#allocation14], %s8936
          %s8939 = sshll.u32 [#allocation13], 4
          %s8940 = int_to_ptr.vmem [resolvable:$true] %s8939
          %8942 = dma.vmem_to_hbm [thread:$0]  %s8940, 128, %s7, [#allocation14]
        $region64: #{net_forward.1} parent=27 // pred_fallthru
          _
        // Predicated region
        $region65: #{net_forward.1} parent=27 // pred_check
          %p8943 = pneg %p92
        $region66: #{net_forward.1} parent=27 // pred_check_branch
          %8945 = sbr.rel (%p8943) target = $region68
        $region67: #{net_forward.1} parent=27 // pred_region
          %8946 = dma.done [#allocation8], 128
        $region68: #{net_forward.1} parent=27 // pred_fallthru
          _
        // Predicated region
        $region69: #{net_forward.1} parent=27 // pred_check
          %p8947 = pneg %p139
        $region70: #{net_forward.1} parent=27 // pred_check_branch
          %8949 = sbr.rel (%p8947) target = $region72
        $region71: #{net_forward.1} parent=27 // pred_region
          %8950 = dma.done [#allocation11], 128
        $region72: #{net_forward.1} parent=27 // pred_fallthru
          _
        // Predicated region
        $region73: #{net_forward.1} parent=27 // pred_check
          %p8951 = pneg %p160
        $region74: #{net_forward.1} parent=27 // pred_check_branch
          %8953 = sbr.rel (%p8951) target = $region76
        $region75: #{net_forward.1} parent=27 // pred_region
          %8954 = dma.done [#allocation14], 128
        $region76: #{net_forward.1} parent=27 // pred_fallthru
          _
      $region28: #{net_forward.1} parent=5 // pred_fallthru
        _
      %p8955 = scmp.le.s32.totalorder 2, %s22
      // Predicated region
      $region77: #{net_forward.1} parent=5 // pred_check
        %p8956 = pneg %p8955
      $region78: #{net_forward.1} parent=5 // pred_check_branch
        %8958 = sbr.rel (%p8956) target = $region80
      $region79: #{net_forward.1} parent=5 // pred_region
        %s8959 = ssub.s32 %s22, 2
        // Predicated region
        $region81: #{net_forward.1} parent=79 // pred_check
          %p8960 = pneg %p124
        $region82: #{net_forward.1} parent=79 // pred_check_branch
          %8962 = sbr.rel (%p8960) target = $region84
        $region83: #{net_forward.1} parent=79 // pred_region
          %s8963 = sand.u32 %s28, 1
          %s8964 = scalar_lea.sflag [#allocation11], %s8963
          %s8965 = sand.u32 %s109, 1
          %s8966 = smul.addr %s8965, 8
          %s8967 = scalar_lea.vmem [#allocation10], %s8966
          %8968 = dma.done %s8964, 128
        $region84: #{net_forward.1} parent=79 // pred_fallthru
          _
      $region80: #{net_forward.1} parent=5 // pred_fallthru
        _
    $region6: #{net_forward.1} parent=1 // loop_footer
      %s26 = sadd.s32 1, %s22
    $region7: #{net_forward.1} parent=1 // loop_footer_branch
      %21 = sbr.rel target = $region3
    $region8: #{net_forward.1} parent=1 // loop_exit
      _
    %8969 = vsyncpa [#allocation7], 1
    %s8970 = scalar_lea.sflag [#allocation7], 1
    %8971 = vsyncpa %s8970, 1
    %8972 = vsyncpa [#allocation8], 1
    %s8973 = scalar_lea.sflag [#allocation8], 1
    %8974 = vsyncpa %s8973, 1
    %8975 = vsyncpa [#allocation11], 1
    %s8976 = scalar_lea.sflag [#allocation11], 1
    %8977 = vsyncpa %s8976, 1
    %8978 = vsyncpa [#allocation14], 1
  %8979 = vsyncmov [#allocation5]
  %s8980 = vpop.sfrf %8979
  %p8981 = scmp.eq.s32.totalorder %s8980, 0
  %p8982 = pneg %p8981
  %8984 = shalt.err (%p8982)
  %s8985 = scalar_lea.sflag [#allocation5], 1
  %8986 = vsyncmov %s8985
  %s8987 = vpop.sfrf %8986
  %p8988 = scmp.eq.s32.totalorder %s8987, 0
  %p8989 = pneg %p8988
  %8991 = shalt.err (%p8989)

</llo_original>
